<compile_context>
chip_gen: v7x
topology: tpu7x:2x2x1
jax: 0.10.0
libtpu: 0.0.40
codegen_flags: <defaults>
</compile_context>

<pallas_src>
import functools

import jax
import jax.numpy as jnp
from jax.experimental import pallas as pl
from jax.experimental.pallas import tpu as pltpu

_NODE_PAD = 256            # node axes padded to a multiple of this (mult. of 8 and 128)
_LANE = 128                # feature dims padded to this
_DST_TILES = (1024, 512, 256)
_SRC_TILES = (2048, 1024, 512, 256)


def _round_up(x, m):
    return ((x + m - 1) // m) * m


def _pad_to(x, shape):
    pads = [(0, t - s) for s, t in zip(x.shape, shape)]
    return jnp.pad(x, pads)


def _pick_tile(n, candidates, prefer_multi):
    """Largest candidate tile dividing n (optionally requiring >= 2 blocks)."""
    if prefer_multi:
        for t in candidates:
            if n % t == 0 and n // t >= 2:
                return t
    for t in candidates:
        if n % t == 0:
            return t
    return candidates[-1]


def _sage_kernel(adj_ref, hsrc_ref, hdst_ref, invdeg_ref, wpack_ref, b_ref,
                 o_ref, acc_ref, *, apply_relu: bool):
    """One SAGEConv('mean') layer for one relation, tiled over (dst rows, src cols).

    adj_ref    : (tm, tk)      bf16 adjacency tile (dst rows x src cols)
    hsrc_ref   : (tk, Fin)     bf16 source features
    hdst_ref   : (tm, Fin)     bf16 destination features
    invdeg_ref : (tm, 1)       f32  1/in-degree of destination rows
    wpack_ref  : (2*Fin, Fout) bf16 packed [W_neigh ; W_self]
    b_ref      : (1, Fout)     f32  bias
    o_ref      : (tm, Fout)    bf16 (hidden layer) or f32 (final layer)
    acc_ref    : (tm, Fin)     f32  scratch accumulator (resident across k axis)
    """
    k = pl.program_id(1)

    @pl.when(k == 0)
    def _():
        acc_ref[...] = jnp.zeros_like(acc_ref)

    # bf16 x bf16 -> f32 aggregation on the MXU.
    acc_ref[...] += jnp.dot(adj_ref[...], hsrc_ref[...],
                            preferred_element_type=jnp.float32)

    @pl.when(k == pl.num_programs(1) - 1)
    def _():
        # Mean normalisation (VPU), then one packed K=2*Fin MXU epilogue:
        # [mean_agg | h_dst] @ [W_neigh ; W_self] + bias.
        neigh = (acc_ref[...] * invdeg_ref[...]).astype(jnp.bfloat16)
        lhs = jnp.concatenate([neigh, hdst_ref[...]], axis=-1)
        out = jnp.dot(lhs, wpack_ref[...],
                      preferred_element_type=jnp.float32) + b_ref[...]
        if apply_relu:
            out = jnp.maximum(out, 0.0)
        o_ref[...] = out.astype(o_ref.dtype)


def sage_conv(adj, inv_deg, h_src, h_dst, w_pack, bias, *, apply_relu, out_dtype):
    """Fused SAGEConv('mean') for one relation on padded inputs.

    adj     : [Nd_p, Ns_p] bf16 (dst rows x src cols)
    inv_deg : [Nd_p, 1]    f32
    h_src   : [Ns_p, Fin_p] bf16,  h_dst: [Nd_p, Fin_p] bf16
    w_pack  : [2*Fin_p, Fout_p] bf16 ([W_neigh ; W_self]),  bias: [1, Fout_p] f32
    returns : [Nd_p, Fout_p] out_dtype
    """
    nd_p, ns_p = adj.shape
    fin_p = h_src.shape[1]
    fout_p = w_pack.shape[1]
    assert w_pack.shape[0] == 2 * fin_p

    tm = _pick_tile(nd_p, _DST_TILES, prefer_multi=True)   # keep >=2 blocks for megacore
    tk = _pick_tile(ns_p, _SRC_TILES, prefer_multi=False)  # biggest reduction tile
    assert nd_p % tm == 0 and ns_p % tk == 0

    grid = (nd_p // tm, ns_p // tk)
    kernel = functools.partial(_sage_kernel, apply_relu=apply_relu)

    n_dst_tiles = nd_p // tm
    flops = 2.0 * nd_p * ns_p * fin_p + 2.0 * nd_p * (2 * fin_p) * fout_p
    bytes_accessed = (adj.size * adj.dtype.itemsize
                      + h_src.size * h_src.dtype.itemsize * n_dst_tiles   # re-streamed
                      + h_dst.size * h_dst.dtype.itemsize
                      + inv_deg.size * 4
                      + w_pack.size * w_pack.dtype.itemsize
                      + bias.size * 4
                      + nd_p * fout_p * jnp.dtype(out_dtype).itemsize)

    return pl.pallas_call(
        kernel,
        out_shape=jax.ShapeDtypeStruct((nd_p, fout_p), out_dtype),
        grid_spec=pltpu.PrefetchScalarGridSpec(
            num_scalar_prefetch=0,
            grid=grid,
            in_specs=[
                pl.BlockSpec((tm, tk), lambda i, k: (i, k)),          # adjacency
                pl.BlockSpec((tk, fin_p), lambda i, k: (k, 0)),       # h_src
                pl.BlockSpec((tm, fin_p), lambda i, k: (i, 0)),       # h_dst
                pl.BlockSpec((tm, 1), lambda i, k: (i, 0)),           # 1/deg
                pl.BlockSpec((2 * fin_p, fout_p), lambda i, k: (0, 0)),  # packed W
                pl.BlockSpec((1, fout_p), lambda i, k: (0, 0)),       # bias
            ],
            out_specs=pl.BlockSpec((tm, fout_p), lambda i, k: (i, 0)),
            scratch_shapes=[pltpu.VMEM((tm, fin_p), jnp.float32)],
        ),
        compiler_params=pltpu.CompilerParams(
            dimension_semantics=("parallel", "arbitrary"),
            vmem_limit_bytes=48 * 1024 * 1024,
        ),
        cost_estimate=pl.CostEstimate(
            flops=int(flops), transcendentals=0, bytes_accessed=int(bytes_accessed)),
    )(adj, h_src, h_dst, inv_deg, w_pack, bias)


def graphsage_forward(params, adj_user_item, h_user, h_item):
    """Two-layer hetero GraphSAGE forward.

    adj_user_item: [Nu, Ni] binary adjacency, edge 'rating' = user -> item.
    Returns dict {'user': [Nu, emb], 'item': [Ni, emb]} (float32).
    """
    nu, ni = adj_user_item.shape
    in_feats = h_user.shape[1]
    h_feats = params['l1_rating_w_self'].shape[1]
    emb = params['l2_rating_w_self'].shape[1]

    nu_p = _round_up(nu, _NODE_PAD)
    ni_p = _round_up(ni, _NODE_PAD)
    f_in = _round_up(in_feats, _LANE)
    f_h = _round_up(h_feats, _LANE)
    f_e = _round_up(emb, _LANE)

    # Degrees from the real adjacency; clip-to-1 gives a zero neighbour term for
    # zero in-degree nodes (matches DGL SAGEConv 'mean').
    inv_deg_item = 1.0 / jnp.clip(adj_user_item.sum(axis=0), 1.0, None)   # item in-deg
    inv_deg_user = 1.0 / jnp.clip(adj_user_item.sum(axis=1), 1.0, None)   # user in-deg
    inv_deg_item = _pad_to(inv_deg_item.astype(jnp.float32)[:, None], (ni_p, 1))
    inv_deg_user = _pad_to(inv_deg_user.astype(jnp.float32)[:, None], (nu_p, 1))

    # bf16 adjacency (0/1 exact).  A second transposed copy is materialised once
    # so both relations use the plain row-major contraction on the MXU.
    adj_p = _pad_to(adj_user_item, (nu_p, ni_p)).astype(jnp.bfloat16)   # [Nu_p, Ni_p]
    adjT_p = adj_p.T                                                    # [Ni_p, Nu_p]

    # bf16 node features in HBM.
    hu = _pad_to(h_user.astype(jnp.bfloat16), (nu_p, f_in))
    hi = _pad_to(h_item.astype(jnp.bfloat16), (ni_p, f_in))

    def wpack(layer, rel, fi, fo):
        wn = _pad_to(params[f'{layer}_{rel}_w_neigh'].astype(jnp.float32), (fi, fo))
        ws = _pad_to(params[f'{layer}_{rel}_w_self'].astype(jnp.float32), (fi, fo))
        return jnp.concatenate([wn, ws], axis=0).astype(jnp.bfloat16)   # [2*fi, fo]

    def pb(name, fo):
        return _pad_to(params[name].astype(jnp.float32)[None, :], (1, fo))

    # ----- layer 1 (ReLU per node type, as apply_each(h, relu)); bf16 hidden -----
    hi1 = sage_conv(adjT_p, inv_deg_item, hu, hi,
                    wpack('l1', 'rating', f_in, f_h), pb('l1_rating_b', f_h),
                    apply_relu=True, out_dtype=jnp.bfloat16)
    hu1 = sage_conv(adj_p, inv_deg_user, hi, hu,
                    wpack('l1', 'rated_by', f_in, f_h), pb('l1_rated_by_b', f_h),
                    apply_relu=True, out_dtype=jnp.bfloat16)

    # ----- layer 2 (no activation); f32 final outputs -----
    hi2 = sage_conv(adjT_p, inv_deg_item, hu1, hi1,
                    wpack('l2', 'rating', f_h, f_e), pb('l2_rating_b', f_e),
                    apply_relu=False, out_dtype=jnp.float32)
    hu2 = sage_conv(adj_p, inv_deg_user, hi1, hu1,
                    wpack('l2', 'rated_by', f_h, f_e), pb('l2_rated_by_b', f_e),
                    apply_relu=False, out_dtype=jnp.float32)

    return {'user': hu2[:nu, :emb], 'item': hi2[:ni, :emb]}


def init_params(key, in_feats, h_feats, embedding_size):
    """Deterministic synthetic parameters (shapes match dglnn.SAGEConv)."""
    keys = jax.random.split(key, 16)
    k = iter(keys)

    def lin(kk, fin, fout):
        scale = 1.0 / jnp.sqrt(jnp.float32(fin))
        return jax.random.normal(kk, (fin, fout), jnp.float32) * scale

    p = {}
    for rel in ('rating', 'rated_by'):            # layer 1: in_feats -> h_feats
        p[f'l1_{rel}_w_self'] = lin(next(k), in_feats, h_feats)
        p[f'l1_{rel}_w_neigh'] = lin(next(k), in_feats, h_feats)
        p[f'l1_{rel}_b'] = jnp.zeros((h_feats,), jnp.float32)
    for rel in ('rating', 'rated_by'):            # layer 2: h_feats -> embedding_size
        p[f'l2_{rel}_w_self'] = lin(next(k), h_feats, embedding_size)
        p[f'l2_{rel}_w_neigh'] = lin(next(k), h_feats, embedding_size)
        p[f'l2_{rel}_b'] = jnp.zeros((embedding_size,), jnp.float32)
    return p


def _reference_forward(params, adj, h_user, h_item):
    """Pure-JAX reference mirroring the kernel's bf16 storage / f32-accumulate math."""
    bf = jnp.bfloat16
    inv_deg_item = 1.0 / jnp.clip(adj.sum(axis=0), 1.0, None)
    inv_deg_user = 1.0 / jnp.clip(adj.sum(axis=1), 1.0, None)
    adj_b = adj.astype(bf)

    def conv(a_rel, inv_deg, hs, hd, ws, wn, b, relu):
        agg = jnp.dot(a_rel, hs, preferred_element_type=jnp.float32) * inv_deg[:, None]
        out = (jnp.dot(hd, ws.astype(bf), preferred_element_type=jnp.float32)
               + jnp.dot(agg.astype(bf), wn.astype(bf),
                         preferred_element_type=jnp.float32)
               + b)
        return jnp.maximum(out, 0.0) if relu else out

    hu0, hi0 = h_user.astype(bf), h_item.astype(bf)
    hi1 = conv(adj_b.T, inv_deg_item, hu0, hi0, params['l1_rating_w_self'],
               params['l1_rating_w_neigh'], params['l1_rating_b'], True).astype(bf)
    hu1 = conv(adj_b, inv_deg_user, hi0, hu0, params['l1_rated_by_w_self'],
               params['l1_rated_by_w_neigh'], params['l1_rated_by_b'], True).astype(bf)
    hi2 = conv(adj_b.T, inv_deg_item, hu1, hi1, params['l2_rating_w_self'],
               params['l2_rating_w_neigh'], params['l2_rating_b'], False)
    hu2 = conv(adj_b, inv_deg_user, hi1, hu1, params['l2_rated_by_w_self'],
               params['l2_rated_by_w_neigh'], params['l2_rated_by_b'], False)
    return {'user': hu2, 'item': hi2}


if __name__ == "__main__":
    key = jax.random.PRNGKey(0)
    k_graph, k_user, k_item, k_params = jax.random.split(key, 4)

    # Small synthetic bipartite graph (big enough to exercise a multi-block grid).
    num_users, num_items = 300, 700
    in_feats, h_feats, embedding_size = 8, 16, 8

    adj = jax.random.bernoulli(k_graph, 0.05, (num_users, num_items)).astype(jnp.float32)
    h_user = jax.random.normal(k_user, (num_users, in_feats), jnp.float32)
    h_item = jax.random.normal(k_item, (num_items, in_feats), jnp.float32)

    params = init_params(k_params, in_feats, h_feats, embedding_size)

    fwd = jax.jit(graphsage_forward)
    out = fwd(params, adj, h_user, h_item)
    out = jax.tree_util.tree_map(jax.block_until_ready, out)

    ref = _reference_forward(params, adj, h_user, h_item)
    assert out['user'].shape == (num_users, embedding_size)
    assert out['item'].shape == (num_items, embedding_size)
    assert jnp.allclose(out['user'], ref['user'], atol=2e-2, rtol=2e-2), (
        float(jnp.max(jnp.abs(out['user'] - ref['user']))))
    assert jnp.allclose(out['item'], ref['item'], atol=2e-2, rtol=2e-2), (
        float(jnp.max(jnp.abs(out['item'] - ref['item']))))

    print("KERNEL_OK")
</pallas_src>

<mosaic_0001>
module attributes {stable_mosaic.version = 11 : i64} {
  func.func @_sage_kernel(%arg0: i32, %arg1: i32, %arg2: memref<256x512xbf16, #tpu.memory_space<vmem>>, %arg3: memref<512x128xbf16, #tpu.memory_space<vmem>>, %arg4: memref<256x128xbf16, #tpu.memory_space<vmem>>, %arg5: memref<256x1xf32, #tpu.memory_space<vmem>>, %arg6: memref<256x128xbf16, #tpu.memory_space<vmem>>, %arg7: memref<1x128xf32, #tpu.memory_space<vmem>>, %arg8: memref<256x128xbf16, #tpu.memory_space<vmem>>, %arg9: memref<256x128xf32, #tpu.memory_space<vmem>>) attributes {dimension_semantics = [#tpu.dimension_semantics<parallel>, #tpu.dimension_semantics<arbitrary>], iteration_bounds = array<i64: 3, 1>, scalar_prefetch = 0 : i64, scratch_operands = 1 : i64, tpu.core_type = #tpu.core_type<tc>, window_params = [{transform_indices = @transform_0, window_bounds = array<i64: 256, 512>}, {transform_indices = @transform_1, window_bounds = array<i64: 512, 128>}, {transform_indices = @transform_2, window_bounds = array<i64: 256, 128>}, {transform_indices = @transform_3, window_bounds = array<i64: 256, 1>}, {pipeline_mode = #tpu.pipeline_mode<synchronous>, transform_indices = @transform_4, window_bounds = array<i64: 256, 128>}, {pipeline_mode = #tpu.pipeline_mode<synchronous>, transform_indices = @transform_5, window_bounds = array<i64: 1, 128>}, {transform_indices = @transform_6, window_bounds = array<i64: 256, 128>}]} {
    %c0_i32 = arith.constant 0 : i32
    %0 = arith.cmpi eq, %arg1, %c0_i32 : i32
    %1 = arith.extui %0 : i1 to i32
    %c0_i32_0 = arith.constant 0 : i32
    %2 = arith.cmpi ne, %1, %c0_i32_0 : i32
    scf.if %2 {
      %cst_10 = arith.constant 0.000000e+00 : f32
      %12 = vector.broadcast %cst_10 : f32 to vector<256x128xf32>
      %c0_11 = arith.constant 0 : index
      %c0_12 = arith.constant 0 : index
      %13 = vector.load %arg9[%c0_11, %c0_12] : memref<256x128xf32, #tpu.memory_space<vmem>>, vector<256x128xf32>
      tpu.vector_store %arg9[%c0_11, %c0_12], %12 {strides = array<i32>} : memref<256x128xf32, #tpu.memory_space<vmem>>, vector<256x128xf32>,
    } else {
    }
    %c0 = arith.constant 0 : index
    %c0_1 = arith.constant 0 : index
    %3 = vector.load %arg9[%c0, %c0_1] : memref<256x128xf32, #tpu.memory_space<vmem>>, vector<256x128xf32>
    %c0_2 = arith.constant 0 : index
    %c0_3 = arith.constant 0 : index
    %4 = vector.load %arg2[%c0_2, %c0_3] : memref<256x512xbf16, #tpu.memory_space<vmem>>, vector<256x512xbf16>
    %c0_4 = arith.constant 0 : index
    %c0_5 = arith.constant 0 : index
    %5 = vector.load %arg3[%c0_4, %c0_5] : memref<512x128xbf16, #tpu.memory_space<vmem>>, vector<512x128xbf16>
    %cst = arith.constant dense<0.000000e+00> : vector<256x128xf32>
    %6 = tpu.matmul %4, %5, %cst {dimension_numbers = #tpu.dot_dimension_numbers<[1], [0], [0], [1], [0, 0, 1, 1], [], []>} : vector<256x512xbf16>, vector<512x128xbf16>, vector<256x128xf32> -> vector<256x128xf32>
    %7 = arith.addf %3, %6 : vector<256x128xf32>
    %c0_6 = arith.constant 0 : index
    %c0_7 = arith.constant 0 : index
    %8 = vector.load %arg9[%c0_6, %c0_7] : memref<256x128xf32, #tpu.memory_space<vmem>>, vector<256x128xf32>
    tpu.vector_store %arg9[%c0_6, %c0_7], %7 {strides = array<i32>} : memref<256x128xf32, #tpu.memory_space<vmem>>, vector<256x128xf32>,
    %c0_i32_8 = arith.constant 0 : i32
    %9 = arith.cmpi eq, %arg1, %c0_i32_8 : i32
    %10 = arith.extui %9 : i1 to i32
    %c0_i32_9 = arith.constant 0 : i32
    %11 = arith.cmpi ne, %10, %c0_i32_9 : i32
    scf.if %11 {
      %c0_10 = arith.constant 0 : index
      %c0_11 = arith.constant 0 : index
      %12 = vector.load %arg9[%c0_10, %c0_11] : memref<256x128xf32, #tpu.memory_space<vmem>>, vector<256x128xf32>
      %c0_12 = arith.constant 0 : index
      %c0_13 = arith.constant 0 : index
      %13 = vector.load %arg5[%c0_12, %c0_13] : memref<256x1xf32, #tpu.memory_space<vmem>>, vector<256x1xf32>
      %14 = vector.broadcast %13 : vector<256x1xf32> to vector<256x128xf32>
      %15 = arith.mulf %12, %14 : vector<256x128xf32>
      %16 = arith.truncf %15 : vector<256x128xf32> to vector<256x128xbf16>
      %c0_14 = arith.constant 0 : index
      %c0_15 = arith.constant 0 : index
      %17 = vector.load %arg4[%c0_14, %c0_15] : memref<256x128xbf16, #tpu.memory_space<vmem>>, vector<256x128xbf16>
      %18 = tpu.concatenate %16, %17 in 1 : vector<256x128xbf16>, vector<256x128xbf16> -> vector<256x256xbf16>
      %c0_16 = arith.constant 0 : index
      %c0_17 = arith.constant 0 : index
      %19 = vector.load %arg6[%c0_16, %c0_17] : memref<256x128xbf16, #tpu.memory_space<vmem>>, vector<256x128xbf16>
      %cst_18 = arith.constant dense<0.000000e+00> : vector<256x128xf32>
      %20 = tpu.matmul %18, %19, %cst_18 {dimension_numbers = #tpu.dot_dimension_numbers<[1], [0], [0], [1], [0, 0, 1, 1], [], []>} : vector<256x256xbf16>, vector<256x128xbf16>, vector<256x128xf32> -> vector<256x128xf32>
      %c0_19 = arith.constant 0 : index
      %c0_20 = arith.constant 0 : index
      %21 = vector.load %arg7[%c0_19, %c0_20] : memref<1x128xf32, #tpu.memory_space<vmem>>, vector<1x128xf32>
      %22 = vector.broadcast %21 : vector<1x128xf32> to vector<256x128xf32>
      %23 = arith.addf %20, %22 : vector<256x128xf32>
      %cst_21 = arith.constant 0.000000e+00 : f32
      %24 = vector.broadcast %cst_21 : f32 to vector<256x128xf32>
      %25 = arith.maximumf %23, %24 : vector<256x128xf32>
      %26 = arith.truncf %25 : vector<256x128xf32> to vector<256x128xbf16>
      %c0_22 = arith.constant 0 : index
      %c0_23 = arith.constant 0 : index
      %27 = vector.load %arg8[%c0_22, %c0_23] : memref<256x128xbf16, #tpu.memory_space<vmem>>, vector<256x128xbf16>
      tpu.vector_store %arg8[%c0_22, %c0_23], %26 {strides = array<i32>} : memref<256x128xbf16, #tpu.memory_space<vmem>>, vector<256x128xbf16>,
    } else {
    }
    return
  }
  func.func @transform_0(%arg0: i32, %arg1: i32) -> (i32, i32) {
    %c0_i32 = arith.constant 0 : i32
    return %arg0, %arg1 : i32, i32
  }
  func.func @transform_1(%arg0: i32, %arg1: i32) -> (i32, i32) {
    %c0_i32 = arith.constant 0 : i32
    %c0_i32_0 = arith.constant 0 : i32
    return %arg1, %c0_i32 : i32, i32
  }
  func.func @transform_2(%arg0: i32, %arg1: i32) -> (i32, i32) {
    %c0_i32 = arith.constant 0 : i32
    %c0_i32_0 = arith.constant 0 : i32
    return %arg0, %c0_i32 : i32, i32
  }
  func.func @transform_3(%arg0: i32, %arg1: i32) -> (i32, i32) {
    %c0_i32 = arith.constant 0 : i32
    %c0_i32_0 = arith.constant 0 : i32
    return %arg0, %c0_i32 : i32, i32
  }
  func.func @transform_4(%arg0: i32, %arg1: i32) -> (i32, i32) {
    %c0_i32 = arith.constant 0 : i32
    %c0_i32_0 = arith.constant 0 : i32
    %c0_i32_1 = arith.constant 0 : i32
    return %c0_i32, %c0_i32_0 : i32, i32
  }
  func.func @transform_5(%arg0: i32, %arg1: i32) -> (i32, i32) {
    %c0_i32 = arith.constant 0 : i32
    %c0_i32_0 = arith.constant 0 : i32
    %c0_i32_1 = arith.constant 0 : i32
    return %c0_i32, %c0_i32_0 : i32, i32
  }
  func.func @transform_6(%arg0: i32, %arg1: i32) -> (i32, i32) {
    %c0_i32 = arith.constant 0 : i32
    %c0_i32_0 = arith.constant 0 : i32
    return %arg0, %c0_i32 : i32, i32
  }
}

module attributes {stable_mosaic.version = 11 : i64} {
  func.func @_sage_kernel(%arg0: i32, %arg1: i32, %arg2: memref<256x256xbf16, #tpu.memory_space<vmem>>, %arg3: memref<256x128xbf16, #tpu.memory_space<vmem>>, %arg4: memref<256x128xbf16, #tpu.memory_space<vmem>>, %arg5: memref<256x1xf32, #tpu.memory_space<vmem>>, %arg6: memref<256x128xbf16, #tpu.memory_space<vmem>>, %arg7: memref<1x128xf32, #tpu.memory_space<vmem>>, %arg8: memref<256x128xbf16, #tpu.memory_space<vmem>>, %arg9: memref<256x128xf32, #tpu.memory_space<vmem>>) attributes {dimension_semantics = [#tpu.dimension_semantics<parallel>, #tpu.dimension_semantics<arbitrary>], iteration_bounds = array<i64: 2, 3>, scalar_prefetch = 0 : i64, scratch_operands = 1 : i64, tpu.core_type = #tpu.core_type<tc>, window_params = [{transform_indices = @transform_0, window_bounds = array<i64: 256, 256>}, {transform_indices = @transform_1, window_bounds = array<i64: 256, 128>}, {transform_indices = @transform_2, window_bounds = array<i64: 256, 128>}, {transform_indices = @transform_3, window_bounds = array<i64: 256, 1>}, {pipeline_mode = #tpu.pipeline_mode<synchronous>, transform_indices = @transform_4, window_bounds = array<i64: 256, 128>}, {pipeline_mode = #tpu.pipeline_mode<synchronous>, transform_indices = @transform_5, window_bounds = array<i64: 1, 128>}, {transform_indices = @transform_6, window_bounds = array<i64: 256, 128>}]} {
    %c0_i32 = arith.constant 0 : i32
    %0 = arith.cmpi eq, %arg1, %c0_i32 : i32
    %1 = arith.extui %0 : i1 to i32
    %c0_i32_0 = arith.constant 0 : i32
    %2 = arith.cmpi ne, %1, %c0_i32_0 : i32
    scf.if %2 {
      %cst_9 = arith.constant 0.000000e+00 : f32
      %12 = vector.broadcast %cst_9 : f32 to vector<256x128xf32>
      %c0_10 = arith.constant 0 : index
      %c0_11 = arith.constant 0 : index
      %13 = vector.load %arg9[%c0_10, %c0_11] : memref<256x128xf32, #tpu.memory_space<vmem>>, vector<256x128xf32>
      tpu.vector_store %arg9[%c0_10, %c0_11], %12 {strides = array<i32>} : memref<256x128xf32, #tpu.memory_space<vmem>>, vector<256x128xf32>,
    } else {
    }
    %c0 = arith.constant 0 : index
    %c0_1 = arith.constant 0 : index
    %3 = vector.load %arg9[%c0, %c0_1] : memref<256x128xf32, #tpu.memory_space<vmem>>, vector<256x128xf32>
    %c0_2 = arith.constant 0 : index
    %c0_3 = arith.constant 0 : index
    %4 = vector.load %arg2[%c0_2, %c0_3] : memref<256x256xbf16, #tpu.memory_space<vmem>>, vector<256x256xbf16>
    %c0_4 = arith.constant 0 : index
    %c0_5 = arith.constant 0 : index
    %5 = vector.load %arg3[%c0_4, %c0_5] : memref<256x128xbf16, #tpu.memory_space<vmem>>, vector<256x128xbf16>
    %cst = arith.constant dense<0.000000e+00> : vector<256x128xf32>
    %6 = tpu.matmul %4, %5, %cst {dimension_numbers = #tpu.dot_dimension_numbers<[1], [0], [0], [1], [0, 0, 1, 1], [], []>} : vector<256x256xbf16>, vector<256x128xbf16>, vector<256x128xf32> -> vector<256x128xf32>
    %7 = arith.addf %3, %6 : vector<256x128xf32>
    %c0_6 = arith.constant 0 : index
    %c0_7 = arith.constant 0 : index
    %8 = vector.load %arg9[%c0_6, %c0_7] : memref<256x128xf32, #tpu.memory_space<vmem>>, vector<256x128xf32>
    tpu.vector_store %arg9[%c0_6, %c0_7], %7 {strides = array<i32>} : memref<256x128xf32, #tpu.memory_space<vmem>>, vector<256x128xf32>,
    %c2_i32 = arith.constant 2 : i32
    %9 = arith.cmpi eq, %arg1, %c2_i32 : i32
    %10 = arith.extui %9 : i1 to i32
    %c0_i32_8 = arith.constant 0 : i32
    %11 = arith.cmpi ne, %10, %c0_i32_8 : i32
    scf.if %11 {
      %c0_9 = arith.constant 0 : index
      %c0_10 = arith.constant 0 : index
      %12 = vector.load %arg9[%c0_9, %c0_10] : memref<256x128xf32, #tpu.memory_space<vmem>>, vector<256x128xf32>
      %c0_11 = arith.constant 0 : index
      %c0_12 = arith.constant 0 : index
      %13 = vector.load %arg5[%c0_11, %c0_12] : memref<256x1xf32, #tpu.memory_space<vmem>>, vector<256x1xf32>
      %14 = vector.broadcast %13 : vector<256x1xf32> to vector<256x128xf32>
      %15 = arith.mulf %12, %14 : vector<256x128xf32>
      %16 = arith.truncf %15 : vector<256x128xf32> to vector<256x128xbf16>
      %c0_13 = arith.constant 0 : index
      %c0_14 = arith.constant 0 : index
      %17 = vector.load %arg4[%c0_13, %c0_14] : memref<256x128xbf16, #tpu.memory_space<vmem>>, vector<256x128xbf16>
      %18 = tpu.concatenate %16, %17 in 1 : vector<256x128xbf16>, vector<256x128xbf16> -> vector<256x256xbf16>
      %c0_15 = arith.constant 0 : index
      %c0_16 = arith.constant 0 : index
      %19 = vector.load %arg6[%c0_15, %c0_16] : memref<256x128xbf16, #tpu.memory_space<vmem>>, vector<256x128xbf16>
      %cst_17 = arith.constant dense<0.000000e+00> : vector<256x128xf32>
      %20 = tpu.matmul %18, %19, %cst_17 {dimension_numbers = #tpu.dot_dimension_numbers<[1], [0], [0], [1], [0, 0, 1, 1], [], []>} : vector<256x256xbf16>, vector<256x128xbf16>, vector<256x128xf32> -> vector<256x128xf32>
      %c0_18 = arith.constant 0 : index
      %c0_19 = arith.constant 0 : index
      %21 = vector.load %arg7[%c0_18, %c0_19] : memref<1x128xf32, #tpu.memory_space<vmem>>, vector<1x128xf32>
      %22 = vector.broadcast %21 : vector<1x128xf32> to vector<256x128xf32>
      %23 = arith.addf %20, %22 : vector<256x128xf32>
      %cst_20 = arith.constant 0.000000e+00 : f32
      %24 = vector.broadcast %cst_20 : f32 to vector<256x128xf32>
      %25 = arith.maximumf %23, %24 : vector<256x128xf32>
      %26 = arith.truncf %25 : vector<256x128xf32> to vector<256x128xbf16>
      %c0_21 = arith.constant 0 : index
      %c0_22 = arith.constant 0 : index
      %27 = vector.load %arg8[%c0_21, %c0_22] : memref<256x128xbf16, #tpu.memory_space<vmem>>, vector<256x128xbf16>
      tpu.vector_store %arg8[%c0_21, %c0_22], %26 {strides = array<i32>} : memref<256x128xbf16, #tpu.memory_space<vmem>>, vector<256x128xbf16>,
    } else {
    }
    return
  }
  func.func @transform_0(%arg0: i32, %arg1: i32) -> (i32, i32) {
    %c0_i32 = arith.constant 0 : i32
    return %arg0, %arg1 : i32, i32
  }
  func.func @transform_1(%arg0: i32, %arg1: i32) -> (i32, i32) {
    %c0_i32 = arith.constant 0 : i32
    %c0_i32_0 = arith.constant 0 : i32
    return %arg1, %c0_i32 : i32, i32
  }
  func.func @transform_2(%arg0: i32, %arg1: i32) -> (i32, i32) {
    %c0_i32 = arith.constant 0 : i32
    %c0_i32_0 = arith.constant 0 : i32
    return %arg0, %c0_i32 : i32, i32
  }
  func.func @transform_3(%arg0: i32, %arg1: i32) -> (i32, i32) {
    %c0_i32 = arith.constant 0 : i32
    %c0_i32_0 = arith.constant 0 : i32
    return %arg0, %c0_i32 : i32, i32
  }
  func.func @transform_4(%arg0: i32, %arg1: i32) -> (i32, i32) {
    %c0_i32 = arith.constant 0 : i32
    %c0_i32_0 = arith.constant 0 : i32
    %c0_i32_1 = arith.constant 0 : i32
    return %c0_i32, %c0_i32_0 : i32, i32
  }
  func.func @transform_5(%arg0: i32, %arg1: i32) -> (i32, i32) {
    %c0_i32 = arith.constant 0 : i32
    %c0_i32_0 = arith.constant 0 : i32
    %c0_i32_1 = arith.constant 0 : i32
    return %c0_i32, %c0_i32_0 : i32, i32
  }
  func.func @transform_6(%arg0: i32, %arg1: i32) -> (i32, i32) {
    %c0_i32 = arith.constant 0 : i32
    %c0_i32_0 = arith.constant 0 : i32
    return %arg0, %c0_i32 : i32, i32
  }
}

module attributes {stable_mosaic.version = 11 : i64} {
  func.func @_sage_kernel(%arg0: i32, %arg1: i32, %arg2: memref<256x256xbf16, #tpu.memory_space<vmem>>, %arg3: memref<256x128xbf16, #tpu.memory_space<vmem>>, %arg4: memref<256x128xbf16, #tpu.memory_space<vmem>>, %arg5: memref<256x1xf32, #tpu.memory_space<vmem>>, %arg6: memref<256x128xbf16, #tpu.memory_space<vmem>>, %arg7: memref<1x128xf32, #tpu.memory_space<vmem>>, %arg8: memref<256x128xf32, #tpu.memory_space<vmem>>, %arg9: memref<256x128xf32, #tpu.memory_space<vmem>>) attributes {dimension_semantics = [#tpu.dimension_semantics<parallel>, #tpu.dimension_semantics<arbitrary>], iteration_bounds = array<i64: 2, 3>, scalar_prefetch = 0 : i64, scratch_operands = 1 : i64, tpu.core_type = #tpu.core_type<tc>, window_params = [{transform_indices = @transform_0, window_bounds = array<i64: 256, 256>}, {transform_indices = @transform_1, window_bounds = array<i64: 256, 128>}, {transform_indices = @transform_2, window_bounds = array<i64: 256, 128>}, {transform_indices = @transform_3, window_bounds = array<i64: 256, 1>}, {pipeline_mode = #tpu.pipeline_mode<synchronous>, transform_indices = @transform_4, window_bounds = array<i64: 256, 128>}, {pipeline_mode = #tpu.pipeline_mode<synchronous>, transform_indices = @transform_5, window_bounds = array<i64: 1, 128>}, {transform_indices = @transform_6, window_bounds = array<i64: 256, 128>}]} {
    %c0_i32 = arith.constant 0 : i32
    %0 = arith.cmpi eq, %arg1, %c0_i32 : i32
    %1 = arith.extui %0 : i1 to i32
    %c0_i32_0 = arith.constant 0 : i32
    %2 = arith.cmpi ne, %1, %c0_i32_0 : i32
    scf.if %2 {
      %cst_9 = arith.constant 0.000000e+00 : f32
      %12 = vector.broadcast %cst_9 : f32 to vector<256x128xf32>
      %c0_10 = arith.constant 0 : index
      %c0_11 = arith.constant 0 : index
      %13 = vector.load %arg9[%c0_10, %c0_11] : memref<256x128xf32, #tpu.memory_space<vmem>>, vector<256x128xf32>
      tpu.vector_store %arg9[%c0_10, %c0_11], %12 {strides = array<i32>} : memref<256x128xf32, #tpu.memory_space<vmem>>, vector<256x128xf32>,
    } else {
    }
    %c0 = arith.constant 0 : index
    %c0_1 = arith.constant 0 : index
    %3 = vector.load %arg9[%c0, %c0_1] : memref<256x128xf32, #tpu.memory_space<vmem>>, vector<256x128xf32>
    %c0_2 = arith.constant 0 : index
    %c0_3 = arith.constant 0 : index
    %4 = vector.load %arg2[%c0_2, %c0_3] : memref<256x256xbf16, #tpu.memory_space<vmem>>, vector<256x256xbf16>
    %c0_4 = arith.constant 0 : index
    %c0_5 = arith.constant 0 : index
    %5 = vector.load %arg3[%c0_4, %c0_5] : memref<256x128xbf16, #tpu.memory_space<vmem>>, vector<256x128xbf16>
    %cst = arith.constant dense<0.000000e+00> : vector<256x128xf32>
    %6 = tpu.matmul %4, %5, %cst {dimension_numbers = #tpu.dot_dimension_numbers<[1], [0], [0], [1], [0, 0, 1, 1], [], []>} : vector<256x256xbf16>, vector<256x128xbf16>, vector<256x128xf32> -> vector<256x128xf32>
    %7 = arith.addf %3, %6 : vector<256x128xf32>
    %c0_6 = arith.constant 0 : index
    %c0_7 = arith.constant 0 : index
    %8 = vector.load %arg9[%c0_6, %c0_7] : memref<256x128xf32, #tpu.memory_space<vmem>>, vector<256x128xf32>
    tpu.vector_store %arg9[%c0_6, %c0_7], %7 {strides = array<i32>} : memref<256x128xf32, #tpu.memory_space<vmem>>, vector<256x128xf32>,
    %c2_i32 = arith.constant 2 : i32
    %9 = arith.cmpi eq, %arg1, %c2_i32 : i32
    %10 = arith.extui %9 : i1 to i32
    %c0_i32_8 = arith.constant 0 : i32
    %11 = arith.cmpi ne, %10, %c0_i32_8 : i32
    scf.if %11 {
      %c0_9 = arith.constant 0 : index
      %c0_10 = arith.constant 0 : index
      %12 = vector.load %arg9[%c0_9, %c0_10] : memref<256x128xf32, #tpu.memory_space<vmem>>, vector<256x128xf32>
      %c0_11 = arith.constant 0 : index
      %c0_12 = arith.constant 0 : index
      %13 = vector.load %arg5[%c0_11, %c0_12] : memref<256x1xf32, #tpu.memory_space<vmem>>, vector<256x1xf32>
      %14 = vector.broadcast %13 : vector<256x1xf32> to vector<256x128xf32>
      %15 = arith.mulf %12, %14 : vector<256x128xf32>
      %16 = arith.truncf %15 : vector<256x128xf32> to vector<256x128xbf16>
      %c0_13 = arith.constant 0 : index
      %c0_14 = arith.constant 0 : index
      %17 = vector.load %arg4[%c0_13, %c0_14] : memref<256x128xbf16, #tpu.memory_space<vmem>>, vector<256x128xbf16>
      %18 = tpu.concatenate %16, %17 in 1 : vector<256x128xbf16>, vector<256x128xbf16> -> vector<256x256xbf16>
      %c0_15 = arith.constant 0 : index
      %c0_16 = arith.constant 0 : index
      %19 = vector.load %arg6[%c0_15, %c0_16] : memref<256x128xbf16, #tpu.memory_space<vmem>>, vector<256x128xbf16>
      %cst_17 = arith.constant dense<0.000000e+00> : vector<256x128xf32>
      %20 = tpu.matmul %18, %19, %cst_17 {dimension_numbers = #tpu.dot_dimension_numbers<[1], [0], [0], [1], [0, 0, 1, 1], [], []>} : vector<256x256xbf16>, vector<256x128xbf16>, vector<256x128xf32> -> vector<256x128xf32>
      %c0_18 = arith.constant 0 : index
      %c0_19 = arith.constant 0 : index
      %21 = vector.load %arg7[%c0_18, %c0_19] : memref<1x128xf32, #tpu.memory_space<vmem>>, vector<1x128xf32>
      %22 = vector.broadcast %21 : vector<1x128xf32> to vector<256x128xf32>
      %23 = arith.addf %20, %22 : vector<256x128xf32>
      %c0_20 = arith.constant 0 : index
      %c0_21 = arith.constant 0 : index
      %24 = vector.load %arg8[%c0_20, %c0_21] : memref<256x128xf32, #tpu.memory_space<vmem>>, vector<256x128xf32>
      tpu.vector_store %arg8[%c0_20, %c0_21], %23 {strides = array<i32>} : memref<256x128xf32, #tpu.memory_space<vmem>>, vector<256x128xf32>,
    } else {
    }
    return
  }
  func.func @transform_0(%arg0: i32, %arg1: i32) -> (i32, i32) {
    %c0_i32 = arith.constant 0 : i32
    return %arg0, %arg1 : i32, i32
  }
  func.func @transform_1(%arg0: i32, %arg1: i32) -> (i32, i32) {
    %c0_i32 = arith.constant 0 : i32
    %c0_i32_0 = arith.constant 0 : i32
    return %arg1, %c0_i32 : i32, i32
  }
  func.func @transform_2(%arg0: i32, %arg1: i32) -> (i32, i32) {
    %c0_i32 = arith.constant 0 : i32
    %c0_i32_0 = arith.constant 0 : i32
    return %arg0, %c0_i32 : i32, i32
  }
  func.func @transform_3(%arg0: i32, %arg1: i32) -> (i32, i32) {
    %c0_i32 = arith.constant 0 : i32
    %c0_i32_0 = arith.constant 0 : i32
    return %arg0, %c0_i32 : i32, i32
  }
  func.func @transform_4(%arg0: i32, %arg1: i32) -> (i32, i32) {
    %c0_i32 = arith.constant 0 : i32
    %c0_i32_0 = arith.constant 0 : i32
    %c0_i32_1 = arith.constant 0 : i32
    return %c0_i32, %c0_i32_0 : i32, i32
  }
  func.func @transform_5(%arg0: i32, %arg1: i32) -> (i32, i32) {
    %c0_i32 = arith.constant 0 : i32
    %c0_i32_0 = arith.constant 0 : i32
    %c0_i32_1 = arith.constant 0 : i32
    return %c0_i32, %c0_i32_0 : i32, i32
  }
  func.func @transform_6(%arg0: i32, %arg1: i32) -> (i32, i32) {
    %c0_i32 = arith.constant 0 : i32
    %c0_i32_0 = arith.constant 0 : i32
    return %arg0, %c0_i32 : i32, i32
  }
}

module attributes {stable_mosaic.version = 11 : i64} {
  func.func @_sage_kernel(%arg0: i32, %arg1: i32, %arg2: memref<256x512xbf16, #tpu.memory_space<vmem>>, %arg3: memref<512x128xbf16, #tpu.memory_space<vmem>>, %arg4: memref<256x128xbf16, #tpu.memory_space<vmem>>, %arg5: memref<256x1xf32, #tpu.memory_space<vmem>>, %arg6: memref<256x128xbf16, #tpu.memory_space<vmem>>, %arg7: memref<1x128xf32, #tpu.memory_space<vmem>>, %arg8: memref<256x128xf32, #tpu.memory_space<vmem>>, %arg9: memref<256x128xf32, #tpu.memory_space<vmem>>) attributes {dimension_semantics = [#tpu.dimension_semantics<parallel>, #tpu.dimension_semantics<arbitrary>], iteration_bounds = array<i64: 3, 1>, scalar_prefetch = 0 : i64, scratch_operands = 1 : i64, tpu.core_type = #tpu.core_type<tc>, window_params = [{transform_indices = @transform_0, window_bounds = array<i64: 256, 512>}, {transform_indices = @transform_1, window_bounds = array<i64: 512, 128>}, {transform_indices = @transform_2, window_bounds = array<i64: 256, 128>}, {transform_indices = @transform_3, window_bounds = array<i64: 256, 1>}, {pipeline_mode = #tpu.pipeline_mode<synchronous>, transform_indices = @transform_4, window_bounds = array<i64: 256, 128>}, {pipeline_mode = #tpu.pipeline_mode<synchronous>, transform_indices = @transform_5, window_bounds = array<i64: 1, 128>}, {transform_indices = @transform_6, window_bounds = array<i64: 256, 128>}]} {
    %c0_i32 = arith.constant 0 : i32
    %0 = arith.cmpi eq, %arg1, %c0_i32 : i32
    %1 = arith.extui %0 : i1 to i32
    %c0_i32_0 = arith.constant 0 : i32
    %2 = arith.cmpi ne, %1, %c0_i32_0 : i32
    scf.if %2 {
      %cst_10 = arith.constant 0.000000e+00 : f32
      %12 = vector.broadcast %cst_10 : f32 to vector<256x128xf32>
      %c0_11 = arith.constant 0 : index
      %c0_12 = arith.constant 0 : index
      %13 = vector.load %arg9[%c0_11, %c0_12] : memref<256x128xf32, #tpu.memory_space<vmem>>, vector<256x128xf32>
      tpu.vector_store %arg9[%c0_11, %c0_12], %12 {strides = array<i32>} : memref<256x128xf32, #tpu.memory_space<vmem>>, vector<256x128xf32>,
    } else {
    }
    %c0 = arith.constant 0 : index
    %c0_1 = arith.constant 0 : index
    %3 = vector.load %arg9[%c0, %c0_1] : memref<256x128xf32, #tpu.memory_space<vmem>>, vector<256x128xf32>
    %c0_2 = arith.constant 0 : index
    %c0_3 = arith.constant 0 : index
    %4 = vector.load %arg2[%c0_2, %c0_3] : memref<256x512xbf16, #tpu.memory_space<vmem>>, vector<256x512xbf16>
    %c0_4 = arith.constant 0 : index
    %c0_5 = arith.constant 0 : index
    %5 = vector.load %arg3[%c0_4, %c0_5] : memref<512x128xbf16, #tpu.memory_space<vmem>>, vector<512x128xbf16>
    %cst = arith.constant dense<0.000000e+00> : vector<256x128xf32>
    %6 = tpu.matmul %4, %5, %cst {dimension_numbers = #tpu.dot_dimension_numbers<[1], [0], [0], [1], [0, 0, 1, 1], [], []>} : vector<256x512xbf16>, vector<512x128xbf16>, vector<256x128xf32> -> vector<256x128xf32>
    %7 = arith.addf %3, %6 : vector<256x128xf32>
    %c0_6 = arith.constant 0 : index
    %c0_7 = arith.constant 0 : index
    %8 = vector.load %arg9[%c0_6, %c0_7] : memref<256x128xf32, #tpu.memory_space<vmem>>, vector<256x128xf32>
    tpu.vector_store %arg9[%c0_6, %c0_7], %7 {strides = array<i32>} : memref<256x128xf32, #tpu.memory_space<vmem>>, vector<256x128xf32>,
    %c0_i32_8 = arith.constant 0 : i32
    %9 = arith.cmpi eq, %arg1, %c0_i32_8 : i32
    %10 = arith.extui %9 : i1 to i32
    %c0_i32_9 = arith.constant 0 : i32
    %11 = arith.cmpi ne, %10, %c0_i32_9 : i32
    scf.if %11 {
      %c0_10 = arith.constant 0 : index
      %c0_11 = arith.constant 0 : index
      %12 = vector.load %arg9[%c0_10, %c0_11] : memref<256x128xf32, #tpu.memory_space<vmem>>, vector<256x128xf32>
      %c0_12 = arith.constant 0 : index
      %c0_13 = arith.constant 0 : index
      %13 = vector.load %arg5[%c0_12, %c0_13] : memref<256x1xf32, #tpu.memory_space<vmem>>, vector<256x1xf32>
      %14 = vector.broadcast %13 : vector<256x1xf32> to vector<256x128xf32>
      %15 = arith.mulf %12, %14 : vector<256x128xf32>
      %16 = arith.truncf %15 : vector<256x128xf32> to vector<256x128xbf16>
      %c0_14 = arith.constant 0 : index
      %c0_15 = arith.constant 0 : index
      %17 = vector.load %arg4[%c0_14, %c0_15] : memref<256x128xbf16, #tpu.memory_space<vmem>>, vector<256x128xbf16>
      %18 = tpu.concatenate %16, %17 in 1 : vector<256x128xbf16>, vector<256x128xbf16> -> vector<256x256xbf16>
      %c0_16 = arith.constant 0 : index
      %c0_17 = arith.constant 0 : index
      %19 = vector.load %arg6[%c0_16, %c0_17] : memref<256x128xbf16, #tpu.memory_space<vmem>>, vector<256x128xbf16>
      %cst_18 = arith.constant dense<0.000000e+00> : vector<256x128xf32>
      %20 = tpu.matmul %18, %19, %cst_18 {dimension_numbers = #tpu.dot_dimension_numbers<[1], [0], [0], [1], [0, 0, 1, 1], [], []>} : vector<256x256xbf16>, vector<256x128xbf16>, vector<256x128xf32> -> vector<256x128xf32>
      %c0_19 = arith.constant 0 : index
      %c0_20 = arith.constant 0 : index
      %21 = vector.load %arg7[%c0_19, %c0_20] : memref<1x128xf32, #tpu.memory_space<vmem>>, vector<1x128xf32>
      %22 = vector.broadcast %21 : vector<1x128xf32> to vector<256x128xf32>
      %23 = arith.addf %20, %22 : vector<256x128xf32>
      %c0_21 = arith.constant 0 : index
      %c0_22 = arith.constant 0 : index
      %24 = vector.load %arg8[%c0_21, %c0_22] : memref<256x128xf32, #tpu.memory_space<vmem>>, vector<256x128xf32>
      tpu.vector_store %arg8[%c0_21, %c0_22], %23 {strides = array<i32>} : memref<256x128xf32, #tpu.memory_space<vmem>>, vector<256x128xf32>,
    } else {
    }
    return
  }
  func.func @transform_0(%arg0: i32, %arg1: i32) -> (i32, i32) {
    %c0_i32 = arith.constant 0 : i32
    return %arg0, %arg1 : i32, i32
  }
  func.func @transform_1(%arg0: i32, %arg1: i32) -> (i32, i32) {
    %c0_i32 = arith.constant 0 : i32
    %c0_i32_0 = arith.constant 0 : i32
    return %arg1, %c0_i32 : i32, i32
  }
  func.func @transform_2(%arg0: i32, %arg1: i32) -> (i32, i32) {
    %c0_i32 = arith.constant 0 : i32
    %c0_i32_0 = arith.constant 0 : i32
    return %arg0, %c0_i32 : i32, i32
  }
  func.func @transform_3(%arg0: i32, %arg1: i32) -> (i32, i32) {
    %c0_i32 = arith.constant 0 : i32
    %c0_i32_0 = arith.constant 0 : i32
    return %arg0, %c0_i32 : i32, i32
  }
  func.func @transform_4(%arg0: i32, %arg1: i32) -> (i32, i32) {
    %c0_i32 = arith.constant 0 : i32
    %c0_i32_0 = arith.constant 0 : i32
    %c0_i32_1 = arith.constant 0 : i32
    return %c0_i32, %c0_i32_0 : i32, i32
  }
  func.func @transform_5(%arg0: i32, %arg1: i32) -> (i32, i32) {
    %c0_i32 = arith.constant 0 : i32
    %c0_i32_0 = arith.constant 0 : i32
    %c0_i32_1 = arith.constant 0 : i32
    return %c0_i32, %c0_i32_0 : i32, i32
  }
  func.func @transform_6(%arg0: i32, %arg1: i32) -> (i32, i32) {
    %c0_i32 = arith.constant 0 : i32
    %c0_i32_0 = arith.constant 0 : i32
    return %arg0, %c0_i32 : i32, i32
  }
}

</mosaic_0001>

<llo_original>
// kernel: graphsage_forward.5
$region0: #{graphsage_forward.5}
  #allocation0 [shape = 'u32[]', space=smem, size = 0x4, offset = 0x4, fixed_abs, tag = 'smem constant byte address 0x4 - core index']
  #allocation1 [shape = 'u32[144,128]{1,0:T(1,128)}', space=vmem, size = 0x12000, scoped, tag = 'internal scratch']
  #allocation2 [shape = 'f32[256,128]{1,0:T(8,128)}', space=vmem, size = 0x20000, scoped, tag = 'scratch operand']
  %s0 = inlined_call_operand.vmem [shape: bf16[512,768], index: 0, kind: input, shape index: {}]
  %s1 = inlined_call_operand.vmem [shape: bf16[768,128], index: 1, kind: input, shape index: {}]
  %s2 = inlined_call_operand.vmem [shape: bf16[512,128], index: 2, kind: input, shape index: {}]
  %s3 = inlined_call_operand.vmem [shape: f32[512,1], index: 3, kind: input, shape index: {}]
  %s4 = inlined_call_operand.vmem [shape: bf16[256,128], index: 4, kind: input, shape index: {}]
  %s5 = inlined_call_operand.vmem [shape: f32[1,128], index: 5, kind: input, shape index: {}]
  %s6 = inlined_call_operand.vmem [shape: bf16[512,128], index: 6, kind: output, shape index: {}]
  %s7 = sld [smem:[#allocation0]]
  $region103: #{graphsage_forward.5} parent=0
    _
  %s9 = ssub.s32 1, %s7
  %s10 = scalar_select 0, %s9, %s7
  $region1: #{graphsage_forward.5} parent=0
    #allocation3 [shape = 'u8[262144]{0}', space=vmem, size = 0x40000, scoped, tag = 'input window, operand 0']
    loop: start=0, step=1, limit=8
    $region2: #{graphsage_forward.5} parent=1 // loop_pre_header
      _
    $region3: #{graphsage_forward.5} parent=1 // loop_header
      %s12 = sphi 0, %s16
      %p13 = scmp.ge.s32.totalorder %s12, 8
      %s19 = sphi 0, %s31
      %s20 = sphi 0, %s27
      %s21 = sphi 0, %s19
      %s22 = sphi 0, %s20
      %s23 = sphi 0, %s21
      %s24 = sphi 0, %s22
      %s36 = sphi 0, %s38
      %s39 = sphi 0, %s36
      %s40 = sphi 0, %s39
      %s56 = sphi 0, %s40
      %s62 = sphi 0, %s64
      %s65 = sphi 0, %s62
      %s66 = sphi 0, %s65
      %s82 = sphi 0, %s66
      %s88 = sphi 0, %s90
      %s91 = sphi 0, %s88
      %s92 = sphi 0, %s91
      %s108 = sphi 0, %s92
      %s114 = sphi 0, %s116
      %s117 = sphi 0, %s114
      %s118 = sphi 0, %s117
      %s134 = sphi 0, %s118
      %s138 = sphi 0, %s138
      %s140 = sphi 0, %s138
      %s141 = sphi 0, %s140
      %s155 = sphi 0, %s141
      %s159 = sphi 0, %s159
      %s161 = sphi 0, %s159
      %s162 = sphi 0, %s161
      %s176 = sphi 0, %s162
      %s182 = sphi 0, %s184
      %s185 = sphi 0, %s182
      %s186 = sphi 0, %s185
      %s202 = sphi 0, %s186
    $region4: #{graphsage_forward.5} parent=1 // loop_header_branch
      %15 = sbr.rel (%p13) target = $region8
    $region5: #{graphsage_forward.5} parent=1 // loop_body
      %s17 = ssub.s32 %s12, 1
      %s18 = ssub.s32 %s12, 2
      %s25 = sadd.s32 1, %s20
      %p26 = scmp.ge.s32.totalorder %s25, 3
      %s27 = scalar_select %p26, 0, %s25
      %s28 = sadd.s32 1, %s19
      %s29 = scalar_select %p26, %s28, %s19
      %p30 = scmp.ge.s32.totalorder %s29, 2
      %s31 = scalar_select %p30, 0, %s29
      %s32 = ssub.s32 %s19, %s31
      %s33 = ssub.s32 %s20, %s27
      %s34 = sor.u32 %s32, %s33
      %p35 = scmp.eq.s32.totalorder %s34, 0
      %s37 = sadd.s32 %s36, 1
      %s38 = scalar_select %p35, %s36, %s37
      %p41 = pneg %p35
      %p42 = scmp.eq.s32.totalorder %s12, 5
      %p43 = por %p41, %p42
      %p44 = scmp.ne.s32.totalorder %s36, %s39
      %p45 = scmp.eq.s32.totalorder %s12, 0
      %p46 = por %p44, %p45
      %p47 = scmp.ne.s32.totalorder %s36, %s39
      %p48 = scmp.eq.s32.totalorder %s17, 5
      %p49 = por %p47, %p48
      %p50 = scmp.ne.s32.totalorder %s39, %s40
      %p51 = scmp.eq.s32.totalorder %s17, 0
      %p52 = por %p50, %p51
      %p53 = scmp.ne.s32.totalorder %s39, %s40
      %p54 = scmp.eq.s32.totalorder %s18, 5
      %p55 = por %p53, %p54
      %p57 = scmp.ne.s32.totalorder %s40, %s56
      %p58 = scmp.eq.s32.totalorder %s18, 0
      %p59 = por %p57, %p58
      %s60 = ssub.s32 %s20, %s27
      %p61 = scmp.eq.s32.totalorder %s60, 0
      %s63 = sadd.s32 %s62, 1
      %s64 = scalar_select %p61, %s62, %s63
      %p67 = pneg %p61
      %p68 = scmp.eq.s32.totalorder %s12, 5
      %p69 = por %p67, %p68
      %p70 = scmp.ne.s32.totalorder %s62, %s65
      %p71 = scmp.eq.s32.totalorder %s12, 0
      %p72 = por %p70, %p71
      %p73 = scmp.ne.s32.totalorder %s62, %s65
      %p74 = scmp.eq.s32.totalorder %s17, 5
      %p75 = por %p73, %p74
      %p76 = scmp.ne.s32.totalorder %s65, %s66
      %p77 = scmp.eq.s32.totalorder %s17, 0
      %p78 = por %p76, %p77
      %p79 = scmp.ne.s32.totalorder %s65, %s66
      %p80 = scmp.eq.s32.totalorder %s18, 5
      %p81 = por %p79, %p80
      %p83 = scmp.ne.s32.totalorder %s66, %s82
      %p84 = scmp.eq.s32.totalorder %s18, 0
      %p85 = por %p83, %p84
      %s86 = ssub.s32 %s19, %s31
      %p87 = scmp.eq.s32.totalorder %s86, 0
      %s89 = sadd.s32 %s88, 1
      %s90 = scalar_select %p87, %s88, %s89
      %p93 = pneg %p87
      %p94 = scmp.eq.s32.totalorder %s12, 5
      %p95 = por %p93, %p94
      %p96 = scmp.ne.s32.totalorder %s88, %s91
      %p97 = scmp.eq.s32.totalorder %s12, 0
      %p98 = por %p96, %p97
      %p99 = scmp.ne.s32.totalorder %s88, %s91
      %p100 = scmp.eq.s32.totalorder %s17, 5
      %p101 = por %p99, %p100
      %p102 = scmp.ne.s32.totalorder %s91, %s92
      %p103 = scmp.eq.s32.totalorder %s17, 0
      %p104 = por %p102, %p103
      %p105 = scmp.ne.s32.totalorder %s91, %s92
      %p106 = scmp.eq.s32.totalorder %s18, 5
      %p107 = por %p105, %p106
      %p109 = scmp.ne.s32.totalorder %s92, %s108
      %p110 = scmp.eq.s32.totalorder %s18, 0
      %p111 = por %p109, %p110
      %s112 = ssub.s32 %s19, %s31
      %p113 = scmp.eq.s32.totalorder %s112, 0
      %s115 = sadd.s32 %s114, 1
      %s116 = scalar_select %p113, %s114, %s115
      %p119 = pneg %p113
      %p120 = scmp.eq.s32.totalorder %s12, 5
      %p121 = por %p119, %p120
      %p122 = scmp.ne.s32.totalorder %s114, %s117
      %p123 = scmp.eq.s32.totalorder %s12, 0
      %p124 = por %p122, %p123
      %p125 = scmp.ne.s32.totalorder %s114, %s117
      %p126 = scmp.eq.s32.totalorder %s17, 5
      %p127 = por %p125, %p126
      %p128 = scmp.ne.s32.totalorder %s117, %s118
      %p129 = scmp.eq.s32.totalorder %s17, 0
      %p130 = por %p128, %p129
      %p131 = scmp.ne.s32.totalorder %s117, %s118
      %p132 = scmp.eq.s32.totalorder %s18, 5
      %p133 = por %p131, %p132
      %p135 = scmp.ne.s32.totalorder %s118, %s134
      %p136 = scmp.eq.s32.totalorder %s18, 0
      %p137 = por %p135, %p136
      %s139 = sadd.s32 %s138, 1
      %p142 = scmp.eq.s32.totalorder %s12, 5
      %p143 = scmp.ne.s32.totalorder %s138, %s140
      %p144 = scmp.eq.s32.totalorder %s12, 0
      %p145 = por %p143, %p144
      %p146 = scmp.ne.s32.totalorder %s138, %s140
      %p147 = scmp.eq.s32.totalorder %s17, 5
      %p148 = por %p146, %p147
      %p149 = scmp.ne.s32.totalorder %s140, %s141
      %p150 = scmp.eq.s32.totalorder %s17, 0
      %p151 = por %p149, %p150
      %p152 = scmp.ne.s32.totalorder %s140, %s141
      %p153 = scmp.eq.s32.totalorder %s18, 5
      %p154 = por %p152, %p153
      %p156 = scmp.ne.s32.totalorder %s141, %s155
      %p157 = scmp.eq.s32.totalorder %s18, 0
      %p158 = por %p156, %p157
      %s160 = sadd.s32 %s159, 1
      %p163 = scmp.eq.s32.totalorder %s12, 5
      %p164 = scmp.ne.s32.totalorder %s159, %s161
      %p165 = scmp.eq.s32.totalorder %s12, 0
      %p166 = por %p164, %p165
      %p167 = scmp.ne.s32.totalorder %s159, %s161
      %p168 = scmp.eq.s32.totalorder %s17, 5
      %p169 = por %p167, %p168
      %p170 = scmp.ne.s32.totalorder %s161, %s162
      %p171 = scmp.eq.s32.totalorder %s17, 0
      %p172 = por %p170, %p171
      %p173 = scmp.ne.s32.totalorder %s161, %s162
      %p174 = scmp.eq.s32.totalorder %s18, 5
      %p175 = por %p173, %p174
      %p177 = scmp.ne.s32.totalorder %s162, %s176
      %p178 = scmp.eq.s32.totalorder %s18, 0
      %p179 = por %p177, %p178
      %s180 = ssub.s32 %s19, %s31
      %p181 = scmp.eq.s32.totalorder %s180, 0
      %s183 = sadd.s32 %s182, 1
      %s184 = scalar_select %p181, %s182, %s183
      %p187 = pneg %p181
      %p188 = scmp.eq.s32.totalorder %s12, 5
      %p189 = por %p187, %p188
      %p190 = scmp.ne.s32.totalorder %s182, %s185
      %p191 = scmp.eq.s32.totalorder %s12, 0
      %p192 = por %p190, %p191
      %p193 = scmp.ne.s32.totalorder %s182, %s185
      %p194 = scmp.eq.s32.totalorder %s17, 5
      %p195 = por %p193, %p194
      %p196 = scmp.ne.s32.totalorder %s185, %s186
      %p197 = scmp.eq.s32.totalorder %s17, 0
      %p198 = por %p196, %p197
      %p199 = scmp.ne.s32.totalorder %s185, %s186
      %p200 = scmp.eq.s32.totalorder %s18, 5
      %p201 = por %p199, %p200
      %p203 = scmp.ne.s32.totalorder %s186, %s202
      %p204 = scmp.eq.s32.totalorder %s18, 0
      %p205 = por %p203, %p204
      %p206 = scmp.le.s32.totalorder 1, %s12
      %p207 = scmp.lt.s32.totalorder %s12, 7
      %p208 = pnand %p206, %p207
      %p209 = pneg %p208
      // Predicated region
      $region9: #{graphsage_forward.5} parent=5 // pred_check
        _
      $region10: #{graphsage_forward.5} parent=5 // pred_check_branch
        %211 = sbr.rel (%p208) target = $region12
      $region11: #{graphsage_forward.5} parent=5 // pred_region
        %s212 = ssub.s32 %s12, 1
        // Predicated region
        $region13: #{graphsage_forward.5} parent=11 // pred_check
          %p213 = pneg %p151
        $region14: #{graphsage_forward.5} parent=11 // pred_check_branch
          %215 = sbr.rel (%p213) target = $region16
        $region15: #{graphsage_forward.5} parent=11 // pred_region
          _
        $region16: #{graphsage_forward.5} parent=11 // pred_fallthru
          _
        // Predicated region
        $region17: #{graphsage_forward.5} parent=11 // pred_check
          %p216 = pneg %p172
        $region18: #{graphsage_forward.5} parent=11 // pred_check_branch
          %218 = sbr.rel (%p216) target = $region20
        $region19: #{graphsage_forward.5} parent=11 // pred_region
          _
        $region20: #{graphsage_forward.5} parent=11 // pred_fallthru
          _
      $region12: #{graphsage_forward.5} parent=5 // pred_fallthru
        _
      %p219 = scmp.lt.s32.totalorder %s12, 6
      // Predicated region
      $region21: #{graphsage_forward.5} parent=5 // pred_check
        %p220 = pneg %p219
      $region22: #{graphsage_forward.5} parent=5 // pred_check_branch
        %222 = sbr.rel (%p220) target = $region24
      $region23: #{graphsage_forward.5} parent=5 // pred_region
        // Predicated region
        $region25: #{graphsage_forward.5} parent=23 // pred_check
          %p223 = pneg %p46
        $region26: #{graphsage_forward.5} parent=23 // pred_check_branch
          %225 = sbr.rel (%p223) target = $region28
        $region27: #{graphsage_forward.5} parent=23 // pred_region
          %s226 = sand.u32 %s36, 1
          %s227 = sand.u32 %s36, 1
          %s228 = smul.addr %s227, 256
          %s229 = scalar_lea.vmem [#allocation3], %s228
          %s230 = smul.u32 32, %s19
          %s231 = smul.u32 2, %s20
          %s232 = smul.addr %s230, 6
          %s233 = sadd.s32 %s231, %s232
          %s234 = smul.addr %s233, 4
          %s235 = scalar_lea.vmem %s0, %s234
          // Predicated region
          $region29: #{graphsage_forward.5} parent=27 // pred_check
            _
          $region30: #{graphsage_forward.5} parent=27 // pred_check_branch
            %237 = sbr.rel (0) target = $region32
          $region31: #{graphsage_forward.5} parent=27 // pred_region
            // Predicated region
            $region33: #{graphsage_forward.5} parent=31 // pred_check
              _
            $region34: #{graphsage_forward.5} parent=31 // pred_check_branch
              %239 = sbr.rel (0) target = $region36
            $region35: #{graphsage_forward.5} parent=31 // pred_region
              // Predicated region
              $region48: #{graphsage_forward.5} parent=35 // pred_check
                _
              $region49: #{graphsage_forward.5} parent=35 // pred_check_branch
                %316 = sbr.rel (0) target = $region51
              $region50: #{graphsage_forward.5} parent=35 // pred_region
                loop: start=0, step=1, limit=1
                $region52: #{graphsage_forward.5} parent=50 // loop_pre_header
                  _
                $region53: #{graphsage_forward.5} parent=50 // loop_header
                  %s318 = sphi 0, %s322
                  %p319 = scmp.ge.s32.totalorder %s318, 1
                  %s323 = sphi %s235, %s235
                  %s324 = sphi %s229, %s229
                $region54: #{graphsage_forward.5} parent=50 // loop_header_branch
                  %321 = sbr.rel (%p319) target = $region58
                $region55: #{graphsage_forward.5} parent=50 // loop_body
                  %v325 = vld [vmem:[%s323] sm:$0xff]
                  %326 = vst [vmem:[%s324] sm:$0xff] %v325
                  %v327 = vld [vmem:[%s323 + $0x18] sm:$0xff]
                  %328 = vst [vmem:[%s324 + $0x8] sm:$0xff] %v327
                  %v329 = vld [vmem:[%s323 + $0x30] sm:$0xff]
                  %330 = vst [vmem:[%s324 + $0x10] sm:$0xff] %v329
                  %v331 = vld [vmem:[%s323 + $0x48] sm:$0xff]
                  %332 = vst [vmem:[%s324 + $0x18] sm:$0xff] %v331
                  %v333 = vld [vmem:[%s323 + $0x60] sm:$0xff]
                  %334 = vst [vmem:[%s324 + $0x20] sm:$0xff] %v333
                  %v335 = vld [vmem:[%s323 + $0x78] sm:$0xff]
                  %336 = vst [vmem:[%s324 + $0x28] sm:$0xff] %v335
                  %v337 = vld [vmem:[%s323 + $0x90] sm:$0xff]
                  %338 = vst [vmem:[%s324 + $0x30] sm:$0xff] %v337
                  %v339 = vld [vmem:[%s323 + $0xa8] sm:$0xff]
                  %340 = vst [vmem:[%s324 + $0x38] sm:$0xff] %v339
                  %v341 = vld [vmem:[%s323 + $0xc0] sm:$0xff]
                  %342 = vst [vmem:[%s324 + $0x40] sm:$0xff] %v341
                  %v343 = vld [vmem:[%s323 + $0xd8] sm:$0xff]
                  %344 = vst [vmem:[%s324 + $0x48] sm:$0xff] %v343
                  %v345 = vld [vmem:[%s323 + $0xf0] sm:$0xff]
                  %346 = vst [vmem:[%s324 + $0x50] sm:$0xff] %v345
                  %v347 = vld [vmem:[%s323 + $0x108] sm:$0xff]
                  %348 = vst [vmem:[%s324 + $0x58] sm:$0xff] %v347
                  %v349 = vld [vmem:[%s323 + $0x120] sm:$0xff]
                  %350 = vst [vmem:[%s324 + $0x60] sm:$0xff] %v349
                  %v351 = vld [vmem:[%s323 + $0x138] sm:$0xff]
                  %352 = vst [vmem:[%s324 + $0x68] sm:$0xff] %v351
                  %v353 = vld [vmem:[%s323 + $0x150] sm:$0xff]
                  %354 = vst [vmem:[%s324 + $0x70] sm:$0xff] %v353
                  %v355 = vld [vmem:[%s323 + $0x168] sm:$0xff]
                  %356 = vst [vmem:[%s324 + $0x78] sm:$0xff] %v355
                  %v357 = vld [vmem:[%s323 + $0x180] sm:$0xff]
                  %358 = vst [vmem:[%s324 + $0x80] sm:$0xff] %v357
                  %v359 = vld [vmem:[%s323 + $0x198] sm:$0xff]
                  %360 = vst [vmem:[%s324 + $0x88] sm:$0xff] %v359
                  %v361 = vld [vmem:[%s323 + $0x1b0] sm:$0xff]
                  %362 = vst [vmem:[%s324 + $0x90] sm:$0xff] %v361
                  %v363 = vld [vmem:[%s323 + $0x1c8] sm:$0xff]
                  %364 = vst [vmem:[%s324 + $0x98] sm:$0xff] %v363
                  %v365 = vld [vmem:[%s323 + $0x1e0] sm:$0xff]
                  %366 = vst [vmem:[%s324 + $0xa0] sm:$0xff] %v365
                  %v367 = vld [vmem:[%s323 + $0x1f8] sm:$0xff]
                  %368 = vst [vmem:[%s324 + $0xa8] sm:$0xff] %v367
                  %v369 = vld [vmem:[%s323 + $0x210] sm:$0xff]
                  %370 = vst [vmem:[%s324 + $0xb0] sm:$0xff] %v369
                  %v371 = vld [vmem:[%s323 + $0x228] sm:$0xff]
                  %372 = vst [vmem:[%s324 + $0xb8] sm:$0xff] %v371
                  %v373 = vld [vmem:[%s323 + $0x240] sm:$0xff]
                  %374 = vst [vmem:[%s324 + $0xc0] sm:$0xff] %v373
                  %v375 = vld [vmem:[%s323 + $0x258] sm:$0xff]
                  %376 = vst [vmem:[%s324 + $0xc8] sm:$0xff] %v375
                  %v377 = vld [vmem:[%s323 + $0x270] sm:$0xff]
                  %378 = vst [vmem:[%s324 + $0xd0] sm:$0xff] %v377
                  %v379 = vld [vmem:[%s323 + $0x288] sm:$0xff]
                  %380 = vst [vmem:[%s324 + $0xd8] sm:$0xff] %v379
                  %v381 = vld [vmem:[%s323 + $0x2a0] sm:$0xff]
                  %382 = vst [vmem:[%s324 + $0xe0] sm:$0xff] %v381
                  %v383 = vld [vmem:[%s323 + $0x2b8] sm:$0xff]
                  %384 = vst [vmem:[%s324 + $0xe8] sm:$0xff] %v383
                  %v385 = vld [vmem:[%s323 + $0x2d0] sm:$0xff]
                  %386 = vst [vmem:[%s324 + $0xf0] sm:$0xff] %v385
                  %v387 = vld [vmem:[%s323 + $0x2e8] sm:$0xff]
                  %388 = vst [vmem:[%s324 + $0xf8] sm:$0xff] %v387
                $region56: #{graphsage_forward.5} parent=50 // loop_footer
                  %s322 = sadd.s32 1, %s318
                $region57: #{graphsage_forward.5} parent=50 // loop_footer_branch
                  %317 = sbr.rel target = $region53
                $region58: #{graphsage_forward.5} parent=50 // loop_exit
                  _
              $region51: #{graphsage_forward.5} parent=35 // pred_fallthru
                _
              // Predicated region
              $region59: #{graphsage_forward.5} parent=35 // pred_check
                _
              $region60: #{graphsage_forward.5} parent=35 // pred_check_branch
                %390 = sbr.rel target = $region62
              $region61: #{graphsage_forward.5} parent=35 // pred_region
                _
              $region62: #{graphsage_forward.5} parent=35 // pred_fallthru
                _
            $region36: #{graphsage_forward.5} parent=31 // pred_fallthru
              _
            // Predicated region
            $region37: #{graphsage_forward.5} parent=31 // pred_check
              _
            $region38: #{graphsage_forward.5} parent=31 // pred_check_branch
              %241 = sbr.rel target = $region40
            $region39: #{graphsage_forward.5} parent=31 // pred_region
              loop: start=0, step=1, limit=1
              $region41: #{graphsage_forward.5} parent=39 // loop_pre_header
                _
              $region42: #{graphsage_forward.5} parent=39 // loop_header
                %s244 = sphi 0, %s248
                %p245 = scmp.ge.s32.totalorder %s244, 1
                %s249 = sphi %s235, %s235
                %s250 = sphi %s229, %s229
              $region43: #{graphsage_forward.5} parent=39 // loop_header_branch
                %247 = sbr.rel (%p245) target = $region47
              $region44: #{graphsage_forward.5} parent=39 // loop_body
                %v251 = vld [vmem:[%s249] sm:$0xff]
                %252 = vst [vmem:[%s250] sm:$0xff] %v251
                %v253 = vld [vmem:[%s249 + $0x18] sm:$0xff]
                %254 = vst [vmem:[%s250 + $0x8] sm:$0xff] %v253
                %v255 = vld [vmem:[%s249 + $0x30] sm:$0xff]
                %256 = vst [vmem:[%s250 + $0x10] sm:$0xff] %v255
                %v257 = vld [vmem:[%s249 + $0x48] sm:$0xff]
                %258 = vst [vmem:[%s250 + $0x18] sm:$0xff] %v257
                %v259 = vld [vmem:[%s249 + $0x60] sm:$0xff]
                %260 = vst [vmem:[%s250 + $0x20] sm:$0xff] %v259
                %v261 = vld [vmem:[%s249 + $0x78] sm:$0xff]
                %262 = vst [vmem:[%s250 + $0x28] sm:$0xff] %v261
                %v263 = vld [vmem:[%s249 + $0x90] sm:$0xff]
                %264 = vst [vmem:[%s250 + $0x30] sm:$0xff] %v263
                %v265 = vld [vmem:[%s249 + $0xa8] sm:$0xff]
                %266 = vst [vmem:[%s250 + $0x38] sm:$0xff] %v265
                %v267 = vld [vmem:[%s249 + $0xc0] sm:$0xff]
                %268 = vst [vmem:[%s250 + $0x40] sm:$0xff] %v267
                %v269 = vld [vmem:[%s249 + $0xd8] sm:$0xff]
                %270 = vst [vmem:[%s250 + $0x48] sm:$0xff] %v269
                %v271 = vld [vmem:[%s249 + $0xf0] sm:$0xff]
                %272 = vst [vmem:[%s250 + $0x50] sm:$0xff] %v271
                %v273 = vld [vmem:[%s249 + $0x108] sm:$0xff]
                %274 = vst [vmem:[%s250 + $0x58] sm:$0xff] %v273
                %v275 = vld [vmem:[%s249 + $0x120] sm:$0xff]
                %276 = vst [vmem:[%s250 + $0x60] sm:$0xff] %v275
                %v277 = vld [vmem:[%s249 + $0x138] sm:$0xff]
                %278 = vst [vmem:[%s250 + $0x68] sm:$0xff] %v277
                %v279 = vld [vmem:[%s249 + $0x150] sm:$0xff]
                %280 = vst [vmem:[%s250 + $0x70] sm:$0xff] %v279
                %v281 = vld [vmem:[%s249 + $0x168] sm:$0xff]
                %282 = vst [vmem:[%s250 + $0x78] sm:$0xff] %v281
                %v283 = vld [vmem:[%s249 + $0x180] sm:$0xff]
                %284 = vst [vmem:[%s250 + $0x80] sm:$0xff] %v283
                %v285 = vld [vmem:[%s249 + $0x198] sm:$0xff]
                %286 = vst [vmem:[%s250 + $0x88] sm:$0xff] %v285
                %v287 = vld [vmem:[%s249 + $0x1b0] sm:$0xff]
                %288 = vst [vmem:[%s250 + $0x90] sm:$0xff] %v287
                %v289 = vld [vmem:[%s249 + $0x1c8] sm:$0xff]
                %290 = vst [vmem:[%s250 + $0x98] sm:$0xff] %v289
                %v291 = vld [vmem:[%s249 + $0x1e0] sm:$0xff]
                %292 = vst [vmem:[%s250 + $0xa0] sm:$0xff] %v291
                %v293 = vld [vmem:[%s249 + $0x1f8] sm:$0xff]
                %294 = vst [vmem:[%s250 + $0xa8] sm:$0xff] %v293
                %v295 = vld [vmem:[%s249 + $0x210] sm:$0xff]
                %296 = vst [vmem:[%s250 + $0xb0] sm:$0xff] %v295
                %v297 = vld [vmem:[%s249 + $0x228] sm:$0xff]
                %298 = vst [vmem:[%s250 + $0xb8] sm:$0xff] %v297
                %v299 = vld [vmem:[%s249 + $0x240] sm:$0xff]
                %300 = vst [vmem:[%s250 + $0xc0] sm:$0xff] %v299
                %v301 = vld [vmem:[%s249 + $0x258] sm:$0xff]
                %302 = vst [vmem:[%s250 + $0xc8] sm:$0xff] %v301
                %v303 = vld [vmem:[%s249 + $0x270] sm:$0xff]
                %304 = vst [vmem:[%s250 + $0xd0] sm:$0xff] %v303
                %v305 = vld [vmem:[%s249 + $0x288] sm:$0xff]
                %306 = vst [vmem:[%s250 + $0xd8] sm:$0xff] %v305
                %v307 = vld [vmem:[%s249 + $0x2a0] sm:$0xff]
                %308 = vst [vmem:[%s250 + $0xe0] sm:$0xff] %v307
                %v309 = vld [vmem:[%s249 + $0x2b8] sm:$0xff]
                %310 = vst [vmem:[%s250 + $0xe8] sm:$0xff] %v309
                %v311 = vld [vmem:[%s249 + $0x2d0] sm:$0xff]
                %312 = vst [vmem:[%s250 + $0xf0] sm:$0xff] %v311
                %v313 = vld [vmem:[%s249 + $0x2e8] sm:$0xff]
                %314 = vst [vmem:[%s250 + $0xf8] sm:$0xff] %v313
              $region45: #{graphsage_forward.5} parent=39 // loop_footer
                %s248 = sadd.s32 1, %s244
              $region46: #{graphsage_forward.5} parent=39 // loop_footer_branch
                %243 = sbr.rel target = $region42
              $region47: #{graphsage_forward.5} parent=39 // loop_exit
                _
            $region40: #{graphsage_forward.5} parent=31 // pred_fallthru
              _
          $region32: #{graphsage_forward.5} parent=27 // pred_fallthru
            _
          %391 = vnop
        $region28: #{graphsage_forward.5} parent=23 // pred_fallthru
          _
        // Predicated region
        $region63: #{graphsage_forward.5} parent=23 // pred_check
          %p392 = pneg %p72
        $region64: #{graphsage_forward.5} parent=23 // pred_check_branch
          %394 = sbr.rel (%p392) target = $region66
        $region65: #{graphsage_forward.5} parent=23 // pred_region
          %s395 = smul.u32 32, %s20
          %p396 = scmp.lt.s32.totalorder %s395, 95
          %s397 = scalar_select %p396, %s395, 95
          %s398 = smul.addr %s397, 4
          %s399 = scalar_lea.vmem %s1, %s398
          %s400 = smul.u32 32, %s20
        $region66: #{graphsage_forward.5} parent=23 // pred_fallthru
          _
        // Predicated region
        $region67: #{graphsage_forward.5} parent=23 // pred_check
          %p401 = pneg %p98
        $region68: #{graphsage_forward.5} parent=23 // pred_check_branch
          %403 = sbr.rel (%p401) target = $region70
        $region69: #{graphsage_forward.5} parent=23 // pred_region
          %s404 = smul.u32 32, %s19
          %p405 = scmp.lt.s32.totalorder %s404, 63
          %s406 = scalar_select %p405, %s404, 63
          %s407 = smul.addr %s406, 4
          %s408 = scalar_lea.vmem %s2, %s407
          %s409 = smul.u32 32, %s19
        $region70: #{graphsage_forward.5} parent=23 // pred_fallthru
          _
        // Predicated region
        $region71: #{graphsage_forward.5} parent=23 // pred_check
          %p410 = pneg %p124
        $region72: #{graphsage_forward.5} parent=23 // pred_check_branch
          %412 = sbr.rel (%p410) target = $region74
        $region73: #{graphsage_forward.5} parent=23 // pred_region
          %s413 = smul.u32 32, %s19
          %p414 = scmp.lt.s32.totalorder %s413, 63
          %s415 = scalar_select %p414, %s413, 63
          %s416 = smul.addr %s415, 8
          %s417 = scalar_lea.vmem %s3, %s416
          %s418 = smul.u32 32, %s19
        $region74: #{graphsage_forward.5} parent=23 // pred_fallthru
          _
      $region24: #{graphsage_forward.5} parent=5 // pred_fallthru
        _
      %p419 = scmp.le.s32.totalorder 1, %s12
      %p420 = scmp.lt.s32.totalorder %s12, 7
      %p421 = pnand %p419, %p420
      %p422 = pneg %p421
      // Predicated region
      $region75: #{graphsage_forward.5} parent=5 // pred_check
        _
      $region76: #{graphsage_forward.5} parent=5 // pred_check_branch
        %424 = sbr.rel (%p421) target = $region78
      $region77: #{graphsage_forward.5} parent=5 // pred_region
        %s425 = ssub.s32 %s12, 1
        %s426 = sand.u32 %s39, 1
        %s427 = sand.u32 %s39, 1
        %s428 = smul.addr %s427, 256
        %s429 = scalar_lea.vmem [#allocation3], %s428
        // Predicated region
        $region79: #{graphsage_forward.5} parent=77 // pred_check
          %p430 = pneg %p52
        $region80: #{graphsage_forward.5} parent=77 // pred_check_branch
          %432 = sbr.rel (%p430) target = $region82
        $region81: #{graphsage_forward.5} parent=77 // pred_region
          _
        $region82: #{graphsage_forward.5} parent=77 // pred_fallthru
          _
        %s433 = sand.u32 %s39, 1
        %s434 = sand.u32 %s39, 1
        %s435 = smul.addr %s434, 256
        %s436 = scalar_lea.vmem [#allocation3], %s435
        %p437 = pneg %p52
        %p438 = pneg %p49
        %s439 = smul.u32 32, %s22
        %p440 = scmp.lt.s32.totalorder %s439, 95
        %s441 = scalar_select %p440, %s439, 95
        %s442 = smul.addr %s441, 4
        %s443 = scalar_lea.vmem %s1, %s442
        %p444 = pneg %p78
        %p445 = pneg %p75
        %s446 = smul.u32 32, %s21
        %p447 = scmp.lt.s32.totalorder %s446, 63
        %s448 = scalar_select %p447, %s446, 63
        %s449 = smul.addr %s448, 4
        %s450 = scalar_lea.vmem %s2, %s449
        %p451 = pneg %p104
        %p452 = pneg %p101
        %s453 = smul.u32 32, %s21
        %p454 = scmp.lt.s32.totalorder %s453, 63
        %s455 = scalar_select %p454, %s453, 63
        %s456 = smul.addr %s455, 8
        %s457 = scalar_lea.vmem %s3, %s456
        %p458 = pneg %p130
        %p459 = pneg %p127
        %p460 = pneg %p151
        %p461 = pneg %p148
        %p462 = pneg %p172
        %p463 = pneg %p169
        %p464 = pneg %p198
        %p465 = pneg %p195
        %s466 = smul.u32 32, %s21
        %p467 = scmp.lt.s32.totalorder %s466, 63
        %s468 = scalar_select %p467, %s466, 63
        %s469 = smul.addr %s468, 4
        %s470 = scalar_lea.vmem %s6, %s469
        %s471 = smul.u32 32, %s21
        %s472 = smul.u32 2, %s22
        %s473 = smul.u32 32, %s22
        %p474 = scmp.lt.s32.totalorder %s473, 95
        %s475 = scalar_select %p474, %s473, 95
        %s476 = smul.addr %s475, 4
        %s477 = scalar_lea.vmem %s1, %s476
        %s478 = smul.u32 32, %s22
        %s479 = smul.u32 32, %s21
        %p480 = scmp.lt.s32.totalorder %s479, 63
        %s481 = scalar_select %p480, %s479, 63
        %s482 = smul.addr %s481, 4
        %s483 = scalar_lea.vmem %s2, %s482
        %s484 = smul.u32 32, %s21
        %s485 = smul.u32 32, %s21
        %p486 = scmp.lt.s32.totalorder %s485, 63
        %s487 = scalar_select %p486, %s485, 63
        %s488 = smul.addr %s487, 8
        %s489 = scalar_lea.vmem %s3, %s488
        %s490 = smul.u32 32, %s21
        %s491 = smul.u32 32, %s21
        %p492 = scmp.lt.s32.totalorder %s491, 63
        %s493 = scalar_select %p492, %s491, 63
        %s494 = smul.addr %s493, 4
        %s495 = scalar_lea.vmem %s6, %s494
        %s496 = smul.u32 32, %s21
        %p498 = scmp.eq.s32.totalorder %s22, 0
        // Predicated region
        $region83: #{graphsage_forward.5} parent=77 // pred_check
          %p499 = pneg %p498
        $region84: #{graphsage_forward.5} parent=77 // pred_check_branch
          %501 = sbr.rel (%p499) target = $region86
        $region85: #{graphsage_forward.5} parent=77 // pred_region
          %502 = vst [vmem:[#allocation2] sm:$0xff] 0.0
          %503 = vst [vmem:[#allocation2 + $0x8] sm:$0xff] 0.0
          %504 = vst [vmem:[#allocation2 + $0x10] sm:$0xff] 0.0
          %505 = vst [vmem:[#allocation2 + $0x18] sm:$0xff] 0.0
          %506 = vst [vmem:[#allocation2 + $0x20] sm:$0xff] 0.0
          %507 = vst [vmem:[#allocation2 + $0x28] sm:$0xff] 0.0
          %508 = vst [vmem:[#allocation2 + $0x30] sm:$0xff] 0.0
          %509 = vst [vmem:[#allocation2 + $0x38] sm:$0xff] 0.0
          %510 = vst [vmem:[#allocation2 + $0x40] sm:$0xff] 0.0
          %511 = vst [vmem:[#allocation2 + $0x48] sm:$0xff] 0.0
          %512 = vst [vmem:[#allocation2 + $0x50] sm:$0xff] 0.0
          %513 = vst [vmem:[#allocation2 + $0x58] sm:$0xff] 0.0
          %514 = vst [vmem:[#allocation2 + $0x60] sm:$0xff] 0.0
          %515 = vst [vmem:[#allocation2 + $0x68] sm:$0xff] 0.0
          %516 = vst [vmem:[#allocation2 + $0x70] sm:$0xff] 0.0
          %517 = vst [vmem:[#allocation2 + $0x78] sm:$0xff] 0.0
          %518 = vst [vmem:[#allocation2 + $0x80] sm:$0xff] 0.0
          %519 = vst [vmem:[#allocation2 + $0x88] sm:$0xff] 0.0
          %520 = vst [vmem:[#allocation2 + $0x90] sm:$0xff] 0.0
          %521 = vst [vmem:[#allocation2 + $0x98] sm:$0xff] 0.0
          %522 = vst [vmem:[#allocation2 + $0xa0] sm:$0xff] 0.0
          %523 = vst [vmem:[#allocation2 + $0xa8] sm:$0xff] 0.0
          %524 = vst [vmem:[#allocation2 + $0xb0] sm:$0xff] 0.0
          %525 = vst [vmem:[#allocation2 + $0xb8] sm:$0xff] 0.0
          %526 = vst [vmem:[#allocation2 + $0xc0] sm:$0xff] 0.0
          %527 = vst [vmem:[#allocation2 + $0xc8] sm:$0xff] 0.0
          %528 = vst [vmem:[#allocation2 + $0xd0] sm:$0xff] 0.0
          %529 = vst [vmem:[#allocation2 + $0xd8] sm:$0xff] 0.0
          %530 = vst [vmem:[#allocation2 + $0xe0] sm:$0xff] 0.0
          %531 = vst [vmem:[#allocation2 + $0xe8] sm:$0xff] 0.0
          %532 = vst [vmem:[#allocation2 + $0xf0] sm:$0xff] 0.0
          %533 = vst [vmem:[#allocation2 + $0xf8] sm:$0xff] 0.0
        $region86: #{graphsage_forward.5} parent=77 // pred_fallthru
          _
        %v534 = vld [vmem:[#allocation2] sm:$0xff]
        %v535 = vld [vmem:[#allocation2 + $0x8] sm:$0xff]
        %v536 = vld [vmem:[#allocation2 + $0x10] sm:$0xff]
        %v537 = vld [vmem:[#allocation2 + $0x18] sm:$0xff]
        %v538 = vld [vmem:[#allocation2 + $0x20] sm:$0xff]
        %v539 = vld [vmem:[#allocation2 + $0x28] sm:$0xff]
        %v540 = vld [vmem:[#allocation2 + $0x30] sm:$0xff]
        %v541 = vld [vmem:[#allocation2 + $0x38] sm:$0xff]
        %v542 = vld [vmem:[#allocation2 + $0x40] sm:$0xff]
        %v543 = vld [vmem:[#allocation2 + $0x48] sm:$0xff]
        %v544 = vld [vmem:[#allocation2 + $0x50] sm:$0xff]
        %v545 = vld [vmem:[#allocation2 + $0x58] sm:$0xff]
        %v546 = vld [vmem:[#allocation2 + $0x60] sm:$0xff]
        %v547 = vld [vmem:[#allocation2 + $0x68] sm:$0xff]
        %v548 = vld [vmem:[#allocation2 + $0x70] sm:$0xff]
        %v549 = vld [vmem:[#allocation2 + $0x78] sm:$0xff]
        %v550 = vld [vmem:[#allocation2 + $0x80] sm:$0xff]
        %v551 = vld [vmem:[#allocation2 + $0x88] sm:$0xff]
        %v552 = vld [vmem:[#allocation2 + $0x90] sm:$0xff]
        %v553 = vld [vmem:[#allocation2 + $0x98] sm:$0xff]
        %v554 = vld [vmem:[#allocation2 + $0xa0] sm:$0xff]
        %v555 = vld [vmem:[#allocation2 + $0xa8] sm:$0xff]
        %v556 = vld [vmem:[#allocation2 + $0xb0] sm:$0xff]
        %v557 = vld [vmem:[#allocation2 + $0xb8] sm:$0xff]
        %v558 = vld [vmem:[#allocation2 + $0xc0] sm:$0xff]
        %v559 = vld [vmem:[#allocation2 + $0xc8] sm:$0xff]
        %v560 = vld [vmem:[#allocation2 + $0xd0] sm:$0xff]
        %v561 = vld [vmem:[#allocation2 + $0xd8] sm:$0xff]
        %v562 = vld [vmem:[#allocation2 + $0xe0] sm:$0xff]
        %v563 = vld [vmem:[#allocation2 + $0xe8] sm:$0xff]
        %v564 = vld [vmem:[#allocation2 + $0xf0] sm:$0xff]
        %v565 = vld [vmem:[#allocation2 + $0xf8] sm:$0xff]
        %v566 = vld [vmem:[%s429] sm:$0xff]
        %v567 = vld [vmem:[%s429 + $0x8] sm:$0xff]
        %v568 = vld [vmem:[%s429 + $0x10] sm:$0xff]
        %v569 = vld [vmem:[%s429 + $0x18] sm:$0xff]
        %v570 = vld [vmem:[%s429 + $0x20] sm:$0xff]
        %v571 = vld [vmem:[%s429 + $0x28] sm:$0xff]
        %v572 = vld [vmem:[%s429 + $0x30] sm:$0xff]
        %v573 = vld [vmem:[%s429 + $0x38] sm:$0xff]
        %v574 = vld [vmem:[%s429 + $0x40] sm:$0xff]
        %v575 = vld [vmem:[%s429 + $0x48] sm:$0xff]
        %v576 = vld [vmem:[%s429 + $0x50] sm:$0xff]
        %v577 = vld [vmem:[%s429 + $0x58] sm:$0xff]
        %v578 = vld [vmem:[%s429 + $0x60] sm:$0xff]
        %v579 = vld [vmem:[%s429 + $0x68] sm:$0xff]
        %v580 = vld [vmem:[%s429 + $0x70] sm:$0xff]
        %v581 = vld [vmem:[%s429 + $0x78] sm:$0xff]
        %v582 = vld [vmem:[%s429 + $0x80] sm:$0xff]
        %v583 = vld [vmem:[%s429 + $0x88] sm:$0xff]
        %v584 = vld [vmem:[%s429 + $0x90] sm:$0xff]
        %v585 = vld [vmem:[%s429 + $0x98] sm:$0xff]
        %v586 = vld [vmem:[%s429 + $0xa0] sm:$0xff]
        %v587 = vld [vmem:[%s429 + $0xa8] sm:$0xff]
        %v588 = vld [vmem:[%s429 + $0xb0] sm:$0xff]
        %v589 = vld [vmem:[%s429 + $0xb8] sm:$0xff]
        %v590 = vld [vmem:[%s429 + $0xc0] sm:$0xff]
        %v591 = vld [vmem:[%s429 + $0xc8] sm:$0xff]
        %v592 = vld [vmem:[%s429 + $0xd0] sm:$0xff]
        %v593 = vld [vmem:[%s429 + $0xd8] sm:$0xff]
        %v594 = vld [vmem:[%s429 + $0xe0] sm:$0xff]
        %v595 = vld [vmem:[%s429 + $0xe8] sm:$0xff]
        %v596 = vld [vmem:[%s429 + $0xf0] sm:$0xff]
        %v597 = vld [vmem:[%s429 + $0xf8] sm:$0xff]
        %v598 = vld [vmem:[%s477] sm:$0xf]
        %v599 = vld [vmem:[%s477 + $0x4] sm:$0xf]
        %v600 = vld [vmem:[%s477 + $0x8] sm:$0xf]
        %v601 = vld [vmem:[%s477 + $0xc] sm:$0xf]
        %v602 = vld [vmem:[%s477 + $0x10] sm:$0xf]
        %v603 = vld [vmem:[%s477 + $0x14] sm:$0xf]
        %v604 = vld [vmem:[%s477 + $0x18] sm:$0xf]
        %v605 = vld [vmem:[%s477 + $0x1c] sm:$0xf]
        %v606 = vld [vmem:[%s477 + $0x20] sm:$0xf]
        %v607 = vld [vmem:[%s477 + $0x24] sm:$0xf]
        %v608 = vld [vmem:[%s477 + $0x28] sm:$0xf]
        %v609 = vld [vmem:[%s477 + $0x2c] sm:$0xf]
        %v610 = vld [vmem:[%s477 + $0x30] sm:$0xf]
        %v611 = vld [vmem:[%s477 + $0x34] sm:$0xf]
        %v612 = vld [vmem:[%s477 + $0x38] sm:$0xf]
        %v613 = vld [vmem:[%s477 + $0x3c] sm:$0xf]
        %v614 = vld [vmem:[%s477 + $0x40] sm:$0xf]
        %v615 = vld [vmem:[%s477 + $0x44] sm:$0xf]
        %v616 = vld [vmem:[%s477 + $0x48] sm:$0xf]
        %v617 = vld [vmem:[%s477 + $0x4c] sm:$0xf]
        %v618 = vld [vmem:[%s477 + $0x50] sm:$0xf]
        %v619 = vld [vmem:[%s477 + $0x54] sm:$0xf]
        %v620 = vld [vmem:[%s477 + $0x58] sm:$0xf]
        %v621 = vld [vmem:[%s477 + $0x5c] sm:$0xf]
        %v622 = vld [vmem:[%s477 + $0x60] sm:$0xf]
        %v623 = vld [vmem:[%s477 + $0x64] sm:$0xf]
        %v624 = vld [vmem:[%s477 + $0x68] sm:$0xf]
        %v625 = vld [vmem:[%s477 + $0x6c] sm:$0xf]
        %v626 = vld [vmem:[%s477 + $0x70] sm:$0xf]
        %v627 = vld [vmem:[%s477 + $0x74] sm:$0xf]
        %v628 = vld [vmem:[%s477 + $0x78] sm:$0xf]
        %v629 = vld [vmem:[%s477 + $0x7c] sm:$0xf]
        %v662 = vunpack.c.l.b16 %v566
        %v663 = vunpack.c.h.b16 %v566
        %v664 = vunpack.c.l.b16 %v567
        %v665 = vunpack.c.h.b16 %v567
        %v666 = vunpack.c.l.b16 %v568
        %v667 = vunpack.c.h.b16 %v568
        %v668 = vunpack.c.l.b16 %v569
        %v669 = vunpack.c.h.b16 %v569
        %v670 = vunpack.c.l.b16 %v570
        %v671 = vunpack.c.h.b16 %v570
        %v672 = vunpack.c.l.b16 %v571
        %v673 = vunpack.c.h.b16 %v571
        %v674 = vunpack.c.l.b16 %v572
        %v675 = vunpack.c.h.b16 %v572
        %v676 = vunpack.c.l.b16 %v573
        %v677 = vunpack.c.h.b16 %v573
        %v678 = vunpack.c.l.b16 %v574
        %v679 = vunpack.c.h.b16 %v574
        %v680 = vunpack.c.l.b16 %v575
        %v681 = vunpack.c.h.b16 %v575
        %v682 = vunpack.c.l.b16 %v576
        %v683 = vunpack.c.h.b16 %v576
        %v684 = vunpack.c.l.b16 %v577
        %v685 = vunpack.c.h.b16 %v577
        %v686 = vunpack.c.l.b16 %v578
        %v687 = vunpack.c.h.b16 %v578
        %v688 = vunpack.c.l.b16 %v579
        %v689 = vunpack.c.h.b16 %v579
        %v690 = vunpack.c.l.b16 %v580
        %v691 = vunpack.c.h.b16 %v580
        %v692 = vunpack.c.l.b16 %v581
        %v693 = vunpack.c.h.b16 %v581
        %v694 = vunpack.c.l.b16 %v582
        %v695 = vunpack.c.h.b16 %v582
        %v696 = vunpack.c.l.b16 %v583
        %v697 = vunpack.c.h.b16 %v583
        %v698 = vunpack.c.l.b16 %v584
        %v699 = vunpack.c.h.b16 %v584
        %v700 = vunpack.c.l.b16 %v585
        %v701 = vunpack.c.h.b16 %v585
        %v702 = vunpack.c.l.b16 %v586
        %v703 = vunpack.c.h.b16 %v586
        %v704 = vunpack.c.l.b16 %v587
        %v705 = vunpack.c.h.b16 %v587
        %v706 = vunpack.c.l.b16 %v588
        %v707 = vunpack.c.h.b16 %v588
        %v708 = vunpack.c.l.b16 %v589
        %v709 = vunpack.c.h.b16 %v589
        %v710 = vunpack.c.l.b16 %v590
        %v711 = vunpack.c.h.b16 %v590
        %v712 = vunpack.c.l.b16 %v591
        %v713 = vunpack.c.h.b16 %v591
        %v714 = vunpack.c.l.b16 %v592
        %v715 = vunpack.c.h.b16 %v592
        %v716 = vunpack.c.l.b16 %v593
        %v717 = vunpack.c.h.b16 %v593
        %v718 = vunpack.c.l.b16 %v594
        %v719 = vunpack.c.h.b16 %v594
        %v720 = vunpack.c.l.b16 %v595
        %v721 = vunpack.c.h.b16 %v595
        %v722 = vunpack.c.l.b16 %v596
        %v723 = vunpack.c.h.b16 %v596
        %v724 = vunpack.c.l.b16 %v597
        %v725 = vunpack.c.h.b16 %v597
        %v726 = vpack.c.b16 %v664, %v662
        %v727 = vpack.c.b16 %v665, %v663
        %v728 = vpack.c.b16 %v668, %v666
        %v729 = vpack.c.b16 %v669, %v667
        %v730 = vpack.c.b16 %v672, %v670
        %v731 = vpack.c.b16 %v673, %v671
        %v732 = vpack.c.b16 %v676, %v674
        %v733 = vpack.c.b16 %v677, %v675
        %v734 = vpack.c.b16 %v680, %v678
        %v735 = vpack.c.b16 %v681, %v679
        %v736 = vpack.c.b16 %v684, %v682
        %v737 = vpack.c.b16 %v685, %v683
        %v738 = vpack.c.b16 %v688, %v686
        %v739 = vpack.c.b16 %v689, %v687
        %v740 = vpack.c.b16 %v692, %v690
        %v741 = vpack.c.b16 %v693, %v691
        %v742 = vpack.c.b16 %v696, %v694
        %v743 = vpack.c.b16 %v697, %v695
        %v744 = vpack.c.b16 %v700, %v698
        %v745 = vpack.c.b16 %v701, %v699
        %v746 = vpack.c.b16 %v704, %v702
        %v747 = vpack.c.b16 %v705, %v703
        %v748 = vpack.c.b16 %v708, %v706
        %v749 = vpack.c.b16 %v709, %v707
        %v750 = vpack.c.b16 %v712, %v710
        %v751 = vpack.c.b16 %v713, %v711
        %v752 = vpack.c.b16 %v716, %v714
        %v753 = vpack.c.b16 %v717, %v715
        %v754 = vpack.c.b16 %v720, %v718
        %v755 = vpack.c.b16 %v721, %v719
        %v756 = vpack.c.b16 %v724, %v722
        %v757 = vpack.c.b16 %v725, %v723
        %v822 = vunpack.c.l.b16 %v598
        %v823 = vunpack.c.l.b16 %v599
        %v824 = vunpack.c.l.b16 %v600
        %v825 = vunpack.c.l.b16 %v601
        %v826 = vunpack.c.l.b16 %v602
        %v827 = vunpack.c.l.b16 %v603
        %v828 = vunpack.c.l.b16 %v604
        %v829 = vunpack.c.l.b16 %v605
        %v830 = vunpack.c.l.b16 %v606
        %v831 = vunpack.c.l.b16 %v607
        %v832 = vunpack.c.l.b16 %v608
        %v833 = vunpack.c.l.b16 %v609
        %v834 = vunpack.c.l.b16 %v610
        %v835 = vunpack.c.l.b16 %v611
        %v836 = vunpack.c.l.b16 %v612
        %v837 = vunpack.c.l.b16 %v613
        %v838 = vunpack.c.l.b16 %v614
        %v839 = vunpack.c.l.b16 %v615
        %v840 = vunpack.c.l.b16 %v616
        %v841 = vunpack.c.l.b16 %v617
        %v842 = vunpack.c.l.b16 %v618
        %v843 = vunpack.c.l.b16 %v619
        %v844 = vunpack.c.l.b16 %v620
        %v845 = vunpack.c.l.b16 %v621
        %v846 = vunpack.c.l.b16 %v622
        %v847 = vunpack.c.l.b16 %v623
        %v848 = vunpack.c.l.b16 %v624
        %v849 = vunpack.c.l.b16 %v625
        %v850 = vunpack.c.l.b16 %v626
        %v851 = vunpack.c.l.b16 %v627
        %v852 = vunpack.c.l.b16 %v628
        %v853 = vunpack.c.l.b16 %v629
        %v854 = vpack.c.b16 %v823, %v822
        %v855 = vpack.c.b16 %v825, %v824
        %v856 = vpack.c.b16 %v827, %v826
        %v857 = vpack.c.b16 %v829, %v828
        %v858 = vpack.c.b16 %v831, %v830
        %v859 = vpack.c.b16 %v833, %v832
        %v860 = vpack.c.b16 %v835, %v834
        %v861 = vpack.c.b16 %v837, %v836
        %v862 = vpack.c.b16 %v839, %v838
        %v863 = vpack.c.b16 %v841, %v840
        %v864 = vpack.c.b16 %v843, %v842
        %v865 = vpack.c.b16 %v845, %v844
        %v866 = vpack.c.b16 %v847, %v846
        %v867 = vpack.c.b16 %v849, %v848
        %v868 = vpack.c.b16 %v851, %v850
        %v869 = vpack.c.b16 %v853, %v852
        %886 = vmatprep.subr.bf16.mxu0 0
        %887 = vmatpush1.bf16.msra.mxu0 %v854
        %888 = vmatprep.subr.bf16.mxu0 0
        %889 = vmatpush1.bf16.msra.mxu0 %v855
        %890 = vmatprep.subr.bf16.mxu0 0
        %891 = vmatpush1.bf16.msra.mxu0 %v856
        %892 = vmatprep.subr.bf16.mxu0 0
        %893 = vmatpush1.bf16.msra.mxu0 %v857
        %894 = vmatprep.subr.bf16.mxu0 0
        %895 = vmatpush1.bf16.msra.mxu0 %v858
        %896 = vmatprep.subr.bf16.mxu0 0
        %897 = vmatpush1.bf16.msra.mxu0 %v859
        %898 = vmatprep.subr.bf16.mxu0 0
        %899 = vmatpush1.bf16.msra.mxu0 %v860
        %900 = vmatprep.subr.bf16.mxu0 0
        %901 = vmatpush1.bf16.msra.mxu0 %v861
        %902 = vmatprep.subr.bf16.mxu0 0
        %903 = vmatpush1.bf16.msra.mxu0 %v862
        %904 = vmatprep.subr.bf16.mxu0 0
        %905 = vmatpush1.bf16.msra.mxu0 %v863
        %906 = vmatprep.subr.bf16.mxu0 0
        %907 = vmatpush1.bf16.msra.mxu0 %v864
        %908 = vmatprep.subr.bf16.mxu0 0
        %909 = vmatpush1.bf16.msra.mxu0 %v865
        %910 = vmatprep.subr.bf16.mxu0 0
        %911 = vmatpush1.bf16.msra.mxu0 %v866
        %912 = vmatprep.subr.bf16.mxu0 0
        %913 = vmatpush1.bf16.msra.mxu0 %v867
        %914 = vmatprep.subr.bf16.mxu0 0
        %915 = vmatpush1.bf16.msra.mxu0 %v868
        %916 = vmatprep.subr.bf16.mxu0 0
        %917 = vmatpush1.bf16.msra.mxu0 %v869
        %918 = vmatprep.mubr.bf16.mxu0 %v727
        %919 = vmatmul.mubr.bf16.gmra.mrb[0].mxu0 %v726
        %v920 = vpop.f32.mrb[0].mxu0
        %v921 = vadd.f32 0.0, %v920
        %v922 = vpop.f32.mrb[0].mxu0
        %v923 = vpop.f32.mrb[0].mxu0
        %v924 = vadd.f32 0.0, %v923
        %v925 = vpop.f32.mrb[0].mxu0
        %926 = vmatprep.mubr.bf16.mxu0 %v729
        %927 = vmatmul.mubr.bf16.gmra.mrb[0].mxu0 %v728
        %v928 = vpop.f32.mrb[0].mxu0
        %v929 = vadd.f32 0.0, %v928
        %v930 = vpop.f32.mrb[0].mxu0
        %v931 = vpop.f32.mrb[0].mxu0
        %v932 = vadd.f32 0.0, %v931
        %v933 = vpop.f32.mrb[0].mxu0
        %934 = vmatprep.mubr.bf16.mxu0 %v731
        %935 = vmatmul.mubr.bf16.gmra.mrb[0].mxu0 %v730
        %v936 = vpop.f32.mrb[0].mxu0
        %v937 = vadd.f32 0.0, %v936
        %v938 = vpop.f32.mrb[0].mxu0
        %v939 = vpop.f32.mrb[0].mxu0
        %v940 = vadd.f32 0.0, %v939
        %v941 = vpop.f32.mrb[0].mxu0
        %942 = vmatprep.mubr.bf16.mxu0 %v733
        %943 = vmatmul.mubr.bf16.gmra.mrb[0].mxu0 %v732
        %v944 = vpop.f32.mrb[0].mxu0
        %v945 = vadd.f32 0.0, %v944
        %v946 = vpop.f32.mrb[0].mxu0
        %v947 = vpop.f32.mrb[0].mxu0
        %v948 = vadd.f32 0.0, %v947
        %v949 = vpop.f32.mrb[0].mxu0
        %950 = vmatprep.mubr.bf16.mxu0 %v735
        %951 = vmatmul.mubr.bf16.gmra.mrb[0].mxu0 %v734
        %v952 = vpop.f32.mrb[0].mxu0
        %v953 = vadd.f32 0.0, %v952
        %v954 = vpop.f32.mrb[0].mxu0
        %v955 = vpop.f32.mrb[0].mxu0
        %v956 = vadd.f32 0.0, %v955
        %v957 = vpop.f32.mrb[0].mxu0
        %958 = vmatprep.mubr.bf16.mxu0 %v737
        %959 = vmatmul.mubr.bf16.gmra.mrb[0].mxu0 %v736
        %v960 = vpop.f32.mrb[0].mxu0
        %v961 = vadd.f32 0.0, %v960
        %v962 = vpop.f32.mrb[0].mxu0
        %v963 = vpop.f32.mrb[0].mxu0
        %v964 = vadd.f32 0.0, %v963
        %v965 = vpop.f32.mrb[0].mxu0
        %966 = vmatprep.mubr.bf16.mxu0 %v739
        %967 = vmatmul.mubr.bf16.gmra.mrb[0].mxu0 %v738
        %v968 = vpop.f32.mrb[0].mxu0
        %v969 = vadd.f32 0.0, %v968
        %v970 = vpop.f32.mrb[0].mxu0
        %v971 = vpop.f32.mrb[0].mxu0
        %v972 = vadd.f32 0.0, %v971
        %v973 = vpop.f32.mrb[0].mxu0
        %974 = vmatprep.mubr.bf16.mxu0 %v741
        %975 = vmatmul.mubr.bf16.gmra.mrb[0].mxu0 %v740
        %v976 = vpop.f32.mrb[0].mxu0
        %v977 = vadd.f32 0.0, %v976
        %v978 = vpop.f32.mrb[0].mxu0
        %v979 = vpop.f32.mrb[0].mxu0
        %v980 = vadd.f32 0.0, %v979
        %v981 = vpop.f32.mrb[0].mxu0
        %982 = vmatprep.mubr.bf16.mxu0 %v743
        %983 = vmatmul.mubr.bf16.gmra.mrb[0].mxu0 %v742
        %v984 = vpop.f32.mrb[0].mxu0
        %v985 = vadd.f32 0.0, %v984
        %v986 = vpop.f32.mrb[0].mxu0
        %v987 = vpop.f32.mrb[0].mxu0
        %v988 = vadd.f32 0.0, %v987
        %v989 = vpop.f32.mrb[0].mxu0
        %990 = vmatprep.mubr.bf16.mxu0 %v745
        %991 = vmatmul.mubr.bf16.gmra.mrb[0].mxu0 %v744
        %v992 = vpop.f32.mrb[0].mxu0
        %v993 = vadd.f32 0.0, %v992
        %v994 = vpop.f32.mrb[0].mxu0
        %v995 = vpop.f32.mrb[0].mxu0
        %v996 = vadd.f32 0.0, %v995
        %v997 = vpop.f32.mrb[0].mxu0
        %998 = vmatprep.mubr.bf16.mxu0 %v747
        %999 = vmatmul.mubr.bf16.gmra.mrb[0].mxu0 %v746
        %v1000 = vpop.f32.mrb[0].mxu0
        %v1001 = vadd.f32 0.0, %v1000
        %v1002 = vpop.f32.mrb[0].mxu0
        %v1003 = vpop.f32.mrb[0].mxu0
        %v1004 = vadd.f32 0.0, %v1003
        %v1005 = vpop.f32.mrb[0].mxu0
        %1006 = vmatprep.mubr.bf16.mxu0 %v749
        %1007 = vmatmul.mubr.bf16.gmra.mrb[0].mxu0 %v748
        %v1008 = vpop.f32.mrb[0].mxu0
        %v1009 = vadd.f32 0.0, %v1008
        %v1010 = vpop.f32.mrb[0].mxu0
        %v1011 = vpop.f32.mrb[0].mxu0
        %v1012 = vadd.f32 0.0, %v1011
        %v1013 = vpop.f32.mrb[0].mxu0
        %1014 = vmatprep.mubr.bf16.mxu0 %v751
        %1015 = vmatmul.mubr.bf16.gmra.mrb[0].mxu0 %v750
        %v1016 = vpop.f32.mrb[0].mxu0
        %v1017 = vadd.f32 0.0, %v1016
        %v1018 = vpop.f32.mrb[0].mxu0
        %v1019 = vpop.f32.mrb[0].mxu0
        %v1020 = vadd.f32 0.0, %v1019
        %v1021 = vpop.f32.mrb[0].mxu0
        %1022 = vmatprep.mubr.bf16.mxu0 %v753
        %1023 = vmatmul.mubr.bf16.gmra.mrb[0].mxu0 %v752
        %v1024 = vpop.f32.mrb[0].mxu0
        %v1025 = vadd.f32 0.0, %v1024
        %v1026 = vpop.f32.mrb[0].mxu0
        %v1027 = vpop.f32.mrb[0].mxu0
        %v1028 = vadd.f32 0.0, %v1027
        %v1029 = vpop.f32.mrb[0].mxu0
        %1030 = vmatprep.mubr.bf16.mxu0 %v755
        %1031 = vmatmul.mubr.bf16.gmra.mrb[0].mxu0 %v754
        %v1032 = vpop.f32.mrb[0].mxu0
        %v1033 = vadd.f32 0.0, %v1032
        %v1034 = vpop.f32.mrb[0].mxu0
        %v1035 = vpop.f32.mrb[0].mxu0
        %v1036 = vadd.f32 0.0, %v1035
        %v1037 = vpop.f32.mrb[0].mxu0
        %1038 = vmatprep.mubr.bf16.mxu0 %v757
        %1039 = vmatmul.mubr.bf16.gmra.mrb[0].mxu0 %v756
        %v1040 = vpop.f32.mrb[0].mxu0
        %v1041 = vadd.f32 0.0, %v1040
        %v1042 = vpop.f32.mrb[0].mxu0
        %v1043 = vpop.f32.mrb[0].mxu0
        %v1044 = vadd.f32 0.0, %v1043
        %v1045 = vpop.f32.mrb[0].mxu0
        %1046 = vdwg.mxu0
        %v1047 = vadd.f32 %v534, %v921
        %v1048 = vadd.f32 %v535, %v924
        %v1049 = vadd.f32 %v536, %v929
        %v1050 = vadd.f32 %v537, %v932
        %v1051 = vadd.f32 %v538, %v937
        %v1052 = vadd.f32 %v539, %v940
        %v1053 = vadd.f32 %v540, %v945
        %v1054 = vadd.f32 %v541, %v948
        %v1055 = vadd.f32 %v542, %v953
        %v1056 = vadd.f32 %v543, %v956
        %v1057 = vadd.f32 %v544, %v961
        %v1058 = vadd.f32 %v545, %v964
        %v1059 = vadd.f32 %v546, %v969
        %v1060 = vadd.f32 %v547, %v972
        %v1061 = vadd.f32 %v548, %v977
        %v1062 = vadd.f32 %v549, %v980
        %v1063 = vadd.f32 %v550, %v985
        %v1064 = vadd.f32 %v551, %v988
        %v1065 = vadd.f32 %v552, %v993
        %v1066 = vadd.f32 %v553, %v996
        %v1067 = vadd.f32 %v554, %v1001
        %v1068 = vadd.f32 %v555, %v1004
        %v1069 = vadd.f32 %v556, %v1009
        %v1070 = vadd.f32 %v557, %v1012
        %v1071 = vadd.f32 %v558, %v1017
        %v1072 = vadd.f32 %v559, %v1020
        %v1073 = vadd.f32 %v560, %v1025
        %v1074 = vadd.f32 %v561, %v1028
        %v1075 = vadd.f32 %v562, %v1033
        %v1076 = vadd.f32 %v563, %v1036
        %v1077 = vadd.f32 %v564, %v1041
        %v1078 = vadd.f32 %v565, %v1044
        %1079 = vst [vmem:[#allocation2] sm:$0xff] %v1047
        %1080 = vst [vmem:[#allocation2 + $0x8] sm:$0xff] %v1048
        %1081 = vst [vmem:[#allocation2 + $0x10] sm:$0xff] %v1049
        %1082 = vst [vmem:[#allocation2 + $0x18] sm:$0xff] %v1050
        %1083 = vst [vmem:[#allocation2 + $0x20] sm:$0xff] %v1051
        %1084 = vst [vmem:[#allocation2 + $0x28] sm:$0xff] %v1052
        %1085 = vst [vmem:[#allocation2 + $0x30] sm:$0xff] %v1053
        %1086 = vst [vmem:[#allocation2 + $0x38] sm:$0xff] %v1054
        %1087 = vst [vmem:[#allocation2 + $0x40] sm:$0xff] %v1055
        %1088 = vst [vmem:[#allocation2 + $0x48] sm:$0xff] %v1056
        %1089 = vst [vmem:[#allocation2 + $0x50] sm:$0xff] %v1057
        %1090 = vst [vmem:[#allocation2 + $0x58] sm:$0xff] %v1058
        %1091 = vst [vmem:[#allocation2 + $0x60] sm:$0xff] %v1059
        %1092 = vst [vmem:[#allocation2 + $0x68] sm:$0xff] %v1060
        %1093 = vst [vmem:[#allocation2 + $0x70] sm:$0xff] %v1061
        %1094 = vst [vmem:[#allocation2 + $0x78] sm:$0xff] %v1062
        %1095 = vst [vmem:[#allocation2 + $0x80] sm:$0xff] %v1063
        %1096 = vst [vmem:[#allocation2 + $0x88] sm:$0xff] %v1064
        %1097 = vst [vmem:[#allocation2 + $0x90] sm:$0xff] %v1065
        %1098 = vst [vmem:[#allocation2 + $0x98] sm:$0xff] %v1066
        %1099 = vst [vmem:[#allocation2 + $0xa0] sm:$0xff] %v1067
        %1100 = vst [vmem:[#allocation2 + $0xa8] sm:$0xff] %v1068
        %1101 = vst [vmem:[#allocation2 + $0xb0] sm:$0xff] %v1069
        %1102 = vst [vmem:[#allocation2 + $0xb8] sm:$0xff] %v1070
        %1103 = vst [vmem:[#allocation2 + $0xc0] sm:$0xff] %v1071
        %1104 = vst [vmem:[#allocation2 + $0xc8] sm:$0xff] %v1072
        %1105 = vst [vmem:[#allocation2 + $0xd0] sm:$0xff] %v1073
        %1106 = vst [vmem:[#allocation2 + $0xd8] sm:$0xff] %v1074
        %1107 = vst [vmem:[#allocation2 + $0xe0] sm:$0xff] %v1075
        %1108 = vst [vmem:[#allocation2 + $0xe8] sm:$0xff] %v1076
        %1109 = vst [vmem:[#allocation2 + $0xf0] sm:$0xff] %v1077
        %1110 = vst [vmem:[#allocation2 + $0xf8] sm:$0xff] %v1078
        %p1111 = scmp.eq.s32.totalorder %s22, 2
        // Predicated region
        $region87: #{graphsage_forward.5} parent=77 // pred_check
          %p1112 = pneg %p1111
        $region88: #{graphsage_forward.5} parent=77 // pred_check_branch
          %1114 = sbr.rel (%p1112) target = $region90
        $region89: #{graphsage_forward.5} parent=77 // pred_region
          %v1115 = vld [vmem:[#allocation2] sm:$0xff]
          %v1116 = vld [vmem:[#allocation2 + $0x8] sm:$0xff]
          %v1117 = vld [vmem:[#allocation2 + $0x10] sm:$0xff]
          %v1118 = vld [vmem:[#allocation2 + $0x18] sm:$0xff]
          %v1119 = vld [vmem:[#allocation2 + $0x20] sm:$0xff]
          %v1120 = vld [vmem:[#allocation2 + $0x28] sm:$0xff]
          %v1121 = vld [vmem:[#allocation2 + $0x30] sm:$0xff]
          %v1122 = vld [vmem:[#allocation2 + $0x38] sm:$0xff]
          %v1123 = vld [vmem:[#allocation2 + $0x40] sm:$0xff]
          %v1124 = vld [vmem:[#allocation2 + $0x48] sm:$0xff]
          %v1125 = vld [vmem:[#allocation2 + $0x50] sm:$0xff]
          %v1126 = vld [vmem:[#allocation2 + $0x58] sm:$0xff]
          %v1127 = vld [vmem:[#allocation2 + $0x60] sm:$0xff]
          %v1128 = vld [vmem:[#allocation2 + $0x68] sm:$0xff]
          %v1129 = vld [vmem:[#allocation2 + $0x70] sm:$0xff]
          %v1130 = vld [vmem:[#allocation2 + $0x78] sm:$0xff]
          %v1131 = vld [vmem:[#allocation2 + $0x80] sm:$0xff]
          %v1132 = vld [vmem:[#allocation2 + $0x88] sm:$0xff]
          %v1133 = vld [vmem:[#allocation2 + $0x90] sm:$0xff]
          %v1134 = vld [vmem:[#allocation2 + $0x98] sm:$0xff]
          %v1135 = vld [vmem:[#allocation2 + $0xa0] sm:$0xff]
          %v1136 = vld [vmem:[#allocation2 + $0xa8] sm:$0xff]
          %v1137 = vld [vmem:[#allocation2 + $0xb0] sm:$0xff]
          %v1138 = vld [vmem:[#allocation2 + $0xb8] sm:$0xff]
          %v1139 = vld [vmem:[#allocation2 + $0xc0] sm:$0xff]
          %v1140 = vld [vmem:[#allocation2 + $0xc8] sm:$0xff]
          %v1141 = vld [vmem:[#allocation2 + $0xd0] sm:$0xff]
          %v1142 = vld [vmem:[#allocation2 + $0xd8] sm:$0xff]
          %v1143 = vld [vmem:[#allocation2 + $0xe0] sm:$0xff]
          %v1144 = vld [vmem:[#allocation2 + $0xe8] sm:$0xff]
          %v1145 = vld [vmem:[#allocation2 + $0xf0] sm:$0xff]
          %v1146 = vld [vmem:[#allocation2 + $0xf8] sm:$0xff]
          %v1147 = vld [vmem:[%s489] sm:$0xff]
          %v1148 = vld [vmem:[%s489 + $0x8] sm:$0xff]
          %v1149 = vld [vmem:[%s489 + $0x10] sm:$0xff]
          %v1150 = vld [vmem:[%s489 + $0x18] sm:$0xff]
          %v1151 = vld [vmem:[%s489 + $0x20] sm:$0xff]
          %v1152 = vld [vmem:[%s489 + $0x28] sm:$0xff]
          %v1153 = vld [vmem:[%s489 + $0x30] sm:$0xff]
          %v1154 = vld [vmem:[%s489 + $0x38] sm:$0xff]
          %v1155 = vld [vmem:[%s489 + $0x40] sm:$0xff]
          %v1156 = vld [vmem:[%s489 + $0x48] sm:$0xff]
          %v1157 = vld [vmem:[%s489 + $0x50] sm:$0xff]
          %v1158 = vld [vmem:[%s489 + $0x58] sm:$0xff]
          %v1159 = vld [vmem:[%s489 + $0x60] sm:$0xff]
          %v1160 = vld [vmem:[%s489 + $0x68] sm:$0xff]
          %v1161 = vld [vmem:[%s489 + $0x70] sm:$0xff]
          %v1162 = vld [vmem:[%s489 + $0x78] sm:$0xff]
          %v1163 = vld [vmem:[%s489 + $0x80] sm:$0xff]
          %v1164 = vld [vmem:[%s489 + $0x88] sm:$0xff]
          %v1165 = vld [vmem:[%s489 + $0x90] sm:$0xff]
          %v1166 = vld [vmem:[%s489 + $0x98] sm:$0xff]
          %v1167 = vld [vmem:[%s489 + $0xa0] sm:$0xff]
          %v1168 = vld [vmem:[%s489 + $0xa8] sm:$0xff]
          %v1169 = vld [vmem:[%s489 + $0xb0] sm:$0xff]
          %v1170 = vld [vmem:[%s489 + $0xb8] sm:$0xff]
          %v1171 = vld [vmem:[%s489 + $0xc0] sm:$0xff]
          %v1172 = vld [vmem:[%s489 + $0xc8] sm:$0xff]
          %v1173 = vld [vmem:[%s489 + $0xd0] sm:$0xff]
          %v1174 = vld [vmem:[%s489 + $0xd8] sm:$0xff]
          %v1175 = vld [vmem:[%s489 + $0xe0] sm:$0xff]
          %v1176 = vld [vmem:[%s489 + $0xe8] sm:$0xff]
          %v1177 = vld [vmem:[%s489 + $0xf0] sm:$0xff]
          %v1178 = vld [vmem:[%s489 + $0xf8] sm:$0xff]
          %1180 = vset.pattern.permute.xlu0 0
          %1181 = vperm.xlu0 %1180, %v1147
          %v1182 = vpop.permute.xlu0 %1181
          %1185 = vset.pattern.permute.xlu0 0
          %1186 = vperm.xlu0 %1185, %v1148
          %v1187 = vpop.permute.xlu0 %1186
          %1190 = vset.pattern.permute.xlu0 0
          %1191 = vperm.xlu0 %1190, %v1149
          %v1192 = vpop.permute.xlu0 %1191
          %1195 = vset.pattern.permute.xlu0 0
          %1196 = vperm.xlu0 %1195, %v1150
          %v1197 = vpop.permute.xlu0 %1196
          %1200 = vset.pattern.permute.xlu0 0
          %1201 = vperm.xlu0 %1200, %v1151
          %v1202 = vpop.permute.xlu0 %1201
          %1205 = vset.pattern.permute.xlu0 0
          %1206 = vperm.xlu0 %1205, %v1152
          %v1207 = vpop.permute.xlu0 %1206
          %1210 = vset.pattern.permute.xlu0 0
          %1211 = vperm.xlu0 %1210, %v1153
          %v1212 = vpop.permute.xlu0 %1211
          %1215 = vset.pattern.permute.xlu0 0
          %1216 = vperm.xlu0 %1215, %v1154
          %v1217 = vpop.permute.xlu0 %1216
          %1220 = vset.pattern.permute.xlu0 0
          %1221 = vperm.xlu0 %1220, %v1155
          %v1222 = vpop.permute.xlu0 %1221
          %1225 = vset.pattern.permute.xlu0 0
          %1226 = vperm.xlu0 %1225, %v1156
          %v1227 = vpop.permute.xlu0 %1226
          %1230 = vset.pattern.permute.xlu0 0
          %1231 = vperm.xlu0 %1230, %v1157
          %v1232 = vpop.permute.xlu0 %1231
          %1235 = vset.pattern.permute.xlu0 0
          %1236 = vperm.xlu0 %1235, %v1158
          %v1237 = vpop.permute.xlu0 %1236
          %1240 = vset.pattern.permute.xlu0 0
          %1241 = vperm.xlu0 %1240, %v1159
          %v1242 = vpop.permute.xlu0 %1241
          %1245 = vset.pattern.permute.xlu0 0
          %1246 = vperm.xlu0 %1245, %v1160
          %v1247 = vpop.permute.xlu0 %1246
          %1250 = vset.pattern.permute.xlu0 0
          %1251 = vperm.xlu0 %1250, %v1161
          %v1252 = vpop.permute.xlu0 %1251
          %1255 = vset.pattern.permute.xlu0 0
          %1256 = vperm.xlu0 %1255, %v1162
          %v1257 = vpop.permute.xlu0 %1256
          %1260 = vset.pattern.permute.xlu0 0
          %1261 = vperm.xlu0 %1260, %v1163
          %v1262 = vpop.permute.xlu0 %1261
          %1265 = vset.pattern.permute.xlu0 0
          %1266 = vperm.xlu0 %1265, %v1164
          %v1267 = vpop.permute.xlu0 %1266
          %1270 = vset.pattern.permute.xlu0 0
          %1271 = vperm.xlu0 %1270, %v1165
          %v1272 = vpop.permute.xlu0 %1271
          %1275 = vset.pattern.permute.xlu0 0
          %1276 = vperm.xlu0 %1275, %v1166
          %v1277 = vpop.permute.xlu0 %1276
          %1280 = vset.pattern.permute.xlu0 0
          %1281 = vperm.xlu0 %1280, %v1167
          %v1282 = vpop.permute.xlu0 %1281
          %1285 = vset.pattern.permute.xlu0 0
          %1286 = vperm.xlu0 %1285, %v1168
          %v1287 = vpop.permute.xlu0 %1286
          %1290 = vset.pattern.permute.xlu0 0
          %1291 = vperm.xlu0 %1290, %v1169
          %v1292 = vpop.permute.xlu0 %1291
          %1295 = vset.pattern.permute.xlu0 0
          %1296 = vperm.xlu0 %1295, %v1170
          %v1297 = vpop.permute.xlu0 %1296
          %1300 = vset.pattern.permute.xlu0 0
          %1301 = vperm.xlu0 %1300, %v1171
          %v1302 = vpop.permute.xlu0 %1301
          %1305 = vset.pattern.permute.xlu0 0
          %1306 = vperm.xlu0 %1305, %v1172
          %v1307 = vpop.permute.xlu0 %1306
          %1310 = vset.pattern.permute.xlu0 0
          %1311 = vperm.xlu0 %1310, %v1173
          %v1312 = vpop.permute.xlu0 %1311
          %1315 = vset.pattern.permute.xlu0 0
          %1316 = vperm.xlu0 %1315, %v1174
          %v1317 = vpop.permute.xlu0 %1316
          %1320 = vset.pattern.permute.xlu0 0
          %1321 = vperm.xlu0 %1320, %v1175
          %v1322 = vpop.permute.xlu0 %1321
          %1325 = vset.pattern.permute.xlu0 0
          %1326 = vperm.xlu0 %1325, %v1176
          %v1327 = vpop.permute.xlu0 %1326
          %1330 = vset.pattern.permute.xlu0 0
          %1331 = vperm.xlu0 %1330, %v1177
          %v1332 = vpop.permute.xlu0 %1331
          %1335 = vset.pattern.permute.xlu0 0
          %1336 = vperm.xlu0 %1335, %v1178
          %v1337 = vpop.permute.xlu0 %1336
          %v1339 = vmul.f32 %v1115, %v1182
          %v1340 = vmul.f32 %v1116, %v1187
          %v1341 = vmul.f32 %v1117, %v1192
          %v1342 = vmul.f32 %v1118, %v1197
          %v1343 = vmul.f32 %v1119, %v1202
          %v1344 = vmul.f32 %v1120, %v1207
          %v1345 = vmul.f32 %v1121, %v1212
          %v1346 = vmul.f32 %v1122, %v1217
          %v1347 = vmul.f32 %v1123, %v1222
          %v1348 = vmul.f32 %v1124, %v1227
          %v1349 = vmul.f32 %v1125, %v1232
          %v1350 = vmul.f32 %v1126, %v1237
          %v1351 = vmul.f32 %v1127, %v1242
          %v1352 = vmul.f32 %v1128, %v1247
          %v1353 = vmul.f32 %v1129, %v1252
          %v1354 = vmul.f32 %v1130, %v1257
          %v1355 = vmul.f32 %v1131, %v1262
          %v1356 = vmul.f32 %v1132, %v1267
          %v1357 = vmul.f32 %v1133, %v1272
          %v1358 = vmul.f32 %v1134, %v1277
          %v1359 = vmul.f32 %v1135, %v1282
          %v1360 = vmul.f32 %v1136, %v1287
          %v1361 = vmul.f32 %v1137, %v1292
          %v1362 = vmul.f32 %v1138, %v1297
          %v1363 = vmul.f32 %v1139, %v1302
          %v1364 = vmul.f32 %v1140, %v1307
          %v1365 = vmul.f32 %v1141, %v1312
          %v1366 = vmul.f32 %v1142, %v1317
          %v1367 = vmul.f32 %v1143, %v1322
          %v1368 = vmul.f32 %v1144, %v1327
          %v1369 = vmul.f32 %v1145, %v1332
          %v1370 = vmul.f32 %v1146, %v1337
          %v1371 = vpack.c.bf16 %v1340, %v1339
          %v1372 = vpack.c.bf16 %v1342, %v1341
          %v1373 = vpack.c.bf16 %v1344, %v1343
          %v1374 = vpack.c.bf16 %v1346, %v1345
          %v1375 = vpack.c.bf16 %v1348, %v1347
          %v1376 = vpack.c.bf16 %v1350, %v1349
          %v1377 = vpack.c.bf16 %v1352, %v1351
          %v1378 = vpack.c.bf16 %v1354, %v1353
          %v1379 = vpack.c.bf16 %v1356, %v1355
          %v1380 = vpack.c.bf16 %v1358, %v1357
          %v1381 = vpack.c.bf16 %v1360, %v1359
          %v1382 = vpack.c.bf16 %v1362, %v1361
          %v1383 = vpack.c.bf16 %v1364, %v1363
          %v1384 = vpack.c.bf16 %v1366, %v1365
          %v1385 = vpack.c.bf16 %v1368, %v1367
          %v1386 = vpack.c.bf16 %v1370, %v1369
          %v1387 = vld [vmem:[%s483] sm:$0xf]
          %v1388 = vld [vmem:[%s483 + $0x4] sm:$0xf]
          %v1389 = vld [vmem:[%s483 + $0x8] sm:$0xf]
          %v1390 = vld [vmem:[%s483 + $0xc] sm:$0xf]
          %v1391 = vld [vmem:[%s483 + $0x10] sm:$0xf]
          %v1392 = vld [vmem:[%s483 + $0x14] sm:$0xf]
          %v1393 = vld [vmem:[%s483 + $0x18] sm:$0xf]
          %v1394 = vld [vmem:[%s483 + $0x1c] sm:$0xf]
          %v1395 = vld [vmem:[%s483 + $0x20] sm:$0xf]
          %v1396 = vld [vmem:[%s483 + $0x24] sm:$0xf]
          %v1397 = vld [vmem:[%s483 + $0x28] sm:$0xf]
          %v1398 = vld [vmem:[%s483 + $0x2c] sm:$0xf]
          %v1399 = vld [vmem:[%s483 + $0x30] sm:$0xf]
          %v1400 = vld [vmem:[%s483 + $0x34] sm:$0xf]
          %v1401 = vld [vmem:[%s483 + $0x38] sm:$0xf]
          %v1402 = vld [vmem:[%s483 + $0x3c] sm:$0xf]
          %v1403 = vld [vmem:[%s483 + $0x40] sm:$0xf]
          %v1404 = vld [vmem:[%s483 + $0x44] sm:$0xf]
          %v1405 = vld [vmem:[%s483 + $0x48] sm:$0xf]
          %v1406 = vld [vmem:[%s483 + $0x4c] sm:$0xf]
          %v1407 = vld [vmem:[%s483 + $0x50] sm:$0xf]
          %v1408 = vld [vmem:[%s483 + $0x54] sm:$0xf]
          %v1409 = vld [vmem:[%s483 + $0x58] sm:$0xf]
          %v1410 = vld [vmem:[%s483 + $0x5c] sm:$0xf]
          %v1411 = vld [vmem:[%s483 + $0x60] sm:$0xf]
          %v1412 = vld [vmem:[%s483 + $0x64] sm:$0xf]
          %v1413 = vld [vmem:[%s483 + $0x68] sm:$0xf]
          %v1414 = vld [vmem:[%s483 + $0x6c] sm:$0xf]
          %v1415 = vld [vmem:[%s483 + $0x70] sm:$0xf]
          %v1416 = vld [vmem:[%s483 + $0x74] sm:$0xf]
          %v1417 = vld [vmem:[%s483 + $0x78] sm:$0xf]
          %v1418 = vld [vmem:[%s483 + $0x7c] sm:$0xf]
          %v1451 = vunpack.c.l.b16 %v1387
          %v1452 = vunpack.c.l.b16 %v1388
          %v1453 = vunpack.c.l.b16 %v1389
          %v1454 = vunpack.c.l.b16 %v1390
          %v1455 = vunpack.c.l.b16 %v1391
          %v1456 = vunpack.c.l.b16 %v1392
          %v1457 = vunpack.c.l.b16 %v1393
          %v1458 = vunpack.c.l.b16 %v1394
          %v1459 = vunpack.c.l.b16 %v1395
          %v1460 = vunpack.c.l.b16 %v1396
          %v1461 = vunpack.c.l.b16 %v1397
          %v1462 = vunpack.c.l.b16 %v1398
          %v1463 = vunpack.c.l.b16 %v1399
          %v1464 = vunpack.c.l.b16 %v1400
          %v1465 = vunpack.c.l.b16 %v1401
          %v1466 = vunpack.c.l.b16 %v1402
          %v1467 = vunpack.c.l.b16 %v1403
          %v1468 = vunpack.c.l.b16 %v1404
          %v1469 = vunpack.c.l.b16 %v1405
          %v1470 = vunpack.c.l.b16 %v1406
          %v1471 = vunpack.c.l.b16 %v1407
          %v1472 = vunpack.c.l.b16 %v1408
          %v1473 = vunpack.c.l.b16 %v1409
          %v1474 = vunpack.c.l.b16 %v1410
          %v1475 = vunpack.c.l.b16 %v1411
          %v1476 = vunpack.c.l.b16 %v1412
          %v1477 = vunpack.c.l.b16 %v1413
          %v1478 = vunpack.c.l.b16 %v1414
          %v1479 = vunpack.c.l.b16 %v1415
          %v1480 = vunpack.c.l.b16 %v1416
          %v1481 = vunpack.c.l.b16 %v1417
          %v1482 = vunpack.c.l.b16 %v1418
          %v1483 = vpack.c.b16 %v1452, %v1451
          %v1484 = vpack.c.b16 %v1454, %v1453
          %v1485 = vpack.c.b16 %v1456, %v1455
          %v1486 = vpack.c.b16 %v1458, %v1457
          %v1487 = vpack.c.b16 %v1460, %v1459
          %v1488 = vpack.c.b16 %v1462, %v1461
          %v1489 = vpack.c.b16 %v1464, %v1463
          %v1490 = vpack.c.b16 %v1466, %v1465
          %v1491 = vpack.c.b16 %v1468, %v1467
          %v1492 = vpack.c.b16 %v1470, %v1469
          %v1493 = vpack.c.b16 %v1472, %v1471
          %v1494 = vpack.c.b16 %v1474, %v1473
          %v1495 = vpack.c.b16 %v1476, %v1475
          %v1496 = vpack.c.b16 %v1478, %v1477
          %v1497 = vpack.c.b16 %v1480, %v1479
          %v1498 = vpack.c.b16 %v1482, %v1481
          %v1515 = vld [vmem:[%s4] sm:$0xf]
          %v1516 = vld [vmem:[%s4 + $0x4] sm:$0xf]
          %v1517 = vld [vmem:[%s4 + $0x8] sm:$0xf]
          %v1518 = vld [vmem:[%s4 + $0xc] sm:$0xf]
          %v1519 = vld [vmem:[%s4 + $0x10] sm:$0xf]
          %v1520 = vld [vmem:[%s4 + $0x14] sm:$0xf]
          %v1521 = vld [vmem:[%s4 + $0x18] sm:$0xf]
          %v1522 = vld [vmem:[%s4 + $0x1c] sm:$0xf]
          %v1523 = vld [vmem:[%s4 + $0x20] sm:$0xf]
          %v1524 = vld [vmem:[%s4 + $0x24] sm:$0xf]
          %v1525 = vld [vmem:[%s4 + $0x28] sm:$0xf]
          %v1526 = vld [vmem:[%s4 + $0x2c] sm:$0xf]
          %v1527 = vld [vmem:[%s4 + $0x30] sm:$0xf]
          %v1528 = vld [vmem:[%s4 + $0x34] sm:$0xf]
          %v1529 = vld [vmem:[%s4 + $0x38] sm:$0xf]
          %v1530 = vld [vmem:[%s4 + $0x3c] sm:$0xf]
          %v1531 = vld [vmem:[%s4 + $0x40] sm:$0xf]
          %v1532 = vld [vmem:[%s4 + $0x44] sm:$0xf]
          %v1533 = vld [vmem:[%s4 + $0x48] sm:$0xf]
          %v1534 = vld [vmem:[%s4 + $0x4c] sm:$0xf]
          %v1535 = vld [vmem:[%s4 + $0x50] sm:$0xf]
          %v1536 = vld [vmem:[%s4 + $0x54] sm:$0xf]
          %v1537 = vld [vmem:[%s4 + $0x58] sm:$0xf]
          %v1538 = vld [vmem:[%s4 + $0x5c] sm:$0xf]
          %v1539 = vld [vmem:[%s4 + $0x60] sm:$0xf]
          %v1540 = vld [vmem:[%s4 + $0x64] sm:$0xf]
          %v1541 = vld [vmem:[%s4 + $0x68] sm:$0xf]
          %v1542 = vld [vmem:[%s4 + $0x6c] sm:$0xf]
          %v1543 = vld [vmem:[%s4 + $0x70] sm:$0xf]
          %v1544 = vld [vmem:[%s4 + $0x74] sm:$0xf]
          %v1545 = vld [vmem:[%s4 + $0x78] sm:$0xf]
          %v1546 = vld [vmem:[%s4 + $0x7c] sm:$0xf]
          %v1547 = vld [vmem:[%s5] sm:$0x1]
          %v1549 = vlaneseq
          %v1550 = vshrl.u32 %v1549, 7
          %v1551 = vsub.s32 0, %v1550
          %v1552 = vrot.slane %v1547, %v1551
          %v1586 = vunpack.c.l.b16 %v1515
          %v1587 = vunpack.c.l.b16 %v1516
          %v1588 = vunpack.c.l.b16 %v1517
          %v1589 = vunpack.c.l.b16 %v1518
          %v1590 = vunpack.c.l.b16 %v1519
          %v1591 = vunpack.c.l.b16 %v1520
          %v1592 = vunpack.c.l.b16 %v1521
          %v1593 = vunpack.c.l.b16 %v1522
          %v1594 = vunpack.c.l.b16 %v1523
          %v1595 = vunpack.c.l.b16 %v1524
          %v1596 = vunpack.c.l.b16 %v1525
          %v1597 = vunpack.c.l.b16 %v1526
          %v1598 = vunpack.c.l.b16 %v1527
          %v1599 = vunpack.c.l.b16 %v1528
          %v1600 = vunpack.c.l.b16 %v1529
          %v1601 = vunpack.c.l.b16 %v1530
          %v1602 = vunpack.c.l.b16 %v1531
          %v1603 = vunpack.c.l.b16 %v1532
          %v1604 = vunpack.c.l.b16 %v1533
          %v1605 = vunpack.c.l.b16 %v1534
          %v1606 = vunpack.c.l.b16 %v1535
          %v1607 = vunpack.c.l.b16 %v1536
          %v1608 = vunpack.c.l.b16 %v1537
          %v1609 = vunpack.c.l.b16 %v1538
          %v1610 = vunpack.c.l.b16 %v1539
          %v1611 = vunpack.c.l.b16 %v1540
          %v1612 = vunpack.c.l.b16 %v1541
          %v1613 = vunpack.c.l.b16 %v1542
          %v1614 = vunpack.c.l.b16 %v1543
          %v1615 = vunpack.c.l.b16 %v1544
          %v1616 = vunpack.c.l.b16 %v1545
          %v1617 = vunpack.c.l.b16 %v1546
          %v1618 = vpack.c.b16 %v1587, %v1586
          %v1619 = vpack.c.b16 %v1589, %v1588
          %v1620 = vpack.c.b16 %v1591, %v1590
          %v1621 = vpack.c.b16 %v1593, %v1592
          %v1622 = vpack.c.b16 %v1595, %v1594
          %v1623 = vpack.c.b16 %v1597, %v1596
          %v1624 = vpack.c.b16 %v1599, %v1598
          %v1625 = vpack.c.b16 %v1601, %v1600
          %v1626 = vpack.c.b16 %v1603, %v1602
          %v1627 = vpack.c.b16 %v1605, %v1604
          %v1628 = vpack.c.b16 %v1607, %v1606
          %v1629 = vpack.c.b16 %v1609, %v1608
          %v1630 = vpack.c.b16 %v1611, %v1610
          %v1631 = vpack.c.b16 %v1613, %v1612
          %v1632 = vpack.c.b16 %v1615, %v1614
          %v1633 = vpack.c.b16 %v1617, %v1616
          %1650 = vmatprep.subr.bf16.mxu0 0
          %1651 = vmatpush1.bf16.msra.mxu0 %v1618
          %1652 = vmatprep.subr.bf16.mxu0 0
          %1653 = vmatpush1.bf16.msra.mxu0 %v1619
          %1654 = vmatprep.subr.bf16.mxu0 0
          %1655 = vmatpush1.bf16.msra.mxu0 %v1620
          %1656 = vmatprep.subr.bf16.mxu0 0
          %1657 = vmatpush1.bf16.msra.mxu0 %v1621
          %1658 = vmatprep.subr.bf16.mxu0 0
          %1659 = vmatpush1.bf16.msra.mxu0 %v1622
          %1660 = vmatprep.subr.bf16.mxu0 0
          %1661 = vmatpush1.bf16.msra.mxu0 %v1623
          %1662 = vmatprep.subr.bf16.mxu0 0
          %1663 = vmatpush1.bf16.msra.mxu0 %v1624
          %1664 = vmatprep.subr.bf16.mxu0 0
          %1665 = vmatpush1.bf16.msra.mxu0 %v1625
          %1666 = vmatprep.subr.bf16.mxu0 0
          %1667 = vmatpush1.bf16.msra.mxu0 %v1626
          %1668 = vmatprep.subr.bf16.mxu0 0
          %1669 = vmatpush1.bf16.msra.mxu0 %v1627
          %1670 = vmatprep.subr.bf16.mxu0 0
          %1671 = vmatpush1.bf16.msra.mxu0 %v1628
          %1672 = vmatprep.subr.bf16.mxu0 0
          %1673 = vmatpush1.bf16.msra.mxu0 %v1629
          %1674 = vmatprep.subr.bf16.mxu0 0
          %1675 = vmatpush1.bf16.msra.mxu0 %v1630
          %1676 = vmatprep.subr.bf16.mxu0 0
          %1677 = vmatpush1.bf16.msra.mxu0 %v1631
          %1678 = vmatprep.subr.bf16.mxu0 0
          %1679 = vmatpush1.bf16.msra.mxu0 %v1632
          %1680 = vmatprep.subr.bf16.mxu0 0
          %1681 = vmatpush1.bf16.msra.mxu0 %v1633
          %1682 = vmatprep.mubr.bf16.mxu0 %v1483
          %1683 = vmatmul.mubr.bf16.gmra.mrb[0].mxu0 %v1371
          %v1684 = vpop.f32.mrb[0].mxu0
          %v1685 = vadd.f32 %v1552, %v1684
          %v1686 = vpop.f32.mrb[0].mxu0
          %v1687 = vpop.f32.mrb[0].mxu0
          %v1688 = vadd.f32 %v1552, %v1687
          %v1689 = vpop.f32.mrb[0].mxu0
          %1690 = vmatprep.mubr.bf16.mxu0 %v1484
          %1691 = vmatmul.mubr.bf16.gmra.mrb[0].mxu0 %v1372
          %v1692 = vpop.f32.mrb[0].mxu0
          %v1693 = vadd.f32 %v1552, %v1692
          %v1694 = vpop.f32.mrb[0].mxu0
          %v1695 = vpop.f32.mrb[0].mxu0
          %v1696 = vadd.f32 %v1552, %v1695
          %v1697 = vpop.f32.mrb[0].mxu0
          %1698 = vmatprep.mubr.bf16.mxu0 %v1485
          %1699 = vmatmul.mubr.bf16.gmra.mrb[0].mxu0 %v1373
          %v1700 = vpop.f32.mrb[0].mxu0
          %v1701 = vadd.f32 %v1552, %v1700
          %v1702 = vpop.f32.mrb[0].mxu0
          %v1703 = vpop.f32.mrb[0].mxu0
          %v1704 = vadd.f32 %v1552, %v1703
          %v1705 = vpop.f32.mrb[0].mxu0
          %1706 = vmatprep.mubr.bf16.mxu0 %v1486
          %1707 = vmatmul.mubr.bf16.gmra.mrb[0].mxu0 %v1374
          %v1708 = vpop.f32.mrb[0].mxu0
          %v1709 = vadd.f32 %v1552, %v1708
          %v1710 = vpop.f32.mrb[0].mxu0
          %v1711 = vpop.f32.mrb[0].mxu0
          %v1712 = vadd.f32 %v1552, %v1711
          %v1713 = vpop.f32.mrb[0].mxu0
          %1714 = vmatprep.mubr.bf16.mxu0 %v1487
          %1715 = vmatmul.mubr.bf16.gmra.mrb[0].mxu0 %v1375
          %v1716 = vpop.f32.mrb[0].mxu0
          %v1717 = vadd.f32 %v1552, %v1716
          %v1718 = vpop.f32.mrb[0].mxu0
          %v1719 = vpop.f32.mrb[0].mxu0
          %v1720 = vadd.f32 %v1552, %v1719
          %v1721 = vpop.f32.mrb[0].mxu0
          %1722 = vmatprep.mubr.bf16.mxu0 %v1488
          %1723 = vmatmul.mubr.bf16.gmra.mrb[0].mxu0 %v1376
          %v1724 = vpop.f32.mrb[0].mxu0
          %v1725 = vadd.f32 %v1552, %v1724
          %v1726 = vpop.f32.mrb[0].mxu0
          %v1727 = vpop.f32.mrb[0].mxu0
          %v1728 = vadd.f32 %v1552, %v1727
          %v1729 = vpop.f32.mrb[0].mxu0
          %1730 = vmatprep.mubr.bf16.mxu0 %v1489
          %1731 = vmatmul.mubr.bf16.gmra.mrb[0].mxu0 %v1377
          %v1732 = vpop.f32.mrb[0].mxu0
          %v1733 = vadd.f32 %v1552, %v1732
          %v1734 = vpop.f32.mrb[0].mxu0
          %v1735 = vpop.f32.mrb[0].mxu0
          %v1736 = vadd.f32 %v1552, %v1735
          %v1737 = vpop.f32.mrb[0].mxu0
          %1738 = vmatprep.mubr.bf16.mxu0 %v1490
          %1739 = vmatmul.mubr.bf16.gmra.mrb[0].mxu0 %v1378
          %v1740 = vpop.f32.mrb[0].mxu0
          %v1741 = vadd.f32 %v1552, %v1740
          %v1742 = vpop.f32.mrb[0].mxu0
          %v1743 = vpop.f32.mrb[0].mxu0
          %v1744 = vadd.f32 %v1552, %v1743
          %v1745 = vpop.f32.mrb[0].mxu0
          %1746 = vmatprep.mubr.bf16.mxu0 %v1491
          %1747 = vmatmul.mubr.bf16.gmra.mrb[0].mxu0 %v1379
          %v1748 = vpop.f32.mrb[0].mxu0
          %v1749 = vadd.f32 %v1552, %v1748
          %v1750 = vpop.f32.mrb[0].mxu0
          %v1751 = vpop.f32.mrb[0].mxu0
          %v1752 = vadd.f32 %v1552, %v1751
          %v1753 = vpop.f32.mrb[0].mxu0
          %1754 = vmatprep.mubr.bf16.mxu0 %v1492
          %1755 = vmatmul.mubr.bf16.gmra.mrb[0].mxu0 %v1380
          %v1756 = vpop.f32.mrb[0].mxu0
          %v1757 = vadd.f32 %v1552, %v1756
          %v1758 = vpop.f32.mrb[0].mxu0
          %v1759 = vpop.f32.mrb[0].mxu0
          %v1760 = vadd.f32 %v1552, %v1759
          %v1761 = vpop.f32.mrb[0].mxu0
          %1762 = vmatprep.mubr.bf16.mxu0 %v1493
          %1763 = vmatmul.mubr.bf16.gmra.mrb[0].mxu0 %v1381
          %v1764 = vpop.f32.mrb[0].mxu0
          %v1765 = vadd.f32 %v1552, %v1764
          %v1766 = vpop.f32.mrb[0].mxu0
          %v1767 = vpop.f32.mrb[0].mxu0
          %v1768 = vadd.f32 %v1552, %v1767
          %v1769 = vpop.f32.mrb[0].mxu0
          %1770 = vmatprep.mubr.bf16.mxu0 %v1494
          %1771 = vmatmul.mubr.bf16.gmra.mrb[0].mxu0 %v1382
          %v1772 = vpop.f32.mrb[0].mxu0
          %v1773 = vadd.f32 %v1552, %v1772
          %v1774 = vpop.f32.mrb[0].mxu0
          %v1775 = vpop.f32.mrb[0].mxu0
          %v1776 = vadd.f32 %v1552, %v1775
          %v1777 = vpop.f32.mrb[0].mxu0
          %1778 = vmatprep.mubr.bf16.mxu0 %v1495
          %1779 = vmatmul.mubr.bf16.gmra.mrb[0].mxu0 %v1383
          %v1780 = vpop.f32.mrb[0].mxu0
          %v1781 = vadd.f32 %v1552, %v1780
          %v1782 = vpop.f32.mrb[0].mxu0
          %v1783 = vpop.f32.mrb[0].mxu0
          %v1784 = vadd.f32 %v1552, %v1783
          %v1785 = vpop.f32.mrb[0].mxu0
          %1786 = vmatprep.mubr.bf16.mxu0 %v1496
          %1787 = vmatmul.mubr.bf16.gmra.mrb[0].mxu0 %v1384
          %v1788 = vpop.f32.mrb[0].mxu0
          %v1789 = vadd.f32 %v1552, %v1788
          %v1790 = vpop.f32.mrb[0].mxu0
          %v1791 = vpop.f32.mrb[0].mxu0
          %v1792 = vadd.f32 %v1552, %v1791
          %v1793 = vpop.f32.mrb[0].mxu0
          %1794 = vmatprep.mubr.bf16.mxu0 %v1497
          %1795 = vmatmul.mubr.bf16.gmra.mrb[0].mxu0 %v1385
          %v1796 = vpop.f32.mrb[0].mxu0
          %v1797 = vadd.f32 %v1552, %v1796
          %v1798 = vpop.f32.mrb[0].mxu0
          %v1799 = vpop.f32.mrb[0].mxu0
          %v1800 = vadd.f32 %v1552, %v1799
          %v1801 = vpop.f32.mrb[0].mxu0
          %1802 = vmatprep.mubr.bf16.mxu0 %v1498
          %1803 = vmatmul.mubr.bf16.gmra.mrb[0].mxu0 %v1386
          %v1804 = vpop.f32.mrb[0].mxu0
          %v1805 = vadd.f32 %v1552, %v1804
          %v1806 = vpop.f32.mrb[0].mxu0
          %v1807 = vpop.f32.mrb[0].mxu0
          %v1808 = vadd.f32 %v1552, %v1807
          %v1809 = vpop.f32.mrb[0].mxu0
          %1810 = vdwg.mxu0
          %v1811 = vmax.f32 %v1685, 0.0
          %v1812 = vmax.f32 %v1688, 0.0
          %v1813 = vmax.f32 %v1693, 0.0
          %v1814 = vmax.f32 %v1696, 0.0
          %v1815 = vmax.f32 %v1701, 0.0
          %v1816 = vmax.f32 %v1704, 0.0
          %v1817 = vmax.f32 %v1709, 0.0
          %v1818 = vmax.f32 %v1712, 0.0
          %v1819 = vmax.f32 %v1717, 0.0
          %v1820 = vmax.f32 %v1720, 0.0
          %v1821 = vmax.f32 %v1725, 0.0
          %v1822 = vmax.f32 %v1728, 0.0
          %v1823 = vmax.f32 %v1733, 0.0
          %v1824 = vmax.f32 %v1736, 0.0
          %v1825 = vmax.f32 %v1741, 0.0
          %v1826 = vmax.f32 %v1744, 0.0
          %v1827 = vmax.f32 %v1749, 0.0
          %v1828 = vmax.f32 %v1752, 0.0
          %v1829 = vmax.f32 %v1757, 0.0
          %v1830 = vmax.f32 %v1760, 0.0
          %v1831 = vmax.f32 %v1765, 0.0
          %v1832 = vmax.f32 %v1768, 0.0
          %v1833 = vmax.f32 %v1773, 0.0
          %v1834 = vmax.f32 %v1776, 0.0
          %v1835 = vmax.f32 %v1781, 0.0
          %v1836 = vmax.f32 %v1784, 0.0
          %v1837 = vmax.f32 %v1789, 0.0
          %v1838 = vmax.f32 %v1792, 0.0
          %v1839 = vmax.f32 %v1797, 0.0
          %v1840 = vmax.f32 %v1800, 0.0
          %v1841 = vmax.f32 %v1805, 0.0
          %v1842 = vmax.f32 %v1808, 0.0
          %v1843 = vpack.c.bf16 %v1812, %v1811
          %v1844 = vpack.c.bf16 %v1814, %v1813
          %v1845 = vpack.c.bf16 %v1816, %v1815
          %v1846 = vpack.c.bf16 %v1818, %v1817
          %v1847 = vpack.c.bf16 %v1820, %v1819
          %v1848 = vpack.c.bf16 %v1822, %v1821
          %v1849 = vpack.c.bf16 %v1824, %v1823
          %v1850 = vpack.c.bf16 %v1826, %v1825
          %v1851 = vpack.c.bf16 %v1828, %v1827
          %v1852 = vpack.c.bf16 %v1830, %v1829
          %v1853 = vpack.c.bf16 %v1832, %v1831
          %v1854 = vpack.c.bf16 %v1834, %v1833
          %v1855 = vpack.c.bf16 %v1836, %v1835
          %v1856 = vpack.c.bf16 %v1838, %v1837
          %v1857 = vpack.c.bf16 %v1840, %v1839
          %v1858 = vpack.c.bf16 %v1842, %v1841
          %v1875 = vunpack.c.l.b16 %v1843
          %v1876 = vunpack.c.h.b16 %v1843
          %v1877 = vunpack.c.l.b16 %v1844
          %v1878 = vunpack.c.h.b16 %v1844
          %v1879 = vunpack.c.l.b16 %v1845
          %v1880 = vunpack.c.h.b16 %v1845
          %v1881 = vunpack.c.l.b16 %v1846
          %v1882 = vunpack.c.h.b16 %v1846
          %v1883 = vunpack.c.l.b16 %v1847
          %v1884 = vunpack.c.h.b16 %v1847
          %v1885 = vunpack.c.l.b16 %v1848
          %v1886 = vunpack.c.h.b16 %v1848
          %v1887 = vunpack.c.l.b16 %v1849
          %v1888 = vunpack.c.h.b16 %v1849
          %v1889 = vunpack.c.l.b16 %v1850
          %v1890 = vunpack.c.h.b16 %v1850
          %v1891 = vunpack.c.l.b16 %v1851
          %v1892 = vunpack.c.h.b16 %v1851
          %v1893 = vunpack.c.l.b16 %v1852
          %v1894 = vunpack.c.h.b16 %v1852
          %v1895 = vunpack.c.l.b16 %v1853
          %v1896 = vunpack.c.h.b16 %v1853
          %v1897 = vunpack.c.l.b16 %v1854
          %v1898 = vunpack.c.h.b16 %v1854
          %v1899 = vunpack.c.l.b16 %v1855
          %v1900 = vunpack.c.h.b16 %v1855
          %v1901 = vunpack.c.l.b16 %v1856
          %v1902 = vunpack.c.h.b16 %v1856
          %v1903 = vunpack.c.l.b16 %v1857
          %v1904 = vunpack.c.h.b16 %v1857
          %v1905 = vunpack.c.l.b16 %v1858
          %v1906 = vunpack.c.h.b16 %v1858
          %v1907 = vpack.c.b16 %v1875, %v1875
          %v1908 = vpack.c.b16 %v1876, %v1876
          %v1909 = vpack.c.b16 %v1877, %v1877
          %v1910 = vpack.c.b16 %v1878, %v1878
          %v1911 = vpack.c.b16 %v1879, %v1879
          %v1912 = vpack.c.b16 %v1880, %v1880
          %v1913 = vpack.c.b16 %v1881, %v1881
          %v1914 = vpack.c.b16 %v1882, %v1882
          %v1915 = vpack.c.b16 %v1883, %v1883
          %v1916 = vpack.c.b16 %v1884, %v1884
          %v1917 = vpack.c.b16 %v1885, %v1885
          %v1918 = vpack.c.b16 %v1886, %v1886
          %v1919 = vpack.c.b16 %v1887, %v1887
          %v1920 = vpack.c.b16 %v1888, %v1888
          %v1921 = vpack.c.b16 %v1889, %v1889
          %v1922 = vpack.c.b16 %v1890, %v1890
          %v1923 = vpack.c.b16 %v1891, %v1891
          %v1924 = vpack.c.b16 %v1892, %v1892
          %v1925 = vpack.c.b16 %v1893, %v1893
          %v1926 = vpack.c.b16 %v1894, %v1894
          %v1927 = vpack.c.b16 %v1895, %v1895
          %v1928 = vpack.c.b16 %v1896, %v1896
          %v1929 = vpack.c.b16 %v1897, %v1897
          %v1930 = vpack.c.b16 %v1898, %v1898
          %v1931 = vpack.c.b16 %v1899, %v1899
          %v1932 = vpack.c.b16 %v1900, %v1900
          %v1933 = vpack.c.b16 %v1901, %v1901
          %v1934 = vpack.c.b16 %v1902, %v1902
          %v1935 = vpack.c.b16 %v1903, %v1903
          %v1936 = vpack.c.b16 %v1904, %v1904
          %v1937 = vpack.c.b16 %v1905, %v1905
          %v1938 = vpack.c.b16 %v1906, %v1906
          %1971 = vst [vmem:[%s495] sm:$0xf] %v1907
          %1972 = vst [vmem:[%s495 + $0x4] sm:$0xf] %v1908
          %1973 = vst [vmem:[%s495 + $0x8] sm:$0xf] %v1909
          %1974 = vst [vmem:[%s495 + $0xc] sm:$0xf] %v1910
          %1975 = vst [vmem:[%s495 + $0x10] sm:$0xf] %v1911
          %1976 = vst [vmem:[%s495 + $0x14] sm:$0xf] %v1912
          %1977 = vst [vmem:[%s495 + $0x18] sm:$0xf] %v1913
          %1978 = vst [vmem:[%s495 + $0x1c] sm:$0xf] %v1914
          %1979 = vst [vmem:[%s495 + $0x20] sm:$0xf] %v1915
          %1980 = vst [vmem:[%s495 + $0x24] sm:$0xf] %v1916
          %1981 = vst [vmem:[%s495 + $0x28] sm:$0xf] %v1917
          %1982 = vst [vmem:[%s495 + $0x2c] sm:$0xf] %v1918
          %1983 = vst [vmem:[%s495 + $0x30] sm:$0xf] %v1919
          %1984 = vst [vmem:[%s495 + $0x34] sm:$0xf] %v1920
          %1985 = vst [vmem:[%s495 + $0x38] sm:$0xf] %v1921
          %1986 = vst [vmem:[%s495 + $0x3c] sm:$0xf] %v1922
          %1987 = vst [vmem:[%s495 + $0x40] sm:$0xf] %v1923
          %1988 = vst [vmem:[%s495 + $0x44] sm:$0xf] %v1924
          %1989 = vst [vmem:[%s495 + $0x48] sm:$0xf] %v1925
          %1990 = vst [vmem:[%s495 + $0x4c] sm:$0xf] %v1926
          %1991 = vst [vmem:[%s495 + $0x50] sm:$0xf] %v1927
          %1992 = vst [vmem:[%s495 + $0x54] sm:$0xf] %v1928
          %1993 = vst [vmem:[%s495 + $0x58] sm:$0xf] %v1929
          %1994 = vst [vmem:[%s495 + $0x5c] sm:$0xf] %v1930
          %1995 = vst [vmem:[%s495 + $0x60] sm:$0xf] %v1931
          %1996 = vst [vmem:[%s495 + $0x64] sm:$0xf] %v1932
          %1997 = vst [vmem:[%s495 + $0x68] sm:$0xf] %v1933
          %1998 = vst [vmem:[%s495 + $0x6c] sm:$0xf] %v1934
          %1999 = vst [vmem:[%s495 + $0x70] sm:$0xf] %v1935
          %2000 = vst [vmem:[%s495 + $0x74] sm:$0xf] %v1936
          %2001 = vst [vmem:[%s495 + $0x78] sm:$0xf] %v1937
          %2002 = vst [vmem:[%s495 + $0x7c] sm:$0xf] %v1938
        $region90: #{graphsage_forward.5} parent=77 // pred_fallthru
          _
        %s2003 = smul.u32 32, %s21
        %p2004 = scmp.lt.s32.totalorder %s2003, 63
        %s2005 = scalar_select %p2004, %s2003, 63
        %s2006 = smul.addr %s2005, 4
        %s2007 = scalar_lea.vmem %s6, %s2006
        // Predicated region
        $region91: #{graphsage_forward.5} parent=77 // pred_check
          %p2008 = pneg %p195
        $region92: #{graphsage_forward.5} parent=77 // pred_check_branch
          %2010 = sbr.rel (%p2008) target = $region94
        $region93: #{graphsage_forward.5} parent=77 // pred_region
          %s2011 = smul.u32 32, %s21
        $region94: #{graphsage_forward.5} parent=77 // pred_fallthru
          _
      $region78: #{graphsage_forward.5} parent=5 // pred_fallthru
        _
      %p2012 = scmp.le.s32.totalorder 2, %s12
      // Predicated region
      $region95: #{graphsage_forward.5} parent=5 // pred_check
        %p2013 = pneg %p2012
      $region96: #{graphsage_forward.5} parent=5 // pred_check_branch
        %2015 = sbr.rel (%p2013) target = $region98
      $region97: #{graphsage_forward.5} parent=5 // pred_region
        %s2016 = ssub.s32 %s12, 2
        // Predicated region
        $region99: #{graphsage_forward.5} parent=97 // pred_check
          %p2017 = pneg %p201
        $region100: #{graphsage_forward.5} parent=97 // pred_check_branch
          %2019 = sbr.rel (%p2017) target = $region102
        $region101: #{graphsage_forward.5} parent=97 // pred_region
          %s2020 = smul.u32 32, %s23
          %p2021 = scmp.lt.s32.totalorder %s2020, 63
          %s2022 = scalar_select %p2021, %s2020, 63
          %s2023 = smul.addr %s2022, 4
          %s2024 = scalar_lea.vmem %s6, %s2023
        $region102: #{graphsage_forward.5} parent=97 // pred_fallthru
          _
      $region98: #{graphsage_forward.5} parent=5 // pred_fallthru
        _
    $region6: #{graphsage_forward.5} parent=1 // loop_footer
      %s16 = sadd.s32 1, %s12
    $region7: #{graphsage_forward.5} parent=1 // loop_footer_branch
      %11 = sbr.rel target = $region3
    $region8: #{graphsage_forward.5} parent=1 // loop_exit
      _

// kernel: graphsage_forward.4
$region0: #{graphsage_forward.4}
  #allocation0 [shape = 'u32[]', space=smem, size = 0x4, offset = 0x4, fixed_abs, tag = 'smem constant byte address 0x4 - core index']
  #allocation1 [shape = 'u32[144,128]{1,0:T(1,128)}', space=vmem, size = 0x12000, scoped, tag = 'internal scratch']
  #allocation2 [shape = 'f32[256,128]{1,0:T(8,128)}', space=vmem, size = 0x20000, scoped, tag = 'scratch operand']
  %s0 = inlined_call_operand.vmem [shape: bf16[768,512], index: 0, kind: input, shape index: {}]
  %s1 = inlined_call_operand.vmem [shape: bf16[512,128], index: 1, kind: input, shape index: {}]
  %s2 = inlined_call_operand.vmem [shape: bf16[768,128], index: 2, kind: input, shape index: {}]
  %s3 = inlined_call_operand.vmem [shape: f32[768,1], index: 3, kind: input, shape index: {}]
  %s4 = inlined_call_operand.vmem [shape: bf16[256,128], index: 4, kind: input, shape index: {}]
  %s5 = inlined_call_operand.vmem [shape: f32[1,128], index: 5, kind: input, shape index: {}]
  %s6 = inlined_call_operand.vmem [shape: bf16[768,128], index: 6, kind: output, shape index: {}]
  %s7 = sld [smem:[#allocation0]]
  $region65: #{graphsage_forward.4} parent=0
    _
  %s9 = ssub.s32 1, %s7
  %s10 = scalar_select 0, %s9, %s7
  loop: start=0, step=1, limit=5
  $region2: #{graphsage_forward.4} parent=0 // loop_pre_header
    _
  $region3: #{graphsage_forward.4} parent=0 // loop_header
    %s12 = sphi 0, %s16
    %p13 = scmp.ge.s32.totalorder %s12, 5
    %s19 = sphi 0, %s31
    %s20 = sphi 0, %s27
    %s21 = sphi 0, %s19
    %s22 = sphi 0, %s20
    %s23 = sphi 0, %s21
    %s24 = sphi 0, %s22
    %s36 = sphi 0, %s38
    %s39 = sphi 0, %s36
    %s40 = sphi 0, %s39
    %s56 = sphi 0, %s40
    %s62 = sphi 0, %s64
    %s65 = sphi 0, %s62
    %s66 = sphi 0, %s65
    %s82 = sphi 0, %s66
    %s88 = sphi 0, %s90
    %s91 = sphi 0, %s88
    %s92 = sphi 0, %s91
    %s108 = sphi 0, %s92
    %s114 = sphi 0, %s116
    %s117 = sphi 0, %s114
    %s118 = sphi 0, %s117
    %s134 = sphi 0, %s118
    %s138 = sphi 0, %s138
    %s140 = sphi 0, %s138
    %s141 = sphi 0, %s140
    %s155 = sphi 0, %s141
    %s159 = sphi 0, %s159
    %s161 = sphi 0, %s159
    %s162 = sphi 0, %s161
    %s176 = sphi 0, %s162
    %s182 = sphi 0, %s184
    %s185 = sphi 0, %s182
    %s186 = sphi 0, %s185
    %s202 = sphi 0, %s186
  $region4: #{graphsage_forward.4} parent=0 // loop_header_branch
    %15 = sbr.rel (%p13) target = $region8
  $region5: #{graphsage_forward.4} parent=0 // loop_body
    %s17 = ssub.s32 %s12, 1
    %s18 = ssub.s32 %s12, 2
    %s25 = sadd.s32 1, %s20
    %p26 = scmp.ge.s32.totalorder %s25, 1
    %s27 = scalar_select %p26, 0, %s25
    %s28 = sadd.s32 1, %s19
    %s29 = scalar_select %p26, %s28, %s19
    %p30 = scmp.ge.s32.totalorder %s29, 3
    %s31 = scalar_select %p30, 0, %s29
    %s32 = ssub.s32 %s19, %s31
    %s33 = ssub.s32 %s20, %s27
    %s34 = sor.u32 %s32, %s33
    %p35 = scmp.eq.s32.totalorder %s34, 0
    %s37 = sadd.s32 %s36, 1
    %s38 = scalar_select %p35, %s36, %s37
    %p41 = pneg %p35
    %p42 = scmp.eq.s32.totalorder %s12, 2
    %p43 = por %p41, %p42
    %p44 = scmp.ne.s32.totalorder %s36, %s39
    %p45 = scmp.eq.s32.totalorder %s12, 0
    %p46 = por %p44, %p45
    %p47 = scmp.ne.s32.totalorder %s36, %s39
    %p48 = scmp.eq.s32.totalorder %s17, 2
    %p49 = por %p47, %p48
    %p50 = scmp.ne.s32.totalorder %s39, %s40
    %p51 = scmp.eq.s32.totalorder %s17, 0
    %p52 = por %p50, %p51
    %p53 = scmp.ne.s32.totalorder %s39, %s40
    %p54 = scmp.eq.s32.totalorder %s18, 2
    %p55 = por %p53, %p54
    %p57 = scmp.ne.s32.totalorder %s40, %s56
    %p58 = scmp.eq.s32.totalorder %s18, 0
    %p59 = por %p57, %p58
    %s60 = ssub.s32 %s20, %s27
    %p61 = scmp.eq.s32.totalorder %s60, 0
    %s63 = sadd.s32 %s62, 1
    %s64 = scalar_select %p61, %s62, %s63
    %p67 = pneg %p61
    %p68 = scmp.eq.s32.totalorder %s12, 2
    %p69 = por %p67, %p68
    %p70 = scmp.ne.s32.totalorder %s62, %s65
    %p71 = scmp.eq.s32.totalorder %s12, 0
    %p72 = por %p70, %p71
    %p73 = scmp.ne.s32.totalorder %s62, %s65
    %p74 = scmp.eq.s32.totalorder %s17, 2
    %p75 = por %p73, %p74
    %p76 = scmp.ne.s32.totalorder %s65, %s66
    %p77 = scmp.eq.s32.totalorder %s17, 0
    %p78 = por %p76, %p77
    %p79 = scmp.ne.s32.totalorder %s65, %s66
    %p80 = scmp.eq.s32.totalorder %s18, 2
    %p81 = por %p79, %p80
    %p83 = scmp.ne.s32.totalorder %s66, %s82
    %p84 = scmp.eq.s32.totalorder %s18, 0
    %p85 = por %p83, %p84
    %s86 = ssub.s32 %s19, %s31
    %p87 = scmp.eq.s32.totalorder %s86, 0
    %s89 = sadd.s32 %s88, 1
    %s90 = scalar_select %p87, %s88, %s89
    %p93 = pneg %p87
    %p94 = scmp.eq.s32.totalorder %s12, 2
    %p95 = por %p93, %p94
    %p96 = scmp.ne.s32.totalorder %s88, %s91
    %p97 = scmp.eq.s32.totalorder %s12, 0
    %p98 = por %p96, %p97
    %p99 = scmp.ne.s32.totalorder %s88, %s91
    %p100 = scmp.eq.s32.totalorder %s17, 2
    %p101 = por %p99, %p100
    %p102 = scmp.ne.s32.totalorder %s91, %s92
    %p103 = scmp.eq.s32.totalorder %s17, 0
    %p104 = por %p102, %p103
    %p105 = scmp.ne.s32.totalorder %s91, %s92
    %p106 = scmp.eq.s32.totalorder %s18, 2
    %p107 = por %p105, %p106
    %p109 = scmp.ne.s32.totalorder %s92, %s108
    %p110 = scmp.eq.s32.totalorder %s18, 0
    %p111 = por %p109, %p110
    %s112 = ssub.s32 %s19, %s31
    %p113 = scmp.eq.s32.totalorder %s112, 0
    %s115 = sadd.s32 %s114, 1
    %s116 = scalar_select %p113, %s114, %s115
    %p119 = pneg %p113
    %p120 = scmp.eq.s32.totalorder %s12, 2
    %p121 = por %p119, %p120
    %p122 = scmp.ne.s32.totalorder %s114, %s117
    %p123 = scmp.eq.s32.totalorder %s12, 0
    %p124 = por %p122, %p123
    %p125 = scmp.ne.s32.totalorder %s114, %s117
    %p126 = scmp.eq.s32.totalorder %s17, 2
    %p127 = por %p125, %p126
    %p128 = scmp.ne.s32.totalorder %s117, %s118
    %p129 = scmp.eq.s32.totalorder %s17, 0
    %p130 = por %p128, %p129
    %p131 = scmp.ne.s32.totalorder %s117, %s118
    %p132 = scmp.eq.s32.totalorder %s18, 2
    %p133 = por %p131, %p132
    %p135 = scmp.ne.s32.totalorder %s118, %s134
    %p136 = scmp.eq.s32.totalorder %s18, 0
    %p137 = por %p135, %p136
    %s139 = sadd.s32 %s138, 1
    %p142 = scmp.eq.s32.totalorder %s12, 2
    %p143 = scmp.ne.s32.totalorder %s138, %s140
    %p144 = scmp.eq.s32.totalorder %s12, 0
    %p145 = por %p143, %p144
    %p146 = scmp.ne.s32.totalorder %s138, %s140
    %p147 = scmp.eq.s32.totalorder %s17, 2
    %p148 = por %p146, %p147
    %p149 = scmp.ne.s32.totalorder %s140, %s141
    %p150 = scmp.eq.s32.totalorder %s17, 0
    %p151 = por %p149, %p150
    %p152 = scmp.ne.s32.totalorder %s140, %s141
    %p153 = scmp.eq.s32.totalorder %s18, 2
    %p154 = por %p152, %p153
    %p156 = scmp.ne.s32.totalorder %s141, %s155
    %p157 = scmp.eq.s32.totalorder %s18, 0
    %p158 = por %p156, %p157
    %s160 = sadd.s32 %s159, 1
    %p163 = scmp.eq.s32.totalorder %s12, 2
    %p164 = scmp.ne.s32.totalorder %s159, %s161
    %p165 = scmp.eq.s32.totalorder %s12, 0
    %p166 = por %p164, %p165
    %p167 = scmp.ne.s32.totalorder %s159, %s161
    %p168 = scmp.eq.s32.totalorder %s17, 2
    %p169 = por %p167, %p168
    %p170 = scmp.ne.s32.totalorder %s161, %s162
    %p171 = scmp.eq.s32.totalorder %s17, 0
    %p172 = por %p170, %p171
    %p173 = scmp.ne.s32.totalorder %s161, %s162
    %p174 = scmp.eq.s32.totalorder %s18, 2
    %p175 = por %p173, %p174
    %p177 = scmp.ne.s32.totalorder %s162, %s176
    %p178 = scmp.eq.s32.totalorder %s18, 0
    %p179 = por %p177, %p178
    %s180 = ssub.s32 %s19, %s31
    %p181 = scmp.eq.s32.totalorder %s180, 0
    %s183 = sadd.s32 %s182, 1
    %s184 = scalar_select %p181, %s182, %s183
    %p187 = pneg %p181
    %p188 = scmp.eq.s32.totalorder %s12, 2
    %p189 = por %p187, %p188
    %p190 = scmp.ne.s32.totalorder %s182, %s185
    %p191 = scmp.eq.s32.totalorder %s12, 0
    %p192 = por %p190, %p191
    %p193 = scmp.ne.s32.totalorder %s182, %s185
    %p194 = scmp.eq.s32.totalorder %s17, 2
    %p195 = por %p193, %p194
    %p196 = scmp.ne.s32.totalorder %s185, %s186
    %p197 = scmp.eq.s32.totalorder %s17, 0
    %p198 = por %p196, %p197
    %p199 = scmp.ne.s32.totalorder %s185, %s186
    %p200 = scmp.eq.s32.totalorder %s18, 2
    %p201 = por %p199, %p200
    %p203 = scmp.ne.s32.totalorder %s186, %s202
    %p204 = scmp.eq.s32.totalorder %s18, 0
    %p205 = por %p203, %p204
    %p206 = scmp.le.s32.totalorder 1, %s12
    %p207 = scmp.lt.s32.totalorder %s12, 4
    %p208 = pnand %p206, %p207
    %p209 = pneg %p208
    // Predicated region
    $region9: #{graphsage_forward.4} parent=5 // pred_check
      _
    $region10: #{graphsage_forward.4} parent=5 // pred_check_branch
      %211 = sbr.rel (%p208) target = $region12
    $region11: #{graphsage_forward.4} parent=5 // pred_region
      %s212 = ssub.s32 %s12, 1
      // Predicated region
      $region13: #{graphsage_forward.4} parent=11 // pred_check
        %p213 = pneg %p78
      $region14: #{graphsage_forward.4} parent=11 // pred_check_branch
        %215 = sbr.rel (%p213) target = $region16
      $region15: #{graphsage_forward.4} parent=11 // pred_region
        %s216 = smul.u32 64, %s22
        %p217 = scmp.lt.s32.totalorder %s216, 63
        %s218 = scalar_select %p217, %s216, 63
        %s219 = smul.addr %s218, 4
        %s220 = scalar_lea.vmem %s1, %s219
        %s221 = smul.u32 64, %s22
      $region16: #{graphsage_forward.4} parent=11 // pred_fallthru
        _
      // Predicated region
      $region17: #{graphsage_forward.4} parent=11 // pred_check
        %p222 = pneg %p151
      $region18: #{graphsage_forward.4} parent=11 // pred_check_branch
        %224 = sbr.rel (%p222) target = $region20
      $region19: #{graphsage_forward.4} parent=11 // pred_region
        _
      $region20: #{graphsage_forward.4} parent=11 // pred_fallthru
        _
      // Predicated region
      $region21: #{graphsage_forward.4} parent=11 // pred_check
        %p225 = pneg %p172
      $region22: #{graphsage_forward.4} parent=11 // pred_check_branch
        %227 = sbr.rel (%p225) target = $region24
      $region23: #{graphsage_forward.4} parent=11 // pred_region
        _
      $region24: #{graphsage_forward.4} parent=11 // pred_fallthru
        _
    $region12: #{graphsage_forward.4} parent=5 // pred_fallthru
      _
    %p228 = scmp.lt.s32.totalorder %s12, 3
    // Predicated region
    $region25: #{graphsage_forward.4} parent=5 // pred_check
      %p229 = pneg %p228
    $region26: #{graphsage_forward.4} parent=5 // pred_check_branch
      %231 = sbr.rel (%p229) target = $region28
    $region27: #{graphsage_forward.4} parent=5 // pred_region
      // Predicated region
      $region29: #{graphsage_forward.4} parent=27 // pred_check
        %p232 = pneg %p46
      $region30: #{graphsage_forward.4} parent=27 // pred_check_branch
        %234 = sbr.rel (%p232) target = $region32
      $region31: #{graphsage_forward.4} parent=27 // pred_region
        %s235 = smul.u32 32, %s19
        %s236 = smul.u32 4, %s20
        %p237 = scmp.lt.s32.totalorder %s235, 95
        %s238 = scalar_select %p237, %s235, 95
        %p239 = scmp.lt.s32.totalorder %s236, 3
        %s240 = scalar_select %p239, %s236, 3
        %s241 = smul.addr %s238, 4
        %s242 = sadd.s32 %s240, %s241
        %s243 = smul.addr %s242, 4
        %s244 = scalar_lea.vmem %s0, %s243
        %s245 = smul.u32 32, %s19
        %s246 = smul.u32 4, %s20
      $region32: #{graphsage_forward.4} parent=27 // pred_fallthru
        _
      // Predicated region
      $region33: #{graphsage_forward.4} parent=27 // pred_check
        %p247 = pneg %p98
      $region34: #{graphsage_forward.4} parent=27 // pred_check_branch
        %249 = sbr.rel (%p247) target = $region36
      $region35: #{graphsage_forward.4} parent=27 // pred_region
        %s250 = smul.u32 32, %s19
        %p251 = scmp.lt.s32.totalorder %s250, 95
        %s252 = scalar_select %p251, %s250, 95
        %s253 = smul.addr %s252, 4
        %s254 = scalar_lea.vmem %s2, %s253
        %s255 = smul.u32 32, %s19
      $region36: #{graphsage_forward.4} parent=27 // pred_fallthru
        _
      // Predicated region
      $region37: #{graphsage_forward.4} parent=27 // pred_check
        %p256 = pneg %p124
      $region38: #{graphsage_forward.4} parent=27 // pred_check_branch
        %258 = sbr.rel (%p256) target = $region40
      $region39: #{graphsage_forward.4} parent=27 // pred_region
        %s259 = smul.u32 32, %s19
        %p260 = scmp.lt.s32.totalorder %s259, 95
        %s261 = scalar_select %p260, %s259, 95
        %s262 = smul.addr %s261, 8
        %s263 = scalar_lea.vmem %s3, %s262
        %s264 = smul.u32 32, %s19
      $region40: #{graphsage_forward.4} parent=27 // pred_fallthru
        _
    $region28: #{graphsage_forward.4} parent=5 // pred_fallthru
      _
    %p265 = scmp.le.s32.totalorder 1, %s12
    %p266 = scmp.lt.s32.totalorder %s12, 4
    %p267 = pnand %p265, %p266
    %p268 = pneg %p267
    // Predicated region
    $region41: #{graphsage_forward.4} parent=5 // pred_check
      _
    $region42: #{graphsage_forward.4} parent=5 // pred_check_branch
      %270 = sbr.rel (%p267) target = $region44
    $region43: #{graphsage_forward.4} parent=5 // pred_region
      %s271 = ssub.s32 %s12, 1
      %s272 = smul.u32 32, %s21
      %s273 = smul.u32 4, %s22
      %p274 = scmp.lt.s32.totalorder %s272, 95
      %s275 = scalar_select %p274, %s272, 95
      %p276 = scmp.lt.s32.totalorder %s273, 3
      %s277 = scalar_select %p276, %s273, 3
      %s278 = smul.addr %s275, 4
      %s279 = sadd.s32 %s277, %s278
      %s280 = smul.addr %s279, 4
      %s281 = scalar_lea.vmem %s0, %s280
      %p282 = pneg %p52
      %p283 = pneg %p49
      %s284 = smul.u32 64, %s22
      %p285 = scmp.lt.s32.totalorder %s284, 63
      %s286 = scalar_select %p285, %s284, 63
      %s287 = smul.addr %s286, 4
      %s288 = scalar_lea.vmem %s1, %s287
      %p289 = pneg %p78
      %p290 = pneg %p75
      %s291 = smul.u32 32, %s21
      %p292 = scmp.lt.s32.totalorder %s291, 95
      %s293 = scalar_select %p292, %s291, 95
      %s294 = smul.addr %s293, 4
      %s295 = scalar_lea.vmem %s2, %s294
      %p296 = pneg %p104
      %p297 = pneg %p101
      %s298 = smul.u32 32, %s21
      %p299 = scmp.lt.s32.totalorder %s298, 95
      %s300 = scalar_select %p299, %s298, 95
      %s301 = smul.addr %s300, 8
      %s302 = scalar_lea.vmem %s3, %s301
      %p303 = pneg %p130
      %p304 = pneg %p127
      %p305 = pneg %p151
      %p306 = pneg %p148
      %p307 = pneg %p172
      %p308 = pneg %p169
      %p309 = pneg %p198
      %p310 = pneg %p195
      %s311 = smul.u32 32, %s21
      %p312 = scmp.lt.s32.totalorder %s311, 95
      %s313 = scalar_select %p312, %s311, 95
      %s314 = smul.addr %s313, 4
      %s315 = scalar_lea.vmem %s6, %s314
      %s316 = smul.u32 32, %s21
      %s317 = smul.u32 4, %s22
      %p318 = scmp.lt.s32.totalorder %s316, 95
      %s319 = scalar_select %p318, %s316, 95
      %p320 = scmp.lt.s32.totalorder %s317, 3
      %s321 = scalar_select %p320, %s317, 3
      %s322 = smul.addr %s319, 4
      %s323 = sadd.s32 %s321, %s322
      %s324 = smul.addr %s323, 4
      %s325 = scalar_lea.vmem %s0, %s324
      %s326 = smul.u32 32, %s21
      %s327 = smul.u32 4, %s22
      %s328 = smul.u32 64, %s22
      %p329 = scmp.lt.s32.totalorder %s328, 63
      %s330 = scalar_select %p329, %s328, 63
      %s331 = smul.addr %s330, 4
      %s332 = scalar_lea.vmem %s1, %s331
      %s333 = smul.u32 64, %s22
      %s334 = smul.u32 32, %s21
      %p335 = scmp.lt.s32.totalorder %s334, 95
      %s336 = scalar_select %p335, %s334, 95
      %s337 = smul.addr %s336, 4
      %s338 = scalar_lea.vmem %s2, %s337
      %s339 = smul.u32 32, %s21
      %s340 = smul.u32 32, %s21
      %p341 = scmp.lt.s32.totalorder %s340, 95
      %s342 = scalar_select %p341, %s340, 95
      %s343 = smul.addr %s342, 8
      %s344 = scalar_lea.vmem %s3, %s343
      %s345 = smul.u32 32, %s21
      %s346 = smul.u32 32, %s21
      %p347 = scmp.lt.s32.totalorder %s346, 95
      %s348 = scalar_select %p347, %s346, 95
      %s349 = smul.addr %s348, 4
      %s350 = scalar_lea.vmem %s6, %s349
      %s351 = smul.u32 32, %s21
      %p353 = scmp.eq.s32.totalorder %s22, 0
      // Predicated region
      $region45: #{graphsage_forward.4} parent=43 // pred_check
        %p354 = pneg %p353
      $region46: #{graphsage_forward.4} parent=43 // pred_check_branch
        %356 = sbr.rel (%p354) target = $region48
      $region47: #{graphsage_forward.4} parent=43 // pred_region
        %357 = vst [vmem:[#allocation2] sm:$0xff] 0.0
        %358 = vst [vmem:[#allocation2 + $0x8] sm:$0xff] 0.0
        %359 = vst [vmem:[#allocation2 + $0x10] sm:$0xff] 0.0
        %360 = vst [vmem:[#allocation2 + $0x18] sm:$0xff] 0.0
        %361 = vst [vmem:[#allocation2 + $0x20] sm:$0xff] 0.0
        %362 = vst [vmem:[#allocation2 + $0x28] sm:$0xff] 0.0
        %363 = vst [vmem:[#allocation2 + $0x30] sm:$0xff] 0.0
        %364 = vst [vmem:[#allocation2 + $0x38] sm:$0xff] 0.0
        %365 = vst [vmem:[#allocation2 + $0x40] sm:$0xff] 0.0
        %366 = vst [vmem:[#allocation2 + $0x48] sm:$0xff] 0.0
        %367 = vst [vmem:[#allocation2 + $0x50] sm:$0xff] 0.0
        %368 = vst [vmem:[#allocation2 + $0x58] sm:$0xff] 0.0
        %369 = vst [vmem:[#allocation2 + $0x60] sm:$0xff] 0.0
        %370 = vst [vmem:[#allocation2 + $0x68] sm:$0xff] 0.0
        %371 = vst [vmem:[#allocation2 + $0x70] sm:$0xff] 0.0
        %372 = vst [vmem:[#allocation2 + $0x78] sm:$0xff] 0.0
        %373 = vst [vmem:[#allocation2 + $0x80] sm:$0xff] 0.0
        %374 = vst [vmem:[#allocation2 + $0x88] sm:$0xff] 0.0
        %375 = vst [vmem:[#allocation2 + $0x90] sm:$0xff] 0.0
        %376 = vst [vmem:[#allocation2 + $0x98] sm:$0xff] 0.0
        %377 = vst [vmem:[#allocation2 + $0xa0] sm:$0xff] 0.0
        %378 = vst [vmem:[#allocation2 + $0xa8] sm:$0xff] 0.0
        %379 = vst [vmem:[#allocation2 + $0xb0] sm:$0xff] 0.0
        %380 = vst [vmem:[#allocation2 + $0xb8] sm:$0xff] 0.0
        %381 = vst [vmem:[#allocation2 + $0xc0] sm:$0xff] 0.0
        %382 = vst [vmem:[#allocation2 + $0xc8] sm:$0xff] 0.0
        %383 = vst [vmem:[#allocation2 + $0xd0] sm:$0xff] 0.0
        %384 = vst [vmem:[#allocation2 + $0xd8] sm:$0xff] 0.0
        %385 = vst [vmem:[#allocation2 + $0xe0] sm:$0xff] 0.0
        %386 = vst [vmem:[#allocation2 + $0xe8] sm:$0xff] 0.0
        %387 = vst [vmem:[#allocation2 + $0xf0] sm:$0xff] 0.0
        %388 = vst [vmem:[#allocation2 + $0xf8] sm:$0xff] 0.0
      $region48: #{graphsage_forward.4} parent=43 // pred_fallthru
        _
      %v389 = vld [vmem:[#allocation2] sm:$0xff]
      %v390 = vld [vmem:[#allocation2 + $0x8] sm:$0xff]
      %v391 = vld [vmem:[#allocation2 + $0x10] sm:$0xff]
      %v392 = vld [vmem:[#allocation2 + $0x18] sm:$0xff]
      %v393 = vld [vmem:[#allocation2 + $0x20] sm:$0xff]
      %v394 = vld [vmem:[#allocation2 + $0x28] sm:$0xff]
      %v395 = vld [vmem:[#allocation2 + $0x30] sm:$0xff]
      %v396 = vld [vmem:[#allocation2 + $0x38] sm:$0xff]
      %v397 = vld [vmem:[#allocation2 + $0x40] sm:$0xff]
      %v398 = vld [vmem:[#allocation2 + $0x48] sm:$0xff]
      %v399 = vld [vmem:[#allocation2 + $0x50] sm:$0xff]
      %v400 = vld [vmem:[#allocation2 + $0x58] sm:$0xff]
      %v401 = vld [vmem:[#allocation2 + $0x60] sm:$0xff]
      %v402 = vld [vmem:[#allocation2 + $0x68] sm:$0xff]
      %v403 = vld [vmem:[#allocation2 + $0x70] sm:$0xff]
      %v404 = vld [vmem:[#allocation2 + $0x78] sm:$0xff]
      %v405 = vld [vmem:[#allocation2 + $0x80] sm:$0xff]
      %v406 = vld [vmem:[#allocation2 + $0x88] sm:$0xff]
      %v407 = vld [vmem:[#allocation2 + $0x90] sm:$0xff]
      %v408 = vld [vmem:[#allocation2 + $0x98] sm:$0xff]
      %v409 = vld [vmem:[#allocation2 + $0xa0] sm:$0xff]
      %v410 = vld [vmem:[#allocation2 + $0xa8] sm:$0xff]
      %v411 = vld [vmem:[#allocation2 + $0xb0] sm:$0xff]
      %v412 = vld [vmem:[#allocation2 + $0xb8] sm:$0xff]
      %v413 = vld [vmem:[#allocation2 + $0xc0] sm:$0xff]
      %v414 = vld [vmem:[#allocation2 + $0xc8] sm:$0xff]
      %v415 = vld [vmem:[#allocation2 + $0xd0] sm:$0xff]
      %v416 = vld [vmem:[#allocation2 + $0xd8] sm:$0xff]
      %v417 = vld [vmem:[#allocation2 + $0xe0] sm:$0xff]
      %v418 = vld [vmem:[#allocation2 + $0xe8] sm:$0xff]
      %v419 = vld [vmem:[#allocation2 + $0xf0] sm:$0xff]
      %v420 = vld [vmem:[#allocation2 + $0xf8] sm:$0xff]
      %v421 = vld [vmem:[%s325] sm:$0xff]
      %v422 = vld [vmem:[%s325 + $0x8] sm:$0xff]
      %v423 = vld [vmem:[%s325 + $0x10] sm:$0xff]
      %v424 = vld [vmem:[%s325 + $0x18] sm:$0xff]
      %v425 = vld [vmem:[%s325 + $0x20] sm:$0xff]
      %v426 = vld [vmem:[%s325 + $0x28] sm:$0xff]
      %v427 = vld [vmem:[%s325 + $0x30] sm:$0xff]
      %v428 = vld [vmem:[%s325 + $0x38] sm:$0xff]
      %v429 = vld [vmem:[%s325 + $0x40] sm:$0xff]
      %v430 = vld [vmem:[%s325 + $0x48] sm:$0xff]
      %v431 = vld [vmem:[%s325 + $0x50] sm:$0xff]
      %v432 = vld [vmem:[%s325 + $0x58] sm:$0xff]
      %v433 = vld [vmem:[%s325 + $0x60] sm:$0xff]
      %v434 = vld [vmem:[%s325 + $0x68] sm:$0xff]
      %v435 = vld [vmem:[%s325 + $0x70] sm:$0xff]
      %v436 = vld [vmem:[%s325 + $0x78] sm:$0xff]
      %v437 = vld [vmem:[%s325 + $0x80] sm:$0xff]
      %v438 = vld [vmem:[%s325 + $0x88] sm:$0xff]
      %v439 = vld [vmem:[%s325 + $0x90] sm:$0xff]
      %v440 = vld [vmem:[%s325 + $0x98] sm:$0xff]
      %v441 = vld [vmem:[%s325 + $0xa0] sm:$0xff]
      %v442 = vld [vmem:[%s325 + $0xa8] sm:$0xff]
      %v443 = vld [vmem:[%s325 + $0xb0] sm:$0xff]
      %v444 = vld [vmem:[%s325 + $0xb8] sm:$0xff]
      %v445 = vld [vmem:[%s325 + $0xc0] sm:$0xff]
      %v446 = vld [vmem:[%s325 + $0xc8] sm:$0xff]
      %v447 = vld [vmem:[%s325 + $0xd0] sm:$0xff]
      %v448 = vld [vmem:[%s325 + $0xd8] sm:$0xff]
      %v449 = vld [vmem:[%s325 + $0xe0] sm:$0xff]
      %v450 = vld [vmem:[%s325 + $0xe8] sm:$0xff]
      %v451 = vld [vmem:[%s325 + $0xf0] sm:$0xff]
      %v452 = vld [vmem:[%s325 + $0xf8] sm:$0xff]
      %v453 = vld [vmem:[%s325 + $0x100] sm:$0xff]
      %v454 = vld [vmem:[%s325 + $0x108] sm:$0xff]
      %v455 = vld [vmem:[%s325 + $0x110] sm:$0xff]
      %v456 = vld [vmem:[%s325 + $0x118] sm:$0xff]
      %v457 = vld [vmem:[%s325 + $0x120] sm:$0xff]
      %v458 = vld [vmem:[%s325 + $0x128] sm:$0xff]
      %v459 = vld [vmem:[%s325 + $0x130] sm:$0xff]
      %v460 = vld [vmem:[%s325 + $0x138] sm:$0xff]
      %v461 = vld [vmem:[%s325 + $0x140] sm:$0xff]
      %v462 = vld [vmem:[%s325 + $0x148] sm:$0xff]
      %v463 = vld [vmem:[%s325 + $0x150] sm:$0xff]
      %v464 = vld [vmem:[%s325 + $0x158] sm:$0xff]
      %v465 = vld [vmem:[%s325 + $0x160] sm:$0xff]
      %v466 = vld [vmem:[%s325 + $0x168] sm:$0xff]
      %v467 = vld [vmem:[%s325 + $0x170] sm:$0xff]
      %v468 = vld [vmem:[%s325 + $0x178] sm:$0xff]
      %v469 = vld [vmem:[%s325 + $0x180] sm:$0xff]
      %v470 = vld [vmem:[%s325 + $0x188] sm:$0xff]
      %v471 = vld [vmem:[%s325 + $0x190] sm:$0xff]
      %v472 = vld [vmem:[%s325 + $0x198] sm:$0xff]
      %v473 = vld [vmem:[%s325 + $0x1a0] sm:$0xff]
      %v474 = vld [vmem:[%s325 + $0x1a8] sm:$0xff]
      %v475 = vld [vmem:[%s325 + $0x1b0] sm:$0xff]
      %v476 = vld [vmem:[%s325 + $0x1b8] sm:$0xff]
      %v477 = vld [vmem:[%s325 + $0x1c0] sm:$0xff]
      %v478 = vld [vmem:[%s325 + $0x1c8] sm:$0xff]
      %v479 = vld [vmem:[%s325 + $0x1d0] sm:$0xff]
      %v480 = vld [vmem:[%s325 + $0x1d8] sm:$0xff]
      %v481 = vld [vmem:[%s325 + $0x1e0] sm:$0xff]
      %v482 = vld [vmem:[%s325 + $0x1e8] sm:$0xff]
      %v483 = vld [vmem:[%s325 + $0x1f0] sm:$0xff]
      %v484 = vld [vmem:[%s325 + $0x1f8] sm:$0xff]
      %v485 = vld [vmem:[%s332] sm:$0xf]
      %v486 = vld [vmem:[%s332 + $0x4] sm:$0xf]
      %v487 = vld [vmem:[%s332 + $0x8] sm:$0xf]
      %v488 = vld [vmem:[%s332 + $0xc] sm:$0xf]
      %v489 = vld [vmem:[%s332 + $0x10] sm:$0xf]
      %v490 = vld [vmem:[%s332 + $0x14] sm:$0xf]
      %v491 = vld [vmem:[%s332 + $0x18] sm:$0xf]
      %v492 = vld [vmem:[%s332 + $0x1c] sm:$0xf]
      %v493 = vld [vmem:[%s332 + $0x20] sm:$0xf]
      %v494 = vld [vmem:[%s332 + $0x24] sm:$0xf]
      %v495 = vld [vmem:[%s332 + $0x28] sm:$0xf]
      %v496 = vld [vmem:[%s332 + $0x2c] sm:$0xf]
      %v497 = vld [vmem:[%s332 + $0x30] sm:$0xf]
      %v498 = vld [vmem:[%s332 + $0x34] sm:$0xf]
      %v499 = vld [vmem:[%s332 + $0x38] sm:$0xf]
      %v500 = vld [vmem:[%s332 + $0x3c] sm:$0xf]
      %v501 = vld [vmem:[%s332 + $0x40] sm:$0xf]
      %v502 = vld [vmem:[%s332 + $0x44] sm:$0xf]
      %v503 = vld [vmem:[%s332 + $0x48] sm:$0xf]
      %v504 = vld [vmem:[%s332 + $0x4c] sm:$0xf]
      %v505 = vld [vmem:[%s332 + $0x50] sm:$0xf]
      %v506 = vld [vmem:[%s332 + $0x54] sm:$0xf]
      %v507 = vld [vmem:[%s332 + $0x58] sm:$0xf]
      %v508 = vld [vmem:[%s332 + $0x5c] sm:$0xf]
      %v509 = vld [vmem:[%s332 + $0x60] sm:$0xf]
      %v510 = vld [vmem:[%s332 + $0x64] sm:$0xf]
      %v511 = vld [vmem:[%s332 + $0x68] sm:$0xf]
      %v512 = vld [vmem:[%s332 + $0x6c] sm:$0xf]
      %v513 = vld [vmem:[%s332 + $0x70] sm:$0xf]
      %v514 = vld [vmem:[%s332 + $0x74] sm:$0xf]
      %v515 = vld [vmem:[%s332 + $0x78] sm:$0xf]
      %v516 = vld [vmem:[%s332 + $0x7c] sm:$0xf]
      %v517 = vld [vmem:[%s332 + $0x80] sm:$0xf]
      %v518 = vld [vmem:[%s332 + $0x84] sm:$0xf]
      %v519 = vld [vmem:[%s332 + $0x88] sm:$0xf]
      %v520 = vld [vmem:[%s332 + $0x8c] sm:$0xf]
      %v521 = vld [vmem:[%s332 + $0x90] sm:$0xf]
      %v522 = vld [vmem:[%s332 + $0x94] sm:$0xf]
      %v523 = vld [vmem:[%s332 + $0x98] sm:$0xf]
      %v524 = vld [vmem:[%s332 + $0x9c] sm:$0xf]
      %v525 = vld [vmem:[%s332 + $0xa0] sm:$0xf]
      %v526 = vld [vmem:[%s332 + $0xa4] sm:$0xf]
      %v527 = vld [vmem:[%s332 + $0xa8] sm:$0xf]
      %v528 = vld [vmem:[%s332 + $0xac] sm:$0xf]
      %v529 = vld [vmem:[%s332 + $0xb0] sm:$0xf]
      %v530 = vld [vmem:[%s332 + $0xb4] sm:$0xf]
      %v531 = vld [vmem:[%s332 + $0xb8] sm:$0xf]
      %v532 = vld [vmem:[%s332 + $0xbc] sm:$0xf]
      %v533 = vld [vmem:[%s332 + $0xc0] sm:$0xf]
      %v534 = vld [vmem:[%s332 + $0xc4] sm:$0xf]
      %v535 = vld [vmem:[%s332 + $0xc8] sm:$0xf]
      %v536 = vld [vmem:[%s332 + $0xcc] sm:$0xf]
      %v537 = vld [vmem:[%s332 + $0xd0] sm:$0xf]
      %v538 = vld [vmem:[%s332 + $0xd4] sm:$0xf]
      %v539 = vld [vmem:[%s332 + $0xd8] sm:$0xf]
      %v540 = vld [vmem:[%s332 + $0xdc] sm:$0xf]
      %v541 = vld [vmem:[%s332 + $0xe0] sm:$0xf]
      %v542 = vld [vmem:[%s332 + $0xe4] sm:$0xf]
      %v543 = vld [vmem:[%s332 + $0xe8] sm:$0xf]
      %v544 = vld [vmem:[%s332 + $0xec] sm:$0xf]
      %v545 = vld [vmem:[%s332 + $0xf0] sm:$0xf]
      %v546 = vld [vmem:[%s332 + $0xf4] sm:$0xf]
      %v547 = vld [vmem:[%s332 + $0xf8] sm:$0xf]
      %v548 = vld [vmem:[%s332 + $0xfc] sm:$0xf]
      %v613 = vunpack.c.l.b16 %v421
      %v614 = vunpack.c.h.b16 %v421
      %v615 = vunpack.c.l.b16 %v422
      %v616 = vunpack.c.h.b16 %v422
      %v617 = vunpack.c.l.b16 %v423
      %v618 = vunpack.c.h.b16 %v423
      %v619 = vunpack.c.l.b16 %v424
      %v620 = vunpack.c.h.b16 %v424
      %v621 = vunpack.c.l.b16 %v425
      %v622 = vunpack.c.h.b16 %v425
      %v623 = vunpack.c.l.b16 %v426
      %v624 = vunpack.c.h.b16 %v426
      %v625 = vunpack.c.l.b16 %v427
      %v626 = vunpack.c.h.b16 %v427
      %v627 = vunpack.c.l.b16 %v428
      %v628 = vunpack.c.h.b16 %v428
      %v629 = vunpack.c.l.b16 %v429
      %v630 = vunpack.c.h.b16 %v429
      %v631 = vunpack.c.l.b16 %v430
      %v632 = vunpack.c.h.b16 %v430
      %v633 = vunpack.c.l.b16 %v431
      %v634 = vunpack.c.h.b16 %v431
      %v635 = vunpack.c.l.b16 %v432
      %v636 = vunpack.c.h.b16 %v432
      %v637 = vunpack.c.l.b16 %v433
      %v638 = vunpack.c.h.b16 %v433
      %v639 = vunpack.c.l.b16 %v434
      %v640 = vunpack.c.h.b16 %v434
      %v641 = vunpack.c.l.b16 %v435
      %v642 = vunpack.c.h.b16 %v435
      %v643 = vunpack.c.l.b16 %v436
      %v644 = vunpack.c.h.b16 %v436
      %v645 = vunpack.c.l.b16 %v437
      %v646 = vunpack.c.h.b16 %v437
      %v647 = vunpack.c.l.b16 %v438
      %v648 = vunpack.c.h.b16 %v438
      %v649 = vunpack.c.l.b16 %v439
      %v650 = vunpack.c.h.b16 %v439
      %v651 = vunpack.c.l.b16 %v440
      %v652 = vunpack.c.h.b16 %v440
      %v653 = vunpack.c.l.b16 %v441
      %v654 = vunpack.c.h.b16 %v441
      %v655 = vunpack.c.l.b16 %v442
      %v656 = vunpack.c.h.b16 %v442
      %v657 = vunpack.c.l.b16 %v443
      %v658 = vunpack.c.h.b16 %v443
      %v659 = vunpack.c.l.b16 %v444
      %v660 = vunpack.c.h.b16 %v444
      %v661 = vunpack.c.l.b16 %v445
      %v662 = vunpack.c.h.b16 %v445
      %v663 = vunpack.c.l.b16 %v446
      %v664 = vunpack.c.h.b16 %v446
      %v665 = vunpack.c.l.b16 %v447
      %v666 = vunpack.c.h.b16 %v447
      %v667 = vunpack.c.l.b16 %v448
      %v668 = vunpack.c.h.b16 %v448
      %v669 = vunpack.c.l.b16 %v449
      %v670 = vunpack.c.h.b16 %v449
      %v671 = vunpack.c.l.b16 %v450
      %v672 = vunpack.c.h.b16 %v450
      %v673 = vunpack.c.l.b16 %v451
      %v674 = vunpack.c.h.b16 %v451
      %v675 = vunpack.c.l.b16 %v452
      %v676 = vunpack.c.h.b16 %v452
      %v677 = vunpack.c.l.b16 %v453
      %v678 = vunpack.c.h.b16 %v453
      %v679 = vunpack.c.l.b16 %v454
      %v680 = vunpack.c.h.b16 %v454
      %v681 = vunpack.c.l.b16 %v455
      %v682 = vunpack.c.h.b16 %v455
      %v683 = vunpack.c.l.b16 %v456
      %v684 = vunpack.c.h.b16 %v456
      %v685 = vunpack.c.l.b16 %v457
      %v686 = vunpack.c.h.b16 %v457
      %v687 = vunpack.c.l.b16 %v458
      %v688 = vunpack.c.h.b16 %v458
      %v689 = vunpack.c.l.b16 %v459
      %v690 = vunpack.c.h.b16 %v459
      %v691 = vunpack.c.l.b16 %v460
      %v692 = vunpack.c.h.b16 %v460
      %v693 = vunpack.c.l.b16 %v461
      %v694 = vunpack.c.h.b16 %v461
      %v695 = vunpack.c.l.b16 %v462
      %v696 = vunpack.c.h.b16 %v462
      %v697 = vunpack.c.l.b16 %v463
      %v698 = vunpack.c.h.b16 %v463
      %v699 = vunpack.c.l.b16 %v464
      %v700 = vunpack.c.h.b16 %v464
      %v701 = vunpack.c.l.b16 %v465
      %v702 = vunpack.c.h.b16 %v465
      %v703 = vunpack.c.l.b16 %v466
      %v704 = vunpack.c.h.b16 %v466
      %v705 = vunpack.c.l.b16 %v467
      %v706 = vunpack.c.h.b16 %v467
      %v707 = vunpack.c.l.b16 %v468
      %v708 = vunpack.c.h.b16 %v468
      %v709 = vunpack.c.l.b16 %v469
      %v710 = vunpack.c.h.b16 %v469
      %v711 = vunpack.c.l.b16 %v470
      %v712 = vunpack.c.h.b16 %v470
      %v713 = vunpack.c.l.b16 %v471
      %v714 = vunpack.c.h.b16 %v471
      %v715 = vunpack.c.l.b16 %v472
      %v716 = vunpack.c.h.b16 %v472
      %v717 = vunpack.c.l.b16 %v473
      %v718 = vunpack.c.h.b16 %v473
      %v719 = vunpack.c.l.b16 %v474
      %v720 = vunpack.c.h.b16 %v474
      %v721 = vunpack.c.l.b16 %v475
      %v722 = vunpack.c.h.b16 %v475
      %v723 = vunpack.c.l.b16 %v476
      %v724 = vunpack.c.h.b16 %v476
      %v725 = vunpack.c.l.b16 %v477
      %v726 = vunpack.c.h.b16 %v477
      %v727 = vunpack.c.l.b16 %v478
      %v728 = vunpack.c.h.b16 %v478
      %v729 = vunpack.c.l.b16 %v479
      %v730 = vunpack.c.h.b16 %v479
      %v731 = vunpack.c.l.b16 %v480
      %v732 = vunpack.c.h.b16 %v480
      %v733 = vunpack.c.l.b16 %v481
      %v734 = vunpack.c.h.b16 %v481
      %v735 = vunpack.c.l.b16 %v482
      %v736 = vunpack.c.h.b16 %v482
      %v737 = vunpack.c.l.b16 %v483
      %v738 = vunpack.c.h.b16 %v483
      %v739 = vunpack.c.l.b16 %v484
      %v740 = vunpack.c.h.b16 %v484
      %v741 = vpack.c.b16 %v617, %v613
      %v742 = vpack.c.b16 %v618, %v614
      %v743 = vpack.c.b16 %v619, %v615
      %v744 = vpack.c.b16 %v620, %v616
      %v745 = vpack.c.b16 %v625, %v621
      %v746 = vpack.c.b16 %v626, %v622
      %v747 = vpack.c.b16 %v627, %v623
      %v748 = vpack.c.b16 %v628, %v624
      %v749 = vpack.c.b16 %v633, %v629
      %v750 = vpack.c.b16 %v634, %v630
      %v751 = vpack.c.b16 %v635, %v631
      %v752 = vpack.c.b16 %v636, %v632
      %v753 = vpack.c.b16 %v641, %v637
      %v754 = vpack.c.b16 %v642, %v638
      %v755 = vpack.c.b16 %v643, %v639
      %v756 = vpack.c.b16 %v644, %v640
      %v757 = vpack.c.b16 %v649, %v645
      %v758 = vpack.c.b16 %v650, %v646
      %v759 = vpack.c.b16 %v651, %v647
      %v760 = vpack.c.b16 %v652, %v648
      %v761 = vpack.c.b16 %v657, %v653
      %v762 = vpack.c.b16 %v658, %v654
      %v763 = vpack.c.b16 %v659, %v655
      %v764 = vpack.c.b16 %v660, %v656
      %v765 = vpack.c.b16 %v665, %v661
      %v766 = vpack.c.b16 %v666, %v662
      %v767 = vpack.c.b16 %v667, %v663
      %v768 = vpack.c.b16 %v668, %v664
      %v769 = vpack.c.b16 %v673, %v669
      %v770 = vpack.c.b16 %v674, %v670
      %v771 = vpack.c.b16 %v675, %v671
      %v772 = vpack.c.b16 %v676, %v672
      %v773 = vpack.c.b16 %v681, %v677
      %v774 = vpack.c.b16 %v682, %v678
      %v775 = vpack.c.b16 %v683, %v679
      %v776 = vpack.c.b16 %v684, %v680
      %v777 = vpack.c.b16 %v689, %v685
      %v778 = vpack.c.b16 %v690, %v686
      %v779 = vpack.c.b16 %v691, %v687
      %v780 = vpack.c.b16 %v692, %v688
      %v781 = vpack.c.b16 %v697, %v693
      %v782 = vpack.c.b16 %v698, %v694
      %v783 = vpack.c.b16 %v699, %v695
      %v784 = vpack.c.b16 %v700, %v696
      %v785 = vpack.c.b16 %v705, %v701
      %v786 = vpack.c.b16 %v706, %v702
      %v787 = vpack.c.b16 %v707, %v703
      %v788 = vpack.c.b16 %v708, %v704
      %v789 = vpack.c.b16 %v713, %v709
      %v790 = vpack.c.b16 %v714, %v710
      %v791 = vpack.c.b16 %v715, %v711
      %v792 = vpack.c.b16 %v716, %v712
      %v793 = vpack.c.b16 %v721, %v717
      %v794 = vpack.c.b16 %v722, %v718
      %v795 = vpack.c.b16 %v723, %v719
      %v796 = vpack.c.b16 %v724, %v720
      %v797 = vpack.c.b16 %v729, %v725
      %v798 = vpack.c.b16 %v730, %v726
      %v799 = vpack.c.b16 %v731, %v727
      %v800 = vpack.c.b16 %v732, %v728
      %v801 = vpack.c.b16 %v737, %v733
      %v802 = vpack.c.b16 %v738, %v734
      %v803 = vpack.c.b16 %v739, %v735
      %v804 = vpack.c.b16 %v740, %v736
      %v933 = vunpack.c.l.b16 %v485
      %v934 = vunpack.c.l.b16 %v486
      %v935 = vunpack.c.l.b16 %v487
      %v936 = vunpack.c.l.b16 %v488
      %v937 = vunpack.c.l.b16 %v489
      %v938 = vunpack.c.l.b16 %v490
      %v939 = vunpack.c.l.b16 %v491
      %v940 = vunpack.c.l.b16 %v492
      %v941 = vunpack.c.l.b16 %v493
      %v942 = vunpack.c.l.b16 %v494
      %v943 = vunpack.c.l.b16 %v495
      %v944 = vunpack.c.l.b16 %v496
      %v945 = vunpack.c.l.b16 %v497
      %v946 = vunpack.c.l.b16 %v498
      %v947 = vunpack.c.l.b16 %v499
      %v948 = vunpack.c.l.b16 %v500
      %v949 = vunpack.c.l.b16 %v501
      %v950 = vunpack.c.l.b16 %v502
      %v951 = vunpack.c.l.b16 %v503
      %v952 = vunpack.c.l.b16 %v504
      %v953 = vunpack.c.l.b16 %v505
      %v954 = vunpack.c.l.b16 %v506
      %v955 = vunpack.c.l.b16 %v507
      %v956 = vunpack.c.l.b16 %v508
      %v957 = vunpack.c.l.b16 %v509
      %v958 = vunpack.c.l.b16 %v510
      %v959 = vunpack.c.l.b16 %v511
      %v960 = vunpack.c.l.b16 %v512
      %v961 = vunpack.c.l.b16 %v513
      %v962 = vunpack.c.l.b16 %v514
      %v963 = vunpack.c.l.b16 %v515
      %v964 = vunpack.c.l.b16 %v516
      %v965 = vunpack.c.l.b16 %v517
      %v966 = vunpack.c.l.b16 %v518
      %v967 = vunpack.c.l.b16 %v519
      %v968 = vunpack.c.l.b16 %v520
      %v969 = vunpack.c.l.b16 %v521
      %v970 = vunpack.c.l.b16 %v522
      %v971 = vunpack.c.l.b16 %v523
      %v972 = vunpack.c.l.b16 %v524
      %v973 = vunpack.c.l.b16 %v525
      %v974 = vunpack.c.l.b16 %v526
      %v975 = vunpack.c.l.b16 %v527
      %v976 = vunpack.c.l.b16 %v528
      %v977 = vunpack.c.l.b16 %v529
      %v978 = vunpack.c.l.b16 %v530
      %v979 = vunpack.c.l.b16 %v531
      %v980 = vunpack.c.l.b16 %v532
      %v981 = vunpack.c.l.b16 %v533
      %v982 = vunpack.c.l.b16 %v534
      %v983 = vunpack.c.l.b16 %v535
      %v984 = vunpack.c.l.b16 %v536
      %v985 = vunpack.c.l.b16 %v537
      %v986 = vunpack.c.l.b16 %v538
      %v987 = vunpack.c.l.b16 %v539
      %v988 = vunpack.c.l.b16 %v540
      %v989 = vunpack.c.l.b16 %v541
      %v990 = vunpack.c.l.b16 %v542
      %v991 = vunpack.c.l.b16 %v543
      %v992 = vunpack.c.l.b16 %v544
      %v993 = vunpack.c.l.b16 %v545
      %v994 = vunpack.c.l.b16 %v546
      %v995 = vunpack.c.l.b16 %v547
      %v996 = vunpack.c.l.b16 %v548
      %v997 = vpack.c.b16 %v934, %v933
      %v998 = vpack.c.b16 %v936, %v935
      %v999 = vpack.c.b16 %v938, %v937
      %v1000 = vpack.c.b16 %v940, %v939
      %v1001 = vpack.c.b16 %v942, %v941
      %v1002 = vpack.c.b16 %v944, %v943
      %v1003 = vpack.c.b16 %v946, %v945
      %v1004 = vpack.c.b16 %v948, %v947
      %v1005 = vpack.c.b16 %v950, %v949
      %v1006 = vpack.c.b16 %v952, %v951
      %v1007 = vpack.c.b16 %v954, %v953
      %v1008 = vpack.c.b16 %v956, %v955
      %v1009 = vpack.c.b16 %v958, %v957
      %v1010 = vpack.c.b16 %v960, %v959
      %v1011 = vpack.c.b16 %v962, %v961
      %v1012 = vpack.c.b16 %v964, %v963
      %v1013 = vpack.c.b16 %v966, %v965
      %v1014 = vpack.c.b16 %v968, %v967
      %v1015 = vpack.c.b16 %v970, %v969
      %v1016 = vpack.c.b16 %v972, %v971
      %v1017 = vpack.c.b16 %v974, %v973
      %v1018 = vpack.c.b16 %v976, %v975
      %v1019 = vpack.c.b16 %v978, %v977
      %v1020 = vpack.c.b16 %v980, %v979
      %v1021 = vpack.c.b16 %v982, %v981
      %v1022 = vpack.c.b16 %v984, %v983
      %v1023 = vpack.c.b16 %v986, %v985
      %v1024 = vpack.c.b16 %v988, %v987
      %v1025 = vpack.c.b16 %v990, %v989
      %v1026 = vpack.c.b16 %v992, %v991
      %v1027 = vpack.c.b16 %v994, %v993
      %v1028 = vpack.c.b16 %v996, %v995
      %1061 = vmatprep.subr.bf16.mxu0 0
      %1062 = vmatpush1.bf16.msra.mxu0 %v997
      %1063 = vmatprep.subr.bf16.mxu0 0
      %1064 = vmatpush1.bf16.msra.mxu0 %v998
      %1065 = vmatprep.subr.bf16.mxu0 0
      %1066 = vmatpush1.bf16.msra.mxu0 %v999
      %1067 = vmatprep.subr.bf16.mxu0 0
      %1068 = vmatpush1.bf16.msra.mxu0 %v1000
      %1069 = vmatprep.subr.bf16.mxu0 0
      %1070 = vmatpush1.bf16.msra.mxu0 %v1001
      %1071 = vmatprep.subr.bf16.mxu0 0
      %1072 = vmatpush1.bf16.msra.mxu0 %v1002
      %1073 = vmatprep.subr.bf16.mxu0 0
      %1074 = vmatpush1.bf16.msra.mxu0 %v1003
      %1075 = vmatprep.subr.bf16.mxu0 0
      %1076 = vmatpush1.bf16.msra.mxu0 %v1004
      %1077 = vmatprep.subr.bf16.mxu0 0
      %1078 = vmatpush1.bf16.msra.mxu0 %v1005
      %1079 = vmatprep.subr.bf16.mxu0 0
      %1080 = vmatpush1.bf16.msra.mxu0 %v1006
      %1081 = vmatprep.subr.bf16.mxu0 0
      %1082 = vmatpush1.bf16.msra.mxu0 %v1007
      %1083 = vmatprep.subr.bf16.mxu0 0
      %1084 = vmatpush1.bf16.msra.mxu0 %v1008
      %1085 = vmatprep.subr.bf16.mxu0 0
      %1086 = vmatpush1.bf16.msra.mxu0 %v1009
      %1087 = vmatprep.subr.bf16.mxu0 0
      %1088 = vmatpush1.bf16.msra.mxu0 %v1010
      %1089 = vmatprep.subr.bf16.mxu0 0
      %1090 = vmatpush1.bf16.msra.mxu0 %v1011
      %1091 = vmatprep.subr.bf16.mxu0 0
      %1092 = vmatpush1.bf16.msra.mxu0 %v1012
      %1093 = vmatprep.mubr.bf16.mxu0 %v742
      %1094 = vmatmul.mubr.bf16.gmra.mrb[0].mxu0 %v741
      %v1095 = vpop.f32.mrb[0].mxu0
      %v1096 = vadd.f32 0.0, %v1095
      %v1097 = vpop.f32.mrb[0].mxu0
      %v1098 = vpop.f32.mrb[0].mxu0
      %v1099 = vadd.f32 0.0, %v1098
      %v1100 = vpop.f32.mrb[0].mxu0
      %1101 = vmatprep.mubr.bf16.mxu0 %v746
      %1102 = vmatmul.mubr.bf16.gmra.mrb[0].mxu0 %v745
      %v1103 = vpop.f32.mrb[0].mxu0
      %v1104 = vadd.f32 0.0, %v1103
      %v1105 = vpop.f32.mrb[0].mxu0
      %v1106 = vpop.f32.mrb[0].mxu0
      %v1107 = vadd.f32 0.0, %v1106
      %v1108 = vpop.f32.mrb[0].mxu0
      %1109 = vmatprep.mubr.bf16.mxu0 %v750
      %1110 = vmatmul.mubr.bf16.gmra.mrb[0].mxu0 %v749
      %v1111 = vpop.f32.mrb[0].mxu0
      %v1112 = vadd.f32 0.0, %v1111
      %v1113 = vpop.f32.mrb[0].mxu0
      %v1114 = vpop.f32.mrb[0].mxu0
      %v1115 = vadd.f32 0.0, %v1114
      %v1116 = vpop.f32.mrb[0].mxu0
      %1117 = vmatprep.mubr.bf16.mxu0 %v754
      %1118 = vmatmul.mubr.bf16.gmra.mrb[0].mxu0 %v753
      %v1119 = vpop.f32.mrb[0].mxu0
      %v1120 = vadd.f32 0.0, %v1119
      %v1121 = vpop.f32.mrb[0].mxu0
      %v1122 = vpop.f32.mrb[0].mxu0
      %v1123 = vadd.f32 0.0, %v1122
      %v1124 = vpop.f32.mrb[0].mxu0
      %1125 = vmatprep.mubr.bf16.mxu0 %v758
      %1126 = vmatmul.mubr.bf16.gmra.mrb[0].mxu0 %v757
      %v1127 = vpop.f32.mrb[0].mxu0
      %v1128 = vadd.f32 0.0, %v1127
      %v1129 = vpop.f32.mrb[0].mxu0
      %v1130 = vpop.f32.mrb[0].mxu0
      %v1131 = vadd.f32 0.0, %v1130
      %v1132 = vpop.f32.mrb[0].mxu0
      %1133 = vmatprep.mubr.bf16.mxu0 %v762
      %1134 = vmatmul.mubr.bf16.gmra.mrb[0].mxu0 %v761
      %v1135 = vpop.f32.mrb[0].mxu0
      %v1136 = vadd.f32 0.0, %v1135
      %v1137 = vpop.f32.mrb[0].mxu0
      %v1138 = vpop.f32.mrb[0].mxu0
      %v1139 = vadd.f32 0.0, %v1138
      %v1140 = vpop.f32.mrb[0].mxu0
      %1141 = vmatprep.mubr.bf16.mxu0 %v766
      %1142 = vmatmul.mubr.bf16.gmra.mrb[0].mxu0 %v765
      %v1143 = vpop.f32.mrb[0].mxu0
      %v1144 = vadd.f32 0.0, %v1143
      %v1145 = vpop.f32.mrb[0].mxu0
      %v1146 = vpop.f32.mrb[0].mxu0
      %v1147 = vadd.f32 0.0, %v1146
      %v1148 = vpop.f32.mrb[0].mxu0
      %1149 = vmatprep.mubr.bf16.mxu0 %v770
      %1150 = vmatmul.mubr.bf16.gmra.mrb[0].mxu0 %v769
      %v1151 = vpop.f32.mrb[0].mxu0
      %v1152 = vadd.f32 0.0, %v1151
      %v1153 = vpop.f32.mrb[0].mxu0
      %v1154 = vpop.f32.mrb[0].mxu0
      %v1155 = vadd.f32 0.0, %v1154
      %v1156 = vpop.f32.mrb[0].mxu0
      %1157 = vmatprep.mubr.bf16.mxu0 %v774
      %1158 = vmatmul.mubr.bf16.gmra.mrb[0].mxu0 %v773
      %v1159 = vpop.f32.mrb[0].mxu0
      %v1160 = vadd.f32 0.0, %v1159
      %v1161 = vpop.f32.mrb[0].mxu0
      %v1162 = vpop.f32.mrb[0].mxu0
      %v1163 = vadd.f32 0.0, %v1162
      %v1164 = vpop.f32.mrb[0].mxu0
      %1165 = vmatprep.mubr.bf16.mxu0 %v778
      %1166 = vmatmul.mubr.bf16.gmra.mrb[0].mxu0 %v777
      %v1167 = vpop.f32.mrb[0].mxu0
      %v1168 = vadd.f32 0.0, %v1167
      %v1169 = vpop.f32.mrb[0].mxu0
      %v1170 = vpop.f32.mrb[0].mxu0
      %v1171 = vadd.f32 0.0, %v1170
      %v1172 = vpop.f32.mrb[0].mxu0
      %1173 = vmatprep.mubr.bf16.mxu0 %v782
      %1174 = vmatmul.mubr.bf16.gmra.mrb[0].mxu0 %v781
      %v1175 = vpop.f32.mrb[0].mxu0
      %v1176 = vadd.f32 0.0, %v1175
      %v1177 = vpop.f32.mrb[0].mxu0
      %v1178 = vpop.f32.mrb[0].mxu0
      %v1179 = vadd.f32 0.0, %v1178
      %v1180 = vpop.f32.mrb[0].mxu0
      %1181 = vmatprep.mubr.bf16.mxu0 %v786
      %1182 = vmatmul.mubr.bf16.gmra.mrb[0].mxu0 %v785
      %v1183 = vpop.f32.mrb[0].mxu0
      %v1184 = vadd.f32 0.0, %v1183
      %v1185 = vpop.f32.mrb[0].mxu0
      %v1186 = vpop.f32.mrb[0].mxu0
      %v1187 = vadd.f32 0.0, %v1186
      %v1188 = vpop.f32.mrb[0].mxu0
      %1189 = vmatprep.mubr.bf16.mxu0 %v790
      %1190 = vmatmul.mubr.bf16.gmra.mrb[0].mxu0 %v789
      %v1191 = vpop.f32.mrb[0].mxu0
      %v1192 = vadd.f32 0.0, %v1191
      %v1193 = vpop.f32.mrb[0].mxu0
      %v1194 = vpop.f32.mrb[0].mxu0
      %v1195 = vadd.f32 0.0, %v1194
      %v1196 = vpop.f32.mrb[0].mxu0
      %1197 = vmatprep.mubr.bf16.mxu0 %v794
      %1198 = vmatmul.mubr.bf16.gmra.mrb[0].mxu0 %v793
      %v1199 = vpop.f32.mrb[0].mxu0
      %v1200 = vadd.f32 0.0, %v1199
      %v1201 = vpop.f32.mrb[0].mxu0
      %v1202 = vpop.f32.mrb[0].mxu0
      %v1203 = vadd.f32 0.0, %v1202
      %v1204 = vpop.f32.mrb[0].mxu0
      %1205 = vmatprep.mubr.bf16.mxu0 %v798
      %1206 = vmatmul.mubr.bf16.gmra.mrb[0].mxu0 %v797
      %v1207 = vpop.f32.mrb[0].mxu0
      %v1208 = vadd.f32 0.0, %v1207
      %v1209 = vpop.f32.mrb[0].mxu0
      %v1210 = vpop.f32.mrb[0].mxu0
      %v1211 = vadd.f32 0.0, %v1210
      %v1212 = vpop.f32.mrb[0].mxu0
      %1213 = vmatprep.mubr.bf16.mxu0 %v802
      %1214 = vmatmul.mubr.bf16.gmra.mrb[0].mxu0 %v801
      %v1215 = vpop.f32.mrb[0].mxu0
      %v1216 = vadd.f32 0.0, %v1215
      %v1217 = vpop.f32.mrb[0].mxu0
      %v1218 = vpop.f32.mrb[0].mxu0
      %v1219 = vadd.f32 0.0, %v1218
      %v1220 = vpop.f32.mrb[0].mxu0
      %1221 = vdwg.mxu0
      %1222 = vmatprep.subr.bf16.mxu0 0
      %1223 = vmatpush1.bf16.msra.mxu0 %v1013
      %1224 = vmatprep.subr.bf16.mxu0 0
      %1225 = vmatpush1.bf16.msra.mxu0 %v1014
      %1226 = vmatprep.subr.bf16.mxu0 0
      %1227 = vmatpush1.bf16.msra.mxu0 %v1015
      %1228 = vmatprep.subr.bf16.mxu0 0
      %1229 = vmatpush1.bf16.msra.mxu0 %v1016
      %1230 = vmatprep.subr.bf16.mxu0 0
      %1231 = vmatpush1.bf16.msra.mxu0 %v1017
      %1232 = vmatprep.subr.bf16.mxu0 0
      %1233 = vmatpush1.bf16.msra.mxu0 %v1018
      %1234 = vmatprep.subr.bf16.mxu0 0
      %1235 = vmatpush1.bf16.msra.mxu0 %v1019
      %1236 = vmatprep.subr.bf16.mxu0 0
      %1237 = vmatpush1.bf16.msra.mxu0 %v1020
      %1238 = vmatprep.subr.bf16.mxu0 0
      %1239 = vmatpush1.bf16.msra.mxu0 %v1021
      %1240 = vmatprep.subr.bf16.mxu0 0
      %1241 = vmatpush1.bf16.msra.mxu0 %v1022
      %1242 = vmatprep.subr.bf16.mxu0 0
      %1243 = vmatpush1.bf16.msra.mxu0 %v1023
      %1244 = vmatprep.subr.bf16.mxu0 0
      %1245 = vmatpush1.bf16.msra.mxu0 %v1024
      %1246 = vmatprep.subr.bf16.mxu0 0
      %1247 = vmatpush1.bf16.msra.mxu0 %v1025
      %1248 = vmatprep.subr.bf16.mxu0 0
      %1249 = vmatpush1.bf16.msra.mxu0 %v1026
      %1250 = vmatprep.subr.bf16.mxu0 0
      %1251 = vmatpush1.bf16.msra.mxu0 %v1027
      %1252 = vmatprep.subr.bf16.mxu0 0
      %1253 = vmatpush1.bf16.msra.mxu0 %v1028
      %1254 = vmatprep.mubr.bf16.mxu0 %v744
      %1255 = vmatmul.mubr.bf16.gmra.mrb[0].mxu0 %v743
      %v1256 = vpop.f32.mrb[0].mxu0
      %v1257 = vadd.f32 %v1096, %v1256
      %v1258 = vpop.f32.mrb[0].mxu0
      %v1259 = vpop.f32.mrb[0].mxu0
      %v1260 = vadd.f32 %v1099, %v1259
      %v1261 = vpop.f32.mrb[0].mxu0
      %1262 = vmatprep.mubr.bf16.mxu0 %v748
      %1263 = vmatmul.mubr.bf16.gmra.mrb[0].mxu0 %v747
      %v1264 = vpop.f32.mrb[0].mxu0
      %v1265 = vadd.f32 %v1104, %v1264
      %v1266 = vpop.f32.mrb[0].mxu0
      %v1267 = vpop.f32.mrb[0].mxu0
      %v1268 = vadd.f32 %v1107, %v1267
      %v1269 = vpop.f32.mrb[0].mxu0
      %1270 = vmatprep.mubr.bf16.mxu0 %v752
      %1271 = vmatmul.mubr.bf16.gmra.mrb[0].mxu0 %v751
      %v1272 = vpop.f32.mrb[0].mxu0
      %v1273 = vadd.f32 %v1112, %v1272
      %v1274 = vpop.f32.mrb[0].mxu0
      %v1275 = vpop.f32.mrb[0].mxu0
      %v1276 = vadd.f32 %v1115, %v1275
      %v1277 = vpop.f32.mrb[0].mxu0
      %1278 = vmatprep.mubr.bf16.mxu0 %v756
      %1279 = vmatmul.mubr.bf16.gmra.mrb[0].mxu0 %v755
      %v1280 = vpop.f32.mrb[0].mxu0
      %v1281 = vadd.f32 %v1120, %v1280
      %v1282 = vpop.f32.mrb[0].mxu0
      %v1283 = vpop.f32.mrb[0].mxu0
      %v1284 = vadd.f32 %v1123, %v1283
      %v1285 = vpop.f32.mrb[0].mxu0
      %1286 = vmatprep.mubr.bf16.mxu0 %v760
      %1287 = vmatmul.mubr.bf16.gmra.mrb[0].mxu0 %v759
      %v1288 = vpop.f32.mrb[0].mxu0
      %v1289 = vadd.f32 %v1128, %v1288
      %v1290 = vpop.f32.mrb[0].mxu0
      %v1291 = vpop.f32.mrb[0].mxu0
      %v1292 = vadd.f32 %v1131, %v1291
      %v1293 = vpop.f32.mrb[0].mxu0
      %1294 = vmatprep.mubr.bf16.mxu0 %v764
      %1295 = vmatmul.mubr.bf16.gmra.mrb[0].mxu0 %v763
      %v1296 = vpop.f32.mrb[0].mxu0
      %v1297 = vadd.f32 %v1136, %v1296
      %v1298 = vpop.f32.mrb[0].mxu0
      %v1299 = vpop.f32.mrb[0].mxu0
      %v1300 = vadd.f32 %v1139, %v1299
      %v1301 = vpop.f32.mrb[0].mxu0
      %1302 = vmatprep.mubr.bf16.mxu0 %v768
      %1303 = vmatmul.mubr.bf16.gmra.mrb[0].mxu0 %v767
      %v1304 = vpop.f32.mrb[0].mxu0
      %v1305 = vadd.f32 %v1144, %v1304
      %v1306 = vpop.f32.mrb[0].mxu0
      %v1307 = vpop.f32.mrb[0].mxu0
      %v1308 = vadd.f32 %v1147, %v1307
      %v1309 = vpop.f32.mrb[0].mxu0
      %1310 = vmatprep.mubr.bf16.mxu0 %v772
      %1311 = vmatmul.mubr.bf16.gmra.mrb[0].mxu0 %v771
      %v1312 = vpop.f32.mrb[0].mxu0
      %v1313 = vadd.f32 %v1152, %v1312
      %v1314 = vpop.f32.mrb[0].mxu0
      %v1315 = vpop.f32.mrb[0].mxu0
      %v1316 = vadd.f32 %v1155, %v1315
      %v1317 = vpop.f32.mrb[0].mxu0
      %1318 = vmatprep.mubr.bf16.mxu0 %v776
      %1319 = vmatmul.mubr.bf16.gmra.mrb[0].mxu0 %v775
      %v1320 = vpop.f32.mrb[0].mxu0
      %v1321 = vadd.f32 %v1160, %v1320
      %v1322 = vpop.f32.mrb[0].mxu0
      %v1323 = vpop.f32.mrb[0].mxu0
      %v1324 = vadd.f32 %v1163, %v1323
      %v1325 = vpop.f32.mrb[0].mxu0
      %1326 = vmatprep.mubr.bf16.mxu0 %v780
      %1327 = vmatmul.mubr.bf16.gmra.mrb[0].mxu0 %v779
      %v1328 = vpop.f32.mrb[0].mxu0
      %v1329 = vadd.f32 %v1168, %v1328
      %v1330 = vpop.f32.mrb[0].mxu0
      %v1331 = vpop.f32.mrb[0].mxu0
      %v1332 = vadd.f32 %v1171, %v1331
      %v1333 = vpop.f32.mrb[0].mxu0
      %1334 = vmatprep.mubr.bf16.mxu0 %v784
      %1335 = vmatmul.mubr.bf16.gmra.mrb[0].mxu0 %v783
      %v1336 = vpop.f32.mrb[0].mxu0
      %v1337 = vadd.f32 %v1176, %v1336
      %v1338 = vpop.f32.mrb[0].mxu0
      %v1339 = vpop.f32.mrb[0].mxu0
      %v1340 = vadd.f32 %v1179, %v1339
      %v1341 = vpop.f32.mrb[0].mxu0
      %1342 = vmatprep.mubr.bf16.mxu0 %v788
      %1343 = vmatmul.mubr.bf16.gmra.mrb[0].mxu0 %v787
      %v1344 = vpop.f32.mrb[0].mxu0
      %v1345 = vadd.f32 %v1184, %v1344
      %v1346 = vpop.f32.mrb[0].mxu0
      %v1347 = vpop.f32.mrb[0].mxu0
      %v1348 = vadd.f32 %v1187, %v1347
      %v1349 = vpop.f32.mrb[0].mxu0
      %1350 = vmatprep.mubr.bf16.mxu0 %v792
      %1351 = vmatmul.mubr.bf16.gmra.mrb[0].mxu0 %v791
      %v1352 = vpop.f32.mrb[0].mxu0
      %v1353 = vadd.f32 %v1192, %v1352
      %v1354 = vpop.f32.mrb[0].mxu0
      %v1355 = vpop.f32.mrb[0].mxu0
      %v1356 = vadd.f32 %v1195, %v1355
      %v1357 = vpop.f32.mrb[0].mxu0
      %1358 = vmatprep.mubr.bf16.mxu0 %v796
      %1359 = vmatmul.mubr.bf16.gmra.mrb[0].mxu0 %v795
      %v1360 = vpop.f32.mrb[0].mxu0
      %v1361 = vadd.f32 %v1200, %v1360
      %v1362 = vpop.f32.mrb[0].mxu0
      %v1363 = vpop.f32.mrb[0].mxu0
      %v1364 = vadd.f32 %v1203, %v1363
      %v1365 = vpop.f32.mrb[0].mxu0
      %1366 = vmatprep.mubr.bf16.mxu0 %v800
      %1367 = vmatmul.mubr.bf16.gmra.mrb[0].mxu0 %v799
      %v1368 = vpop.f32.mrb[0].mxu0
      %v1369 = vadd.f32 %v1208, %v1368
      %v1370 = vpop.f32.mrb[0].mxu0
      %v1371 = vpop.f32.mrb[0].mxu0
      %v1372 = vadd.f32 %v1211, %v1371
      %v1373 = vpop.f32.mrb[0].mxu0
      %1374 = vmatprep.mubr.bf16.mxu0 %v804
      %1375 = vmatmul.mubr.bf16.gmra.mrb[0].mxu0 %v803
      %v1376 = vpop.f32.mrb[0].mxu0
      %v1377 = vadd.f32 %v1216, %v1376
      %v1378 = vpop.f32.mrb[0].mxu0
      %v1379 = vpop.f32.mrb[0].mxu0
      %v1380 = vadd.f32 %v1219, %v1379
      %v1381 = vpop.f32.mrb[0].mxu0
      %1382 = vdwg.mxu0
      %v1383 = vadd.f32 %v389, %v1257
      %v1384 = vadd.f32 %v390, %v1260
      %v1385 = vadd.f32 %v391, %v1265
      %v1386 = vadd.f32 %v392, %v1268
      %v1387 = vadd.f32 %v393, %v1273
      %v1388 = vadd.f32 %v394, %v1276
      %v1389 = vadd.f32 %v395, %v1281
      %v1390 = vadd.f32 %v396, %v1284
      %v1391 = vadd.f32 %v397, %v1289
      %v1392 = vadd.f32 %v398, %v1292
      %v1393 = vadd.f32 %v399, %v1297
      %v1394 = vadd.f32 %v400, %v1300
      %v1395 = vadd.f32 %v401, %v1305
      %v1396 = vadd.f32 %v402, %v1308
      %v1397 = vadd.f32 %v403, %v1313
      %v1398 = vadd.f32 %v404, %v1316
      %v1399 = vadd.f32 %v405, %v1321
      %v1400 = vadd.f32 %v406, %v1324
      %v1401 = vadd.f32 %v407, %v1329
      %v1402 = vadd.f32 %v408, %v1332
      %v1403 = vadd.f32 %v409, %v1337
      %v1404 = vadd.f32 %v410, %v1340
      %v1405 = vadd.f32 %v411, %v1345
      %v1406 = vadd.f32 %v412, %v1348
      %v1407 = vadd.f32 %v413, %v1353
      %v1408 = vadd.f32 %v414, %v1356
      %v1409 = vadd.f32 %v415, %v1361
      %v1410 = vadd.f32 %v416, %v1364
      %v1411 = vadd.f32 %v417, %v1369
      %v1412 = vadd.f32 %v418, %v1372
      %v1413 = vadd.f32 %v419, %v1377
      %v1414 = vadd.f32 %v420, %v1380
      %1415 = vst [vmem:[#allocation2] sm:$0xff] %v1383
      %1416 = vst [vmem:[#allocation2 + $0x8] sm:$0xff] %v1384
      %1417 = vst [vmem:[#allocation2 + $0x10] sm:$0xff] %v1385
      %1418 = vst [vmem:[#allocation2 + $0x18] sm:$0xff] %v1386
      %1419 = vst [vmem:[#allocation2 + $0x20] sm:$0xff] %v1387
      %1420 = vst [vmem:[#allocation2 + $0x28] sm:$0xff] %v1388
      %1421 = vst [vmem:[#allocation2 + $0x30] sm:$0xff] %v1389
      %1422 = vst [vmem:[#allocation2 + $0x38] sm:$0xff] %v1390
      %1423 = vst [vmem:[#allocation2 + $0x40] sm:$0xff] %v1391
      %1424 = vst [vmem:[#allocation2 + $0x48] sm:$0xff] %v1392
      %1425 = vst [vmem:[#allocation2 + $0x50] sm:$0xff] %v1393
      %1426 = vst [vmem:[#allocation2 + $0x58] sm:$0xff] %v1394
      %1427 = vst [vmem:[#allocation2 + $0x60] sm:$0xff] %v1395
      %1428 = vst [vmem:[#allocation2 + $0x68] sm:$0xff] %v1396
      %1429 = vst [vmem:[#allocation2 + $0x70] sm:$0xff] %v1397
      %1430 = vst [vmem:[#allocation2 + $0x78] sm:$0xff] %v1398
      %1431 = vst [vmem:[#allocation2 + $0x80] sm:$0xff] %v1399
      %1432 = vst [vmem:[#allocation2 + $0x88] sm:$0xff] %v1400
      %1433 = vst [vmem:[#allocation2 + $0x90] sm:$0xff] %v1401
      %1434 = vst [vmem:[#allocation2 + $0x98] sm:$0xff] %v1402
      %1435 = vst [vmem:[#allocation2 + $0xa0] sm:$0xff] %v1403
      %1436 = vst [vmem:[#allocation2 + $0xa8] sm:$0xff] %v1404
      %1437 = vst [vmem:[#allocation2 + $0xb0] sm:$0xff] %v1405
      %1438 = vst [vmem:[#allocation2 + $0xb8] sm:$0xff] %v1406
      %1439 = vst [vmem:[#allocation2 + $0xc0] sm:$0xff] %v1407
      %1440 = vst [vmem:[#allocation2 + $0xc8] sm:$0xff] %v1408
      %1441 = vst [vmem:[#allocation2 + $0xd0] sm:$0xff] %v1409
      %1442 = vst [vmem:[#allocation2 + $0xd8] sm:$0xff] %v1410
      %1443 = vst [vmem:[#allocation2 + $0xe0] sm:$0xff] %v1411
      %1444 = vst [vmem:[#allocation2 + $0xe8] sm:$0xff] %v1412
      %1445 = vst [vmem:[#allocation2 + $0xf0] sm:$0xff] %v1413
      %1446 = vst [vmem:[#allocation2 + $0xf8] sm:$0xff] %v1414
      // Predicated region
      $region49: #{graphsage_forward.4} parent=43 // pred_check
        %p1447 = pneg %p353
      $region50: #{graphsage_forward.4} parent=43 // pred_check_branch
        %1449 = sbr.rel (%p1447) target = $region52
      $region51: #{graphsage_forward.4} parent=43 // pred_region
        %v1450 = vld [vmem:[#allocation2] sm:$0xff]
        %v1451 = vld [vmem:[#allocation2 + $0x8] sm:$0xff]
        %v1452 = vld [vmem:[#allocation2 + $0x10] sm:$0xff]
        %v1453 = vld [vmem:[#allocation2 + $0x18] sm:$0xff]
        %v1454 = vld [vmem:[#allocation2 + $0x20] sm:$0xff]
        %v1455 = vld [vmem:[#allocation2 + $0x28] sm:$0xff]
        %v1456 = vld [vmem:[#allocation2 + $0x30] sm:$0xff]
        %v1457 = vld [vmem:[#allocation2 + $0x38] sm:$0xff]
        %v1458 = vld [vmem:[#allocation2 + $0x40] sm:$0xff]
        %v1459 = vld [vmem:[#allocation2 + $0x48] sm:$0xff]
        %v1460 = vld [vmem:[#allocation2 + $0x50] sm:$0xff]
        %v1461 = vld [vmem:[#allocation2 + $0x58] sm:$0xff]
        %v1462 = vld [vmem:[#allocation2 + $0x60] sm:$0xff]
        %v1463 = vld [vmem:[#allocation2 + $0x68] sm:$0xff]
        %v1464 = vld [vmem:[#allocation2 + $0x70] sm:$0xff]
        %v1465 = vld [vmem:[#allocation2 + $0x78] sm:$0xff]
        %v1466 = vld [vmem:[#allocation2 + $0x80] sm:$0xff]
        %v1467 = vld [vmem:[#allocation2 + $0x88] sm:$0xff]
        %v1468 = vld [vmem:[#allocation2 + $0x90] sm:$0xff]
        %v1469 = vld [vmem:[#allocation2 + $0x98] sm:$0xff]
        %v1470 = vld [vmem:[#allocation2 + $0xa0] sm:$0xff]
        %v1471 = vld [vmem:[#allocation2 + $0xa8] sm:$0xff]
        %v1472 = vld [vmem:[#allocation2 + $0xb0] sm:$0xff]
        %v1473 = vld [vmem:[#allocation2 + $0xb8] sm:$0xff]
        %v1474 = vld [vmem:[#allocation2 + $0xc0] sm:$0xff]
        %v1475 = vld [vmem:[#allocation2 + $0xc8] sm:$0xff]
        %v1476 = vld [vmem:[#allocation2 + $0xd0] sm:$0xff]
        %v1477 = vld [vmem:[#allocation2 + $0xd8] sm:$0xff]
        %v1478 = vld [vmem:[#allocation2 + $0xe0] sm:$0xff]
        %v1479 = vld [vmem:[#allocation2 + $0xe8] sm:$0xff]
        %v1480 = vld [vmem:[#allocation2 + $0xf0] sm:$0xff]
        %v1481 = vld [vmem:[#allocation2 + $0xf8] sm:$0xff]
        %v1482 = vld [vmem:[%s344] sm:$0xff]
        %v1483 = vld [vmem:[%s344 + $0x8] sm:$0xff]
        %v1484 = vld [vmem:[%s344 + $0x10] sm:$0xff]
        %v1485 = vld [vmem:[%s344 + $0x18] sm:$0xff]
        %v1486 = vld [vmem:[%s344 + $0x20] sm:$0xff]
        %v1487 = vld [vmem:[%s344 + $0x28] sm:$0xff]
        %v1488 = vld [vmem:[%s344 + $0x30] sm:$0xff]
        %v1489 = vld [vmem:[%s344 + $0x38] sm:$0xff]
        %v1490 = vld [vmem:[%s344 + $0x40] sm:$0xff]
        %v1491 = vld [vmem:[%s344 + $0x48] sm:$0xff]
        %v1492 = vld [vmem:[%s344 + $0x50] sm:$0xff]
        %v1493 = vld [vmem:[%s344 + $0x58] sm:$0xff]
        %v1494 = vld [vmem:[%s344 + $0x60] sm:$0xff]
        %v1495 = vld [vmem:[%s344 + $0x68] sm:$0xff]
        %v1496 = vld [vmem:[%s344 + $0x70] sm:$0xff]
        %v1497 = vld [vmem:[%s344 + $0x78] sm:$0xff]
        %v1498 = vld [vmem:[%s344 + $0x80] sm:$0xff]
        %v1499 = vld [vmem:[%s344 + $0x88] sm:$0xff]
        %v1500 = vld [vmem:[%s344 + $0x90] sm:$0xff]
        %v1501 = vld [vmem:[%s344 + $0x98] sm:$0xff]
        %v1502 = vld [vmem:[%s344 + $0xa0] sm:$0xff]
        %v1503 = vld [vmem:[%s344 + $0xa8] sm:$0xff]
        %v1504 = vld [vmem:[%s344 + $0xb0] sm:$0xff]
        %v1505 = vld [vmem:[%s344 + $0xb8] sm:$0xff]
        %v1506 = vld [vmem:[%s344 + $0xc0] sm:$0xff]
        %v1507 = vld [vmem:[%s344 + $0xc8] sm:$0xff]
        %v1508 = vld [vmem:[%s344 + $0xd0] sm:$0xff]
        %v1509 = vld [vmem:[%s344 + $0xd8] sm:$0xff]
        %v1510 = vld [vmem:[%s344 + $0xe0] sm:$0xff]
        %v1511 = vld [vmem:[%s344 + $0xe8] sm:$0xff]
        %v1512 = vld [vmem:[%s344 + $0xf0] sm:$0xff]
        %v1513 = vld [vmem:[%s344 + $0xf8] sm:$0xff]
        %1515 = vset.pattern.permute.xlu0 0
        %1516 = vperm.xlu0 %1515, %v1482
        %v1517 = vpop.permute.xlu0 %1516
        %1520 = vset.pattern.permute.xlu0 0
        %1521 = vperm.xlu0 %1520, %v1483
        %v1522 = vpop.permute.xlu0 %1521
        %1525 = vset.pattern.permute.xlu0 0
        %1526 = vperm.xlu0 %1525, %v1484
        %v1527 = vpop.permute.xlu0 %1526
        %1530 = vset.pattern.permute.xlu0 0
        %1531 = vperm.xlu0 %1530, %v1485
        %v1532 = vpop.permute.xlu0 %1531
        %1535 = vset.pattern.permute.xlu0 0
        %1536 = vperm.xlu0 %1535, %v1486
        %v1537 = vpop.permute.xlu0 %1536
        %1540 = vset.pattern.permute.xlu0 0
        %1541 = vperm.xlu0 %1540, %v1487
        %v1542 = vpop.permute.xlu0 %1541
        %1545 = vset.pattern.permute.xlu0 0
        %1546 = vperm.xlu0 %1545, %v1488
        %v1547 = vpop.permute.xlu0 %1546
        %1550 = vset.pattern.permute.xlu0 0
        %1551 = vperm.xlu0 %1550, %v1489
        %v1552 = vpop.permute.xlu0 %1551
        %1555 = vset.pattern.permute.xlu0 0
        %1556 = vperm.xlu0 %1555, %v1490
        %v1557 = vpop.permute.xlu0 %1556
        %1560 = vset.pattern.permute.xlu0 0
        %1561 = vperm.xlu0 %1560, %v1491
        %v1562 = vpop.permute.xlu0 %1561
        %1565 = vset.pattern.permute.xlu0 0
        %1566 = vperm.xlu0 %1565, %v1492
        %v1567 = vpop.permute.xlu0 %1566
        %1570 = vset.pattern.permute.xlu0 0
        %1571 = vperm.xlu0 %1570, %v1493
        %v1572 = vpop.permute.xlu0 %1571
        %1575 = vset.pattern.permute.xlu0 0
        %1576 = vperm.xlu0 %1575, %v1494
        %v1577 = vpop.permute.xlu0 %1576
        %1580 = vset.pattern.permute.xlu0 0
        %1581 = vperm.xlu0 %1580, %v1495
        %v1582 = vpop.permute.xlu0 %1581
        %1585 = vset.pattern.permute.xlu0 0
        %1586 = vperm.xlu0 %1585, %v1496
        %v1587 = vpop.permute.xlu0 %1586
        %1590 = vset.pattern.permute.xlu0 0
        %1591 = vperm.xlu0 %1590, %v1497
        %v1592 = vpop.permute.xlu0 %1591
        %1595 = vset.pattern.permute.xlu0 0
        %1596 = vperm.xlu0 %1595, %v1498
        %v1597 = vpop.permute.xlu0 %1596
        %1600 = vset.pattern.permute.xlu0 0
        %1601 = vperm.xlu0 %1600, %v1499
        %v1602 = vpop.permute.xlu0 %1601
        %1605 = vset.pattern.permute.xlu0 0
        %1606 = vperm.xlu0 %1605, %v1500
        %v1607 = vpop.permute.xlu0 %1606
        %1610 = vset.pattern.permute.xlu0 0
        %1611 = vperm.xlu0 %1610, %v1501
        %v1612 = vpop.permute.xlu0 %1611
        %1615 = vset.pattern.permute.xlu0 0
        %1616 = vperm.xlu0 %1615, %v1502
        %v1617 = vpop.permute.xlu0 %1616
        %1620 = vset.pattern.permute.xlu0 0
        %1621 = vperm.xlu0 %1620, %v1503
        %v1622 = vpop.permute.xlu0 %1621
        %1625 = vset.pattern.permute.xlu0 0
        %1626 = vperm.xlu0 %1625, %v1504
        %v1627 = vpop.permute.xlu0 %1626
        %1630 = vset.pattern.permute.xlu0 0
        %1631 = vperm.xlu0 %1630, %v1505
        %v1632 = vpop.permute.xlu0 %1631
        %1635 = vset.pattern.permute.xlu0 0
        %1636 = vperm.xlu0 %1635, %v1506
        %v1637 = vpop.permute.xlu0 %1636
        %1640 = vset.pattern.permute.xlu0 0
        %1641 = vperm.xlu0 %1640, %v1507
        %v1642 = vpop.permute.xlu0 %1641
        %1645 = vset.pattern.permute.xlu0 0
        %1646 = vperm.xlu0 %1645, %v1508
        %v1647 = vpop.permute.xlu0 %1646
        %1650 = vset.pattern.permute.xlu0 0
        %1651 = vperm.xlu0 %1650, %v1509
        %v1652 = vpop.permute.xlu0 %1651
        %1655 = vset.pattern.permute.xlu0 0
        %1656 = vperm.xlu0 %1655, %v1510
        %v1657 = vpop.permute.xlu0 %1656
        %1660 = vset.pattern.permute.xlu0 0
        %1661 = vperm.xlu0 %1660, %v1511
        %v1662 = vpop.permute.xlu0 %1661
        %1665 = vset.pattern.permute.xlu0 0
        %1666 = vperm.xlu0 %1665, %v1512
        %v1667 = vpop.permute.xlu0 %1666
        %1670 = vset.pattern.permute.xlu0 0
        %1671 = vperm.xlu0 %1670, %v1513
        %v1672 = vpop.permute.xlu0 %1671
        %v1674 = vmul.f32 %v1450, %v1517
        %v1675 = vmul.f32 %v1451, %v1522
        %v1676 = vmul.f32 %v1452, %v1527
        %v1677 = vmul.f32 %v1453, %v1532
        %v1678 = vmul.f32 %v1454, %v1537
        %v1679 = vmul.f32 %v1455, %v1542
        %v1680 = vmul.f32 %v1456, %v1547
        %v1681 = vmul.f32 %v1457, %v1552
        %v1682 = vmul.f32 %v1458, %v1557
        %v1683 = vmul.f32 %v1459, %v1562
        %v1684 = vmul.f32 %v1460, %v1567
        %v1685 = vmul.f32 %v1461, %v1572
        %v1686 = vmul.f32 %v1462, %v1577
        %v1687 = vmul.f32 %v1463, %v1582
        %v1688 = vmul.f32 %v1464, %v1587
        %v1689 = vmul.f32 %v1465, %v1592
        %v1690 = vmul.f32 %v1466, %v1597
        %v1691 = vmul.f32 %v1467, %v1602
        %v1692 = vmul.f32 %v1468, %v1607
        %v1693 = vmul.f32 %v1469, %v1612
        %v1694 = vmul.f32 %v1470, %v1617
        %v1695 = vmul.f32 %v1471, %v1622
        %v1696 = vmul.f32 %v1472, %v1627
        %v1697 = vmul.f32 %v1473, %v1632
        %v1698 = vmul.f32 %v1474, %v1637
        %v1699 = vmul.f32 %v1475, %v1642
        %v1700 = vmul.f32 %v1476, %v1647
        %v1701 = vmul.f32 %v1477, %v1652
        %v1702 = vmul.f32 %v1478, %v1657
        %v1703 = vmul.f32 %v1479, %v1662
        %v1704 = vmul.f32 %v1480, %v1667
        %v1705 = vmul.f32 %v1481, %v1672
        %v1706 = vpack.c.bf16 %v1675, %v1674
        %v1707 = vpack.c.bf16 %v1677, %v1676
        %v1708 = vpack.c.bf16 %v1679, %v1678
        %v1709 = vpack.c.bf16 %v1681, %v1680
        %v1710 = vpack.c.bf16 %v1683, %v1682
        %v1711 = vpack.c.bf16 %v1685, %v1684
        %v1712 = vpack.c.bf16 %v1687, %v1686
        %v1713 = vpack.c.bf16 %v1689, %v1688
        %v1714 = vpack.c.bf16 %v1691, %v1690
        %v1715 = vpack.c.bf16 %v1693, %v1692
        %v1716 = vpack.c.bf16 %v1695, %v1694
        %v1717 = vpack.c.bf16 %v1697, %v1696
        %v1718 = vpack.c.bf16 %v1699, %v1698
        %v1719 = vpack.c.bf16 %v1701, %v1700
        %v1720 = vpack.c.bf16 %v1703, %v1702
        %v1721 = vpack.c.bf16 %v1705, %v1704
        %v1722 = vld [vmem:[%s338] sm:$0xf]
        %v1723 = vld [vmem:[%s338 + $0x4] sm:$0xf]
        %v1724 = vld [vmem:[%s338 + $0x8] sm:$0xf]
        %v1725 = vld [vmem:[%s338 + $0xc] sm:$0xf]
        %v1726 = vld [vmem:[%s338 + $0x10] sm:$0xf]
        %v1727 = vld [vmem:[%s338 + $0x14] sm:$0xf]
        %v1728 = vld [vmem:[%s338 + $0x18] sm:$0xf]
        %v1729 = vld [vmem:[%s338 + $0x1c] sm:$0xf]
        %v1730 = vld [vmem:[%s338 + $0x20] sm:$0xf]
        %v1731 = vld [vmem:[%s338 + $0x24] sm:$0xf]
        %v1732 = vld [vmem:[%s338 + $0x28] sm:$0xf]
        %v1733 = vld [vmem:[%s338 + $0x2c] sm:$0xf]
        %v1734 = vld [vmem:[%s338 + $0x30] sm:$0xf]
        %v1735 = vld [vmem:[%s338 + $0x34] sm:$0xf]
        %v1736 = vld [vmem:[%s338 + $0x38] sm:$0xf]
        %v1737 = vld [vmem:[%s338 + $0x3c] sm:$0xf]
        %v1738 = vld [vmem:[%s338 + $0x40] sm:$0xf]
        %v1739 = vld [vmem:[%s338 + $0x44] sm:$0xf]
        %v1740 = vld [vmem:[%s338 + $0x48] sm:$0xf]
        %v1741 = vld [vmem:[%s338 + $0x4c] sm:$0xf]
        %v1742 = vld [vmem:[%s338 + $0x50] sm:$0xf]
        %v1743 = vld [vmem:[%s338 + $0x54] sm:$0xf]
        %v1744 = vld [vmem:[%s338 + $0x58] sm:$0xf]
        %v1745 = vld [vmem:[%s338 + $0x5c] sm:$0xf]
        %v1746 = vld [vmem:[%s338 + $0x60] sm:$0xf]
        %v1747 = vld [vmem:[%s338 + $0x64] sm:$0xf]
        %v1748 = vld [vmem:[%s338 + $0x68] sm:$0xf]
        %v1749 = vld [vmem:[%s338 + $0x6c] sm:$0xf]
        %v1750 = vld [vmem:[%s338 + $0x70] sm:$0xf]
        %v1751 = vld [vmem:[%s338 + $0x74] sm:$0xf]
        %v1752 = vld [vmem:[%s338 + $0x78] sm:$0xf]
        %v1753 = vld [vmem:[%s338 + $0x7c] sm:$0xf]
        %v1786 = vunpack.c.l.b16 %v1722
        %v1787 = vunpack.c.l.b16 %v1723
        %v1788 = vunpack.c.l.b16 %v1724
        %v1789 = vunpack.c.l.b16 %v1725
        %v1790 = vunpack.c.l.b16 %v1726
        %v1791 = vunpack.c.l.b16 %v1727
        %v1792 = vunpack.c.l.b16 %v1728
        %v1793 = vunpack.c.l.b16 %v1729
        %v1794 = vunpack.c.l.b16 %v1730
        %v1795 = vunpack.c.l.b16 %v1731
        %v1796 = vunpack.c.l.b16 %v1732
        %v1797 = vunpack.c.l.b16 %v1733
        %v1798 = vunpack.c.l.b16 %v1734
        %v1799 = vunpack.c.l.b16 %v1735
        %v1800 = vunpack.c.l.b16 %v1736
        %v1801 = vunpack.c.l.b16 %v1737
        %v1802 = vunpack.c.l.b16 %v1738
        %v1803 = vunpack.c.l.b16 %v1739
        %v1804 = vunpack.c.l.b16 %v1740
        %v1805 = vunpack.c.l.b16 %v1741
        %v1806 = vunpack.c.l.b16 %v1742
        %v1807 = vunpack.c.l.b16 %v1743
        %v1808 = vunpack.c.l.b16 %v1744
        %v1809 = vunpack.c.l.b16 %v1745
        %v1810 = vunpack.c.l.b16 %v1746
        %v1811 = vunpack.c.l.b16 %v1747
        %v1812 = vunpack.c.l.b16 %v1748
        %v1813 = vunpack.c.l.b16 %v1749
        %v1814 = vunpack.c.l.b16 %v1750
        %v1815 = vunpack.c.l.b16 %v1751
        %v1816 = vunpack.c.l.b16 %v1752
        %v1817 = vunpack.c.l.b16 %v1753
        %v1818 = vpack.c.b16 %v1787, %v1786
        %v1819 = vpack.c.b16 %v1789, %v1788
        %v1820 = vpack.c.b16 %v1791, %v1790
        %v1821 = vpack.c.b16 %v1793, %v1792
        %v1822 = vpack.c.b16 %v1795, %v1794
        %v1823 = vpack.c.b16 %v1797, %v1796
        %v1824 = vpack.c.b16 %v1799, %v1798
        %v1825 = vpack.c.b16 %v1801, %v1800
        %v1826 = vpack.c.b16 %v1803, %v1802
        %v1827 = vpack.c.b16 %v1805, %v1804
        %v1828 = vpack.c.b16 %v1807, %v1806
        %v1829 = vpack.c.b16 %v1809, %v1808
        %v1830 = vpack.c.b16 %v1811, %v1810
        %v1831 = vpack.c.b16 %v1813, %v1812
        %v1832 = vpack.c.b16 %v1815, %v1814
        %v1833 = vpack.c.b16 %v1817, %v1816
        %v1850 = vld [vmem:[%s4] sm:$0xf]
        %v1851 = vld [vmem:[%s4 + $0x4] sm:$0xf]
        %v1852 = vld [vmem:[%s4 + $0x8] sm:$0xf]
        %v1853 = vld [vmem:[%s4 + $0xc] sm:$0xf]
        %v1854 = vld [vmem:[%s4 + $0x10] sm:$0xf]
        %v1855 = vld [vmem:[%s4 + $0x14] sm:$0xf]
        %v1856 = vld [vmem:[%s4 + $0x18] sm:$0xf]
        %v1857 = vld [vmem:[%s4 + $0x1c] sm:$0xf]
        %v1858 = vld [vmem:[%s4 + $0x20] sm:$0xf]
        %v1859 = vld [vmem:[%s4 + $0x24] sm:$0xf]
        %v1860 = vld [vmem:[%s4 + $0x28] sm:$0xf]
        %v1861 = vld [vmem:[%s4 + $0x2c] sm:$0xf]
        %v1862 = vld [vmem:[%s4 + $0x30] sm:$0xf]
        %v1863 = vld [vmem:[%s4 + $0x34] sm:$0xf]
        %v1864 = vld [vmem:[%s4 + $0x38] sm:$0xf]
        %v1865 = vld [vmem:[%s4 + $0x3c] sm:$0xf]
        %v1866 = vld [vmem:[%s4 + $0x40] sm:$0xf]
        %v1867 = vld [vmem:[%s4 + $0x44] sm:$0xf]
        %v1868 = vld [vmem:[%s4 + $0x48] sm:$0xf]
        %v1869 = vld [vmem:[%s4 + $0x4c] sm:$0xf]
        %v1870 = vld [vmem:[%s4 + $0x50] sm:$0xf]
        %v1871 = vld [vmem:[%s4 + $0x54] sm:$0xf]
        %v1872 = vld [vmem:[%s4 + $0x58] sm:$0xf]
        %v1873 = vld [vmem:[%s4 + $0x5c] sm:$0xf]
        %v1874 = vld [vmem:[%s4 + $0x60] sm:$0xf]
        %v1875 = vld [vmem:[%s4 + $0x64] sm:$0xf]
        %v1876 = vld [vmem:[%s4 + $0x68] sm:$0xf]
        %v1877 = vld [vmem:[%s4 + $0x6c] sm:$0xf]
        %v1878 = vld [vmem:[%s4 + $0x70] sm:$0xf]
        %v1879 = vld [vmem:[%s4 + $0x74] sm:$0xf]
        %v1880 = vld [vmem:[%s4 + $0x78] sm:$0xf]
        %v1881 = vld [vmem:[%s4 + $0x7c] sm:$0xf]
        %v1882 = vld [vmem:[%s5] sm:$0x1]
        %v1884 = vlaneseq
        %v1885 = vshrl.u32 %v1884, 7
        %v1886 = vsub.s32 0, %v1885
        %v1887 = vrot.slane %v1882, %v1886
        %v1921 = vunpack.c.l.b16 %v1850
        %v1922 = vunpack.c.l.b16 %v1851
        %v1923 = vunpack.c.l.b16 %v1852
        %v1924 = vunpack.c.l.b16 %v1853
        %v1925 = vunpack.c.l.b16 %v1854
        %v1926 = vunpack.c.l.b16 %v1855
        %v1927 = vunpack.c.l.b16 %v1856
        %v1928 = vunpack.c.l.b16 %v1857
        %v1929 = vunpack.c.l.b16 %v1858
        %v1930 = vunpack.c.l.b16 %v1859
        %v1931 = vunpack.c.l.b16 %v1860
        %v1932 = vunpack.c.l.b16 %v1861
        %v1933 = vunpack.c.l.b16 %v1862
        %v1934 = vunpack.c.l.b16 %v1863
        %v1935 = vunpack.c.l.b16 %v1864
        %v1936 = vunpack.c.l.b16 %v1865
        %v1937 = vunpack.c.l.b16 %v1866
        %v1938 = vunpack.c.l.b16 %v1867
        %v1939 = vunpack.c.l.b16 %v1868
        %v1940 = vunpack.c.l.b16 %v1869
        %v1941 = vunpack.c.l.b16 %v1870
        %v1942 = vunpack.c.l.b16 %v1871
        %v1943 = vunpack.c.l.b16 %v1872
        %v1944 = vunpack.c.l.b16 %v1873
        %v1945 = vunpack.c.l.b16 %v1874
        %v1946 = vunpack.c.l.b16 %v1875
        %v1947 = vunpack.c.l.b16 %v1876
        %v1948 = vunpack.c.l.b16 %v1877
        %v1949 = vunpack.c.l.b16 %v1878
        %v1950 = vunpack.c.l.b16 %v1879
        %v1951 = vunpack.c.l.b16 %v1880
        %v1952 = vunpack.c.l.b16 %v1881
        %v1953 = vpack.c.b16 %v1922, %v1921
        %v1954 = vpack.c.b16 %v1924, %v1923
        %v1955 = vpack.c.b16 %v1926, %v1925
        %v1956 = vpack.c.b16 %v1928, %v1927
        %v1957 = vpack.c.b16 %v1930, %v1929
        %v1958 = vpack.c.b16 %v1932, %v1931
        %v1959 = vpack.c.b16 %v1934, %v1933
        %v1960 = vpack.c.b16 %v1936, %v1935
        %v1961 = vpack.c.b16 %v1938, %v1937
        %v1962 = vpack.c.b16 %v1940, %v1939
        %v1963 = vpack.c.b16 %v1942, %v1941
        %v1964 = vpack.c.b16 %v1944, %v1943
        %v1965 = vpack.c.b16 %v1946, %v1945
        %v1966 = vpack.c.b16 %v1948, %v1947
        %v1967 = vpack.c.b16 %v1950, %v1949
        %v1968 = vpack.c.b16 %v1952, %v1951
        %1985 = vmatprep.subr.bf16.mxu0 0
        %1986 = vmatpush1.bf16.msra.mxu0 %v1953
        %1987 = vmatprep.subr.bf16.mxu0 0
        %1988 = vmatpush1.bf16.msra.mxu0 %v1954
        %1989 = vmatprep.subr.bf16.mxu0 0
        %1990 = vmatpush1.bf16.msra.mxu0 %v1955
        %1991 = vmatprep.subr.bf16.mxu0 0
        %1992 = vmatpush1.bf16.msra.mxu0 %v1956
        %1993 = vmatprep.subr.bf16.mxu0 0
        %1994 = vmatpush1.bf16.msra.mxu0 %v1957
        %1995 = vmatprep.subr.bf16.mxu0 0
        %1996 = vmatpush1.bf16.msra.mxu0 %v1958
        %1997 = vmatprep.subr.bf16.mxu0 0
        %1998 = vmatpush1.bf16.msra.mxu0 %v1959
        %1999 = vmatprep.subr.bf16.mxu0 0
        %2000 = vmatpush1.bf16.msra.mxu0 %v1960
        %2001 = vmatprep.subr.bf16.mxu0 0
        %2002 = vmatpush1.bf16.msra.mxu0 %v1961
        %2003 = vmatprep.subr.bf16.mxu0 0
        %2004 = vmatpush1.bf16.msra.mxu0 %v1962
        %2005 = vmatprep.subr.bf16.mxu0 0
        %2006 = vmatpush1.bf16.msra.mxu0 %v1963
        %2007 = vmatprep.subr.bf16.mxu0 0
        %2008 = vmatpush1.bf16.msra.mxu0 %v1964
        %2009 = vmatprep.subr.bf16.mxu0 0
        %2010 = vmatpush1.bf16.msra.mxu0 %v1965
        %2011 = vmatprep.subr.bf16.mxu0 0
        %2012 = vmatpush1.bf16.msra.mxu0 %v1966
        %2013 = vmatprep.subr.bf16.mxu0 0
        %2014 = vmatpush1.bf16.msra.mxu0 %v1967
        %2015 = vmatprep.subr.bf16.mxu0 0
        %2016 = vmatpush1.bf16.msra.mxu0 %v1968
        %2017 = vmatprep.mubr.bf16.mxu0 %v1818
        %2018 = vmatmul.mubr.bf16.gmra.mrb[0].mxu0 %v1706
        %v2019 = vpop.f32.mrb[0].mxu0
        %v2020 = vadd.f32 %v1887, %v2019
        %v2021 = vpop.f32.mrb[0].mxu0
        %v2022 = vpop.f32.mrb[0].mxu0
        %v2023 = vadd.f32 %v1887, %v2022
        %v2024 = vpop.f32.mrb[0].mxu0
        %2025 = vmatprep.mubr.bf16.mxu0 %v1819
        %2026 = vmatmul.mubr.bf16.gmra.mrb[0].mxu0 %v1707
        %v2027 = vpop.f32.mrb[0].mxu0
        %v2028 = vadd.f32 %v1887, %v2027
        %v2029 = vpop.f32.mrb[0].mxu0
        %v2030 = vpop.f32.mrb[0].mxu0
        %v2031 = vadd.f32 %v1887, %v2030
        %v2032 = vpop.f32.mrb[0].mxu0
        %2033 = vmatprep.mubr.bf16.mxu0 %v1820
        %2034 = vmatmul.mubr.bf16.gmra.mrb[0].mxu0 %v1708
        %v2035 = vpop.f32.mrb[0].mxu0
        %v2036 = vadd.f32 %v1887, %v2035
        %v2037 = vpop.f32.mrb[0].mxu0
        %v2038 = vpop.f32.mrb[0].mxu0
        %v2039 = vadd.f32 %v1887, %v2038
        %v2040 = vpop.f32.mrb[0].mxu0
        %2041 = vmatprep.mubr.bf16.mxu0 %v1821
        %2042 = vmatmul.mubr.bf16.gmra.mrb[0].mxu0 %v1709
        %v2043 = vpop.f32.mrb[0].mxu0
        %v2044 = vadd.f32 %v1887, %v2043
        %v2045 = vpop.f32.mrb[0].mxu0
        %v2046 = vpop.f32.mrb[0].mxu0
        %v2047 = vadd.f32 %v1887, %v2046
        %v2048 = vpop.f32.mrb[0].mxu0
        %2049 = vmatprep.mubr.bf16.mxu0 %v1822
        %2050 = vmatmul.mubr.bf16.gmra.mrb[0].mxu0 %v1710
        %v2051 = vpop.f32.mrb[0].mxu0
        %v2052 = vadd.f32 %v1887, %v2051
        %v2053 = vpop.f32.mrb[0].mxu0
        %v2054 = vpop.f32.mrb[0].mxu0
        %v2055 = vadd.f32 %v1887, %v2054
        %v2056 = vpop.f32.mrb[0].mxu0
        %2057 = vmatprep.mubr.bf16.mxu0 %v1823
        %2058 = vmatmul.mubr.bf16.gmra.mrb[0].mxu0 %v1711
        %v2059 = vpop.f32.mrb[0].mxu0
        %v2060 = vadd.f32 %v1887, %v2059
        %v2061 = vpop.f32.mrb[0].mxu0
        %v2062 = vpop.f32.mrb[0].mxu0
        %v2063 = vadd.f32 %v1887, %v2062
        %v2064 = vpop.f32.mrb[0].mxu0
        %2065 = vmatprep.mubr.bf16.mxu0 %v1824
        %2066 = vmatmul.mubr.bf16.gmra.mrb[0].mxu0 %v1712
        %v2067 = vpop.f32.mrb[0].mxu0
        %v2068 = vadd.f32 %v1887, %v2067
        %v2069 = vpop.f32.mrb[0].mxu0
        %v2070 = vpop.f32.mrb[0].mxu0
        %v2071 = vadd.f32 %v1887, %v2070
        %v2072 = vpop.f32.mrb[0].mxu0
        %2073 = vmatprep.mubr.bf16.mxu0 %v1825
        %2074 = vmatmul.mubr.bf16.gmra.mrb[0].mxu0 %v1713
        %v2075 = vpop.f32.mrb[0].mxu0
        %v2076 = vadd.f32 %v1887, %v2075
        %v2077 = vpop.f32.mrb[0].mxu0
        %v2078 = vpop.f32.mrb[0].mxu0
        %v2079 = vadd.f32 %v1887, %v2078
        %v2080 = vpop.f32.mrb[0].mxu0
        %2081 = vmatprep.mubr.bf16.mxu0 %v1826
        %2082 = vmatmul.mubr.bf16.gmra.mrb[0].mxu0 %v1714
        %v2083 = vpop.f32.mrb[0].mxu0
        %v2084 = vadd.f32 %v1887, %v2083
        %v2085 = vpop.f32.mrb[0].mxu0
        %v2086 = vpop.f32.mrb[0].mxu0
        %v2087 = vadd.f32 %v1887, %v2086
        %v2088 = vpop.f32.mrb[0].mxu0
        %2089 = vmatprep.mubr.bf16.mxu0 %v1827
        %2090 = vmatmul.mubr.bf16.gmra.mrb[0].mxu0 %v1715
        %v2091 = vpop.f32.mrb[0].mxu0
        %v2092 = vadd.f32 %v1887, %v2091
        %v2093 = vpop.f32.mrb[0].mxu0
        %v2094 = vpop.f32.mrb[0].mxu0
        %v2095 = vadd.f32 %v1887, %v2094
        %v2096 = vpop.f32.mrb[0].mxu0
        %2097 = vmatprep.mubr.bf16.mxu0 %v1828
        %2098 = vmatmul.mubr.bf16.gmra.mrb[0].mxu0 %v1716
        %v2099 = vpop.f32.mrb[0].mxu0
        %v2100 = vadd.f32 %v1887, %v2099
        %v2101 = vpop.f32.mrb[0].mxu0
        %v2102 = vpop.f32.mrb[0].mxu0
        %v2103 = vadd.f32 %v1887, %v2102
        %v2104 = vpop.f32.mrb[0].mxu0
        %2105 = vmatprep.mubr.bf16.mxu0 %v1829
        %2106 = vmatmul.mubr.bf16.gmra.mrb[0].mxu0 %v1717
        %v2107 = vpop.f32.mrb[0].mxu0
        %v2108 = vadd.f32 %v1887, %v2107
        %v2109 = vpop.f32.mrb[0].mxu0
        %v2110 = vpop.f32.mrb[0].mxu0
        %v2111 = vadd.f32 %v1887, %v2110
        %v2112 = vpop.f32.mrb[0].mxu0
        %2113 = vmatprep.mubr.bf16.mxu0 %v1830
        %2114 = vmatmul.mubr.bf16.gmra.mrb[0].mxu0 %v1718
        %v2115 = vpop.f32.mrb[0].mxu0
        %v2116 = vadd.f32 %v1887, %v2115
        %v2117 = vpop.f32.mrb[0].mxu0
        %v2118 = vpop.f32.mrb[0].mxu0
        %v2119 = vadd.f32 %v1887, %v2118
        %v2120 = vpop.f32.mrb[0].mxu0
        %2121 = vmatprep.mubr.bf16.mxu0 %v1831
        %2122 = vmatmul.mubr.bf16.gmra.mrb[0].mxu0 %v1719
        %v2123 = vpop.f32.mrb[0].mxu0
        %v2124 = vadd.f32 %v1887, %v2123
        %v2125 = vpop.f32.mrb[0].mxu0
        %v2126 = vpop.f32.mrb[0].mxu0
        %v2127 = vadd.f32 %v1887, %v2126
        %v2128 = vpop.f32.mrb[0].mxu0
        %2129 = vmatprep.mubr.bf16.mxu0 %v1832
        %2130 = vmatmul.mubr.bf16.gmra.mrb[0].mxu0 %v1720
        %v2131 = vpop.f32.mrb[0].mxu0
        %v2132 = vadd.f32 %v1887, %v2131
        %v2133 = vpop.f32.mrb[0].mxu0
        %v2134 = vpop.f32.mrb[0].mxu0
        %v2135 = vadd.f32 %v1887, %v2134
        %v2136 = vpop.f32.mrb[0].mxu0
        %2137 = vmatprep.mubr.bf16.mxu0 %v1833
        %2138 = vmatmul.mubr.bf16.gmra.mrb[0].mxu0 %v1721
        %v2139 = vpop.f32.mrb[0].mxu0
        %v2140 = vadd.f32 %v1887, %v2139
        %v2141 = vpop.f32.mrb[0].mxu0
        %v2142 = vpop.f32.mrb[0].mxu0
        %v2143 = vadd.f32 %v1887, %v2142
        %v2144 = vpop.f32.mrb[0].mxu0
        %2145 = vdwg.mxu0
        %v2146 = vmax.f32 %v2020, 0.0
        %v2147 = vmax.f32 %v2023, 0.0
        %v2148 = vmax.f32 %v2028, 0.0
        %v2149 = vmax.f32 %v2031, 0.0
        %v2150 = vmax.f32 %v2036, 0.0
        %v2151 = vmax.f32 %v2039, 0.0
        %v2152 = vmax.f32 %v2044, 0.0
        %v2153 = vmax.f32 %v2047, 0.0
        %v2154 = vmax.f32 %v2052, 0.0
        %v2155 = vmax.f32 %v2055, 0.0
        %v2156 = vmax.f32 %v2060, 0.0
        %v2157 = vmax.f32 %v2063, 0.0
        %v2158 = vmax.f32 %v2068, 0.0
        %v2159 = vmax.f32 %v2071, 0.0
        %v2160 = vmax.f32 %v2076, 0.0
        %v2161 = vmax.f32 %v2079, 0.0
        %v2162 = vmax.f32 %v2084, 0.0
        %v2163 = vmax.f32 %v2087, 0.0
        %v2164 = vmax.f32 %v2092, 0.0
        %v2165 = vmax.f32 %v2095, 0.0
        %v2166 = vmax.f32 %v2100, 0.0
        %v2167 = vmax.f32 %v2103, 0.0
        %v2168 = vmax.f32 %v2108, 0.0
        %v2169 = vmax.f32 %v2111, 0.0
        %v2170 = vmax.f32 %v2116, 0.0
        %v2171 = vmax.f32 %v2119, 0.0
        %v2172 = vmax.f32 %v2124, 0.0
        %v2173 = vmax.f32 %v2127, 0.0
        %v2174 = vmax.f32 %v2132, 0.0
        %v2175 = vmax.f32 %v2135, 0.0
        %v2176 = vmax.f32 %v2140, 0.0
        %v2177 = vmax.f32 %v2143, 0.0
        %v2178 = vpack.c.bf16 %v2147, %v2146
        %v2179 = vpack.c.bf16 %v2149, %v2148
        %v2180 = vpack.c.bf16 %v2151, %v2150
        %v2181 = vpack.c.bf16 %v2153, %v2152
        %v2182 = vpack.c.bf16 %v2155, %v2154
        %v2183 = vpack.c.bf16 %v2157, %v2156
        %v2184 = vpack.c.bf16 %v2159, %v2158
        %v2185 = vpack.c.bf16 %v2161, %v2160
        %v2186 = vpack.c.bf16 %v2163, %v2162
        %v2187 = vpack.c.bf16 %v2165, %v2164
        %v2188 = vpack.c.bf16 %v2167, %v2166
        %v2189 = vpack.c.bf16 %v2169, %v2168
        %v2190 = vpack.c.bf16 %v2171, %v2170
        %v2191 = vpack.c.bf16 %v2173, %v2172
        %v2192 = vpack.c.bf16 %v2175, %v2174
        %v2193 = vpack.c.bf16 %v2177, %v2176
        %v2210 = vunpack.c.l.b16 %v2178
        %v2211 = vunpack.c.h.b16 %v2178
        %v2212 = vunpack.c.l.b16 %v2179
        %v2213 = vunpack.c.h.b16 %v2179
        %v2214 = vunpack.c.l.b16 %v2180
        %v2215 = vunpack.c.h.b16 %v2180
        %v2216 = vunpack.c.l.b16 %v2181
        %v2217 = vunpack.c.h.b16 %v2181
        %v2218 = vunpack.c.l.b16 %v2182
        %v2219 = vunpack.c.h.b16 %v2182
        %v2220 = vunpack.c.l.b16 %v2183
        %v2221 = vunpack.c.h.b16 %v2183
        %v2222 = vunpack.c.l.b16 %v2184
        %v2223 = vunpack.c.h.b16 %v2184
        %v2224 = vunpack.c.l.b16 %v2185
        %v2225 = vunpack.c.h.b16 %v2185
        %v2226 = vunpack.c.l.b16 %v2186
        %v2227 = vunpack.c.h.b16 %v2186
        %v2228 = vunpack.c.l.b16 %v2187
        %v2229 = vunpack.c.h.b16 %v2187
        %v2230 = vunpack.c.l.b16 %v2188
        %v2231 = vunpack.c.h.b16 %v2188
        %v2232 = vunpack.c.l.b16 %v2189
        %v2233 = vunpack.c.h.b16 %v2189
        %v2234 = vunpack.c.l.b16 %v2190
        %v2235 = vunpack.c.h.b16 %v2190
        %v2236 = vunpack.c.l.b16 %v2191
        %v2237 = vunpack.c.h.b16 %v2191
        %v2238 = vunpack.c.l.b16 %v2192
        %v2239 = vunpack.c.h.b16 %v2192
        %v2240 = vunpack.c.l.b16 %v2193
        %v2241 = vunpack.c.h.b16 %v2193
        %v2242 = vpack.c.b16 %v2210, %v2210
        %v2243 = vpack.c.b16 %v2211, %v2211
        %v2244 = vpack.c.b16 %v2212, %v2212
        %v2245 = vpack.c.b16 %v2213, %v2213
        %v2246 = vpack.c.b16 %v2214, %v2214
        %v2247 = vpack.c.b16 %v2215, %v2215
        %v2248 = vpack.c.b16 %v2216, %v2216
        %v2249 = vpack.c.b16 %v2217, %v2217
        %v2250 = vpack.c.b16 %v2218, %v2218
        %v2251 = vpack.c.b16 %v2219, %v2219
        %v2252 = vpack.c.b16 %v2220, %v2220
        %v2253 = vpack.c.b16 %v2221, %v2221
        %v2254 = vpack.c.b16 %v2222, %v2222
        %v2255 = vpack.c.b16 %v2223, %v2223
        %v2256 = vpack.c.b16 %v2224, %v2224
        %v2257 = vpack.c.b16 %v2225, %v2225
        %v2258 = vpack.c.b16 %v2226, %v2226
        %v2259 = vpack.c.b16 %v2227, %v2227
        %v2260 = vpack.c.b16 %v2228, %v2228
        %v2261 = vpack.c.b16 %v2229, %v2229
        %v2262 = vpack.c.b16 %v2230, %v2230
        %v2263 = vpack.c.b16 %v2231, %v2231
        %v2264 = vpack.c.b16 %v2232, %v2232
        %v2265 = vpack.c.b16 %v2233, %v2233
        %v2266 = vpack.c.b16 %v2234, %v2234
        %v2267 = vpack.c.b16 %v2235, %v2235
        %v2268 = vpack.c.b16 %v2236, %v2236
        %v2269 = vpack.c.b16 %v2237, %v2237
        %v2270 = vpack.c.b16 %v2238, %v2238
        %v2271 = vpack.c.b16 %v2239, %v2239
        %v2272 = vpack.c.b16 %v2240, %v2240
        %v2273 = vpack.c.b16 %v2241, %v2241
        %2306 = vst [vmem:[%s350] sm:$0xf] %v2242
        %2307 = vst [vmem:[%s350 + $0x4] sm:$0xf] %v2243
        %2308 = vst [vmem:[%s350 + $0x8] sm:$0xf] %v2244
        %2309 = vst [vmem:[%s350 + $0xc] sm:$0xf] %v2245
        %2310 = vst [vmem:[%s350 + $0x10] sm:$0xf] %v2246
        %2311 = vst [vmem:[%s350 + $0x14] sm:$0xf] %v2247
        %2312 = vst [vmem:[%s350 + $0x18] sm:$0xf] %v2248
        %2313 = vst [vmem:[%s350 + $0x1c] sm:$0xf] %v2249
        %2314 = vst [vmem:[%s350 + $0x20] sm:$0xf] %v2250
        %2315 = vst [vmem:[%s350 + $0x24] sm:$0xf] %v2251
        %2316 = vst [vmem:[%s350 + $0x28] sm:$0xf] %v2252
        %2317 = vst [vmem:[%s350 + $0x2c] sm:$0xf] %v2253
        %2318 = vst [vmem:[%s350 + $0x30] sm:$0xf] %v2254
        %2319 = vst [vmem:[%s350 + $0x34] sm:$0xf] %v2255
        %2320 = vst [vmem:[%s350 + $0x38] sm:$0xf] %v2256
        %2321 = vst [vmem:[%s350 + $0x3c] sm:$0xf] %v2257
        %2322 = vst [vmem:[%s350 + $0x40] sm:$0xf] %v2258
        %2323 = vst [vmem:[%s350 + $0x44] sm:$0xf] %v2259
        %2324 = vst [vmem:[%s350 + $0x48] sm:$0xf] %v2260
        %2325 = vst [vmem:[%s350 + $0x4c] sm:$0xf] %v2261
        %2326 = vst [vmem:[%s350 + $0x50] sm:$0xf] %v2262
        %2327 = vst [vmem:[%s350 + $0x54] sm:$0xf] %v2263
        %2328 = vst [vmem:[%s350 + $0x58] sm:$0xf] %v2264
        %2329 = vst [vmem:[%s350 + $0x5c] sm:$0xf] %v2265
        %2330 = vst [vmem:[%s350 + $0x60] sm:$0xf] %v2266
        %2331 = vst [vmem:[%s350 + $0x64] sm:$0xf] %v2267
        %2332 = vst [vmem:[%s350 + $0x68] sm:$0xf] %v2268
        %2333 = vst [vmem:[%s350 + $0x6c] sm:$0xf] %v2269
        %2334 = vst [vmem:[%s350 + $0x70] sm:$0xf] %v2270
        %2335 = vst [vmem:[%s350 + $0x74] sm:$0xf] %v2271
        %2336 = vst [vmem:[%s350 + $0x78] sm:$0xf] %v2272
        %2337 = vst [vmem:[%s350 + $0x7c] sm:$0xf] %v2273
      $region52: #{graphsage_forward.4} parent=43 // pred_fallthru
        _
      %s2338 = smul.u32 32, %s21
      %p2339 = scmp.lt.s32.totalorder %s2338, 95
      %s2340 = scalar_select %p2339, %s2338, 95
      %s2341 = smul.addr %s2340, 4
      %s2342 = scalar_lea.vmem %s6, %s2341
      // Predicated region
      $region53: #{graphsage_forward.4} parent=43 // pred_check
        %p2343 = pneg %p195
      $region54: #{graphsage_forward.4} parent=43 // pred_check_branch
        %2345 = sbr.rel (%p2343) target = $region56
      $region55: #{graphsage_forward.4} parent=43 // pred_region
        %s2346 = smul.u32 32, %s21
      $region56: #{graphsage_forward.4} parent=43 // pred_fallthru
        _
    $region44: #{graphsage_forward.4} parent=5 // pred_fallthru
      _
    %p2347 = scmp.le.s32.totalorder 2, %s12
    // Predicated region
    $region57: #{graphsage_forward.4} parent=5 // pred_check
      %p2348 = pneg %p2347
    $region58: #{graphsage_forward.4} parent=5 // pred_check_branch
      %2350 = sbr.rel (%p2348) target = $region60
    $region59: #{graphsage_forward.4} parent=5 // pred_region
      %s2351 = ssub.s32 %s12, 2
      // Predicated region
      $region61: #{graphsage_forward.4} parent=59 // pred_check
        %p2352 = pneg %p201
      $region62: #{graphsage_forward.4} parent=59 // pred_check_branch
        %2354 = sbr.rel (%p2352) target = $region64
      $region63: #{graphsage_forward.4} parent=59 // pred_region
        %s2355 = smul.u32 32, %s23
        %p2356 = scmp.lt.s32.totalorder %s2355, 95
        %s2357 = scalar_select %p2356, %s2355, 95
        %s2358 = smul.addr %s2357, 4
        %s2359 = scalar_lea.vmem %s6, %s2358
      $region64: #{graphsage_forward.4} parent=59 // pred_fallthru
        _
    $region60: #{graphsage_forward.4} parent=5 // pred_fallthru
      _
  $region6: #{graphsage_forward.4} parent=0 // loop_footer
    %s16 = sadd.s32 1, %s12
  $region7: #{graphsage_forward.4} parent=0 // loop_footer_branch
    %11 = sbr.rel target = $region3
  $region8: #{graphsage_forward.4} parent=0 // loop_exit
    _

// kernel: graphsage_forward.7
$region0: #{graphsage_forward.7}
  #allocation0 [shape = 'u32[]', space=smem, size = 0x4, offset = 0x4, fixed_abs, tag = 'smem constant byte address 0x4 - core index']
  #allocation1 [shape = 'u32[144,128]{1,0:T(1,128)}', space=vmem, size = 0x12000, scoped, tag = 'internal scratch']
  #allocation2 [shape = 'f32[256,128]{1,0:T(8,128)}', space=vmem, size = 0x20000, scoped, tag = 'scratch operand']
  %s0 = inlined_call_operand.vmem [shape: bf16[512,768], index: 0, kind: input, shape index: {}]
  %s1 = inlined_call_operand.vmem [shape: bf16[768,128], index: 1, kind: input, shape index: {}]
  %s2 = inlined_call_operand.vmem [shape: bf16[512,128], index: 2, kind: input, shape index: {}]
  %s3 = inlined_call_operand.vmem [shape: f32[512,1], index: 3, kind: input, shape index: {}]
  %s4 = inlined_call_operand.vmem [shape: bf16[256,128], index: 4, kind: input, shape index: {}]
  %s5 = inlined_call_operand.vmem [shape: f32[1,128], index: 5, kind: input, shape index: {}]
  %s6 = inlined_call_operand.vmem [shape: f32[512,128], index: 6, kind: output, shape index: {}]
  %s7 = sld [smem:[#allocation0]]
  $region103: #{graphsage_forward.7} parent=0
    _
  %s9 = ssub.s32 1, %s7
  %s10 = scalar_select 0, %s9, %s7
  $region1: #{graphsage_forward.7} parent=0
    #allocation3 [shape = 'u8[262144]{0}', space=vmem, size = 0x40000, scoped, tag = 'input window, operand 0']
    loop: start=0, step=1, limit=8
    $region2: #{graphsage_forward.7} parent=1 // loop_pre_header
      _
    $region3: #{graphsage_forward.7} parent=1 // loop_header
      %s12 = sphi 0, %s16
      %p13 = scmp.ge.s32.totalorder %s12, 8
      %s19 = sphi 0, %s31
      %s20 = sphi 0, %s27
      %s21 = sphi 0, %s19
      %s22 = sphi 0, %s20
      %s23 = sphi 0, %s21
      %s24 = sphi 0, %s22
      %s36 = sphi 0, %s38
      %s39 = sphi 0, %s36
      %s40 = sphi 0, %s39
      %s56 = sphi 0, %s40
      %s62 = sphi 0, %s64
      %s65 = sphi 0, %s62
      %s66 = sphi 0, %s65
      %s82 = sphi 0, %s66
      %s88 = sphi 0, %s90
      %s91 = sphi 0, %s88
      %s92 = sphi 0, %s91
      %s108 = sphi 0, %s92
      %s114 = sphi 0, %s116
      %s117 = sphi 0, %s114
      %s118 = sphi 0, %s117
      %s134 = sphi 0, %s118
      %s138 = sphi 0, %s138
      %s140 = sphi 0, %s138
      %s141 = sphi 0, %s140
      %s155 = sphi 0, %s141
      %s159 = sphi 0, %s159
      %s161 = sphi 0, %s159
      %s162 = sphi 0, %s161
      %s176 = sphi 0, %s162
      %s182 = sphi 0, %s184
      %s185 = sphi 0, %s182
      %s186 = sphi 0, %s185
      %s202 = sphi 0, %s186
    $region4: #{graphsage_forward.7} parent=1 // loop_header_branch
      %15 = sbr.rel (%p13) target = $region8
    $region5: #{graphsage_forward.7} parent=1 // loop_body
      %s17 = ssub.s32 %s12, 1
      %s18 = ssub.s32 %s12, 2
      %s25 = sadd.s32 1, %s20
      %p26 = scmp.ge.s32.totalorder %s25, 3
      %s27 = scalar_select %p26, 0, %s25
      %s28 = sadd.s32 1, %s19
      %s29 = scalar_select %p26, %s28, %s19
      %p30 = scmp.ge.s32.totalorder %s29, 2
      %s31 = scalar_select %p30, 0, %s29
      %s32 = ssub.s32 %s19, %s31
      %s33 = ssub.s32 %s20, %s27
      %s34 = sor.u32 %s32, %s33
      %p35 = scmp.eq.s32.totalorder %s34, 0
      %s37 = sadd.s32 %s36, 1
      %s38 = scalar_select %p35, %s36, %s37
      %p41 = pneg %p35
      %p42 = scmp.eq.s32.totalorder %s12, 5
      %p43 = por %p41, %p42
      %p44 = scmp.ne.s32.totalorder %s36, %s39
      %p45 = scmp.eq.s32.totalorder %s12, 0
      %p46 = por %p44, %p45
      %p47 = scmp.ne.s32.totalorder %s36, %s39
      %p48 = scmp.eq.s32.totalorder %s17, 5
      %p49 = por %p47, %p48
      %p50 = scmp.ne.s32.totalorder %s39, %s40
      %p51 = scmp.eq.s32.totalorder %s17, 0
      %p52 = por %p50, %p51
      %p53 = scmp.ne.s32.totalorder %s39, %s40
      %p54 = scmp.eq.s32.totalorder %s18, 5
      %p55 = por %p53, %p54
      %p57 = scmp.ne.s32.totalorder %s40, %s56
      %p58 = scmp.eq.s32.totalorder %s18, 0
      %p59 = por %p57, %p58
      %s60 = ssub.s32 %s20, %s27
      %p61 = scmp.eq.s32.totalorder %s60, 0
      %s63 = sadd.s32 %s62, 1
      %s64 = scalar_select %p61, %s62, %s63
      %p67 = pneg %p61
      %p68 = scmp.eq.s32.totalorder %s12, 5
      %p69 = por %p67, %p68
      %p70 = scmp.ne.s32.totalorder %s62, %s65
      %p71 = scmp.eq.s32.totalorder %s12, 0
      %p72 = por %p70, %p71
      %p73 = scmp.ne.s32.totalorder %s62, %s65
      %p74 = scmp.eq.s32.totalorder %s17, 5
      %p75 = por %p73, %p74
      %p76 = scmp.ne.s32.totalorder %s65, %s66
      %p77 = scmp.eq.s32.totalorder %s17, 0
      %p78 = por %p76, %p77
      %p79 = scmp.ne.s32.totalorder %s65, %s66
      %p80 = scmp.eq.s32.totalorder %s18, 5
      %p81 = por %p79, %p80
      %p83 = scmp.ne.s32.totalorder %s66, %s82
      %p84 = scmp.eq.s32.totalorder %s18, 0
      %p85 = por %p83, %p84
      %s86 = ssub.s32 %s19, %s31
      %p87 = scmp.eq.s32.totalorder %s86, 0
      %s89 = sadd.s32 %s88, 1
      %s90 = scalar_select %p87, %s88, %s89
      %p93 = pneg %p87
      %p94 = scmp.eq.s32.totalorder %s12, 5
      %p95 = por %p93, %p94
      %p96 = scmp.ne.s32.totalorder %s88, %s91
      %p97 = scmp.eq.s32.totalorder %s12, 0
      %p98 = por %p96, %p97
      %p99 = scmp.ne.s32.totalorder %s88, %s91
      %p100 = scmp.eq.s32.totalorder %s17, 5
      %p101 = por %p99, %p100
      %p102 = scmp.ne.s32.totalorder %s91, %s92
      %p103 = scmp.eq.s32.totalorder %s17, 0
      %p104 = por %p102, %p103
      %p105 = scmp.ne.s32.totalorder %s91, %s92
      %p106 = scmp.eq.s32.totalorder %s18, 5
      %p107 = por %p105, %p106
      %p109 = scmp.ne.s32.totalorder %s92, %s108
      %p110 = scmp.eq.s32.totalorder %s18, 0
      %p111 = por %p109, %p110
      %s112 = ssub.s32 %s19, %s31
      %p113 = scmp.eq.s32.totalorder %s112, 0
      %s115 = sadd.s32 %s114, 1
      %s116 = scalar_select %p113, %s114, %s115
      %p119 = pneg %p113
      %p120 = scmp.eq.s32.totalorder %s12, 5
      %p121 = por %p119, %p120
      %p122 = scmp.ne.s32.totalorder %s114, %s117
      %p123 = scmp.eq.s32.totalorder %s12, 0
      %p124 = por %p122, %p123
      %p125 = scmp.ne.s32.totalorder %s114, %s117
      %p126 = scmp.eq.s32.totalorder %s17, 5
      %p127 = por %p125, %p126
      %p128 = scmp.ne.s32.totalorder %s117, %s118
      %p129 = scmp.eq.s32.totalorder %s17, 0
      %p130 = por %p128, %p129
      %p131 = scmp.ne.s32.totalorder %s117, %s118
      %p132 = scmp.eq.s32.totalorder %s18, 5
      %p133 = por %p131, %p132
      %p135 = scmp.ne.s32.totalorder %s118, %s134
      %p136 = scmp.eq.s32.totalorder %s18, 0
      %p137 = por %p135, %p136
      %s139 = sadd.s32 %s138, 1
      %p142 = scmp.eq.s32.totalorder %s12, 5
      %p143 = scmp.ne.s32.totalorder %s138, %s140
      %p144 = scmp.eq.s32.totalorder %s12, 0
      %p145 = por %p143, %p144
      %p146 = scmp.ne.s32.totalorder %s138, %s140
      %p147 = scmp.eq.s32.totalorder %s17, 5
      %p148 = por %p146, %p147
      %p149 = scmp.ne.s32.totalorder %s140, %s141
      %p150 = scmp.eq.s32.totalorder %s17, 0
      %p151 = por %p149, %p150
      %p152 = scmp.ne.s32.totalorder %s140, %s141
      %p153 = scmp.eq.s32.totalorder %s18, 5
      %p154 = por %p152, %p153
      %p156 = scmp.ne.s32.totalorder %s141, %s155
      %p157 = scmp.eq.s32.totalorder %s18, 0
      %p158 = por %p156, %p157
      %s160 = sadd.s32 %s159, 1
      %p163 = scmp.eq.s32.totalorder %s12, 5
      %p164 = scmp.ne.s32.totalorder %s159, %s161
      %p165 = scmp.eq.s32.totalorder %s12, 0
      %p166 = por %p164, %p165
      %p167 = scmp.ne.s32.totalorder %s159, %s161
      %p168 = scmp.eq.s32.totalorder %s17, 5
      %p169 = por %p167, %p168
      %p170 = scmp.ne.s32.totalorder %s161, %s162
      %p171 = scmp.eq.s32.totalorder %s17, 0
      %p172 = por %p170, %p171
      %p173 = scmp.ne.s32.totalorder %s161, %s162
      %p174 = scmp.eq.s32.totalorder %s18, 5
      %p175 = por %p173, %p174
      %p177 = scmp.ne.s32.totalorder %s162, %s176
      %p178 = scmp.eq.s32.totalorder %s18, 0
      %p179 = por %p177, %p178
      %s180 = ssub.s32 %s19, %s31
      %p181 = scmp.eq.s32.totalorder %s180, 0
      %s183 = sadd.s32 %s182, 1
      %s184 = scalar_select %p181, %s182, %s183
      %p187 = pneg %p181
      %p188 = scmp.eq.s32.totalorder %s12, 5
      %p189 = por %p187, %p188
      %p190 = scmp.ne.s32.totalorder %s182, %s185
      %p191 = scmp.eq.s32.totalorder %s12, 0
      %p192 = por %p190, %p191
      %p193 = scmp.ne.s32.totalorder %s182, %s185
      %p194 = scmp.eq.s32.totalorder %s17, 5
      %p195 = por %p193, %p194
      %p196 = scmp.ne.s32.totalorder %s185, %s186
      %p197 = scmp.eq.s32.totalorder %s17, 0
      %p198 = por %p196, %p197
      %p199 = scmp.ne.s32.totalorder %s185, %s186
      %p200 = scmp.eq.s32.totalorder %s18, 5
      %p201 = por %p199, %p200
      %p203 = scmp.ne.s32.totalorder %s186, %s202
      %p204 = scmp.eq.s32.totalorder %s18, 0
      %p205 = por %p203, %p204
      %p206 = scmp.le.s32.totalorder 1, %s12
      %p207 = scmp.lt.s32.totalorder %s12, 7
      %p208 = pnand %p206, %p207
      %p209 = pneg %p208
      // Predicated region
      $region9: #{graphsage_forward.7} parent=5 // pred_check
        _
      $region10: #{graphsage_forward.7} parent=5 // pred_check_branch
        %211 = sbr.rel (%p208) target = $region12
      $region11: #{graphsage_forward.7} parent=5 // pred_region
        %s212 = ssub.s32 %s12, 1
        // Predicated region
        $region13: #{graphsage_forward.7} parent=11 // pred_check
          %p213 = pneg %p151
        $region14: #{graphsage_forward.7} parent=11 // pred_check_branch
          %215 = sbr.rel (%p213) target = $region16
        $region15: #{graphsage_forward.7} parent=11 // pred_region
          _
        $region16: #{graphsage_forward.7} parent=11 // pred_fallthru
          _
        // Predicated region
        $region17: #{graphsage_forward.7} parent=11 // pred_check
          %p216 = pneg %p172
        $region18: #{graphsage_forward.7} parent=11 // pred_check_branch
          %218 = sbr.rel (%p216) target = $region20
        $region19: #{graphsage_forward.7} parent=11 // pred_region
          _
        $region20: #{graphsage_forward.7} parent=11 // pred_fallthru
          _
      $region12: #{graphsage_forward.7} parent=5 // pred_fallthru
        _
      %p219 = scmp.lt.s32.totalorder %s12, 6
      // Predicated region
      $region21: #{graphsage_forward.7} parent=5 // pred_check
        %p220 = pneg %p219
      $region22: #{graphsage_forward.7} parent=5 // pred_check_branch
        %222 = sbr.rel (%p220) target = $region24
      $region23: #{graphsage_forward.7} parent=5 // pred_region
        // Predicated region
        $region25: #{graphsage_forward.7} parent=23 // pred_check
          %p223 = pneg %p46
        $region26: #{graphsage_forward.7} parent=23 // pred_check_branch
          %225 = sbr.rel (%p223) target = $region28
        $region27: #{graphsage_forward.7} parent=23 // pred_region
          %s226 = sand.u32 %s36, 1
          %s227 = sand.u32 %s36, 1
          %s228 = smul.addr %s227, 256
          %s229 = scalar_lea.vmem [#allocation3], %s228
          %s230 = smul.u32 32, %s19
          %s231 = smul.u32 2, %s20
          %s232 = smul.addr %s230, 6
          %s233 = sadd.s32 %s231, %s232
          %s234 = smul.addr %s233, 4
          %s235 = scalar_lea.vmem %s0, %s234
          // Predicated region
          $region29: #{graphsage_forward.7} parent=27 // pred_check
            _
          $region30: #{graphsage_forward.7} parent=27 // pred_check_branch
            %237 = sbr.rel (0) target = $region32
          $region31: #{graphsage_forward.7} parent=27 // pred_region
            // Predicated region
            $region33: #{graphsage_forward.7} parent=31 // pred_check
              _
            $region34: #{graphsage_forward.7} parent=31 // pred_check_branch
              %239 = sbr.rel (0) target = $region36
            $region35: #{graphsage_forward.7} parent=31 // pred_region
              // Predicated region
              $region48: #{graphsage_forward.7} parent=35 // pred_check
                _
              $region49: #{graphsage_forward.7} parent=35 // pred_check_branch
                %316 = sbr.rel (0) target = $region51
              $region50: #{graphsage_forward.7} parent=35 // pred_region
                loop: start=0, step=1, limit=1
                $region52: #{graphsage_forward.7} parent=50 // loop_pre_header
                  _
                $region53: #{graphsage_forward.7} parent=50 // loop_header
                  %s318 = sphi 0, %s322
                  %p319 = scmp.ge.s32.totalorder %s318, 1
                  %s323 = sphi %s235, %s235
                  %s324 = sphi %s229, %s229
                $region54: #{graphsage_forward.7} parent=50 // loop_header_branch
                  %321 = sbr.rel (%p319) target = $region58
                $region55: #{graphsage_forward.7} parent=50 // loop_body
                  %v325 = vld [vmem:[%s323] sm:$0xff]
                  %326 = vst [vmem:[%s324] sm:$0xff] %v325
                  %v327 = vld [vmem:[%s323 + $0x18] sm:$0xff]
                  %328 = vst [vmem:[%s324 + $0x8] sm:$0xff] %v327
                  %v329 = vld [vmem:[%s323 + $0x30] sm:$0xff]
                  %330 = vst [vmem:[%s324 + $0x10] sm:$0xff] %v329
                  %v331 = vld [vmem:[%s323 + $0x48] sm:$0xff]
                  %332 = vst [vmem:[%s324 + $0x18] sm:$0xff] %v331
                  %v333 = vld [vmem:[%s323 + $0x60] sm:$0xff]
                  %334 = vst [vmem:[%s324 + $0x20] sm:$0xff] %v333
                  %v335 = vld [vmem:[%s323 + $0x78] sm:$0xff]
                  %336 = vst [vmem:[%s324 + $0x28] sm:$0xff] %v335
                  %v337 = vld [vmem:[%s323 + $0x90] sm:$0xff]
                  %338 = vst [vmem:[%s324 + $0x30] sm:$0xff] %v337
                  %v339 = vld [vmem:[%s323 + $0xa8] sm:$0xff]
                  %340 = vst [vmem:[%s324 + $0x38] sm:$0xff] %v339
                  %v341 = vld [vmem:[%s323 + $0xc0] sm:$0xff]
                  %342 = vst [vmem:[%s324 + $0x40] sm:$0xff] %v341
                  %v343 = vld [vmem:[%s323 + $0xd8] sm:$0xff]
                  %344 = vst [vmem:[%s324 + $0x48] sm:$0xff] %v343
                  %v345 = vld [vmem:[%s323 + $0xf0] sm:$0xff]
                  %346 = vst [vmem:[%s324 + $0x50] sm:$0xff] %v345
                  %v347 = vld [vmem:[%s323 + $0x108] sm:$0xff]
                  %348 = vst [vmem:[%s324 + $0x58] sm:$0xff] %v347
                  %v349 = vld [vmem:[%s323 + $0x120] sm:$0xff]
                  %350 = vst [vmem:[%s324 + $0x60] sm:$0xff] %v349
                  %v351 = vld [vmem:[%s323 + $0x138] sm:$0xff]
                  %352 = vst [vmem:[%s324 + $0x68] sm:$0xff] %v351
                  %v353 = vld [vmem:[%s323 + $0x150] sm:$0xff]
                  %354 = vst [vmem:[%s324 + $0x70] sm:$0xff] %v353
                  %v355 = vld [vmem:[%s323 + $0x168] sm:$0xff]
                  %356 = vst [vmem:[%s324 + $0x78] sm:$0xff] %v355
                  %v357 = vld [vmem:[%s323 + $0x180] sm:$0xff]
                  %358 = vst [vmem:[%s324 + $0x80] sm:$0xff] %v357
                  %v359 = vld [vmem:[%s323 + $0x198] sm:$0xff]
                  %360 = vst [vmem:[%s324 + $0x88] sm:$0xff] %v359
                  %v361 = vld [vmem:[%s323 + $0x1b0] sm:$0xff]
                  %362 = vst [vmem:[%s324 + $0x90] sm:$0xff] %v361
                  %v363 = vld [vmem:[%s323 + $0x1c8] sm:$0xff]
                  %364 = vst [vmem:[%s324 + $0x98] sm:$0xff] %v363
                  %v365 = vld [vmem:[%s323 + $0x1e0] sm:$0xff]
                  %366 = vst [vmem:[%s324 + $0xa0] sm:$0xff] %v365
                  %v367 = vld [vmem:[%s323 + $0x1f8] sm:$0xff]
                  %368 = vst [vmem:[%s324 + $0xa8] sm:$0xff] %v367
                  %v369 = vld [vmem:[%s323 + $0x210] sm:$0xff]
                  %370 = vst [vmem:[%s324 + $0xb0] sm:$0xff] %v369
                  %v371 = vld [vmem:[%s323 + $0x228] sm:$0xff]
                  %372 = vst [vmem:[%s324 + $0xb8] sm:$0xff] %v371
                  %v373 = vld [vmem:[%s323 + $0x240] sm:$0xff]
                  %374 = vst [vmem:[%s324 + $0xc0] sm:$0xff] %v373
                  %v375 = vld [vmem:[%s323 + $0x258] sm:$0xff]
                  %376 = vst [vmem:[%s324 + $0xc8] sm:$0xff] %v375
                  %v377 = vld [vmem:[%s323 + $0x270] sm:$0xff]
                  %378 = vst [vmem:[%s324 + $0xd0] sm:$0xff] %v377
                  %v379 = vld [vmem:[%s323 + $0x288] sm:$0xff]
                  %380 = vst [vmem:[%s324 + $0xd8] sm:$0xff] %v379
                  %v381 = vld [vmem:[%s323 + $0x2a0] sm:$0xff]
                  %382 = vst [vmem:[%s324 + $0xe0] sm:$0xff] %v381
                  %v383 = vld [vmem:[%s323 + $0x2b8] sm:$0xff]
                  %384 = vst [vmem:[%s324 + $0xe8] sm:$0xff] %v383
                  %v385 = vld [vmem:[%s323 + $0x2d0] sm:$0xff]
                  %386 = vst [vmem:[%s324 + $0xf0] sm:$0xff] %v385
                  %v387 = vld [vmem:[%s323 + $0x2e8] sm:$0xff]
                  %388 = vst [vmem:[%s324 + $0xf8] sm:$0xff] %v387
                $region56: #{graphsage_forward.7} parent=50 // loop_footer
                  %s322 = sadd.s32 1, %s318
                $region57: #{graphsage_forward.7} parent=50 // loop_footer_branch
                  %317 = sbr.rel target = $region53
                $region58: #{graphsage_forward.7} parent=50 // loop_exit
                  _
              $region51: #{graphsage_forward.7} parent=35 // pred_fallthru
                _
              // Predicated region
              $region59: #{graphsage_forward.7} parent=35 // pred_check
                _
              $region60: #{graphsage_forward.7} parent=35 // pred_check_branch
                %390 = sbr.rel target = $region62
              $region61: #{graphsage_forward.7} parent=35 // pred_region
                _
              $region62: #{graphsage_forward.7} parent=35 // pred_fallthru
                _
            $region36: #{graphsage_forward.7} parent=31 // pred_fallthru
              _
            // Predicated region
            $region37: #{graphsage_forward.7} parent=31 // pred_check
              _
            $region38: #{graphsage_forward.7} parent=31 // pred_check_branch
              %241 = sbr.rel target = $region40
            $region39: #{graphsage_forward.7} parent=31 // pred_region
              loop: start=0, step=1, limit=1
              $region41: #{graphsage_forward.7} parent=39 // loop_pre_header
                _
              $region42: #{graphsage_forward.7} parent=39 // loop_header
                %s244 = sphi 0, %s248
                %p245 = scmp.ge.s32.totalorder %s244, 1
                %s249 = sphi %s235, %s235
                %s250 = sphi %s229, %s229
              $region43: #{graphsage_forward.7} parent=39 // loop_header_branch
                %247 = sbr.rel (%p245) target = $region47
              $region44: #{graphsage_forward.7} parent=39 // loop_body
                %v251 = vld [vmem:[%s249] sm:$0xff]
                %252 = vst [vmem:[%s250] sm:$0xff] %v251
                %v253 = vld [vmem:[%s249 + $0x18] sm:$0xff]
                %254 = vst [vmem:[%s250 + $0x8] sm:$0xff] %v253
                %v255 = vld [vmem:[%s249 + $0x30] sm:$0xff]
                %256 = vst [vmem:[%s250 + $0x10] sm:$0xff] %v255
                %v257 = vld [vmem:[%s249 + $0x48] sm:$0xff]
                %258 = vst [vmem:[%s250 + $0x18] sm:$0xff] %v257
                %v259 = vld [vmem:[%s249 + $0x60] sm:$0xff]
                %260 = vst [vmem:[%s250 + $0x20] sm:$0xff] %v259
                %v261 = vld [vmem:[%s249 + $0x78] sm:$0xff]
                %262 = vst [vmem:[%s250 + $0x28] sm:$0xff] %v261
                %v263 = vld [vmem:[%s249 + $0x90] sm:$0xff]
                %264 = vst [vmem:[%s250 + $0x30] sm:$0xff] %v263
                %v265 = vld [vmem:[%s249 + $0xa8] sm:$0xff]
                %266 = vst [vmem:[%s250 + $0x38] sm:$0xff] %v265
                %v267 = vld [vmem:[%s249 + $0xc0] sm:$0xff]
                %268 = vst [vmem:[%s250 + $0x40] sm:$0xff] %v267
                %v269 = vld [vmem:[%s249 + $0xd8] sm:$0xff]
                %270 = vst [vmem:[%s250 + $0x48] sm:$0xff] %v269
                %v271 = vld [vmem:[%s249 + $0xf0] sm:$0xff]
                %272 = vst [vmem:[%s250 + $0x50] sm:$0xff] %v271
                %v273 = vld [vmem:[%s249 + $0x108] sm:$0xff]
                %274 = vst [vmem:[%s250 + $0x58] sm:$0xff] %v273
                %v275 = vld [vmem:[%s249 + $0x120] sm:$0xff]
                %276 = vst [vmem:[%s250 + $0x60] sm:$0xff] %v275
                %v277 = vld [vmem:[%s249 + $0x138] sm:$0xff]
                %278 = vst [vmem:[%s250 + $0x68] sm:$0xff] %v277
                %v279 = vld [vmem:[%s249 + $0x150] sm:$0xff]
                %280 = vst [vmem:[%s250 + $0x70] sm:$0xff] %v279
                %v281 = vld [vmem:[%s249 + $0x168] sm:$0xff]
                %282 = vst [vmem:[%s250 + $0x78] sm:$0xff] %v281
                %v283 = vld [vmem:[%s249 + $0x180] sm:$0xff]
                %284 = vst [vmem:[%s250 + $0x80] sm:$0xff] %v283
                %v285 = vld [vmem:[%s249 + $0x198] sm:$0xff]
                %286 = vst [vmem:[%s250 + $0x88] sm:$0xff] %v285
                %v287 = vld [vmem:[%s249 + $0x1b0] sm:$0xff]
                %288 = vst [vmem:[%s250 + $0x90] sm:$0xff] %v287
                %v289 = vld [vmem:[%s249 + $0x1c8] sm:$0xff]
                %290 = vst [vmem:[%s250 + $0x98] sm:$0xff] %v289
                %v291 = vld [vmem:[%s249 + $0x1e0] sm:$0xff]
                %292 = vst [vmem:[%s250 + $0xa0] sm:$0xff] %v291
                %v293 = vld [vmem:[%s249 + $0x1f8] sm:$0xff]
                %294 = vst [vmem:[%s250 + $0xa8] sm:$0xff] %v293
                %v295 = vld [vmem:[%s249 + $0x210] sm:$0xff]
                %296 = vst [vmem:[%s250 + $0xb0] sm:$0xff] %v295
                %v297 = vld [vmem:[%s249 + $0x228] sm:$0xff]
                %298 = vst [vmem:[%s250 + $0xb8] sm:$0xff] %v297
                %v299 = vld [vmem:[%s249 + $0x240] sm:$0xff]
                %300 = vst [vmem:[%s250 + $0xc0] sm:$0xff] %v299
                %v301 = vld [vmem:[%s249 + $0x258] sm:$0xff]
                %302 = vst [vmem:[%s250 + $0xc8] sm:$0xff] %v301
                %v303 = vld [vmem:[%s249 + $0x270] sm:$0xff]
                %304 = vst [vmem:[%s250 + $0xd0] sm:$0xff] %v303
                %v305 = vld [vmem:[%s249 + $0x288] sm:$0xff]
                %306 = vst [vmem:[%s250 + $0xd8] sm:$0xff] %v305
                %v307 = vld [vmem:[%s249 + $0x2a0] sm:$0xff]
                %308 = vst [vmem:[%s250 + $0xe0] sm:$0xff] %v307
                %v309 = vld [vmem:[%s249 + $0x2b8] sm:$0xff]
                %310 = vst [vmem:[%s250 + $0xe8] sm:$0xff] %v309
                %v311 = vld [vmem:[%s249 + $0x2d0] sm:$0xff]
                %312 = vst [vmem:[%s250 + $0xf0] sm:$0xff] %v311
                %v313 = vld [vmem:[%s249 + $0x2e8] sm:$0xff]
                %314 = vst [vmem:[%s250 + $0xf8] sm:$0xff] %v313
              $region45: #{graphsage_forward.7} parent=39 // loop_footer
                %s248 = sadd.s32 1, %s244
              $region46: #{graphsage_forward.7} parent=39 // loop_footer_branch
                %243 = sbr.rel target = $region42
              $region47: #{graphsage_forward.7} parent=39 // loop_exit
                _
            $region40: #{graphsage_forward.7} parent=31 // pred_fallthru
              _
          $region32: #{graphsage_forward.7} parent=27 // pred_fallthru
            _
          %391 = vnop
        $region28: #{graphsage_forward.7} parent=23 // pred_fallthru
          _
        // Predicated region
        $region63: #{graphsage_forward.7} parent=23 // pred_check
          %p392 = pneg %p72
        $region64: #{graphsage_forward.7} parent=23 // pred_check_branch
          %394 = sbr.rel (%p392) target = $region66
        $region65: #{graphsage_forward.7} parent=23 // pred_region
          %s395 = smul.u32 32, %s20
          %p396 = scmp.lt.s32.totalorder %s395, 95
          %s397 = scalar_select %p396, %s395, 95
          %s398 = smul.addr %s397, 4
          %s399 = scalar_lea.vmem %s1, %s398
          %s400 = smul.u32 32, %s20
        $region66: #{graphsage_forward.7} parent=23 // pred_fallthru
          _
        // Predicated region
        $region67: #{graphsage_forward.7} parent=23 // pred_check
          %p401 = pneg %p98
        $region68: #{graphsage_forward.7} parent=23 // pred_check_branch
          %403 = sbr.rel (%p401) target = $region70
        $region69: #{graphsage_forward.7} parent=23 // pred_region
          %s404 = smul.u32 32, %s19
          %p405 = scmp.lt.s32.totalorder %s404, 63
          %s406 = scalar_select %p405, %s404, 63
          %s407 = smul.addr %s406, 4
          %s408 = scalar_lea.vmem %s2, %s407
          %s409 = smul.u32 32, %s19
        $region70: #{graphsage_forward.7} parent=23 // pred_fallthru
          _
        // Predicated region
        $region71: #{graphsage_forward.7} parent=23 // pred_check
          %p410 = pneg %p124
        $region72: #{graphsage_forward.7} parent=23 // pred_check_branch
          %412 = sbr.rel (%p410) target = $region74
        $region73: #{graphsage_forward.7} parent=23 // pred_region
          %s413 = smul.u32 32, %s19
          %p414 = scmp.lt.s32.totalorder %s413, 63
          %s415 = scalar_select %p414, %s413, 63
          %s416 = smul.addr %s415, 8
          %s417 = scalar_lea.vmem %s3, %s416
          %s418 = smul.u32 32, %s19
        $region74: #{graphsage_forward.7} parent=23 // pred_fallthru
          _
      $region24: #{graphsage_forward.7} parent=5 // pred_fallthru
        _
      %p419 = scmp.le.s32.totalorder 1, %s12
      %p420 = scmp.lt.s32.totalorder %s12, 7
      %p421 = pnand %p419, %p420
      %p422 = pneg %p421
      // Predicated region
      $region75: #{graphsage_forward.7} parent=5 // pred_check
        _
      $region76: #{graphsage_forward.7} parent=5 // pred_check_branch
        %424 = sbr.rel (%p421) target = $region78
      $region77: #{graphsage_forward.7} parent=5 // pred_region
        %s425 = ssub.s32 %s12, 1
        %s426 = sand.u32 %s39, 1
        %s427 = sand.u32 %s39, 1
        %s428 = smul.addr %s427, 256
        %s429 = scalar_lea.vmem [#allocation3], %s428
        // Predicated region
        $region79: #{graphsage_forward.7} parent=77 // pred_check
          %p430 = pneg %p52
        $region80: #{graphsage_forward.7} parent=77 // pred_check_branch
          %432 = sbr.rel (%p430) target = $region82
        $region81: #{graphsage_forward.7} parent=77 // pred_region
          _
        $region82: #{graphsage_forward.7} parent=77 // pred_fallthru
          _
        %s433 = sand.u32 %s39, 1
        %s434 = sand.u32 %s39, 1
        %s435 = smul.addr %s434, 256
        %s436 = scalar_lea.vmem [#allocation3], %s435
        %p437 = pneg %p52
        %p438 = pneg %p49
        %s439 = smul.u32 32, %s22
        %p440 = scmp.lt.s32.totalorder %s439, 95
        %s441 = scalar_select %p440, %s439, 95
        %s442 = smul.addr %s441, 4
        %s443 = scalar_lea.vmem %s1, %s442
        %p444 = pneg %p78
        %p445 = pneg %p75
        %s446 = smul.u32 32, %s21
        %p447 = scmp.lt.s32.totalorder %s446, 63
        %s448 = scalar_select %p447, %s446, 63
        %s449 = smul.addr %s448, 4
        %s450 = scalar_lea.vmem %s2, %s449
        %p451 = pneg %p104
        %p452 = pneg %p101
        %s453 = smul.u32 32, %s21
        %p454 = scmp.lt.s32.totalorder %s453, 63
        %s455 = scalar_select %p454, %s453, 63
        %s456 = smul.addr %s455, 8
        %s457 = scalar_lea.vmem %s3, %s456
        %p458 = pneg %p130
        %p459 = pneg %p127
        %p460 = pneg %p151
        %p461 = pneg %p148
        %p462 = pneg %p172
        %p463 = pneg %p169
        %p464 = pneg %p198
        %p465 = pneg %p195
        %s466 = smul.u32 32, %s21
        %p467 = scmp.lt.s32.totalorder %s466, 63
        %s468 = scalar_select %p467, %s466, 63
        %s469 = smul.addr %s468, 8
        %s470 = scalar_lea.vmem %s6, %s469
        %s471 = smul.u32 32, %s21
        %s472 = smul.u32 2, %s22
        %s473 = smul.u32 32, %s22
        %p474 = scmp.lt.s32.totalorder %s473, 95
        %s475 = scalar_select %p474, %s473, 95
        %s476 = smul.addr %s475, 4
        %s477 = scalar_lea.vmem %s1, %s476
        %s478 = smul.u32 32, %s22
        %s479 = smul.u32 32, %s21
        %p480 = scmp.lt.s32.totalorder %s479, 63
        %s481 = scalar_select %p480, %s479, 63
        %s482 = smul.addr %s481, 4
        %s483 = scalar_lea.vmem %s2, %s482
        %s484 = smul.u32 32, %s21
        %s485 = smul.u32 32, %s21
        %p486 = scmp.lt.s32.totalorder %s485, 63
        %s487 = scalar_select %p486, %s485, 63
        %s488 = smul.addr %s487, 8
        %s489 = scalar_lea.vmem %s3, %s488
        %s490 = smul.u32 32, %s21
        %s491 = smul.u32 32, %s21
        %p492 = scmp.lt.s32.totalorder %s491, 63
        %s493 = scalar_select %p492, %s491, 63
        %s494 = smul.addr %s493, 8
        %s495 = scalar_lea.vmem %s6, %s494
        %s496 = smul.u32 32, %s21
        %p498 = scmp.eq.s32.totalorder %s22, 0
        // Predicated region
        $region83: #{graphsage_forward.7} parent=77 // pred_check
          %p499 = pneg %p498
        $region84: #{graphsage_forward.7} parent=77 // pred_check_branch
          %501 = sbr.rel (%p499) target = $region86
        $region85: #{graphsage_forward.7} parent=77 // pred_region
          %502 = vst [vmem:[#allocation2] sm:$0xff] 0.0
          %503 = vst [vmem:[#allocation2 + $0x8] sm:$0xff] 0.0
          %504 = vst [vmem:[#allocation2 + $0x10] sm:$0xff] 0.0
          %505 = vst [vmem:[#allocation2 + $0x18] sm:$0xff] 0.0
          %506 = vst [vmem:[#allocation2 + $0x20] sm:$0xff] 0.0
          %507 = vst [vmem:[#allocation2 + $0x28] sm:$0xff] 0.0
          %508 = vst [vmem:[#allocation2 + $0x30] sm:$0xff] 0.0
          %509 = vst [vmem:[#allocation2 + $0x38] sm:$0xff] 0.0
          %510 = vst [vmem:[#allocation2 + $0x40] sm:$0xff] 0.0
          %511 = vst [vmem:[#allocation2 + $0x48] sm:$0xff] 0.0
          %512 = vst [vmem:[#allocation2 + $0x50] sm:$0xff] 0.0
          %513 = vst [vmem:[#allocation2 + $0x58] sm:$0xff] 0.0
          %514 = vst [vmem:[#allocation2 + $0x60] sm:$0xff] 0.0
          %515 = vst [vmem:[#allocation2 + $0x68] sm:$0xff] 0.0
          %516 = vst [vmem:[#allocation2 + $0x70] sm:$0xff] 0.0
          %517 = vst [vmem:[#allocation2 + $0x78] sm:$0xff] 0.0
          %518 = vst [vmem:[#allocation2 + $0x80] sm:$0xff] 0.0
          %519 = vst [vmem:[#allocation2 + $0x88] sm:$0xff] 0.0
          %520 = vst [vmem:[#allocation2 + $0x90] sm:$0xff] 0.0
          %521 = vst [vmem:[#allocation2 + $0x98] sm:$0xff] 0.0
          %522 = vst [vmem:[#allocation2 + $0xa0] sm:$0xff] 0.0
          %523 = vst [vmem:[#allocation2 + $0xa8] sm:$0xff] 0.0
          %524 = vst [vmem:[#allocation2 + $0xb0] sm:$0xff] 0.0
          %525 = vst [vmem:[#allocation2 + $0xb8] sm:$0xff] 0.0
          %526 = vst [vmem:[#allocation2 + $0xc0] sm:$0xff] 0.0
          %527 = vst [vmem:[#allocation2 + $0xc8] sm:$0xff] 0.0
          %528 = vst [vmem:[#allocation2 + $0xd0] sm:$0xff] 0.0
          %529 = vst [vmem:[#allocation2 + $0xd8] sm:$0xff] 0.0
          %530 = vst [vmem:[#allocation2 + $0xe0] sm:$0xff] 0.0
          %531 = vst [vmem:[#allocation2 + $0xe8] sm:$0xff] 0.0
          %532 = vst [vmem:[#allocation2 + $0xf0] sm:$0xff] 0.0
          %533 = vst [vmem:[#allocation2 + $0xf8] sm:$0xff] 0.0
        $region86: #{graphsage_forward.7} parent=77 // pred_fallthru
          _
        %v534 = vld [vmem:[#allocation2] sm:$0xff]
        %v535 = vld [vmem:[#allocation2 + $0x8] sm:$0xff]
        %v536 = vld [vmem:[#allocation2 + $0x10] sm:$0xff]
        %v537 = vld [vmem:[#allocation2 + $0x18] sm:$0xff]
        %v538 = vld [vmem:[#allocation2 + $0x20] sm:$0xff]
        %v539 = vld [vmem:[#allocation2 + $0x28] sm:$0xff]
        %v540 = vld [vmem:[#allocation2 + $0x30] sm:$0xff]
        %v541 = vld [vmem:[#allocation2 + $0x38] sm:$0xff]
        %v542 = vld [vmem:[#allocation2 + $0x40] sm:$0xff]
        %v543 = vld [vmem:[#allocation2 + $0x48] sm:$0xff]
        %v544 = vld [vmem:[#allocation2 + $0x50] sm:$0xff]
        %v545 = vld [vmem:[#allocation2 + $0x58] sm:$0xff]
        %v546 = vld [vmem:[#allocation2 + $0x60] sm:$0xff]
        %v547 = vld [vmem:[#allocation2 + $0x68] sm:$0xff]
        %v548 = vld [vmem:[#allocation2 + $0x70] sm:$0xff]
        %v549 = vld [vmem:[#allocation2 + $0x78] sm:$0xff]
        %v550 = vld [vmem:[#allocation2 + $0x80] sm:$0xff]
        %v551 = vld [vmem:[#allocation2 + $0x88] sm:$0xff]
        %v552 = vld [vmem:[#allocation2 + $0x90] sm:$0xff]
        %v553 = vld [vmem:[#allocation2 + $0x98] sm:$0xff]
        %v554 = vld [vmem:[#allocation2 + $0xa0] sm:$0xff]
        %v555 = vld [vmem:[#allocation2 + $0xa8] sm:$0xff]
        %v556 = vld [vmem:[#allocation2 + $0xb0] sm:$0xff]
        %v557 = vld [vmem:[#allocation2 + $0xb8] sm:$0xff]
        %v558 = vld [vmem:[#allocation2 + $0xc0] sm:$0xff]
        %v559 = vld [vmem:[#allocation2 + $0xc8] sm:$0xff]
        %v560 = vld [vmem:[#allocation2 + $0xd0] sm:$0xff]
        %v561 = vld [vmem:[#allocation2 + $0xd8] sm:$0xff]
        %v562 = vld [vmem:[#allocation2 + $0xe0] sm:$0xff]
        %v563 = vld [vmem:[#allocation2 + $0xe8] sm:$0xff]
        %v564 = vld [vmem:[#allocation2 + $0xf0] sm:$0xff]
        %v565 = vld [vmem:[#allocation2 + $0xf8] sm:$0xff]
        %v566 = vld [vmem:[%s429] sm:$0xff]
        %v567 = vld [vmem:[%s429 + $0x8] sm:$0xff]
        %v568 = vld [vmem:[%s429 + $0x10] sm:$0xff]
        %v569 = vld [vmem:[%s429 + $0x18] sm:$0xff]
        %v570 = vld [vmem:[%s429 + $0x20] sm:$0xff]
        %v571 = vld [vmem:[%s429 + $0x28] sm:$0xff]
        %v572 = vld [vmem:[%s429 + $0x30] sm:$0xff]
        %v573 = vld [vmem:[%s429 + $0x38] sm:$0xff]
        %v574 = vld [vmem:[%s429 + $0x40] sm:$0xff]
        %v575 = vld [vmem:[%s429 + $0x48] sm:$0xff]
        %v576 = vld [vmem:[%s429 + $0x50] sm:$0xff]
        %v577 = vld [vmem:[%s429 + $0x58] sm:$0xff]
        %v578 = vld [vmem:[%s429 + $0x60] sm:$0xff]
        %v579 = vld [vmem:[%s429 + $0x68] sm:$0xff]
        %v580 = vld [vmem:[%s429 + $0x70] sm:$0xff]
        %v581 = vld [vmem:[%s429 + $0x78] sm:$0xff]
        %v582 = vld [vmem:[%s429 + $0x80] sm:$0xff]
        %v583 = vld [vmem:[%s429 + $0x88] sm:$0xff]
        %v584 = vld [vmem:[%s429 + $0x90] sm:$0xff]
        %v585 = vld [vmem:[%s429 + $0x98] sm:$0xff]
        %v586 = vld [vmem:[%s429 + $0xa0] sm:$0xff]
        %v587 = vld [vmem:[%s429 + $0xa8] sm:$0xff]
        %v588 = vld [vmem:[%s429 + $0xb0] sm:$0xff]
        %v589 = vld [vmem:[%s429 + $0xb8] sm:$0xff]
        %v590 = vld [vmem:[%s429 + $0xc0] sm:$0xff]
        %v591 = vld [vmem:[%s429 + $0xc8] sm:$0xff]
        %v592 = vld [vmem:[%s429 + $0xd0] sm:$0xff]
        %v593 = vld [vmem:[%s429 + $0xd8] sm:$0xff]
        %v594 = vld [vmem:[%s429 + $0xe0] sm:$0xff]
        %v595 = vld [vmem:[%s429 + $0xe8] sm:$0xff]
        %v596 = vld [vmem:[%s429 + $0xf0] sm:$0xff]
        %v597 = vld [vmem:[%s429 + $0xf8] sm:$0xff]
        %v598 = vld [vmem:[%s477] sm:$0xf]
        %v599 = vld [vmem:[%s477 + $0x4] sm:$0xf]
        %v600 = vld [vmem:[%s477 + $0x8] sm:$0xf]
        %v601 = vld [vmem:[%s477 + $0xc] sm:$0xf]
        %v602 = vld [vmem:[%s477 + $0x10] sm:$0xf]
        %v603 = vld [vmem:[%s477 + $0x14] sm:$0xf]
        %v604 = vld [vmem:[%s477 + $0x18] sm:$0xf]
        %v605 = vld [vmem:[%s477 + $0x1c] sm:$0xf]
        %v606 = vld [vmem:[%s477 + $0x20] sm:$0xf]
        %v607 = vld [vmem:[%s477 + $0x24] sm:$0xf]
        %v608 = vld [vmem:[%s477 + $0x28] sm:$0xf]
        %v609 = vld [vmem:[%s477 + $0x2c] sm:$0xf]
        %v610 = vld [vmem:[%s477 + $0x30] sm:$0xf]
        %v611 = vld [vmem:[%s477 + $0x34] sm:$0xf]
        %v612 = vld [vmem:[%s477 + $0x38] sm:$0xf]
        %v613 = vld [vmem:[%s477 + $0x3c] sm:$0xf]
        %v614 = vld [vmem:[%s477 + $0x40] sm:$0xf]
        %v615 = vld [vmem:[%s477 + $0x44] sm:$0xf]
        %v616 = vld [vmem:[%s477 + $0x48] sm:$0xf]
        %v617 = vld [vmem:[%s477 + $0x4c] sm:$0xf]
        %v618 = vld [vmem:[%s477 + $0x50] sm:$0xf]
        %v619 = vld [vmem:[%s477 + $0x54] sm:$0xf]
        %v620 = vld [vmem:[%s477 + $0x58] sm:$0xf]
        %v621 = vld [vmem:[%s477 + $0x5c] sm:$0xf]
        %v622 = vld [vmem:[%s477 + $0x60] sm:$0xf]
        %v623 = vld [vmem:[%s477 + $0x64] sm:$0xf]
        %v624 = vld [vmem:[%s477 + $0x68] sm:$0xf]
        %v625 = vld [vmem:[%s477 + $0x6c] sm:$0xf]
        %v626 = vld [vmem:[%s477 + $0x70] sm:$0xf]
        %v627 = vld [vmem:[%s477 + $0x74] sm:$0xf]
        %v628 = vld [vmem:[%s477 + $0x78] sm:$0xf]
        %v629 = vld [vmem:[%s477 + $0x7c] sm:$0xf]
        %v662 = vunpack.c.l.b16 %v566
        %v663 = vunpack.c.h.b16 %v566
        %v664 = vunpack.c.l.b16 %v567
        %v665 = vunpack.c.h.b16 %v567
        %v666 = vunpack.c.l.b16 %v568
        %v667 = vunpack.c.h.b16 %v568
        %v668 = vunpack.c.l.b16 %v569
        %v669 = vunpack.c.h.b16 %v569
        %v670 = vunpack.c.l.b16 %v570
        %v671 = vunpack.c.h.b16 %v570
        %v672 = vunpack.c.l.b16 %v571
        %v673 = vunpack.c.h.b16 %v571
        %v674 = vunpack.c.l.b16 %v572
        %v675 = vunpack.c.h.b16 %v572
        %v676 = vunpack.c.l.b16 %v573
        %v677 = vunpack.c.h.b16 %v573
        %v678 = vunpack.c.l.b16 %v574
        %v679 = vunpack.c.h.b16 %v574
        %v680 = vunpack.c.l.b16 %v575
        %v681 = vunpack.c.h.b16 %v575
        %v682 = vunpack.c.l.b16 %v576
        %v683 = vunpack.c.h.b16 %v576
        %v684 = vunpack.c.l.b16 %v577
        %v685 = vunpack.c.h.b16 %v577
        %v686 = vunpack.c.l.b16 %v578
        %v687 = vunpack.c.h.b16 %v578
        %v688 = vunpack.c.l.b16 %v579
        %v689 = vunpack.c.h.b16 %v579
        %v690 = vunpack.c.l.b16 %v580
        %v691 = vunpack.c.h.b16 %v580
        %v692 = vunpack.c.l.b16 %v581
        %v693 = vunpack.c.h.b16 %v581
        %v694 = vunpack.c.l.b16 %v582
        %v695 = vunpack.c.h.b16 %v582
        %v696 = vunpack.c.l.b16 %v583
        %v697 = vunpack.c.h.b16 %v583
        %v698 = vunpack.c.l.b16 %v584
        %v699 = vunpack.c.h.b16 %v584
        %v700 = vunpack.c.l.b16 %v585
        %v701 = vunpack.c.h.b16 %v585
        %v702 = vunpack.c.l.b16 %v586
        %v703 = vunpack.c.h.b16 %v586
        %v704 = vunpack.c.l.b16 %v587
        %v705 = vunpack.c.h.b16 %v587
        %v706 = vunpack.c.l.b16 %v588
        %v707 = vunpack.c.h.b16 %v588
        %v708 = vunpack.c.l.b16 %v589
        %v709 = vunpack.c.h.b16 %v589
        %v710 = vunpack.c.l.b16 %v590
        %v711 = vunpack.c.h.b16 %v590
        %v712 = vunpack.c.l.b16 %v591
        %v713 = vunpack.c.h.b16 %v591
        %v714 = vunpack.c.l.b16 %v592
        %v715 = vunpack.c.h.b16 %v592
        %v716 = vunpack.c.l.b16 %v593
        %v717 = vunpack.c.h.b16 %v593
        %v718 = vunpack.c.l.b16 %v594
        %v719 = vunpack.c.h.b16 %v594
        %v720 = vunpack.c.l.b16 %v595
        %v721 = vunpack.c.h.b16 %v595
        %v722 = vunpack.c.l.b16 %v596
        %v723 = vunpack.c.h.b16 %v596
        %v724 = vunpack.c.l.b16 %v597
        %v725 = vunpack.c.h.b16 %v597
        %v726 = vpack.c.b16 %v664, %v662
        %v727 = vpack.c.b16 %v665, %v663
        %v728 = vpack.c.b16 %v668, %v666
        %v729 = vpack.c.b16 %v669, %v667
        %v730 = vpack.c.b16 %v672, %v670
        %v731 = vpack.c.b16 %v673, %v671
        %v732 = vpack.c.b16 %v676, %v674
        %v733 = vpack.c.b16 %v677, %v675
        %v734 = vpack.c.b16 %v680, %v678
        %v735 = vpack.c.b16 %v681, %v679
        %v736 = vpack.c.b16 %v684, %v682
        %v737 = vpack.c.b16 %v685, %v683
        %v738 = vpack.c.b16 %v688, %v686
        %v739 = vpack.c.b16 %v689, %v687
        %v740 = vpack.c.b16 %v692, %v690
        %v741 = vpack.c.b16 %v693, %v691
        %v742 = vpack.c.b16 %v696, %v694
        %v743 = vpack.c.b16 %v697, %v695
        %v744 = vpack.c.b16 %v700, %v698
        %v745 = vpack.c.b16 %v701, %v699
        %v746 = vpack.c.b16 %v704, %v702
        %v747 = vpack.c.b16 %v705, %v703
        %v748 = vpack.c.b16 %v708, %v706
        %v749 = vpack.c.b16 %v709, %v707
        %v750 = vpack.c.b16 %v712, %v710
        %v751 = vpack.c.b16 %v713, %v711
        %v752 = vpack.c.b16 %v716, %v714
        %v753 = vpack.c.b16 %v717, %v715
        %v754 = vpack.c.b16 %v720, %v718
        %v755 = vpack.c.b16 %v721, %v719
        %v756 = vpack.c.b16 %v724, %v722
        %v757 = vpack.c.b16 %v725, %v723
        %v822 = vunpack.c.l.b16 %v598
        %v823 = vunpack.c.l.b16 %v599
        %v824 = vunpack.c.l.b16 %v600
        %v825 = vunpack.c.l.b16 %v601
        %v826 = vunpack.c.l.b16 %v602
        %v827 = vunpack.c.l.b16 %v603
        %v828 = vunpack.c.l.b16 %v604
        %v829 = vunpack.c.l.b16 %v605
        %v830 = vunpack.c.l.b16 %v606
        %v831 = vunpack.c.l.b16 %v607
        %v832 = vunpack.c.l.b16 %v608
        %v833 = vunpack.c.l.b16 %v609
        %v834 = vunpack.c.l.b16 %v610
        %v835 = vunpack.c.l.b16 %v611
        %v836 = vunpack.c.l.b16 %v612
        %v837 = vunpack.c.l.b16 %v613
        %v838 = vunpack.c.l.b16 %v614
        %v839 = vunpack.c.l.b16 %v615
        %v840 = vunpack.c.l.b16 %v616
        %v841 = vunpack.c.l.b16 %v617
        %v842 = vunpack.c.l.b16 %v618
        %v843 = vunpack.c.l.b16 %v619
        %v844 = vunpack.c.l.b16 %v620
        %v845 = vunpack.c.l.b16 %v621
        %v846 = vunpack.c.l.b16 %v622
        %v847 = vunpack.c.l.b16 %v623
        %v848 = vunpack.c.l.b16 %v624
        %v849 = vunpack.c.l.b16 %v625
        %v850 = vunpack.c.l.b16 %v626
        %v851 = vunpack.c.l.b16 %v627
        %v852 = vunpack.c.l.b16 %v628
        %v853 = vunpack.c.l.b16 %v629
        %v854 = vpack.c.b16 %v823, %v822
        %v855 = vpack.c.b16 %v825, %v824
        %v856 = vpack.c.b16 %v827, %v826
        %v857 = vpack.c.b16 %v829, %v828
        %v858 = vpack.c.b16 %v831, %v830
        %v859 = vpack.c.b16 %v833, %v832
        %v860 = vpack.c.b16 %v835, %v834
        %v861 = vpack.c.b16 %v837, %v836
        %v862 = vpack.c.b16 %v839, %v838
        %v863 = vpack.c.b16 %v841, %v840
        %v864 = vpack.c.b16 %v843, %v842
        %v865 = vpack.c.b16 %v845, %v844
        %v866 = vpack.c.b16 %v847, %v846
        %v867 = vpack.c.b16 %v849, %v848
        %v868 = vpack.c.b16 %v851, %v850
        %v869 = vpack.c.b16 %v853, %v852
        %886 = vmatprep.subr.bf16.mxu0 0
        %887 = vmatpush1.bf16.msra.mxu0 %v854
        %888 = vmatprep.subr.bf16.mxu0 0
        %889 = vmatpush1.bf16.msra.mxu0 %v855
        %890 = vmatprep.subr.bf16.mxu0 0
        %891 = vmatpush1.bf16.msra.mxu0 %v856
        %892 = vmatprep.subr.bf16.mxu0 0
        %893 = vmatpush1.bf16.msra.mxu0 %v857
        %894 = vmatprep.subr.bf16.mxu0 0
        %895 = vmatpush1.bf16.msra.mxu0 %v858
        %896 = vmatprep.subr.bf16.mxu0 0
        %897 = vmatpush1.bf16.msra.mxu0 %v859
        %898 = vmatprep.subr.bf16.mxu0 0
        %899 = vmatpush1.bf16.msra.mxu0 %v860
        %900 = vmatprep.subr.bf16.mxu0 0
        %901 = vmatpush1.bf16.msra.mxu0 %v861
        %902 = vmatprep.subr.bf16.mxu0 0
        %903 = vmatpush1.bf16.msra.mxu0 %v862
        %904 = vmatprep.subr.bf16.mxu0 0
        %905 = vmatpush1.bf16.msra.mxu0 %v863
        %906 = vmatprep.subr.bf16.mxu0 0
        %907 = vmatpush1.bf16.msra.mxu0 %v864
        %908 = vmatprep.subr.bf16.mxu0 0
        %909 = vmatpush1.bf16.msra.mxu0 %v865
        %910 = vmatprep.subr.bf16.mxu0 0
        %911 = vmatpush1.bf16.msra.mxu0 %v866
        %912 = vmatprep.subr.bf16.mxu0 0
        %913 = vmatpush1.bf16.msra.mxu0 %v867
        %914 = vmatprep.subr.bf16.mxu0 0
        %915 = vmatpush1.bf16.msra.mxu0 %v868
        %916 = vmatprep.subr.bf16.mxu0 0
        %917 = vmatpush1.bf16.msra.mxu0 %v869
        %918 = vmatprep.mubr.bf16.mxu0 %v727
        %919 = vmatmul.mubr.bf16.gmra.mrb[0].mxu0 %v726
        %v920 = vpop.f32.mrb[0].mxu0
        %v921 = vadd.f32 0.0, %v920
        %v922 = vpop.f32.mrb[0].mxu0
        %v923 = vpop.f32.mrb[0].mxu0
        %v924 = vadd.f32 0.0, %v923
        %v925 = vpop.f32.mrb[0].mxu0
        %926 = vmatprep.mubr.bf16.mxu0 %v729
        %927 = vmatmul.mubr.bf16.gmra.mrb[0].mxu0 %v728
        %v928 = vpop.f32.mrb[0].mxu0
        %v929 = vadd.f32 0.0, %v928
        %v930 = vpop.f32.mrb[0].mxu0
        %v931 = vpop.f32.mrb[0].mxu0
        %v932 = vadd.f32 0.0, %v931
        %v933 = vpop.f32.mrb[0].mxu0
        %934 = vmatprep.mubr.bf16.mxu0 %v731
        %935 = vmatmul.mubr.bf16.gmra.mrb[0].mxu0 %v730
        %v936 = vpop.f32.mrb[0].mxu0
        %v937 = vadd.f32 0.0, %v936
        %v938 = vpop.f32.mrb[0].mxu0
        %v939 = vpop.f32.mrb[0].mxu0
        %v940 = vadd.f32 0.0, %v939
        %v941 = vpop.f32.mrb[0].mxu0
        %942 = vmatprep.mubr.bf16.mxu0 %v733
        %943 = vmatmul.mubr.bf16.gmra.mrb[0].mxu0 %v732
        %v944 = vpop.f32.mrb[0].mxu0
        %v945 = vadd.f32 0.0, %v944
        %v946 = vpop.f32.mrb[0].mxu0
        %v947 = vpop.f32.mrb[0].mxu0
        %v948 = vadd.f32 0.0, %v947
        %v949 = vpop.f32.mrb[0].mxu0
        %950 = vmatprep.mubr.bf16.mxu0 %v735
        %951 = vmatmul.mubr.bf16.gmra.mrb[0].mxu0 %v734
        %v952 = vpop.f32.mrb[0].mxu0
        %v953 = vadd.f32 0.0, %v952
        %v954 = vpop.f32.mrb[0].mxu0
        %v955 = vpop.f32.mrb[0].mxu0
        %v956 = vadd.f32 0.0, %v955
        %v957 = vpop.f32.mrb[0].mxu0
        %958 = vmatprep.mubr.bf16.mxu0 %v737
        %959 = vmatmul.mubr.bf16.gmra.mrb[0].mxu0 %v736
        %v960 = vpop.f32.mrb[0].mxu0
        %v961 = vadd.f32 0.0, %v960
        %v962 = vpop.f32.mrb[0].mxu0
        %v963 = vpop.f32.mrb[0].mxu0
        %v964 = vadd.f32 0.0, %v963
        %v965 = vpop.f32.mrb[0].mxu0
        %966 = vmatprep.mubr.bf16.mxu0 %v739
        %967 = vmatmul.mubr.bf16.gmra.mrb[0].mxu0 %v738
        %v968 = vpop.f32.mrb[0].mxu0
        %v969 = vadd.f32 0.0, %v968
        %v970 = vpop.f32.mrb[0].mxu0
        %v971 = vpop.f32.mrb[0].mxu0
        %v972 = vadd.f32 0.0, %v971
        %v973 = vpop.f32.mrb[0].mxu0
        %974 = vmatprep.mubr.bf16.mxu0 %v741
        %975 = vmatmul.mubr.bf16.gmra.mrb[0].mxu0 %v740
        %v976 = vpop.f32.mrb[0].mxu0
        %v977 = vadd.f32 0.0, %v976
        %v978 = vpop.f32.mrb[0].mxu0
        %v979 = vpop.f32.mrb[0].mxu0
        %v980 = vadd.f32 0.0, %v979
        %v981 = vpop.f32.mrb[0].mxu0
        %982 = vmatprep.mubr.bf16.mxu0 %v743
        %983 = vmatmul.mubr.bf16.gmra.mrb[0].mxu0 %v742
        %v984 = vpop.f32.mrb[0].mxu0
        %v985 = vadd.f32 0.0, %v984
        %v986 = vpop.f32.mrb[0].mxu0
        %v987 = vpop.f32.mrb[0].mxu0
        %v988 = vadd.f32 0.0, %v987
        %v989 = vpop.f32.mrb[0].mxu0
        %990 = vmatprep.mubr.bf16.mxu0 %v745
        %991 = vmatmul.mubr.bf16.gmra.mrb[0].mxu0 %v744
        %v992 = vpop.f32.mrb[0].mxu0
        %v993 = vadd.f32 0.0, %v992
        %v994 = vpop.f32.mrb[0].mxu0
        %v995 = vpop.f32.mrb[0].mxu0
        %v996 = vadd.f32 0.0, %v995
        %v997 = vpop.f32.mrb[0].mxu0
        %998 = vmatprep.mubr.bf16.mxu0 %v747
        %999 = vmatmul.mubr.bf16.gmra.mrb[0].mxu0 %v746
        %v1000 = vpop.f32.mrb[0].mxu0
        %v1001 = vadd.f32 0.0, %v1000
        %v1002 = vpop.f32.mrb[0].mxu0
        %v1003 = vpop.f32.mrb[0].mxu0
        %v1004 = vadd.f32 0.0, %v1003
        %v1005 = vpop.f32.mrb[0].mxu0
        %1006 = vmatprep.mubr.bf16.mxu0 %v749
        %1007 = vmatmul.mubr.bf16.gmra.mrb[0].mxu0 %v748
        %v1008 = vpop.f32.mrb[0].mxu0
        %v1009 = vadd.f32 0.0, %v1008
        %v1010 = vpop.f32.mrb[0].mxu0
        %v1011 = vpop.f32.mrb[0].mxu0
        %v1012 = vadd.f32 0.0, %v1011
        %v1013 = vpop.f32.mrb[0].mxu0
        %1014 = vmatprep.mubr.bf16.mxu0 %v751
        %1015 = vmatmul.mubr.bf16.gmra.mrb[0].mxu0 %v750
        %v1016 = vpop.f32.mrb[0].mxu0
        %v1017 = vadd.f32 0.0, %v1016
        %v1018 = vpop.f32.mrb[0].mxu0
        %v1019 = vpop.f32.mrb[0].mxu0
        %v1020 = vadd.f32 0.0, %v1019
        %v1021 = vpop.f32.mrb[0].mxu0
        %1022 = vmatprep.mubr.bf16.mxu0 %v753
        %1023 = vmatmul.mubr.bf16.gmra.mrb[0].mxu0 %v752
        %v1024 = vpop.f32.mrb[0].mxu0
        %v1025 = vadd.f32 0.0, %v1024
        %v1026 = vpop.f32.mrb[0].mxu0
        %v1027 = vpop.f32.mrb[0].mxu0
        %v1028 = vadd.f32 0.0, %v1027
        %v1029 = vpop.f32.mrb[0].mxu0
        %1030 = vmatprep.mubr.bf16.mxu0 %v755
        %1031 = vmatmul.mubr.bf16.gmra.mrb[0].mxu0 %v754
        %v1032 = vpop.f32.mrb[0].mxu0
        %v1033 = vadd.f32 0.0, %v1032
        %v1034 = vpop.f32.mrb[0].mxu0
        %v1035 = vpop.f32.mrb[0].mxu0
        %v1036 = vadd.f32 0.0, %v1035
        %v1037 = vpop.f32.mrb[0].mxu0
        %1038 = vmatprep.mubr.bf16.mxu0 %v757
        %1039 = vmatmul.mubr.bf16.gmra.mrb[0].mxu0 %v756
        %v1040 = vpop.f32.mrb[0].mxu0
        %v1041 = vadd.f32 0.0, %v1040
        %v1042 = vpop.f32.mrb[0].mxu0
        %v1043 = vpop.f32.mrb[0].mxu0
        %v1044 = vadd.f32 0.0, %v1043
        %v1045 = vpop.f32.mrb[0].mxu0
        %1046 = vdwg.mxu0
        %v1047 = vadd.f32 %v534, %v921
        %v1048 = vadd.f32 %v535, %v924
        %v1049 = vadd.f32 %v536, %v929
        %v1050 = vadd.f32 %v537, %v932
        %v1051 = vadd.f32 %v538, %v937
        %v1052 = vadd.f32 %v539, %v940
        %v1053 = vadd.f32 %v540, %v945
        %v1054 = vadd.f32 %v541, %v948
        %v1055 = vadd.f32 %v542, %v953
        %v1056 = vadd.f32 %v543, %v956
        %v1057 = vadd.f32 %v544, %v961
        %v1058 = vadd.f32 %v545, %v964
        %v1059 = vadd.f32 %v546, %v969
        %v1060 = vadd.f32 %v547, %v972
        %v1061 = vadd.f32 %v548, %v977
        %v1062 = vadd.f32 %v549, %v980
        %v1063 = vadd.f32 %v550, %v985
        %v1064 = vadd.f32 %v551, %v988
        %v1065 = vadd.f32 %v552, %v993
        %v1066 = vadd.f32 %v553, %v996
        %v1067 = vadd.f32 %v554, %v1001
        %v1068 = vadd.f32 %v555, %v1004
        %v1069 = vadd.f32 %v556, %v1009
        %v1070 = vadd.f32 %v557, %v1012
        %v1071 = vadd.f32 %v558, %v1017
        %v1072 = vadd.f32 %v559, %v1020
        %v1073 = vadd.f32 %v560, %v1025
        %v1074 = vadd.f32 %v561, %v1028
        %v1075 = vadd.f32 %v562, %v1033
        %v1076 = vadd.f32 %v563, %v1036
        %v1077 = vadd.f32 %v564, %v1041
        %v1078 = vadd.f32 %v565, %v1044
        %1079 = vst [vmem:[#allocation2] sm:$0xff] %v1047
        %1080 = vst [vmem:[#allocation2 + $0x8] sm:$0xff] %v1048
        %1081 = vst [vmem:[#allocation2 + $0x10] sm:$0xff] %v1049
        %1082 = vst [vmem:[#allocation2 + $0x18] sm:$0xff] %v1050
        %1083 = vst [vmem:[#allocation2 + $0x20] sm:$0xff] %v1051
        %1084 = vst [vmem:[#allocation2 + $0x28] sm:$0xff] %v1052
        %1085 = vst [vmem:[#allocation2 + $0x30] sm:$0xff] %v1053
        %1086 = vst [vmem:[#allocation2 + $0x38] sm:$0xff] %v1054
        %1087 = vst [vmem:[#allocation2 + $0x40] sm:$0xff] %v1055
        %1088 = vst [vmem:[#allocation2 + $0x48] sm:$0xff] %v1056
        %1089 = vst [vmem:[#allocation2 + $0x50] sm:$0xff] %v1057
        %1090 = vst [vmem:[#allocation2 + $0x58] sm:$0xff] %v1058
        %1091 = vst [vmem:[#allocation2 + $0x60] sm:$0xff] %v1059
        %1092 = vst [vmem:[#allocation2 + $0x68] sm:$0xff] %v1060
        %1093 = vst [vmem:[#allocation2 + $0x70] sm:$0xff] %v1061
        %1094 = vst [vmem:[#allocation2 + $0x78] sm:$0xff] %v1062
        %1095 = vst [vmem:[#allocation2 + $0x80] sm:$0xff] %v1063
        %1096 = vst [vmem:[#allocation2 + $0x88] sm:$0xff] %v1064
        %1097 = vst [vmem:[#allocation2 + $0x90] sm:$0xff] %v1065
        %1098 = vst [vmem:[#allocation2 + $0x98] sm:$0xff] %v1066
        %1099 = vst [vmem:[#allocation2 + $0xa0] sm:$0xff] %v1067
        %1100 = vst [vmem:[#allocation2 + $0xa8] sm:$0xff] %v1068
        %1101 = vst [vmem:[#allocation2 + $0xb0] sm:$0xff] %v1069
        %1102 = vst [vmem:[#allocation2 + $0xb8] sm:$0xff] %v1070
        %1103 = vst [vmem:[#allocation2 + $0xc0] sm:$0xff] %v1071
        %1104 = vst [vmem:[#allocation2 + $0xc8] sm:$0xff] %v1072
        %1105 = vst [vmem:[#allocation2 + $0xd0] sm:$0xff] %v1073
        %1106 = vst [vmem:[#allocation2 + $0xd8] sm:$0xff] %v1074
        %1107 = vst [vmem:[#allocation2 + $0xe0] sm:$0xff] %v1075
        %1108 = vst [vmem:[#allocation2 + $0xe8] sm:$0xff] %v1076
        %1109 = vst [vmem:[#allocation2 + $0xf0] sm:$0xff] %v1077
        %1110 = vst [vmem:[#allocation2 + $0xf8] sm:$0xff] %v1078
        %p1111 = scmp.eq.s32.totalorder %s22, 2
        // Predicated region
        $region87: #{graphsage_forward.7} parent=77 // pred_check
          %p1112 = pneg %p1111
        $region88: #{graphsage_forward.7} parent=77 // pred_check_branch
          %1114 = sbr.rel (%p1112) target = $region90
        $region89: #{graphsage_forward.7} parent=77 // pred_region
          %v1115 = vld [vmem:[#allocation2] sm:$0xff]
          %v1116 = vld [vmem:[#allocation2 + $0x8] sm:$0xff]
          %v1117 = vld [vmem:[#allocation2 + $0x10] sm:$0xff]
          %v1118 = vld [vmem:[#allocation2 + $0x18] sm:$0xff]
          %v1119 = vld [vmem:[#allocation2 + $0x20] sm:$0xff]
          %v1120 = vld [vmem:[#allocation2 + $0x28] sm:$0xff]
          %v1121 = vld [vmem:[#allocation2 + $0x30] sm:$0xff]
          %v1122 = vld [vmem:[#allocation2 + $0x38] sm:$0xff]
          %v1123 = vld [vmem:[#allocation2 + $0x40] sm:$0xff]
          %v1124 = vld [vmem:[#allocation2 + $0x48] sm:$0xff]
          %v1125 = vld [vmem:[#allocation2 + $0x50] sm:$0xff]
          %v1126 = vld [vmem:[#allocation2 + $0x58] sm:$0xff]
          %v1127 = vld [vmem:[#allocation2 + $0x60] sm:$0xff]
          %v1128 = vld [vmem:[#allocation2 + $0x68] sm:$0xff]
          %v1129 = vld [vmem:[#allocation2 + $0x70] sm:$0xff]
          %v1130 = vld [vmem:[#allocation2 + $0x78] sm:$0xff]
          %v1131 = vld [vmem:[#allocation2 + $0x80] sm:$0xff]
          %v1132 = vld [vmem:[#allocation2 + $0x88] sm:$0xff]
          %v1133 = vld [vmem:[#allocation2 + $0x90] sm:$0xff]
          %v1134 = vld [vmem:[#allocation2 + $0x98] sm:$0xff]
          %v1135 = vld [vmem:[#allocation2 + $0xa0] sm:$0xff]
          %v1136 = vld [vmem:[#allocation2 + $0xa8] sm:$0xff]
          %v1137 = vld [vmem:[#allocation2 + $0xb0] sm:$0xff]
          %v1138 = vld [vmem:[#allocation2 + $0xb8] sm:$0xff]
          %v1139 = vld [vmem:[#allocation2 + $0xc0] sm:$0xff]
          %v1140 = vld [vmem:[#allocation2 + $0xc8] sm:$0xff]
          %v1141 = vld [vmem:[#allocation2 + $0xd0] sm:$0xff]
          %v1142 = vld [vmem:[#allocation2 + $0xd8] sm:$0xff]
          %v1143 = vld [vmem:[#allocation2 + $0xe0] sm:$0xff]
          %v1144 = vld [vmem:[#allocation2 + $0xe8] sm:$0xff]
          %v1145 = vld [vmem:[#allocation2 + $0xf0] sm:$0xff]
          %v1146 = vld [vmem:[#allocation2 + $0xf8] sm:$0xff]
          %v1147 = vld [vmem:[%s489] sm:$0xff]
          %v1148 = vld [vmem:[%s489 + $0x8] sm:$0xff]
          %v1149 = vld [vmem:[%s489 + $0x10] sm:$0xff]
          %v1150 = vld [vmem:[%s489 + $0x18] sm:$0xff]
          %v1151 = vld [vmem:[%s489 + $0x20] sm:$0xff]
          %v1152 = vld [vmem:[%s489 + $0x28] sm:$0xff]
          %v1153 = vld [vmem:[%s489 + $0x30] sm:$0xff]
          %v1154 = vld [vmem:[%s489 + $0x38] sm:$0xff]
          %v1155 = vld [vmem:[%s489 + $0x40] sm:$0xff]
          %v1156 = vld [vmem:[%s489 + $0x48] sm:$0xff]
          %v1157 = vld [vmem:[%s489 + $0x50] sm:$0xff]
          %v1158 = vld [vmem:[%s489 + $0x58] sm:$0xff]
          %v1159 = vld [vmem:[%s489 + $0x60] sm:$0xff]
          %v1160 = vld [vmem:[%s489 + $0x68] sm:$0xff]
          %v1161 = vld [vmem:[%s489 + $0x70] sm:$0xff]
          %v1162 = vld [vmem:[%s489 + $0x78] sm:$0xff]
          %v1163 = vld [vmem:[%s489 + $0x80] sm:$0xff]
          %v1164 = vld [vmem:[%s489 + $0x88] sm:$0xff]
          %v1165 = vld [vmem:[%s489 + $0x90] sm:$0xff]
          %v1166 = vld [vmem:[%s489 + $0x98] sm:$0xff]
          %v1167 = vld [vmem:[%s489 + $0xa0] sm:$0xff]
          %v1168 = vld [vmem:[%s489 + $0xa8] sm:$0xff]
          %v1169 = vld [vmem:[%s489 + $0xb0] sm:$0xff]
          %v1170 = vld [vmem:[%s489 + $0xb8] sm:$0xff]
          %v1171 = vld [vmem:[%s489 + $0xc0] sm:$0xff]
          %v1172 = vld [vmem:[%s489 + $0xc8] sm:$0xff]
          %v1173 = vld [vmem:[%s489 + $0xd0] sm:$0xff]
          %v1174 = vld [vmem:[%s489 + $0xd8] sm:$0xff]
          %v1175 = vld [vmem:[%s489 + $0xe0] sm:$0xff]
          %v1176 = vld [vmem:[%s489 + $0xe8] sm:$0xff]
          %v1177 = vld [vmem:[%s489 + $0xf0] sm:$0xff]
          %v1178 = vld [vmem:[%s489 + $0xf8] sm:$0xff]
          %1180 = vset.pattern.permute.xlu0 0
          %1181 = vperm.xlu0 %1180, %v1147
          %v1182 = vpop.permute.xlu0 %1181
          %1185 = vset.pattern.permute.xlu0 0
          %1186 = vperm.xlu0 %1185, %v1148
          %v1187 = vpop.permute.xlu0 %1186
          %1190 = vset.pattern.permute.xlu0 0
          %1191 = vperm.xlu0 %1190, %v1149
          %v1192 = vpop.permute.xlu0 %1191
          %1195 = vset.pattern.permute.xlu0 0
          %1196 = vperm.xlu0 %1195, %v1150
          %v1197 = vpop.permute.xlu0 %1196
          %1200 = vset.pattern.permute.xlu0 0
          %1201 = vperm.xlu0 %1200, %v1151
          %v1202 = vpop.permute.xlu0 %1201
          %1205 = vset.pattern.permute.xlu0 0
          %1206 = vperm.xlu0 %1205, %v1152
          %v1207 = vpop.permute.xlu0 %1206
          %1210 = vset.pattern.permute.xlu0 0
          %1211 = vperm.xlu0 %1210, %v1153
          %v1212 = vpop.permute.xlu0 %1211
          %1215 = vset.pattern.permute.xlu0 0
          %1216 = vperm.xlu0 %1215, %v1154
          %v1217 = vpop.permute.xlu0 %1216
          %1220 = vset.pattern.permute.xlu0 0
          %1221 = vperm.xlu0 %1220, %v1155
          %v1222 = vpop.permute.xlu0 %1221
          %1225 = vset.pattern.permute.xlu0 0
          %1226 = vperm.xlu0 %1225, %v1156
          %v1227 = vpop.permute.xlu0 %1226
          %1230 = vset.pattern.permute.xlu0 0
          %1231 = vperm.xlu0 %1230, %v1157
          %v1232 = vpop.permute.xlu0 %1231
          %1235 = vset.pattern.permute.xlu0 0
          %1236 = vperm.xlu0 %1235, %v1158
          %v1237 = vpop.permute.xlu0 %1236
          %1240 = vset.pattern.permute.xlu0 0
          %1241 = vperm.xlu0 %1240, %v1159
          %v1242 = vpop.permute.xlu0 %1241
          %1245 = vset.pattern.permute.xlu0 0
          %1246 = vperm.xlu0 %1245, %v1160
          %v1247 = vpop.permute.xlu0 %1246
          %1250 = vset.pattern.permute.xlu0 0
          %1251 = vperm.xlu0 %1250, %v1161
          %v1252 = vpop.permute.xlu0 %1251
          %1255 = vset.pattern.permute.xlu0 0
          %1256 = vperm.xlu0 %1255, %v1162
          %v1257 = vpop.permute.xlu0 %1256
          %1260 = vset.pattern.permute.xlu0 0
          %1261 = vperm.xlu0 %1260, %v1163
          %v1262 = vpop.permute.xlu0 %1261
          %1265 = vset.pattern.permute.xlu0 0
          %1266 = vperm.xlu0 %1265, %v1164
          %v1267 = vpop.permute.xlu0 %1266
          %1270 = vset.pattern.permute.xlu0 0
          %1271 = vperm.xlu0 %1270, %v1165
          %v1272 = vpop.permute.xlu0 %1271
          %1275 = vset.pattern.permute.xlu0 0
          %1276 = vperm.xlu0 %1275, %v1166
          %v1277 = vpop.permute.xlu0 %1276
          %1280 = vset.pattern.permute.xlu0 0
          %1281 = vperm.xlu0 %1280, %v1167
          %v1282 = vpop.permute.xlu0 %1281
          %1285 = vset.pattern.permute.xlu0 0
          %1286 = vperm.xlu0 %1285, %v1168
          %v1287 = vpop.permute.xlu0 %1286
          %1290 = vset.pattern.permute.xlu0 0
          %1291 = vperm.xlu0 %1290, %v1169
          %v1292 = vpop.permute.xlu0 %1291
          %1295 = vset.pattern.permute.xlu0 0
          %1296 = vperm.xlu0 %1295, %v1170
          %v1297 = vpop.permute.xlu0 %1296
          %1300 = vset.pattern.permute.xlu0 0
          %1301 = vperm.xlu0 %1300, %v1171
          %v1302 = vpop.permute.xlu0 %1301
          %1305 = vset.pattern.permute.xlu0 0
          %1306 = vperm.xlu0 %1305, %v1172
          %v1307 = vpop.permute.xlu0 %1306
          %1310 = vset.pattern.permute.xlu0 0
          %1311 = vperm.xlu0 %1310, %v1173
          %v1312 = vpop.permute.xlu0 %1311
          %1315 = vset.pattern.permute.xlu0 0
          %1316 = vperm.xlu0 %1315, %v1174
          %v1317 = vpop.permute.xlu0 %1316
          %1320 = vset.pattern.permute.xlu0 0
          %1321 = vperm.xlu0 %1320, %v1175
          %v1322 = vpop.permute.xlu0 %1321
          %1325 = vset.pattern.permute.xlu0 0
          %1326 = vperm.xlu0 %1325, %v1176
          %v1327 = vpop.permute.xlu0 %1326
          %1330 = vset.pattern.permute.xlu0 0
          %1331 = vperm.xlu0 %1330, %v1177
          %v1332 = vpop.permute.xlu0 %1331
          %1335 = vset.pattern.permute.xlu0 0
          %1336 = vperm.xlu0 %1335, %v1178
          %v1337 = vpop.permute.xlu0 %1336
          %v1339 = vmul.f32 %v1115, %v1182
          %v1340 = vmul.f32 %v1116, %v1187
          %v1341 = vmul.f32 %v1117, %v1192
          %v1342 = vmul.f32 %v1118, %v1197
          %v1343 = vmul.f32 %v1119, %v1202
          %v1344 = vmul.f32 %v1120, %v1207
          %v1345 = vmul.f32 %v1121, %v1212
          %v1346 = vmul.f32 %v1122, %v1217
          %v1347 = vmul.f32 %v1123, %v1222
          %v1348 = vmul.f32 %v1124, %v1227
          %v1349 = vmul.f32 %v1125, %v1232
          %v1350 = vmul.f32 %v1126, %v1237
          %v1351 = vmul.f32 %v1127, %v1242
          %v1352 = vmul.f32 %v1128, %v1247
          %v1353 = vmul.f32 %v1129, %v1252
          %v1354 = vmul.f32 %v1130, %v1257
          %v1355 = vmul.f32 %v1131, %v1262
          %v1356 = vmul.f32 %v1132, %v1267
          %v1357 = vmul.f32 %v1133, %v1272
          %v1358 = vmul.f32 %v1134, %v1277
          %v1359 = vmul.f32 %v1135, %v1282
          %v1360 = vmul.f32 %v1136, %v1287
          %v1361 = vmul.f32 %v1137, %v1292
          %v1362 = vmul.f32 %v1138, %v1297
          %v1363 = vmul.f32 %v1139, %v1302
          %v1364 = vmul.f32 %v1140, %v1307
          %v1365 = vmul.f32 %v1141, %v1312
          %v1366 = vmul.f32 %v1142, %v1317
          %v1367 = vmul.f32 %v1143, %v1322
          %v1368 = vmul.f32 %v1144, %v1327
          %v1369 = vmul.f32 %v1145, %v1332
          %v1370 = vmul.f32 %v1146, %v1337
          %v1371 = vpack.c.bf16 %v1340, %v1339
          %v1372 = vpack.c.bf16 %v1342, %v1341
          %v1373 = vpack.c.bf16 %v1344, %v1343
          %v1374 = vpack.c.bf16 %v1346, %v1345
          %v1375 = vpack.c.bf16 %v1348, %v1347
          %v1376 = vpack.c.bf16 %v1350, %v1349
          %v1377 = vpack.c.bf16 %v1352, %v1351
          %v1378 = vpack.c.bf16 %v1354, %v1353
          %v1379 = vpack.c.bf16 %v1356, %v1355
          %v1380 = vpack.c.bf16 %v1358, %v1357
          %v1381 = vpack.c.bf16 %v1360, %v1359
          %v1382 = vpack.c.bf16 %v1362, %v1361
          %v1383 = vpack.c.bf16 %v1364, %v1363
          %v1384 = vpack.c.bf16 %v1366, %v1365
          %v1385 = vpack.c.bf16 %v1368, %v1367
          %v1386 = vpack.c.bf16 %v1370, %v1369
          %v1387 = vld [vmem:[%s483] sm:$0xf]
          %v1388 = vld [vmem:[%s483 + $0x4] sm:$0xf]
          %v1389 = vld [vmem:[%s483 + $0x8] sm:$0xf]
          %v1390 = vld [vmem:[%s483 + $0xc] sm:$0xf]
          %v1391 = vld [vmem:[%s483 + $0x10] sm:$0xf]
          %v1392 = vld [vmem:[%s483 + $0x14] sm:$0xf]
          %v1393 = vld [vmem:[%s483 + $0x18] sm:$0xf]
          %v1394 = vld [vmem:[%s483 + $0x1c] sm:$0xf]
          %v1395 = vld [vmem:[%s483 + $0x20] sm:$0xf]
          %v1396 = vld [vmem:[%s483 + $0x24] sm:$0xf]
          %v1397 = vld [vmem:[%s483 + $0x28] sm:$0xf]
          %v1398 = vld [vmem:[%s483 + $0x2c] sm:$0xf]
          %v1399 = vld [vmem:[%s483 + $0x30] sm:$0xf]
          %v1400 = vld [vmem:[%s483 + $0x34] sm:$0xf]
          %v1401 = vld [vmem:[%s483 + $0x38] sm:$0xf]
          %v1402 = vld [vmem:[%s483 + $0x3c] sm:$0xf]
          %v1403 = vld [vmem:[%s483 + $0x40] sm:$0xf]
          %v1404 = vld [vmem:[%s483 + $0x44] sm:$0xf]
          %v1405 = vld [vmem:[%s483 + $0x48] sm:$0xf]
          %v1406 = vld [vmem:[%s483 + $0x4c] sm:$0xf]
          %v1407 = vld [vmem:[%s483 + $0x50] sm:$0xf]
          %v1408 = vld [vmem:[%s483 + $0x54] sm:$0xf]
          %v1409 = vld [vmem:[%s483 + $0x58] sm:$0xf]
          %v1410 = vld [vmem:[%s483 + $0x5c] sm:$0xf]
          %v1411 = vld [vmem:[%s483 + $0x60] sm:$0xf]
          %v1412 = vld [vmem:[%s483 + $0x64] sm:$0xf]
          %v1413 = vld [vmem:[%s483 + $0x68] sm:$0xf]
          %v1414 = vld [vmem:[%s483 + $0x6c] sm:$0xf]
          %v1415 = vld [vmem:[%s483 + $0x70] sm:$0xf]
          %v1416 = vld [vmem:[%s483 + $0x74] sm:$0xf]
          %v1417 = vld [vmem:[%s483 + $0x78] sm:$0xf]
          %v1418 = vld [vmem:[%s483 + $0x7c] sm:$0xf]
          %v1451 = vunpack.c.l.b16 %v1387
          %v1452 = vunpack.c.l.b16 %v1388
          %v1453 = vunpack.c.l.b16 %v1389
          %v1454 = vunpack.c.l.b16 %v1390
          %v1455 = vunpack.c.l.b16 %v1391
          %v1456 = vunpack.c.l.b16 %v1392
          %v1457 = vunpack.c.l.b16 %v1393
          %v1458 = vunpack.c.l.b16 %v1394
          %v1459 = vunpack.c.l.b16 %v1395
          %v1460 = vunpack.c.l.b16 %v1396
          %v1461 = vunpack.c.l.b16 %v1397
          %v1462 = vunpack.c.l.b16 %v1398
          %v1463 = vunpack.c.l.b16 %v1399
          %v1464 = vunpack.c.l.b16 %v1400
          %v1465 = vunpack.c.l.b16 %v1401
          %v1466 = vunpack.c.l.b16 %v1402
          %v1467 = vunpack.c.l.b16 %v1403
          %v1468 = vunpack.c.l.b16 %v1404
          %v1469 = vunpack.c.l.b16 %v1405
          %v1470 = vunpack.c.l.b16 %v1406
          %v1471 = vunpack.c.l.b16 %v1407
          %v1472 = vunpack.c.l.b16 %v1408
          %v1473 = vunpack.c.l.b16 %v1409
          %v1474 = vunpack.c.l.b16 %v1410
          %v1475 = vunpack.c.l.b16 %v1411
          %v1476 = vunpack.c.l.b16 %v1412
          %v1477 = vunpack.c.l.b16 %v1413
          %v1478 = vunpack.c.l.b16 %v1414
          %v1479 = vunpack.c.l.b16 %v1415
          %v1480 = vunpack.c.l.b16 %v1416
          %v1481 = vunpack.c.l.b16 %v1417
          %v1482 = vunpack.c.l.b16 %v1418
          %v1483 = vpack.c.b16 %v1452, %v1451
          %v1484 = vpack.c.b16 %v1454, %v1453
          %v1485 = vpack.c.b16 %v1456, %v1455
          %v1486 = vpack.c.b16 %v1458, %v1457
          %v1487 = vpack.c.b16 %v1460, %v1459
          %v1488 = vpack.c.b16 %v1462, %v1461
          %v1489 = vpack.c.b16 %v1464, %v1463
          %v1490 = vpack.c.b16 %v1466, %v1465
          %v1491 = vpack.c.b16 %v1468, %v1467
          %v1492 = vpack.c.b16 %v1470, %v1469
          %v1493 = vpack.c.b16 %v1472, %v1471
          %v1494 = vpack.c.b16 %v1474, %v1473
          %v1495 = vpack.c.b16 %v1476, %v1475
          %v1496 = vpack.c.b16 %v1478, %v1477
          %v1497 = vpack.c.b16 %v1480, %v1479
          %v1498 = vpack.c.b16 %v1482, %v1481
          %v1515 = vld [vmem:[%s4] sm:$0xf]
          %v1516 = vld [vmem:[%s4 + $0x4] sm:$0xf]
          %v1517 = vld [vmem:[%s4 + $0x8] sm:$0xf]
          %v1518 = vld [vmem:[%s4 + $0xc] sm:$0xf]
          %v1519 = vld [vmem:[%s4 + $0x10] sm:$0xf]
          %v1520 = vld [vmem:[%s4 + $0x14] sm:$0xf]
          %v1521 = vld [vmem:[%s4 + $0x18] sm:$0xf]
          %v1522 = vld [vmem:[%s4 + $0x1c] sm:$0xf]
          %v1523 = vld [vmem:[%s4 + $0x20] sm:$0xf]
          %v1524 = vld [vmem:[%s4 + $0x24] sm:$0xf]
          %v1525 = vld [vmem:[%s4 + $0x28] sm:$0xf]
          %v1526 = vld [vmem:[%s4 + $0x2c] sm:$0xf]
          %v1527 = vld [vmem:[%s4 + $0x30] sm:$0xf]
          %v1528 = vld [vmem:[%s4 + $0x34] sm:$0xf]
          %v1529 = vld [vmem:[%s4 + $0x38] sm:$0xf]
          %v1530 = vld [vmem:[%s4 + $0x3c] sm:$0xf]
          %v1531 = vld [vmem:[%s4 + $0x40] sm:$0xf]
          %v1532 = vld [vmem:[%s4 + $0x44] sm:$0xf]
          %v1533 = vld [vmem:[%s4 + $0x48] sm:$0xf]
          %v1534 = vld [vmem:[%s4 + $0x4c] sm:$0xf]
          %v1535 = vld [vmem:[%s4 + $0x50] sm:$0xf]
          %v1536 = vld [vmem:[%s4 + $0x54] sm:$0xf]
          %v1537 = vld [vmem:[%s4 + $0x58] sm:$0xf]
          %v1538 = vld [vmem:[%s4 + $0x5c] sm:$0xf]
          %v1539 = vld [vmem:[%s4 + $0x60] sm:$0xf]
          %v1540 = vld [vmem:[%s4 + $0x64] sm:$0xf]
          %v1541 = vld [vmem:[%s4 + $0x68] sm:$0xf]
          %v1542 = vld [vmem:[%s4 + $0x6c] sm:$0xf]
          %v1543 = vld [vmem:[%s4 + $0x70] sm:$0xf]
          %v1544 = vld [vmem:[%s4 + $0x74] sm:$0xf]
          %v1545 = vld [vmem:[%s4 + $0x78] sm:$0xf]
          %v1546 = vld [vmem:[%s4 + $0x7c] sm:$0xf]
          %v1547 = vld [vmem:[%s5] sm:$0x1]
          %v1549 = vlaneseq
          %v1550 = vshrl.u32 %v1549, 7
          %v1551 = vsub.s32 0, %v1550
          %v1552 = vrot.slane %v1547, %v1551
          %v1586 = vunpack.c.l.b16 %v1515
          %v1587 = vunpack.c.l.b16 %v1516
          %v1588 = vunpack.c.l.b16 %v1517
          %v1589 = vunpack.c.l.b16 %v1518
          %v1590 = vunpack.c.l.b16 %v1519
          %v1591 = vunpack.c.l.b16 %v1520
          %v1592 = vunpack.c.l.b16 %v1521
          %v1593 = vunpack.c.l.b16 %v1522
          %v1594 = vunpack.c.l.b16 %v1523
          %v1595 = vunpack.c.l.b16 %v1524
          %v1596 = vunpack.c.l.b16 %v1525
          %v1597 = vunpack.c.l.b16 %v1526
          %v1598 = vunpack.c.l.b16 %v1527
          %v1599 = vunpack.c.l.b16 %v1528
          %v1600 = vunpack.c.l.b16 %v1529
          %v1601 = vunpack.c.l.b16 %v1530
          %v1602 = vunpack.c.l.b16 %v1531
          %v1603 = vunpack.c.l.b16 %v1532
          %v1604 = vunpack.c.l.b16 %v1533
          %v1605 = vunpack.c.l.b16 %v1534
          %v1606 = vunpack.c.l.b16 %v1535
          %v1607 = vunpack.c.l.b16 %v1536
          %v1608 = vunpack.c.l.b16 %v1537
          %v1609 = vunpack.c.l.b16 %v1538
          %v1610 = vunpack.c.l.b16 %v1539
          %v1611 = vunpack.c.l.b16 %v1540
          %v1612 = vunpack.c.l.b16 %v1541
          %v1613 = vunpack.c.l.b16 %v1542
          %v1614 = vunpack.c.l.b16 %v1543
          %v1615 = vunpack.c.l.b16 %v1544
          %v1616 = vunpack.c.l.b16 %v1545
          %v1617 = vunpack.c.l.b16 %v1546
          %v1618 = vpack.c.b16 %v1587, %v1586
          %v1619 = vpack.c.b16 %v1589, %v1588
          %v1620 = vpack.c.b16 %v1591, %v1590
          %v1621 = vpack.c.b16 %v1593, %v1592
          %v1622 = vpack.c.b16 %v1595, %v1594
          %v1623 = vpack.c.b16 %v1597, %v1596
          %v1624 = vpack.c.b16 %v1599, %v1598
          %v1625 = vpack.c.b16 %v1601, %v1600
          %v1626 = vpack.c.b16 %v1603, %v1602
          %v1627 = vpack.c.b16 %v1605, %v1604
          %v1628 = vpack.c.b16 %v1607, %v1606
          %v1629 = vpack.c.b16 %v1609, %v1608
          %v1630 = vpack.c.b16 %v1611, %v1610
          %v1631 = vpack.c.b16 %v1613, %v1612
          %v1632 = vpack.c.b16 %v1615, %v1614
          %v1633 = vpack.c.b16 %v1617, %v1616
          %1650 = vmatprep.subr.bf16.mxu0 0
          %1651 = vmatpush1.bf16.msra.mxu0 %v1618
          %1652 = vmatprep.subr.bf16.mxu0 0
          %1653 = vmatpush1.bf16.msra.mxu0 %v1619
          %1654 = vmatprep.subr.bf16.mxu0 0
          %1655 = vmatpush1.bf16.msra.mxu0 %v1620
          %1656 = vmatprep.subr.bf16.mxu0 0
          %1657 = vmatpush1.bf16.msra.mxu0 %v1621
          %1658 = vmatprep.subr.bf16.mxu0 0
          %1659 = vmatpush1.bf16.msra.mxu0 %v1622
          %1660 = vmatprep.subr.bf16.mxu0 0
          %1661 = vmatpush1.bf16.msra.mxu0 %v1623
          %1662 = vmatprep.subr.bf16.mxu0 0
          %1663 = vmatpush1.bf16.msra.mxu0 %v1624
          %1664 = vmatprep.subr.bf16.mxu0 0
          %1665 = vmatpush1.bf16.msra.mxu0 %v1625
          %1666 = vmatprep.subr.bf16.mxu0 0
          %1667 = vmatpush1.bf16.msra.mxu0 %v1626
          %1668 = vmatprep.subr.bf16.mxu0 0
          %1669 = vmatpush1.bf16.msra.mxu0 %v1627
          %1670 = vmatprep.subr.bf16.mxu0 0
          %1671 = vmatpush1.bf16.msra.mxu0 %v1628
          %1672 = vmatprep.subr.bf16.mxu0 0
          %1673 = vmatpush1.bf16.msra.mxu0 %v1629
          %1674 = vmatprep.subr.bf16.mxu0 0
          %1675 = vmatpush1.bf16.msra.mxu0 %v1630
          %1676 = vmatprep.subr.bf16.mxu0 0
          %1677 = vmatpush1.bf16.msra.mxu0 %v1631
          %1678 = vmatprep.subr.bf16.mxu0 0
          %1679 = vmatpush1.bf16.msra.mxu0 %v1632
          %1680 = vmatprep.subr.bf16.mxu0 0
          %1681 = vmatpush1.bf16.msra.mxu0 %v1633
          %1682 = vmatprep.mubr.bf16.mxu0 %v1483
          %1683 = vmatmul.mubr.bf16.gmra.mrb[0].mxu0 %v1371
          %v1684 = vpop.f32.mrb[0].mxu0
          %v1685 = vadd.f32 %v1552, %v1684
          %v1686 = vpop.f32.mrb[0].mxu0
          %v1687 = vpop.f32.mrb[0].mxu0
          %v1688 = vadd.f32 %v1552, %v1687
          %v1689 = vpop.f32.mrb[0].mxu0
          %1690 = vmatprep.mubr.bf16.mxu0 %v1484
          %1691 = vmatmul.mubr.bf16.gmra.mrb[0].mxu0 %v1372
          %v1692 = vpop.f32.mrb[0].mxu0
          %v1693 = vadd.f32 %v1552, %v1692
          %v1694 = vpop.f32.mrb[0].mxu0
          %v1695 = vpop.f32.mrb[0].mxu0
          %v1696 = vadd.f32 %v1552, %v1695
          %v1697 = vpop.f32.mrb[0].mxu0
          %1698 = vmatprep.mubr.bf16.mxu0 %v1485
          %1699 = vmatmul.mubr.bf16.gmra.mrb[0].mxu0 %v1373
          %v1700 = vpop.f32.mrb[0].mxu0
          %v1701 = vadd.f32 %v1552, %v1700
          %v1702 = vpop.f32.mrb[0].mxu0
          %v1703 = vpop.f32.mrb[0].mxu0
          %v1704 = vadd.f32 %v1552, %v1703
          %v1705 = vpop.f32.mrb[0].mxu0
          %1706 = vmatprep.mubr.bf16.mxu0 %v1486
          %1707 = vmatmul.mubr.bf16.gmra.mrb[0].mxu0 %v1374
          %v1708 = vpop.f32.mrb[0].mxu0
          %v1709 = vadd.f32 %v1552, %v1708
          %v1710 = vpop.f32.mrb[0].mxu0
          %v1711 = vpop.f32.mrb[0].mxu0
          %v1712 = vadd.f32 %v1552, %v1711
          %v1713 = vpop.f32.mrb[0].mxu0
          %1714 = vmatprep.mubr.bf16.mxu0 %v1487
          %1715 = vmatmul.mubr.bf16.gmra.mrb[0].mxu0 %v1375
          %v1716 = vpop.f32.mrb[0].mxu0
          %v1717 = vadd.f32 %v1552, %v1716
          %v1718 = vpop.f32.mrb[0].mxu0
          %v1719 = vpop.f32.mrb[0].mxu0
          %v1720 = vadd.f32 %v1552, %v1719
          %v1721 = vpop.f32.mrb[0].mxu0
          %1722 = vmatprep.mubr.bf16.mxu0 %v1488
          %1723 = vmatmul.mubr.bf16.gmra.mrb[0].mxu0 %v1376
          %v1724 = vpop.f32.mrb[0].mxu0
          %v1725 = vadd.f32 %v1552, %v1724
          %v1726 = vpop.f32.mrb[0].mxu0
          %v1727 = vpop.f32.mrb[0].mxu0
          %v1728 = vadd.f32 %v1552, %v1727
          %v1729 = vpop.f32.mrb[0].mxu0
          %1730 = vmatprep.mubr.bf16.mxu0 %v1489
          %1731 = vmatmul.mubr.bf16.gmra.mrb[0].mxu0 %v1377
          %v1732 = vpop.f32.mrb[0].mxu0
          %v1733 = vadd.f32 %v1552, %v1732
          %v1734 = vpop.f32.mrb[0].mxu0
          %v1735 = vpop.f32.mrb[0].mxu0
          %v1736 = vadd.f32 %v1552, %v1735
          %v1737 = vpop.f32.mrb[0].mxu0
          %1738 = vmatprep.mubr.bf16.mxu0 %v1490
          %1739 = vmatmul.mubr.bf16.gmra.mrb[0].mxu0 %v1378
          %v1740 = vpop.f32.mrb[0].mxu0
          %v1741 = vadd.f32 %v1552, %v1740
          %v1742 = vpop.f32.mrb[0].mxu0
          %v1743 = vpop.f32.mrb[0].mxu0
          %v1744 = vadd.f32 %v1552, %v1743
          %v1745 = vpop.f32.mrb[0].mxu0
          %1746 = vmatprep.mubr.bf16.mxu0 %v1491
          %1747 = vmatmul.mubr.bf16.gmra.mrb[0].mxu0 %v1379
          %v1748 = vpop.f32.mrb[0].mxu0
          %v1749 = vadd.f32 %v1552, %v1748
          %v1750 = vpop.f32.mrb[0].mxu0
          %v1751 = vpop.f32.mrb[0].mxu0
          %v1752 = vadd.f32 %v1552, %v1751
          %v1753 = vpop.f32.mrb[0].mxu0
          %1754 = vmatprep.mubr.bf16.mxu0 %v1492
          %1755 = vmatmul.mubr.bf16.gmra.mrb[0].mxu0 %v1380
          %v1756 = vpop.f32.mrb[0].mxu0
          %v1757 = vadd.f32 %v1552, %v1756
          %v1758 = vpop.f32.mrb[0].mxu0
          %v1759 = vpop.f32.mrb[0].mxu0
          %v1760 = vadd.f32 %v1552, %v1759
          %v1761 = vpop.f32.mrb[0].mxu0
          %1762 = vmatprep.mubr.bf16.mxu0 %v1493
          %1763 = vmatmul.mubr.bf16.gmra.mrb[0].mxu0 %v1381
          %v1764 = vpop.f32.mrb[0].mxu0
          %v1765 = vadd.f32 %v1552, %v1764
          %v1766 = vpop.f32.mrb[0].mxu0
          %v1767 = vpop.f32.mrb[0].mxu0
          %v1768 = vadd.f32 %v1552, %v1767
          %v1769 = vpop.f32.mrb[0].mxu0
          %1770 = vmatprep.mubr.bf16.mxu0 %v1494
          %1771 = vmatmul.mubr.bf16.gmra.mrb[0].mxu0 %v1382
          %v1772 = vpop.f32.mrb[0].mxu0
          %v1773 = vadd.f32 %v1552, %v1772
          %v1774 = vpop.f32.mrb[0].mxu0
          %v1775 = vpop.f32.mrb[0].mxu0
          %v1776 = vadd.f32 %v1552, %v1775
          %v1777 = vpop.f32.mrb[0].mxu0
          %1778 = vmatprep.mubr.bf16.mxu0 %v1495
          %1779 = vmatmul.mubr.bf16.gmra.mrb[0].mxu0 %v1383
          %v1780 = vpop.f32.mrb[0].mxu0
          %v1781 = vadd.f32 %v1552, %v1780
          %v1782 = vpop.f32.mrb[0].mxu0
          %v1783 = vpop.f32.mrb[0].mxu0
          %v1784 = vadd.f32 %v1552, %v1783
          %v1785 = vpop.f32.mrb[0].mxu0
          %1786 = vmatprep.mubr.bf16.mxu0 %v1496
          %1787 = vmatmul.mubr.bf16.gmra.mrb[0].mxu0 %v1384
          %v1788 = vpop.f32.mrb[0].mxu0
          %v1789 = vadd.f32 %v1552, %v1788
          %v1790 = vpop.f32.mrb[0].mxu0
          %v1791 = vpop.f32.mrb[0].mxu0
          %v1792 = vadd.f32 %v1552, %v1791
          %v1793 = vpop.f32.mrb[0].mxu0
          %1794 = vmatprep.mubr.bf16.mxu0 %v1497
          %1795 = vmatmul.mubr.bf16.gmra.mrb[0].mxu0 %v1385
          %v1796 = vpop.f32.mrb[0].mxu0
          %v1797 = vadd.f32 %v1552, %v1796
          %v1798 = vpop.f32.mrb[0].mxu0
          %v1799 = vpop.f32.mrb[0].mxu0
          %v1800 = vadd.f32 %v1552, %v1799
          %v1801 = vpop.f32.mrb[0].mxu0
          %1802 = vmatprep.mubr.bf16.mxu0 %v1498
          %1803 = vmatmul.mubr.bf16.gmra.mrb[0].mxu0 %v1386
          %v1804 = vpop.f32.mrb[0].mxu0
          %v1805 = vadd.f32 %v1552, %v1804
          %v1806 = vpop.f32.mrb[0].mxu0
          %v1807 = vpop.f32.mrb[0].mxu0
          %v1808 = vadd.f32 %v1552, %v1807
          %v1809 = vpop.f32.mrb[0].mxu0
          %1810 = vdwg.mxu0
          %1811 = vst [vmem:[%s495] sm:$0xff] %v1685
          %1812 = vst [vmem:[%s495 + $0x8] sm:$0xff] %v1688
          %1813 = vst [vmem:[%s495 + $0x10] sm:$0xff] %v1693
          %1814 = vst [vmem:[%s495 + $0x18] sm:$0xff] %v1696
          %1815 = vst [vmem:[%s495 + $0x20] sm:$0xff] %v1701
          %1816 = vst [vmem:[%s495 + $0x28] sm:$0xff] %v1704
          %1817 = vst [vmem:[%s495 + $0x30] sm:$0xff] %v1709
          %1818 = vst [vmem:[%s495 + $0x38] sm:$0xff] %v1712
          %1819 = vst [vmem:[%s495 + $0x40] sm:$0xff] %v1717
          %1820 = vst [vmem:[%s495 + $0x48] sm:$0xff] %v1720
          %1821 = vst [vmem:[%s495 + $0x50] sm:$0xff] %v1725
          %1822 = vst [vmem:[%s495 + $0x58] sm:$0xff] %v1728
          %1823 = vst [vmem:[%s495 + $0x60] sm:$0xff] %v1733
          %1824 = vst [vmem:[%s495 + $0x68] sm:$0xff] %v1736
          %1825 = vst [vmem:[%s495 + $0x70] sm:$0xff] %v1741
          %1826 = vst [vmem:[%s495 + $0x78] sm:$0xff] %v1744
          %1827 = vst [vmem:[%s495 + $0x80] sm:$0xff] %v1749
          %1828 = vst [vmem:[%s495 + $0x88] sm:$0xff] %v1752
          %1829 = vst [vmem:[%s495 + $0x90] sm:$0xff] %v1757
          %1830 = vst [vmem:[%s495 + $0x98] sm:$0xff] %v1760
          %1831 = vst [vmem:[%s495 + $0xa0] sm:$0xff] %v1765
          %1832 = vst [vmem:[%s495 + $0xa8] sm:$0xff] %v1768
          %1833 = vst [vmem:[%s495 + $0xb0] sm:$0xff] %v1773
          %1834 = vst [vmem:[%s495 + $0xb8] sm:$0xff] %v1776
          %1835 = vst [vmem:[%s495 + $0xc0] sm:$0xff] %v1781
          %1836 = vst [vmem:[%s495 + $0xc8] sm:$0xff] %v1784
          %1837 = vst [vmem:[%s495 + $0xd0] sm:$0xff] %v1789
          %1838 = vst [vmem:[%s495 + $0xd8] sm:$0xff] %v1792
          %1839 = vst [vmem:[%s495 + $0xe0] sm:$0xff] %v1797
          %1840 = vst [vmem:[%s495 + $0xe8] sm:$0xff] %v1800
          %1841 = vst [vmem:[%s495 + $0xf0] sm:$0xff] %v1805
          %1842 = vst [vmem:[%s495 + $0xf8] sm:$0xff] %v1808
        $region90: #{graphsage_forward.7} parent=77 // pred_fallthru
          _
        %s1843 = smul.u32 32, %s21
        %p1844 = scmp.lt.s32.totalorder %s1843, 63
        %s1845 = scalar_select %p1844, %s1843, 63
        %s1846 = smul.addr %s1845, 8
        %s1847 = scalar_lea.vmem %s6, %s1846
        // Predicated region
        $region91: #{graphsage_forward.7} parent=77 // pred_check
          %p1848 = pneg %p195
        $region92: #{graphsage_forward.7} parent=77 // pred_check_branch
          %1850 = sbr.rel (%p1848) target = $region94
        $region93: #{graphsage_forward.7} parent=77 // pred_region
          %s1851 = smul.u32 32, %s21
        $region94: #{graphsage_forward.7} parent=77 // pred_fallthru
          _
      $region78: #{graphsage_forward.7} parent=5 // pred_fallthru
        _
      %p1852 = scmp.le.s32.totalorder 2, %s12
      // Predicated region
      $region95: #{graphsage_forward.7} parent=5 // pred_check
        %p1853 = pneg %p1852
      $region96: #{graphsage_forward.7} parent=5 // pred_check_branch
        %1855 = sbr.rel (%p1853) target = $region98
      $region97: #{graphsage_forward.7} parent=5 // pred_region
        %s1856 = ssub.s32 %s12, 2
        // Predicated region
        $region99: #{graphsage_forward.7} parent=97 // pred_check
          %p1857 = pneg %p201
        $region100: #{graphsage_forward.7} parent=97 // pred_check_branch
          %1859 = sbr.rel (%p1857) target = $region102
        $region101: #{graphsage_forward.7} parent=97 // pred_region
          %s1860 = smul.u32 32, %s23
          %p1861 = scmp.lt.s32.totalorder %s1860, 63
          %s1862 = scalar_select %p1861, %s1860, 63
          %s1863 = smul.addr %s1862, 8
          %s1864 = scalar_lea.vmem %s6, %s1863
        $region102: #{graphsage_forward.7} parent=97 // pred_fallthru
          _
      $region98: #{graphsage_forward.7} parent=5 // pred_fallthru
        _
    $region6: #{graphsage_forward.7} parent=1 // loop_footer
      %s16 = sadd.s32 1, %s12
    $region7: #{graphsage_forward.7} parent=1 // loop_footer_branch
      %11 = sbr.rel target = $region3
    $region8: #{graphsage_forward.7} parent=1 // loop_exit
      _

// kernel: graphsage_forward.6
$region0: #{graphsage_forward.6}
  #allocation0 [shape = 'u32[]', space=smem, size = 0x4, offset = 0x4, fixed_abs, tag = 'smem constant byte address 0x4 - core index']
  #allocation1 [shape = 'u32[144,128]{1,0:T(1,128)}', space=vmem, size = 0x12000, scoped, tag = 'internal scratch']
  #allocation2 [shape = 'f32[256,128]{1,0:T(8,128)}', space=vmem, size = 0x20000, scoped, tag = 'scratch operand']
  %s0 = inlined_call_operand.vmem [shape: bf16[768,512], index: 0, kind: input, shape index: {}]
  %s1 = inlined_call_operand.vmem [shape: bf16[512,128], index: 1, kind: input, shape index: {}]
  %s2 = inlined_call_operand.vmem [shape: bf16[768,128], index: 2, kind: input, shape index: {}]
  %s3 = inlined_call_operand.vmem [shape: f32[768,1], index: 3, kind: input, shape index: {}]
  %s4 = inlined_call_operand.vmem [shape: bf16[256,128], index: 4, kind: input, shape index: {}]
  %s5 = inlined_call_operand.vmem [shape: f32[1,128], index: 5, kind: input, shape index: {}]
  %s6 = inlined_call_operand.vmem [shape: f32[768,128], index: 6, kind: output, shape index: {}]
  %s7 = sld [smem:[#allocation0]]
  $region65: #{graphsage_forward.6} parent=0
    _
  %s9 = ssub.s32 1, %s7
  %s10 = scalar_select 0, %s9, %s7
  loop: start=0, step=1, limit=5
  $region2: #{graphsage_forward.6} parent=0 // loop_pre_header
    _
  $region3: #{graphsage_forward.6} parent=0 // loop_header
    %s12 = sphi 0, %s16
    %p13 = scmp.ge.s32.totalorder %s12, 5
    %s19 = sphi 0, %s31
    %s20 = sphi 0, %s27
    %s21 = sphi 0, %s19
    %s22 = sphi 0, %s20
    %s23 = sphi 0, %s21
    %s24 = sphi 0, %s22
    %s36 = sphi 0, %s38
    %s39 = sphi 0, %s36
    %s40 = sphi 0, %s39
    %s56 = sphi 0, %s40
    %s62 = sphi 0, %s64
    %s65 = sphi 0, %s62
    %s66 = sphi 0, %s65
    %s82 = sphi 0, %s66
    %s88 = sphi 0, %s90
    %s91 = sphi 0, %s88
    %s92 = sphi 0, %s91
    %s108 = sphi 0, %s92
    %s114 = sphi 0, %s116
    %s117 = sphi 0, %s114
    %s118 = sphi 0, %s117
    %s134 = sphi 0, %s118
    %s138 = sphi 0, %s138
    %s140 = sphi 0, %s138
    %s141 = sphi 0, %s140
    %s155 = sphi 0, %s141
    %s159 = sphi 0, %s159
    %s161 = sphi 0, %s159
    %s162 = sphi 0, %s161
    %s176 = sphi 0, %s162
    %s182 = sphi 0, %s184
    %s185 = sphi 0, %s182
    %s186 = sphi 0, %s185
    %s202 = sphi 0, %s186
  $region4: #{graphsage_forward.6} parent=0 // loop_header_branch
    %15 = sbr.rel (%p13) target = $region8
  $region5: #{graphsage_forward.6} parent=0 // loop_body
    %s17 = ssub.s32 %s12, 1
    %s18 = ssub.s32 %s12, 2
    %s25 = sadd.s32 1, %s20
    %p26 = scmp.ge.s32.totalorder %s25, 1
    %s27 = scalar_select %p26, 0, %s25
    %s28 = sadd.s32 1, %s19
    %s29 = scalar_select %p26, %s28, %s19
    %p30 = scmp.ge.s32.totalorder %s29, 3
    %s31 = scalar_select %p30, 0, %s29
    %s32 = ssub.s32 %s19, %s31
    %s33 = ssub.s32 %s20, %s27
    %s34 = sor.u32 %s32, %s33
    %p35 = scmp.eq.s32.totalorder %s34, 0
    %s37 = sadd.s32 %s36, 1
    %s38 = scalar_select %p35, %s36, %s37
    %p41 = pneg %p35
    %p42 = scmp.eq.s32.totalorder %s12, 2
    %p43 = por %p41, %p42
    %p44 = scmp.ne.s32.totalorder %s36, %s39
    %p45 = scmp.eq.s32.totalorder %s12, 0
    %p46 = por %p44, %p45
    %p47 = scmp.ne.s32.totalorder %s36, %s39
    %p48 = scmp.eq.s32.totalorder %s17, 2
    %p49 = por %p47, %p48
    %p50 = scmp.ne.s32.totalorder %s39, %s40
    %p51 = scmp.eq.s32.totalorder %s17, 0
    %p52 = por %p50, %p51
    %p53 = scmp.ne.s32.totalorder %s39, %s40
    %p54 = scmp.eq.s32.totalorder %s18, 2
    %p55 = por %p53, %p54
    %p57 = scmp.ne.s32.totalorder %s40, %s56
    %p58 = scmp.eq.s32.totalorder %s18, 0
    %p59 = por %p57, %p58
    %s60 = ssub.s32 %s20, %s27
    %p61 = scmp.eq.s32.totalorder %s60, 0
    %s63 = sadd.s32 %s62, 1
    %s64 = scalar_select %p61, %s62, %s63
    %p67 = pneg %p61
    %p68 = scmp.eq.s32.totalorder %s12, 2
    %p69 = por %p67, %p68
    %p70 = scmp.ne.s32.totalorder %s62, %s65
    %p71 = scmp.eq.s32.totalorder %s12, 0
    %p72 = por %p70, %p71
    %p73 = scmp.ne.s32.totalorder %s62, %s65
    %p74 = scmp.eq.s32.totalorder %s17, 2
    %p75 = por %p73, %p74
    %p76 = scmp.ne.s32.totalorder %s65, %s66
    %p77 = scmp.eq.s32.totalorder %s17, 0
    %p78 = por %p76, %p77
    %p79 = scmp.ne.s32.totalorder %s65, %s66
    %p80 = scmp.eq.s32.totalorder %s18, 2
    %p81 = por %p79, %p80
    %p83 = scmp.ne.s32.totalorder %s66, %s82
    %p84 = scmp.eq.s32.totalorder %s18, 0
    %p85 = por %p83, %p84
    %s86 = ssub.s32 %s19, %s31
    %p87 = scmp.eq.s32.totalorder %s86, 0
    %s89 = sadd.s32 %s88, 1
    %s90 = scalar_select %p87, %s88, %s89
    %p93 = pneg %p87
    %p94 = scmp.eq.s32.totalorder %s12, 2
    %p95 = por %p93, %p94
    %p96 = scmp.ne.s32.totalorder %s88, %s91
    %p97 = scmp.eq.s32.totalorder %s12, 0
    %p98 = por %p96, %p97
    %p99 = scmp.ne.s32.totalorder %s88, %s91
    %p100 = scmp.eq.s32.totalorder %s17, 2
    %p101 = por %p99, %p100
    %p102 = scmp.ne.s32.totalorder %s91, %s92
    %p103 = scmp.eq.s32.totalorder %s17, 0
    %p104 = por %p102, %p103
    %p105 = scmp.ne.s32.totalorder %s91, %s92
    %p106 = scmp.eq.s32.totalorder %s18, 2
    %p107 = por %p105, %p106
    %p109 = scmp.ne.s32.totalorder %s92, %s108
    %p110 = scmp.eq.s32.totalorder %s18, 0
    %p111 = por %p109, %p110
    %s112 = ssub.s32 %s19, %s31
    %p113 = scmp.eq.s32.totalorder %s112, 0
    %s115 = sadd.s32 %s114, 1
    %s116 = scalar_select %p113, %s114, %s115
    %p119 = pneg %p113
    %p120 = scmp.eq.s32.totalorder %s12, 2
    %p121 = por %p119, %p120
    %p122 = scmp.ne.s32.totalorder %s114, %s117
    %p123 = scmp.eq.s32.totalorder %s12, 0
    %p124 = por %p122, %p123
    %p125 = scmp.ne.s32.totalorder %s114, %s117
    %p126 = scmp.eq.s32.totalorder %s17, 2
    %p127 = por %p125, %p126
    %p128 = scmp.ne.s32.totalorder %s117, %s118
    %p129 = scmp.eq.s32.totalorder %s17, 0
    %p130 = por %p128, %p129
    %p131 = scmp.ne.s32.totalorder %s117, %s118
    %p132 = scmp.eq.s32.totalorder %s18, 2
    %p133 = por %p131, %p132
    %p135 = scmp.ne.s32.totalorder %s118, %s134
    %p136 = scmp.eq.s32.totalorder %s18, 0
    %p137 = por %p135, %p136
    %s139 = sadd.s32 %s138, 1
    %p142 = scmp.eq.s32.totalorder %s12, 2
    %p143 = scmp.ne.s32.totalorder %s138, %s140
    %p144 = scmp.eq.s32.totalorder %s12, 0
    %p145 = por %p143, %p144
    %p146 = scmp.ne.s32.totalorder %s138, %s140
    %p147 = scmp.eq.s32.totalorder %s17, 2
    %p148 = por %p146, %p147
    %p149 = scmp.ne.s32.totalorder %s140, %s141
    %p150 = scmp.eq.s32.totalorder %s17, 0
    %p151 = por %p149, %p150
    %p152 = scmp.ne.s32.totalorder %s140, %s141
    %p153 = scmp.eq.s32.totalorder %s18, 2
    %p154 = por %p152, %p153
    %p156 = scmp.ne.s32.totalorder %s141, %s155
    %p157 = scmp.eq.s32.totalorder %s18, 0
    %p158 = por %p156, %p157
    %s160 = sadd.s32 %s159, 1
    %p163 = scmp.eq.s32.totalorder %s12, 2
    %p164 = scmp.ne.s32.totalorder %s159, %s161
    %p165 = scmp.eq.s32.totalorder %s12, 0
    %p166 = por %p164, %p165
    %p167 = scmp.ne.s32.totalorder %s159, %s161
    %p168 = scmp.eq.s32.totalorder %s17, 2
    %p169 = por %p167, %p168
    %p170 = scmp.ne.s32.totalorder %s161, %s162
    %p171 = scmp.eq.s32.totalorder %s17, 0
    %p172 = por %p170, %p171
    %p173 = scmp.ne.s32.totalorder %s161, %s162
    %p174 = scmp.eq.s32.totalorder %s18, 2
    %p175 = por %p173, %p174
    %p177 = scmp.ne.s32.totalorder %s162, %s176
    %p178 = scmp.eq.s32.totalorder %s18, 0
    %p179 = por %p177, %p178
    %s180 = ssub.s32 %s19, %s31
    %p181 = scmp.eq.s32.totalorder %s180, 0
    %s183 = sadd.s32 %s182, 1
    %s184 = scalar_select %p181, %s182, %s183
    %p187 = pneg %p181
    %p188 = scmp.eq.s32.totalorder %s12, 2
    %p189 = por %p187, %p188
    %p190 = scmp.ne.s32.totalorder %s182, %s185
    %p191 = scmp.eq.s32.totalorder %s12, 0
    %p192 = por %p190, %p191
    %p193 = scmp.ne.s32.totalorder %s182, %s185
    %p194 = scmp.eq.s32.totalorder %s17, 2
    %p195 = por %p193, %p194
    %p196 = scmp.ne.s32.totalorder %s185, %s186
    %p197 = scmp.eq.s32.totalorder %s17, 0
    %p198 = por %p196, %p197
    %p199 = scmp.ne.s32.totalorder %s185, %s186
    %p200 = scmp.eq.s32.totalorder %s18, 2
    %p201 = por %p199, %p200
    %p203 = scmp.ne.s32.totalorder %s186, %s202
    %p204 = scmp.eq.s32.totalorder %s18, 0
    %p205 = por %p203, %p204
    %p206 = scmp.le.s32.totalorder 1, %s12
    %p207 = scmp.lt.s32.totalorder %s12, 4
    %p208 = pnand %p206, %p207
    %p209 = pneg %p208
    // Predicated region
    $region9: #{graphsage_forward.6} parent=5 // pred_check
      _
    $region10: #{graphsage_forward.6} parent=5 // pred_check_branch
      %211 = sbr.rel (%p208) target = $region12
    $region11: #{graphsage_forward.6} parent=5 // pred_region
      %s212 = ssub.s32 %s12, 1
      // Predicated region
      $region13: #{graphsage_forward.6} parent=11 // pred_check
        %p213 = pneg %p78
      $region14: #{graphsage_forward.6} parent=11 // pred_check_branch
        %215 = sbr.rel (%p213) target = $region16
      $region15: #{graphsage_forward.6} parent=11 // pred_region
        %s216 = smul.u32 64, %s22
        %p217 = scmp.lt.s32.totalorder %s216, 63
        %s218 = scalar_select %p217, %s216, 63
        %s219 = smul.addr %s218, 4
        %s220 = scalar_lea.vmem %s1, %s219
        %s221 = smul.u32 64, %s22
      $region16: #{graphsage_forward.6} parent=11 // pred_fallthru
        _
      // Predicated region
      $region17: #{graphsage_forward.6} parent=11 // pred_check
        %p222 = pneg %p151
      $region18: #{graphsage_forward.6} parent=11 // pred_check_branch
        %224 = sbr.rel (%p222) target = $region20
      $region19: #{graphsage_forward.6} parent=11 // pred_region
        _
      $region20: #{graphsage_forward.6} parent=11 // pred_fallthru
        _
      // Predicated region
      $region21: #{graphsage_forward.6} parent=11 // pred_check
        %p225 = pneg %p172
      $region22: #{graphsage_forward.6} parent=11 // pred_check_branch
        %227 = sbr.rel (%p225) target = $region24
      $region23: #{graphsage_forward.6} parent=11 // pred_region
        _
      $region24: #{graphsage_forward.6} parent=11 // pred_fallthru
        _
    $region12: #{graphsage_forward.6} parent=5 // pred_fallthru
      _
    %p228 = scmp.lt.s32.totalorder %s12, 3
    // Predicated region
    $region25: #{graphsage_forward.6} parent=5 // pred_check
      %p229 = pneg %p228
    $region26: #{graphsage_forward.6} parent=5 // pred_check_branch
      %231 = sbr.rel (%p229) target = $region28
    $region27: #{graphsage_forward.6} parent=5 // pred_region
      // Predicated region
      $region29: #{graphsage_forward.6} parent=27 // pred_check
        %p232 = pneg %p46
      $region30: #{graphsage_forward.6} parent=27 // pred_check_branch
        %234 = sbr.rel (%p232) target = $region32
      $region31: #{graphsage_forward.6} parent=27 // pred_region
        %s235 = smul.u32 32, %s19
        %s236 = smul.u32 4, %s20
        %p237 = scmp.lt.s32.totalorder %s235, 95
        %s238 = scalar_select %p237, %s235, 95
        %p239 = scmp.lt.s32.totalorder %s236, 3
        %s240 = scalar_select %p239, %s236, 3
        %s241 = smul.addr %s238, 4
        %s242 = sadd.s32 %s240, %s241
        %s243 = smul.addr %s242, 4
        %s244 = scalar_lea.vmem %s0, %s243
        %s245 = smul.u32 32, %s19
        %s246 = smul.u32 4, %s20
      $region32: #{graphsage_forward.6} parent=27 // pred_fallthru
        _
      // Predicated region
      $region33: #{graphsage_forward.6} parent=27 // pred_check
        %p247 = pneg %p98
      $region34: #{graphsage_forward.6} parent=27 // pred_check_branch
        %249 = sbr.rel (%p247) target = $region36
      $region35: #{graphsage_forward.6} parent=27 // pred_region
        %s250 = smul.u32 32, %s19
        %p251 = scmp.lt.s32.totalorder %s250, 95
        %s252 = scalar_select %p251, %s250, 95
        %s253 = smul.addr %s252, 4
        %s254 = scalar_lea.vmem %s2, %s253
        %s255 = smul.u32 32, %s19
      $region36: #{graphsage_forward.6} parent=27 // pred_fallthru
        _
      // Predicated region
      $region37: #{graphsage_forward.6} parent=27 // pred_check
        %p256 = pneg %p124
      $region38: #{graphsage_forward.6} parent=27 // pred_check_branch
        %258 = sbr.rel (%p256) target = $region40
      $region39: #{graphsage_forward.6} parent=27 // pred_region
        %s259 = smul.u32 32, %s19
        %p260 = scmp.lt.s32.totalorder %s259, 95
        %s261 = scalar_select %p260, %s259, 95
        %s262 = smul.addr %s261, 8
        %s263 = scalar_lea.vmem %s3, %s262
        %s264 = smul.u32 32, %s19
      $region40: #{graphsage_forward.6} parent=27 // pred_fallthru
        _
    $region28: #{graphsage_forward.6} parent=5 // pred_fallthru
      _
    %p265 = scmp.le.s32.totalorder 1, %s12
    %p266 = scmp.lt.s32.totalorder %s12, 4
    %p267 = pnand %p265, %p266
    %p268 = pneg %p267
    // Predicated region
    $region41: #{graphsage_forward.6} parent=5 // pred_check
      _
    $region42: #{graphsage_forward.6} parent=5 // pred_check_branch
      %270 = sbr.rel (%p267) target = $region44
    $region43: #{graphsage_forward.6} parent=5 // pred_region
      %s271 = ssub.s32 %s12, 1
      %s272 = smul.u32 32, %s21
      %s273 = smul.u32 4, %s22
      %p274 = scmp.lt.s32.totalorder %s272, 95
      %s275 = scalar_select %p274, %s272, 95
      %p276 = scmp.lt.s32.totalorder %s273, 3
      %s277 = scalar_select %p276, %s273, 3
      %s278 = smul.addr %s275, 4
      %s279 = sadd.s32 %s277, %s278
      %s280 = smul.addr %s279, 4
      %s281 = scalar_lea.vmem %s0, %s280
      %p282 = pneg %p52
      %p283 = pneg %p49
      %s284 = smul.u32 64, %s22
      %p285 = scmp.lt.s32.totalorder %s284, 63
      %s286 = scalar_select %p285, %s284, 63
      %s287 = smul.addr %s286, 4
      %s288 = scalar_lea.vmem %s1, %s287
      %p289 = pneg %p78
      %p290 = pneg %p75
      %s291 = smul.u32 32, %s21
      %p292 = scmp.lt.s32.totalorder %s291, 95
      %s293 = scalar_select %p292, %s291, 95
      %s294 = smul.addr %s293, 4
      %s295 = scalar_lea.vmem %s2, %s294
      %p296 = pneg %p104
      %p297 = pneg %p101
      %s298 = smul.u32 32, %s21
      %p299 = scmp.lt.s32.totalorder %s298, 95
      %s300 = scalar_select %p299, %s298, 95
      %s301 = smul.addr %s300, 8
      %s302 = scalar_lea.vmem %s3, %s301
      %p303 = pneg %p130
      %p304 = pneg %p127
      %p305 = pneg %p151
      %p306 = pneg %p148
      %p307 = pneg %p172
      %p308 = pneg %p169
      %p309 = pneg %p198
      %p310 = pneg %p195
      %s311 = smul.u32 32, %s21
      %p312 = scmp.lt.s32.totalorder %s311, 95
      %s313 = scalar_select %p312, %s311, 95
      %s314 = smul.addr %s313, 8
      %s315 = scalar_lea.vmem %s6, %s314
      %s316 = smul.u32 32, %s21
      %s317 = smul.u32 4, %s22
      %p318 = scmp.lt.s32.totalorder %s316, 95
      %s319 = scalar_select %p318, %s316, 95
      %p320 = scmp.lt.s32.totalorder %s317, 3
      %s321 = scalar_select %p320, %s317, 3
      %s322 = smul.addr %s319, 4
      %s323 = sadd.s32 %s321, %s322
      %s324 = smul.addr %s323, 4
      %s325 = scalar_lea.vmem %s0, %s324
      %s326 = smul.u32 32, %s21
      %s327 = smul.u32 4, %s22
      %s328 = smul.u32 64, %s22
      %p329 = scmp.lt.s32.totalorder %s328, 63
      %s330 = scalar_select %p329, %s328, 63
      %s331 = smul.addr %s330, 4
      %s332 = scalar_lea.vmem %s1, %s331
      %s333 = smul.u32 64, %s22
      %s334 = smul.u32 32, %s21
      %p335 = scmp.lt.s32.totalorder %s334, 95
      %s336 = scalar_select %p335, %s334, 95
      %s337 = smul.addr %s336, 4
      %s338 = scalar_lea.vmem %s2, %s337
      %s339 = smul.u32 32, %s21
      %s340 = smul.u32 32, %s21
      %p341 = scmp.lt.s32.totalorder %s340, 95
      %s342 = scalar_select %p341, %s340, 95
      %s343 = smul.addr %s342, 8
      %s344 = scalar_lea.vmem %s3, %s343
      %s345 = smul.u32 32, %s21
      %s346 = smul.u32 32, %s21
      %p347 = scmp.lt.s32.totalorder %s346, 95
      %s348 = scalar_select %p347, %s346, 95
      %s349 = smul.addr %s348, 8
      %s350 = scalar_lea.vmem %s6, %s349
      %s351 = smul.u32 32, %s21
      %p353 = scmp.eq.s32.totalorder %s22, 0
      // Predicated region
      $region45: #{graphsage_forward.6} parent=43 // pred_check
        %p354 = pneg %p353
      $region46: #{graphsage_forward.6} parent=43 // pred_check_branch
        %356 = sbr.rel (%p354) target = $region48
      $region47: #{graphsage_forward.6} parent=43 // pred_region
        %357 = vst [vmem:[#allocation2] sm:$0xff] 0.0
        %358 = vst [vmem:[#allocation2 + $0x8] sm:$0xff] 0.0
        %359 = vst [vmem:[#allocation2 + $0x10] sm:$0xff] 0.0
        %360 = vst [vmem:[#allocation2 + $0x18] sm:$0xff] 0.0
        %361 = vst [vmem:[#allocation2 + $0x20] sm:$0xff] 0.0
        %362 = vst [vmem:[#allocation2 + $0x28] sm:$0xff] 0.0
        %363 = vst [vmem:[#allocation2 + $0x30] sm:$0xff] 0.0
        %364 = vst [vmem:[#allocation2 + $0x38] sm:$0xff] 0.0
        %365 = vst [vmem:[#allocation2 + $0x40] sm:$0xff] 0.0
        %366 = vst [vmem:[#allocation2 + $0x48] sm:$0xff] 0.0
        %367 = vst [vmem:[#allocation2 + $0x50] sm:$0xff] 0.0
        %368 = vst [vmem:[#allocation2 + $0x58] sm:$0xff] 0.0
        %369 = vst [vmem:[#allocation2 + $0x60] sm:$0xff] 0.0
        %370 = vst [vmem:[#allocation2 + $0x68] sm:$0xff] 0.0
        %371 = vst [vmem:[#allocation2 + $0x70] sm:$0xff] 0.0
        %372 = vst [vmem:[#allocation2 + $0x78] sm:$0xff] 0.0
        %373 = vst [vmem:[#allocation2 + $0x80] sm:$0xff] 0.0
        %374 = vst [vmem:[#allocation2 + $0x88] sm:$0xff] 0.0
        %375 = vst [vmem:[#allocation2 + $0x90] sm:$0xff] 0.0
        %376 = vst [vmem:[#allocation2 + $0x98] sm:$0xff] 0.0
        %377 = vst [vmem:[#allocation2 + $0xa0] sm:$0xff] 0.0
        %378 = vst [vmem:[#allocation2 + $0xa8] sm:$0xff] 0.0
        %379 = vst [vmem:[#allocation2 + $0xb0] sm:$0xff] 0.0
        %380 = vst [vmem:[#allocation2 + $0xb8] sm:$0xff] 0.0
        %381 = vst [vmem:[#allocation2 + $0xc0] sm:$0xff] 0.0
        %382 = vst [vmem:[#allocation2 + $0xc8] sm:$0xff] 0.0
        %383 = vst [vmem:[#allocation2 + $0xd0] sm:$0xff] 0.0
        %384 = vst [vmem:[#allocation2 + $0xd8] sm:$0xff] 0.0
        %385 = vst [vmem:[#allocation2 + $0xe0] sm:$0xff] 0.0
        %386 = vst [vmem:[#allocation2 + $0xe8] sm:$0xff] 0.0
        %387 = vst [vmem:[#allocation2 + $0xf0] sm:$0xff] 0.0
        %388 = vst [vmem:[#allocation2 + $0xf8] sm:$0xff] 0.0
      $region48: #{graphsage_forward.6} parent=43 // pred_fallthru
        _
      %v389 = vld [vmem:[#allocation2] sm:$0xff]
      %v390 = vld [vmem:[#allocation2 + $0x8] sm:$0xff]
      %v391 = vld [vmem:[#allocation2 + $0x10] sm:$0xff]
      %v392 = vld [vmem:[#allocation2 + $0x18] sm:$0xff]
      %v393 = vld [vmem:[#allocation2 + $0x20] sm:$0xff]
      %v394 = vld [vmem:[#allocation2 + $0x28] sm:$0xff]
      %v395 = vld [vmem:[#allocation2 + $0x30] sm:$0xff]
      %v396 = vld [vmem:[#allocation2 + $0x38] sm:$0xff]
      %v397 = vld [vmem:[#allocation2 + $0x40] sm:$0xff]
      %v398 = vld [vmem:[#allocation2 + $0x48] sm:$0xff]
      %v399 = vld [vmem:[#allocation2 + $0x50] sm:$0xff]
      %v400 = vld [vmem:[#allocation2 + $0x58] sm:$0xff]
      %v401 = vld [vmem:[#allocation2 + $0x60] sm:$0xff]
      %v402 = vld [vmem:[#allocation2 + $0x68] sm:$0xff]
      %v403 = vld [vmem:[#allocation2 + $0x70] sm:$0xff]
      %v404 = vld [vmem:[#allocation2 + $0x78] sm:$0xff]
      %v405 = vld [vmem:[#allocation2 + $0x80] sm:$0xff]
      %v406 = vld [vmem:[#allocation2 + $0x88] sm:$0xff]
      %v407 = vld [vmem:[#allocation2 + $0x90] sm:$0xff]
      %v408 = vld [vmem:[#allocation2 + $0x98] sm:$0xff]
      %v409 = vld [vmem:[#allocation2 + $0xa0] sm:$0xff]
      %v410 = vld [vmem:[#allocation2 + $0xa8] sm:$0xff]
      %v411 = vld [vmem:[#allocation2 + $0xb0] sm:$0xff]
      %v412 = vld [vmem:[#allocation2 + $0xb8] sm:$0xff]
      %v413 = vld [vmem:[#allocation2 + $0xc0] sm:$0xff]
      %v414 = vld [vmem:[#allocation2 + $0xc8] sm:$0xff]
      %v415 = vld [vmem:[#allocation2 + $0xd0] sm:$0xff]
      %v416 = vld [vmem:[#allocation2 + $0xd8] sm:$0xff]
      %v417 = vld [vmem:[#allocation2 + $0xe0] sm:$0xff]
      %v418 = vld [vmem:[#allocation2 + $0xe8] sm:$0xff]
      %v419 = vld [vmem:[#allocation2 + $0xf0] sm:$0xff]
      %v420 = vld [vmem:[#allocation2 + $0xf8] sm:$0xff]
      %v421 = vld [vmem:[%s325] sm:$0xff]
      %v422 = vld [vmem:[%s325 + $0x8] sm:$0xff]
      %v423 = vld [vmem:[%s325 + $0x10] sm:$0xff]
      %v424 = vld [vmem:[%s325 + $0x18] sm:$0xff]
      %v425 = vld [vmem:[%s325 + $0x20] sm:$0xff]
      %v426 = vld [vmem:[%s325 + $0x28] sm:$0xff]
      %v427 = vld [vmem:[%s325 + $0x30] sm:$0xff]
      %v428 = vld [vmem:[%s325 + $0x38] sm:$0xff]
      %v429 = vld [vmem:[%s325 + $0x40] sm:$0xff]
      %v430 = vld [vmem:[%s325 + $0x48] sm:$0xff]
      %v431 = vld [vmem:[%s325 + $0x50] sm:$0xff]
      %v432 = vld [vmem:[%s325 + $0x58] sm:$0xff]
      %v433 = vld [vmem:[%s325 + $0x60] sm:$0xff]
      %v434 = vld [vmem:[%s325 + $0x68] sm:$0xff]
      %v435 = vld [vmem:[%s325 + $0x70] sm:$0xff]
      %v436 = vld [vmem:[%s325 + $0x78] sm:$0xff]
      %v437 = vld [vmem:[%s325 + $0x80] sm:$0xff]
      %v438 = vld [vmem:[%s325 + $0x88] sm:$0xff]
      %v439 = vld [vmem:[%s325 + $0x90] sm:$0xff]
      %v440 = vld [vmem:[%s325 + $0x98] sm:$0xff]
      %v441 = vld [vmem:[%s325 + $0xa0] sm:$0xff]
      %v442 = vld [vmem:[%s325 + $0xa8] sm:$0xff]
      %v443 = vld [vmem:[%s325 + $0xb0] sm:$0xff]
      %v444 = vld [vmem:[%s325 + $0xb8] sm:$0xff]
      %v445 = vld [vmem:[%s325 + $0xc0] sm:$0xff]
      %v446 = vld [vmem:[%s325 + $0xc8] sm:$0xff]
      %v447 = vld [vmem:[%s325 + $0xd0] sm:$0xff]
      %v448 = vld [vmem:[%s325 + $0xd8] sm:$0xff]
      %v449 = vld [vmem:[%s325 + $0xe0] sm:$0xff]
      %v450 = vld [vmem:[%s325 + $0xe8] sm:$0xff]
      %v451 = vld [vmem:[%s325 + $0xf0] sm:$0xff]
      %v452 = vld [vmem:[%s325 + $0xf8] sm:$0xff]
      %v453 = vld [vmem:[%s325 + $0x100] sm:$0xff]
      %v454 = vld [vmem:[%s325 + $0x108] sm:$0xff]
      %v455 = vld [vmem:[%s325 + $0x110] sm:$0xff]
      %v456 = vld [vmem:[%s325 + $0x118] sm:$0xff]
      %v457 = vld [vmem:[%s325 + $0x120] sm:$0xff]
      %v458 = vld [vmem:[%s325 + $0x128] sm:$0xff]
      %v459 = vld [vmem:[%s325 + $0x130] sm:$0xff]
      %v460 = vld [vmem:[%s325 + $0x138] sm:$0xff]
      %v461 = vld [vmem:[%s325 + $0x140] sm:$0xff]
      %v462 = vld [vmem:[%s325 + $0x148] sm:$0xff]
      %v463 = vld [vmem:[%s325 + $0x150] sm:$0xff]
      %v464 = vld [vmem:[%s325 + $0x158] sm:$0xff]
      %v465 = vld [vmem:[%s325 + $0x160] sm:$0xff]
      %v466 = vld [vmem:[%s325 + $0x168] sm:$0xff]
      %v467 = vld [vmem:[%s325 + $0x170] sm:$0xff]
      %v468 = vld [vmem:[%s325 + $0x178] sm:$0xff]
      %v469 = vld [vmem:[%s325 + $0x180] sm:$0xff]
      %v470 = vld [vmem:[%s325 + $0x188] sm:$0xff]
      %v471 = vld [vmem:[%s325 + $0x190] sm:$0xff]
      %v472 = vld [vmem:[%s325 + $0x198] sm:$0xff]
      %v473 = vld [vmem:[%s325 + $0x1a0] sm:$0xff]
      %v474 = vld [vmem:[%s325 + $0x1a8] sm:$0xff]
      %v475 = vld [vmem:[%s325 + $0x1b0] sm:$0xff]
      %v476 = vld [vmem:[%s325 + $0x1b8] sm:$0xff]
      %v477 = vld [vmem:[%s325 + $0x1c0] sm:$0xff]
      %v478 = vld [vmem:[%s325 + $0x1c8] sm:$0xff]
      %v479 = vld [vmem:[%s325 + $0x1d0] sm:$0xff]
      %v480 = vld [vmem:[%s325 + $0x1d8] sm:$0xff]
      %v481 = vld [vmem:[%s325 + $0x1e0] sm:$0xff]
      %v482 = vld [vmem:[%s325 + $0x1e8] sm:$0xff]
      %v483 = vld [vmem:[%s325 + $0x1f0] sm:$0xff]
      %v484 = vld [vmem:[%s325 + $0x1f8] sm:$0xff]
      %v485 = vld [vmem:[%s332] sm:$0xf]
      %v486 = vld [vmem:[%s332 + $0x4] sm:$0xf]
      %v487 = vld [vmem:[%s332 + $0x8] sm:$0xf]
      %v488 = vld [vmem:[%s332 + $0xc] sm:$0xf]
      %v489 = vld [vmem:[%s332 + $0x10] sm:$0xf]
      %v490 = vld [vmem:[%s332 + $0x14] sm:$0xf]
      %v491 = vld [vmem:[%s332 + $0x18] sm:$0xf]
      %v492 = vld [vmem:[%s332 + $0x1c] sm:$0xf]
      %v493 = vld [vmem:[%s332 + $0x20] sm:$0xf]
      %v494 = vld [vmem:[%s332 + $0x24] sm:$0xf]
      %v495 = vld [vmem:[%s332 + $0x28] sm:$0xf]
      %v496 = vld [vmem:[%s332 + $0x2c] sm:$0xf]
      %v497 = vld [vmem:[%s332 + $0x30] sm:$0xf]
      %v498 = vld [vmem:[%s332 + $0x34] sm:$0xf]
      %v499 = vld [vmem:[%s332 + $0x38] sm:$0xf]
      %v500 = vld [vmem:[%s332 + $0x3c] sm:$0xf]
      %v501 = vld [vmem:[%s332 + $0x40] sm:$0xf]
      %v502 = vld [vmem:[%s332 + $0x44] sm:$0xf]
      %v503 = vld [vmem:[%s332 + $0x48] sm:$0xf]
      %v504 = vld [vmem:[%s332 + $0x4c] sm:$0xf]
      %v505 = vld [vmem:[%s332 + $0x50] sm:$0xf]
      %v506 = vld [vmem:[%s332 + $0x54] sm:$0xf]
      %v507 = vld [vmem:[%s332 + $0x58] sm:$0xf]
      %v508 = vld [vmem:[%s332 + $0x5c] sm:$0xf]
      %v509 = vld [vmem:[%s332 + $0x60] sm:$0xf]
      %v510 = vld [vmem:[%s332 + $0x64] sm:$0xf]
      %v511 = vld [vmem:[%s332 + $0x68] sm:$0xf]
      %v512 = vld [vmem:[%s332 + $0x6c] sm:$0xf]
      %v513 = vld [vmem:[%s332 + $0x70] sm:$0xf]
      %v514 = vld [vmem:[%s332 + $0x74] sm:$0xf]
      %v515 = vld [vmem:[%s332 + $0x78] sm:$0xf]
      %v516 = vld [vmem:[%s332 + $0x7c] sm:$0xf]
      %v517 = vld [vmem:[%s332 + $0x80] sm:$0xf]
      %v518 = vld [vmem:[%s332 + $0x84] sm:$0xf]
      %v519 = vld [vmem:[%s332 + $0x88] sm:$0xf]
      %v520 = vld [vmem:[%s332 + $0x8c] sm:$0xf]
      %v521 = vld [vmem:[%s332 + $0x90] sm:$0xf]
      %v522 = vld [vmem:[%s332 + $0x94] sm:$0xf]
      %v523 = vld [vmem:[%s332 + $0x98] sm:$0xf]
      %v524 = vld [vmem:[%s332 + $0x9c] sm:$0xf]
      %v525 = vld [vmem:[%s332 + $0xa0] sm:$0xf]
      %v526 = vld [vmem:[%s332 + $0xa4] sm:$0xf]
      %v527 = vld [vmem:[%s332 + $0xa8] sm:$0xf]
      %v528 = vld [vmem:[%s332 + $0xac] sm:$0xf]
      %v529 = vld [vmem:[%s332 + $0xb0] sm:$0xf]
      %v530 = vld [vmem:[%s332 + $0xb4] sm:$0xf]
      %v531 = vld [vmem:[%s332 + $0xb8] sm:$0xf]
      %v532 = vld [vmem:[%s332 + $0xbc] sm:$0xf]
      %v533 = vld [vmem:[%s332 + $0xc0] sm:$0xf]
      %v534 = vld [vmem:[%s332 + $0xc4] sm:$0xf]
      %v535 = vld [vmem:[%s332 + $0xc8] sm:$0xf]
      %v536 = vld [vmem:[%s332 + $0xcc] sm:$0xf]
      %v537 = vld [vmem:[%s332 + $0xd0] sm:$0xf]
      %v538 = vld [vmem:[%s332 + $0xd4] sm:$0xf]
      %v539 = vld [vmem:[%s332 + $0xd8] sm:$0xf]
      %v540 = vld [vmem:[%s332 + $0xdc] sm:$0xf]
      %v541 = vld [vmem:[%s332 + $0xe0] sm:$0xf]
      %v542 = vld [vmem:[%s332 + $0xe4] sm:$0xf]
      %v543 = vld [vmem:[%s332 + $0xe8] sm:$0xf]
      %v544 = vld [vmem:[%s332 + $0xec] sm:$0xf]
      %v545 = vld [vmem:[%s332 + $0xf0] sm:$0xf]
      %v546 = vld [vmem:[%s332 + $0xf4] sm:$0xf]
      %v547 = vld [vmem:[%s332 + $0xf8] sm:$0xf]
      %v548 = vld [vmem:[%s332 + $0xfc] sm:$0xf]
      %v613 = vunpack.c.l.b16 %v421
      %v614 = vunpack.c.h.b16 %v421
      %v615 = vunpack.c.l.b16 %v422
      %v616 = vunpack.c.h.b16 %v422
      %v617 = vunpack.c.l.b16 %v423
      %v618 = vunpack.c.h.b16 %v423
      %v619 = vunpack.c.l.b16 %v424
      %v620 = vunpack.c.h.b16 %v424
      %v621 = vunpack.c.l.b16 %v425
      %v622 = vunpack.c.h.b16 %v425
      %v623 = vunpack.c.l.b16 %v426
      %v624 = vunpack.c.h.b16 %v426
      %v625 = vunpack.c.l.b16 %v427
      %v626 = vunpack.c.h.b16 %v427
      %v627 = vunpack.c.l.b16 %v428
      %v628 = vunpack.c.h.b16 %v428
      %v629 = vunpack.c.l.b16 %v429
      %v630 = vunpack.c.h.b16 %v429
      %v631 = vunpack.c.l.b16 %v430
      %v632 = vunpack.c.h.b16 %v430
      %v633 = vunpack.c.l.b16 %v431
      %v634 = vunpack.c.h.b16 %v431
      %v635 = vunpack.c.l.b16 %v432
      %v636 = vunpack.c.h.b16 %v432
      %v637 = vunpack.c.l.b16 %v433
      %v638 = vunpack.c.h.b16 %v433
      %v639 = vunpack.c.l.b16 %v434
      %v640 = vunpack.c.h.b16 %v434
      %v641 = vunpack.c.l.b16 %v435
      %v642 = vunpack.c.h.b16 %v435
      %v643 = vunpack.c.l.b16 %v436
      %v644 = vunpack.c.h.b16 %v436
      %v645 = vunpack.c.l.b16 %v437
      %v646 = vunpack.c.h.b16 %v437
      %v647 = vunpack.c.l.b16 %v438
      %v648 = vunpack.c.h.b16 %v438
      %v649 = vunpack.c.l.b16 %v439
      %v650 = vunpack.c.h.b16 %v439
      %v651 = vunpack.c.l.b16 %v440
      %v652 = vunpack.c.h.b16 %v440
      %v653 = vunpack.c.l.b16 %v441
      %v654 = vunpack.c.h.b16 %v441
      %v655 = vunpack.c.l.b16 %v442
      %v656 = vunpack.c.h.b16 %v442
      %v657 = vunpack.c.l.b16 %v443
      %v658 = vunpack.c.h.b16 %v443
      %v659 = vunpack.c.l.b16 %v444
      %v660 = vunpack.c.h.b16 %v444
      %v661 = vunpack.c.l.b16 %v445
      %v662 = vunpack.c.h.b16 %v445
      %v663 = vunpack.c.l.b16 %v446
      %v664 = vunpack.c.h.b16 %v446
      %v665 = vunpack.c.l.b16 %v447
      %v666 = vunpack.c.h.b16 %v447
      %v667 = vunpack.c.l.b16 %v448
      %v668 = vunpack.c.h.b16 %v448
      %v669 = vunpack.c.l.b16 %v449
      %v670 = vunpack.c.h.b16 %v449
      %v671 = vunpack.c.l.b16 %v450
      %v672 = vunpack.c.h.b16 %v450
      %v673 = vunpack.c.l.b16 %v451
      %v674 = vunpack.c.h.b16 %v451
      %v675 = vunpack.c.l.b16 %v452
      %v676 = vunpack.c.h.b16 %v452
      %v677 = vunpack.c.l.b16 %v453
      %v678 = vunpack.c.h.b16 %v453
      %v679 = vunpack.c.l.b16 %v454
      %v680 = vunpack.c.h.b16 %v454
      %v681 = vunpack.c.l.b16 %v455
      %v682 = vunpack.c.h.b16 %v455
      %v683 = vunpack.c.l.b16 %v456
      %v684 = vunpack.c.h.b16 %v456
      %v685 = vunpack.c.l.b16 %v457
      %v686 = vunpack.c.h.b16 %v457
      %v687 = vunpack.c.l.b16 %v458
      %v688 = vunpack.c.h.b16 %v458
      %v689 = vunpack.c.l.b16 %v459
      %v690 = vunpack.c.h.b16 %v459
      %v691 = vunpack.c.l.b16 %v460
      %v692 = vunpack.c.h.b16 %v460
      %v693 = vunpack.c.l.b16 %v461
      %v694 = vunpack.c.h.b16 %v461
      %v695 = vunpack.c.l.b16 %v462
      %v696 = vunpack.c.h.b16 %v462
      %v697 = vunpack.c.l.b16 %v463
      %v698 = vunpack.c.h.b16 %v463
      %v699 = vunpack.c.l.b16 %v464
      %v700 = vunpack.c.h.b16 %v464
      %v701 = vunpack.c.l.b16 %v465
      %v702 = vunpack.c.h.b16 %v465
      %v703 = vunpack.c.l.b16 %v466
      %v704 = vunpack.c.h.b16 %v466
      %v705 = vunpack.c.l.b16 %v467
      %v706 = vunpack.c.h.b16 %v467
      %v707 = vunpack.c.l.b16 %v468
      %v708 = vunpack.c.h.b16 %v468
      %v709 = vunpack.c.l.b16 %v469
      %v710 = vunpack.c.h.b16 %v469
      %v711 = vunpack.c.l.b16 %v470
      %v712 = vunpack.c.h.b16 %v470
      %v713 = vunpack.c.l.b16 %v471
      %v714 = vunpack.c.h.b16 %v471
      %v715 = vunpack.c.l.b16 %v472
      %v716 = vunpack.c.h.b16 %v472
      %v717 = vunpack.c.l.b16 %v473
      %v718 = vunpack.c.h.b16 %v473
      %v719 = vunpack.c.l.b16 %v474
      %v720 = vunpack.c.h.b16 %v474
      %v721 = vunpack.c.l.b16 %v475
      %v722 = vunpack.c.h.b16 %v475
      %v723 = vunpack.c.l.b16 %v476
      %v724 = vunpack.c.h.b16 %v476
      %v725 = vunpack.c.l.b16 %v477
      %v726 = vunpack.c.h.b16 %v477
      %v727 = vunpack.c.l.b16 %v478
      %v728 = vunpack.c.h.b16 %v478
      %v729 = vunpack.c.l.b16 %v479
      %v730 = vunpack.c.h.b16 %v479
      %v731 = vunpack.c.l.b16 %v480
      %v732 = vunpack.c.h.b16 %v480
      %v733 = vunpack.c.l.b16 %v481
      %v734 = vunpack.c.h.b16 %v481
      %v735 = vunpack.c.l.b16 %v482
      %v736 = vunpack.c.h.b16 %v482
      %v737 = vunpack.c.l.b16 %v483
      %v738 = vunpack.c.h.b16 %v483
      %v739 = vunpack.c.l.b16 %v484
      %v740 = vunpack.c.h.b16 %v484
      %v741 = vpack.c.b16 %v617, %v613
      %v742 = vpack.c.b16 %v618, %v614
      %v743 = vpack.c.b16 %v619, %v615
      %v744 = vpack.c.b16 %v620, %v616
      %v745 = vpack.c.b16 %v625, %v621
      %v746 = vpack.c.b16 %v626, %v622
      %v747 = vpack.c.b16 %v627, %v623
      %v748 = vpack.c.b16 %v628, %v624
      %v749 = vpack.c.b16 %v633, %v629
      %v750 = vpack.c.b16 %v634, %v630
      %v751 = vpack.c.b16 %v635, %v631
      %v752 = vpack.c.b16 %v636, %v632
      %v753 = vpack.c.b16 %v641, %v637
      %v754 = vpack.c.b16 %v642, %v638
      %v755 = vpack.c.b16 %v643, %v639
      %v756 = vpack.c.b16 %v644, %v640
      %v757 = vpack.c.b16 %v649, %v645
      %v758 = vpack.c.b16 %v650, %v646
      %v759 = vpack.c.b16 %v651, %v647
      %v760 = vpack.c.b16 %v652, %v648
      %v761 = vpack.c.b16 %v657, %v653
      %v762 = vpack.c.b16 %v658, %v654
      %v763 = vpack.c.b16 %v659, %v655
      %v764 = vpack.c.b16 %v660, %v656
      %v765 = vpack.c.b16 %v665, %v661
      %v766 = vpack.c.b16 %v666, %v662
      %v767 = vpack.c.b16 %v667, %v663
      %v768 = vpack.c.b16 %v668, %v664
      %v769 = vpack.c.b16 %v673, %v669
      %v770 = vpack.c.b16 %v674, %v670
      %v771 = vpack.c.b16 %v675, %v671
      %v772 = vpack.c.b16 %v676, %v672
      %v773 = vpack.c.b16 %v681, %v677
      %v774 = vpack.c.b16 %v682, %v678
      %v775 = vpack.c.b16 %v683, %v679
      %v776 = vpack.c.b16 %v684, %v680
      %v777 = vpack.c.b16 %v689, %v685
      %v778 = vpack.c.b16 %v690, %v686
      %v779 = vpack.c.b16 %v691, %v687
      %v780 = vpack.c.b16 %v692, %v688
      %v781 = vpack.c.b16 %v697, %v693
      %v782 = vpack.c.b16 %v698, %v694
      %v783 = vpack.c.b16 %v699, %v695
      %v784 = vpack.c.b16 %v700, %v696
      %v785 = vpack.c.b16 %v705, %v701
      %v786 = vpack.c.b16 %v706, %v702
      %v787 = vpack.c.b16 %v707, %v703
      %v788 = vpack.c.b16 %v708, %v704
      %v789 = vpack.c.b16 %v713, %v709
      %v790 = vpack.c.b16 %v714, %v710
      %v791 = vpack.c.b16 %v715, %v711
      %v792 = vpack.c.b16 %v716, %v712
      %v793 = vpack.c.b16 %v721, %v717
      %v794 = vpack.c.b16 %v722, %v718
      %v795 = vpack.c.b16 %v723, %v719
      %v796 = vpack.c.b16 %v724, %v720
      %v797 = vpack.c.b16 %v729, %v725
      %v798 = vpack.c.b16 %v730, %v726
      %v799 = vpack.c.b16 %v731, %v727
      %v800 = vpack.c.b16 %v732, %v728
      %v801 = vpack.c.b16 %v737, %v733
      %v802 = vpack.c.b16 %v738, %v734
      %v803 = vpack.c.b16 %v739, %v735
      %v804 = vpack.c.b16 %v740, %v736
      %v933 = vunpack.c.l.b16 %v485
      %v934 = vunpack.c.l.b16 %v486
      %v935 = vunpack.c.l.b16 %v487
      %v936 = vunpack.c.l.b16 %v488
      %v937 = vunpack.c.l.b16 %v489
      %v938 = vunpack.c.l.b16 %v490
      %v939 = vunpack.c.l.b16 %v491
      %v940 = vunpack.c.l.b16 %v492
      %v941 = vunpack.c.l.b16 %v493
      %v942 = vunpack.c.l.b16 %v494
      %v943 = vunpack.c.l.b16 %v495
      %v944 = vunpack.c.l.b16 %v496
      %v945 = vunpack.c.l.b16 %v497
      %v946 = vunpack.c.l.b16 %v498
      %v947 = vunpack.c.l.b16 %v499
      %v948 = vunpack.c.l.b16 %v500
      %v949 = vunpack.c.l.b16 %v501
      %v950 = vunpack.c.l.b16 %v502
      %v951 = vunpack.c.l.b16 %v503
      %v952 = vunpack.c.l.b16 %v504
      %v953 = vunpack.c.l.b16 %v505
      %v954 = vunpack.c.l.b16 %v506
      %v955 = vunpack.c.l.b16 %v507
      %v956 = vunpack.c.l.b16 %v508
      %v957 = vunpack.c.l.b16 %v509
      %v958 = vunpack.c.l.b16 %v510
      %v959 = vunpack.c.l.b16 %v511
      %v960 = vunpack.c.l.b16 %v512
      %v961 = vunpack.c.l.b16 %v513
      %v962 = vunpack.c.l.b16 %v514
      %v963 = vunpack.c.l.b16 %v515
      %v964 = vunpack.c.l.b16 %v516
      %v965 = vunpack.c.l.b16 %v517
      %v966 = vunpack.c.l.b16 %v518
      %v967 = vunpack.c.l.b16 %v519
      %v968 = vunpack.c.l.b16 %v520
      %v969 = vunpack.c.l.b16 %v521
      %v970 = vunpack.c.l.b16 %v522
      %v971 = vunpack.c.l.b16 %v523
      %v972 = vunpack.c.l.b16 %v524
      %v973 = vunpack.c.l.b16 %v525
      %v974 = vunpack.c.l.b16 %v526
      %v975 = vunpack.c.l.b16 %v527
      %v976 = vunpack.c.l.b16 %v528
      %v977 = vunpack.c.l.b16 %v529
      %v978 = vunpack.c.l.b16 %v530
      %v979 = vunpack.c.l.b16 %v531
      %v980 = vunpack.c.l.b16 %v532
      %v981 = vunpack.c.l.b16 %v533
      %v982 = vunpack.c.l.b16 %v534
      %v983 = vunpack.c.l.b16 %v535
      %v984 = vunpack.c.l.b16 %v536
      %v985 = vunpack.c.l.b16 %v537
      %v986 = vunpack.c.l.b16 %v538
      %v987 = vunpack.c.l.b16 %v539
      %v988 = vunpack.c.l.b16 %v540
      %v989 = vunpack.c.l.b16 %v541
      %v990 = vunpack.c.l.b16 %v542
      %v991 = vunpack.c.l.b16 %v543
      %v992 = vunpack.c.l.b16 %v544
      %v993 = vunpack.c.l.b16 %v545
      %v994 = vunpack.c.l.b16 %v546
      %v995 = vunpack.c.l.b16 %v547
      %v996 = vunpack.c.l.b16 %v548
      %v997 = vpack.c.b16 %v934, %v933
      %v998 = vpack.c.b16 %v936, %v935
      %v999 = vpack.c.b16 %v938, %v937
      %v1000 = vpack.c.b16 %v940, %v939
      %v1001 = vpack.c.b16 %v942, %v941
      %v1002 = vpack.c.b16 %v944, %v943
      %v1003 = vpack.c.b16 %v946, %v945
      %v1004 = vpack.c.b16 %v948, %v947
      %v1005 = vpack.c.b16 %v950, %v949
      %v1006 = vpack.c.b16 %v952, %v951
      %v1007 = vpack.c.b16 %v954, %v953
      %v1008 = vpack.c.b16 %v956, %v955
      %v1009 = vpack.c.b16 %v958, %v957
      %v1010 = vpack.c.b16 %v960, %v959
      %v1011 = vpack.c.b16 %v962, %v961
      %v1012 = vpack.c.b16 %v964, %v963
      %v1013 = vpack.c.b16 %v966, %v965
      %v1014 = vpack.c.b16 %v968, %v967
      %v1015 = vpack.c.b16 %v970, %v969
      %v1016 = vpack.c.b16 %v972, %v971
      %v1017 = vpack.c.b16 %v974, %v973
      %v1018 = vpack.c.b16 %v976, %v975
      %v1019 = vpack.c.b16 %v978, %v977
      %v1020 = vpack.c.b16 %v980, %v979
      %v1021 = vpack.c.b16 %v982, %v981
      %v1022 = vpack.c.b16 %v984, %v983
      %v1023 = vpack.c.b16 %v986, %v985
      %v1024 = vpack.c.b16 %v988, %v987
      %v1025 = vpack.c.b16 %v990, %v989
      %v1026 = vpack.c.b16 %v992, %v991
      %v1027 = vpack.c.b16 %v994, %v993
      %v1028 = vpack.c.b16 %v996, %v995
      %1061 = vmatprep.subr.bf16.mxu0 0
      %1062 = vmatpush1.bf16.msra.mxu0 %v997
      %1063 = vmatprep.subr.bf16.mxu0 0
      %1064 = vmatpush1.bf16.msra.mxu0 %v998
      %1065 = vmatprep.subr.bf16.mxu0 0
      %1066 = vmatpush1.bf16.msra.mxu0 %v999
      %1067 = vmatprep.subr.bf16.mxu0 0
      %1068 = vmatpush1.bf16.msra.mxu0 %v1000
      %1069 = vmatprep.subr.bf16.mxu0 0
      %1070 = vmatpush1.bf16.msra.mxu0 %v1001
      %1071 = vmatprep.subr.bf16.mxu0 0
      %1072 = vmatpush1.bf16.msra.mxu0 %v1002
      %1073 = vmatprep.subr.bf16.mxu0 0
      %1074 = vmatpush1.bf16.msra.mxu0 %v1003
      %1075 = vmatprep.subr.bf16.mxu0 0
      %1076 = vmatpush1.bf16.msra.mxu0 %v1004
      %1077 = vmatprep.subr.bf16.mxu0 0
      %1078 = vmatpush1.bf16.msra.mxu0 %v1005
      %1079 = vmatprep.subr.bf16.mxu0 0
      %1080 = vmatpush1.bf16.msra.mxu0 %v1006
      %1081 = vmatprep.subr.bf16.mxu0 0
      %1082 = vmatpush1.bf16.msra.mxu0 %v1007
      %1083 = vmatprep.subr.bf16.mxu0 0
      %1084 = vmatpush1.bf16.msra.mxu0 %v1008
      %1085 = vmatprep.subr.bf16.mxu0 0
      %1086 = vmatpush1.bf16.msra.mxu0 %v1009
      %1087 = vmatprep.subr.bf16.mxu0 0
      %1088 = vmatpush1.bf16.msra.mxu0 %v1010
      %1089 = vmatprep.subr.bf16.mxu0 0
      %1090 = vmatpush1.bf16.msra.mxu0 %v1011
      %1091 = vmatprep.subr.bf16.mxu0 0
      %1092 = vmatpush1.bf16.msra.mxu0 %v1012
      %1093 = vmatprep.mubr.bf16.mxu0 %v742
      %1094 = vmatmul.mubr.bf16.gmra.mrb[0].mxu0 %v741
      %v1095 = vpop.f32.mrb[0].mxu0
      %v1096 = vadd.f32 0.0, %v1095
      %v1097 = vpop.f32.mrb[0].mxu0
      %v1098 = vpop.f32.mrb[0].mxu0
      %v1099 = vadd.f32 0.0, %v1098
      %v1100 = vpop.f32.mrb[0].mxu0
      %1101 = vmatprep.mubr.bf16.mxu0 %v746
      %1102 = vmatmul.mubr.bf16.gmra.mrb[0].mxu0 %v745
      %v1103 = vpop.f32.mrb[0].mxu0
      %v1104 = vadd.f32 0.0, %v1103
      %v1105 = vpop.f32.mrb[0].mxu0
      %v1106 = vpop.f32.mrb[0].mxu0
      %v1107 = vadd.f32 0.0, %v1106
      %v1108 = vpop.f32.mrb[0].mxu0
      %1109 = vmatprep.mubr.bf16.mxu0 %v750
      %1110 = vmatmul.mubr.bf16.gmra.mrb[0].mxu0 %v749
      %v1111 = vpop.f32.mrb[0].mxu0
      %v1112 = vadd.f32 0.0, %v1111
      %v1113 = vpop.f32.mrb[0].mxu0
      %v1114 = vpop.f32.mrb[0].mxu0
      %v1115 = vadd.f32 0.0, %v1114
      %v1116 = vpop.f32.mrb[0].mxu0
      %1117 = vmatprep.mubr.bf16.mxu0 %v754
      %1118 = vmatmul.mubr.bf16.gmra.mrb[0].mxu0 %v753
      %v1119 = vpop.f32.mrb[0].mxu0
      %v1120 = vadd.f32 0.0, %v1119
      %v1121 = vpop.f32.mrb[0].mxu0
      %v1122 = vpop.f32.mrb[0].mxu0
      %v1123 = vadd.f32 0.0, %v1122
      %v1124 = vpop.f32.mrb[0].mxu0
      %1125 = vmatprep.mubr.bf16.mxu0 %v758
      %1126 = vmatmul.mubr.bf16.gmra.mrb[0].mxu0 %v757
      %v1127 = vpop.f32.mrb[0].mxu0
      %v1128 = vadd.f32 0.0, %v1127
      %v1129 = vpop.f32.mrb[0].mxu0
      %v1130 = vpop.f32.mrb[0].mxu0
      %v1131 = vadd.f32 0.0, %v1130
      %v1132 = vpop.f32.mrb[0].mxu0
      %1133 = vmatprep.mubr.bf16.mxu0 %v762
      %1134 = vmatmul.mubr.bf16.gmra.mrb[0].mxu0 %v761
      %v1135 = vpop.f32.mrb[0].mxu0
      %v1136 = vadd.f32 0.0, %v1135
      %v1137 = vpop.f32.mrb[0].mxu0
      %v1138 = vpop.f32.mrb[0].mxu0
      %v1139 = vadd.f32 0.0, %v1138
      %v1140 = vpop.f32.mrb[0].mxu0
      %1141 = vmatprep.mubr.bf16.mxu0 %v766
      %1142 = vmatmul.mubr.bf16.gmra.mrb[0].mxu0 %v765
      %v1143 = vpop.f32.mrb[0].mxu0
      %v1144 = vadd.f32 0.0, %v1143
      %v1145 = vpop.f32.mrb[0].mxu0
      %v1146 = vpop.f32.mrb[0].mxu0
      %v1147 = vadd.f32 0.0, %v1146
      %v1148 = vpop.f32.mrb[0].mxu0
      %1149 = vmatprep.mubr.bf16.mxu0 %v770
      %1150 = vmatmul.mubr.bf16.gmra.mrb[0].mxu0 %v769
      %v1151 = vpop.f32.mrb[0].mxu0
      %v1152 = vadd.f32 0.0, %v1151
      %v1153 = vpop.f32.mrb[0].mxu0
      %v1154 = vpop.f32.mrb[0].mxu0
      %v1155 = vadd.f32 0.0, %v1154
      %v1156 = vpop.f32.mrb[0].mxu0
      %1157 = vmatprep.mubr.bf16.mxu0 %v774
      %1158 = vmatmul.mubr.bf16.gmra.mrb[0].mxu0 %v773
      %v1159 = vpop.f32.mrb[0].mxu0
      %v1160 = vadd.f32 0.0, %v1159
      %v1161 = vpop.f32.mrb[0].mxu0
      %v1162 = vpop.f32.mrb[0].mxu0
      %v1163 = vadd.f32 0.0, %v1162
      %v1164 = vpop.f32.mrb[0].mxu0
      %1165 = vmatprep.mubr.bf16.mxu0 %v778
      %1166 = vmatmul.mubr.bf16.gmra.mrb[0].mxu0 %v777
      %v1167 = vpop.f32.mrb[0].mxu0
      %v1168 = vadd.f32 0.0, %v1167
      %v1169 = vpop.f32.mrb[0].mxu0
      %v1170 = vpop.f32.mrb[0].mxu0
      %v1171 = vadd.f32 0.0, %v1170
      %v1172 = vpop.f32.mrb[0].mxu0
      %1173 = vmatprep.mubr.bf16.mxu0 %v782
      %1174 = vmatmul.mubr.bf16.gmra.mrb[0].mxu0 %v781
      %v1175 = vpop.f32.mrb[0].mxu0
      %v1176 = vadd.f32 0.0, %v1175
      %v1177 = vpop.f32.mrb[0].mxu0
      %v1178 = vpop.f32.mrb[0].mxu0
      %v1179 = vadd.f32 0.0, %v1178
      %v1180 = vpop.f32.mrb[0].mxu0
      %1181 = vmatprep.mubr.bf16.mxu0 %v786
      %1182 = vmatmul.mubr.bf16.gmra.mrb[0].mxu0 %v785
      %v1183 = vpop.f32.mrb[0].mxu0
      %v1184 = vadd.f32 0.0, %v1183
      %v1185 = vpop.f32.mrb[0].mxu0
      %v1186 = vpop.f32.mrb[0].mxu0
      %v1187 = vadd.f32 0.0, %v1186
      %v1188 = vpop.f32.mrb[0].mxu0
      %1189 = vmatprep.mubr.bf16.mxu0 %v790
      %1190 = vmatmul.mubr.bf16.gmra.mrb[0].mxu0 %v789
      %v1191 = vpop.f32.mrb[0].mxu0
      %v1192 = vadd.f32 0.0, %v1191
      %v1193 = vpop.f32.mrb[0].mxu0
      %v1194 = vpop.f32.mrb[0].mxu0
      %v1195 = vadd.f32 0.0, %v1194
      %v1196 = vpop.f32.mrb[0].mxu0
      %1197 = vmatprep.mubr.bf16.mxu0 %v794
      %1198 = vmatmul.mubr.bf16.gmra.mrb[0].mxu0 %v793
      %v1199 = vpop.f32.mrb[0].mxu0
      %v1200 = vadd.f32 0.0, %v1199
      %v1201 = vpop.f32.mrb[0].mxu0
      %v1202 = vpop.f32.mrb[0].mxu0
      %v1203 = vadd.f32 0.0, %v1202
      %v1204 = vpop.f32.mrb[0].mxu0
      %1205 = vmatprep.mubr.bf16.mxu0 %v798
      %1206 = vmatmul.mubr.bf16.gmra.mrb[0].mxu0 %v797
      %v1207 = vpop.f32.mrb[0].mxu0
      %v1208 = vadd.f32 0.0, %v1207
      %v1209 = vpop.f32.mrb[0].mxu0
      %v1210 = vpop.f32.mrb[0].mxu0
      %v1211 = vadd.f32 0.0, %v1210
      %v1212 = vpop.f32.mrb[0].mxu0
      %1213 = vmatprep.mubr.bf16.mxu0 %v802
      %1214 = vmatmul.mubr.bf16.gmra.mrb[0].mxu0 %v801
      %v1215 = vpop.f32.mrb[0].mxu0
      %v1216 = vadd.f32 0.0, %v1215
      %v1217 = vpop.f32.mrb[0].mxu0
      %v1218 = vpop.f32.mrb[0].mxu0
      %v1219 = vadd.f32 0.0, %v1218
      %v1220 = vpop.f32.mrb[0].mxu0
      %1221 = vdwg.mxu0
      %1222 = vmatprep.subr.bf16.mxu0 0
      %1223 = vmatpush1.bf16.msra.mxu0 %v1013
      %1224 = vmatprep.subr.bf16.mxu0 0
      %1225 = vmatpush1.bf16.msra.mxu0 %v1014
      %1226 = vmatprep.subr.bf16.mxu0 0
      %1227 = vmatpush1.bf16.msra.mxu0 %v1015
      %1228 = vmatprep.subr.bf16.mxu0 0
      %1229 = vmatpush1.bf16.msra.mxu0 %v1016
      %1230 = vmatprep.subr.bf16.mxu0 0
      %1231 = vmatpush1.bf16.msra.mxu0 %v1017
      %1232 = vmatprep.subr.bf16.mxu0 0
      %1233 = vmatpush1.bf16.msra.mxu0 %v1018
      %1234 = vmatprep.subr.bf16.mxu0 0
      %1235 = vmatpush1.bf16.msra.mxu0 %v1019
      %1236 = vmatprep.subr.bf16.mxu0 0
      %1237 = vmatpush1.bf16.msra.mxu0 %v1020
      %1238 = vmatprep.subr.bf16.mxu0 0
      %1239 = vmatpush1.bf16.msra.mxu0 %v1021
      %1240 = vmatprep.subr.bf16.mxu0 0
      %1241 = vmatpush1.bf16.msra.mxu0 %v1022
      %1242 = vmatprep.subr.bf16.mxu0 0
      %1243 = vmatpush1.bf16.msra.mxu0 %v1023
      %1244 = vmatprep.subr.bf16.mxu0 0
      %1245 = vmatpush1.bf16.msra.mxu0 %v1024
      %1246 = vmatprep.subr.bf16.mxu0 0
      %1247 = vmatpush1.bf16.msra.mxu0 %v1025
      %1248 = vmatprep.subr.bf16.mxu0 0
      %1249 = vmatpush1.bf16.msra.mxu0 %v1026
      %1250 = vmatprep.subr.bf16.mxu0 0
      %1251 = vmatpush1.bf16.msra.mxu0 %v1027
      %1252 = vmatprep.subr.bf16.mxu0 0
      %1253 = vmatpush1.bf16.msra.mxu0 %v1028
      %1254 = vmatprep.mubr.bf16.mxu0 %v744
      %1255 = vmatmul.mubr.bf16.gmra.mrb[0].mxu0 %v743
      %v1256 = vpop.f32.mrb[0].mxu0
      %v1257 = vadd.f32 %v1096, %v1256
      %v1258 = vpop.f32.mrb[0].mxu0
      %v1259 = vpop.f32.mrb[0].mxu0
      %v1260 = vadd.f32 %v1099, %v1259
      %v1261 = vpop.f32.mrb[0].mxu0
      %1262 = vmatprep.mubr.bf16.mxu0 %v748
      %1263 = vmatmul.mubr.bf16.gmra.mrb[0].mxu0 %v747
      %v1264 = vpop.f32.mrb[0].mxu0
      %v1265 = vadd.f32 %v1104, %v1264
      %v1266 = vpop.f32.mrb[0].mxu0
      %v1267 = vpop.f32.mrb[0].mxu0
      %v1268 = vadd.f32 %v1107, %v1267
      %v1269 = vpop.f32.mrb[0].mxu0
      %1270 = vmatprep.mubr.bf16.mxu0 %v752
      %1271 = vmatmul.mubr.bf16.gmra.mrb[0].mxu0 %v751
      %v1272 = vpop.f32.mrb[0].mxu0
      %v1273 = vadd.f32 %v1112, %v1272
      %v1274 = vpop.f32.mrb[0].mxu0
      %v1275 = vpop.f32.mrb[0].mxu0
      %v1276 = vadd.f32 %v1115, %v1275
      %v1277 = vpop.f32.mrb[0].mxu0
      %1278 = vmatprep.mubr.bf16.mxu0 %v756
      %1279 = vmatmul.mubr.bf16.gmra.mrb[0].mxu0 %v755
      %v1280 = vpop.f32.mrb[0].mxu0
      %v1281 = vadd.f32 %v1120, %v1280
      %v1282 = vpop.f32.mrb[0].mxu0
      %v1283 = vpop.f32.mrb[0].mxu0
      %v1284 = vadd.f32 %v1123, %v1283
      %v1285 = vpop.f32.mrb[0].mxu0
      %1286 = vmatprep.mubr.bf16.mxu0 %v760
      %1287 = vmatmul.mubr.bf16.gmra.mrb[0].mxu0 %v759
      %v1288 = vpop.f32.mrb[0].mxu0
      %v1289 = vadd.f32 %v1128, %v1288
      %v1290 = vpop.f32.mrb[0].mxu0
      %v1291 = vpop.f32.mrb[0].mxu0
      %v1292 = vadd.f32 %v1131, %v1291
      %v1293 = vpop.f32.mrb[0].mxu0
      %1294 = vmatprep.mubr.bf16.mxu0 %v764
      %1295 = vmatmul.mubr.bf16.gmra.mrb[0].mxu0 %v763
      %v1296 = vpop.f32.mrb[0].mxu0
      %v1297 = vadd.f32 %v1136, %v1296
      %v1298 = vpop.f32.mrb[0].mxu0
      %v1299 = vpop.f32.mrb[0].mxu0
      %v1300 = vadd.f32 %v1139, %v1299
      %v1301 = vpop.f32.mrb[0].mxu0
      %1302 = vmatprep.mubr.bf16.mxu0 %v768
      %1303 = vmatmul.mubr.bf16.gmra.mrb[0].mxu0 %v767
      %v1304 = vpop.f32.mrb[0].mxu0
      %v1305 = vadd.f32 %v1144, %v1304
      %v1306 = vpop.f32.mrb[0].mxu0
      %v1307 = vpop.f32.mrb[0].mxu0
      %v1308 = vadd.f32 %v1147, %v1307
      %v1309 = vpop.f32.mrb[0].mxu0
      %1310 = vmatprep.mubr.bf16.mxu0 %v772
      %1311 = vmatmul.mubr.bf16.gmra.mrb[0].mxu0 %v771
      %v1312 = vpop.f32.mrb[0].mxu0
      %v1313 = vadd.f32 %v1152, %v1312
      %v1314 = vpop.f32.mrb[0].mxu0
      %v1315 = vpop.f32.mrb[0].mxu0
      %v1316 = vadd.f32 %v1155, %v1315
      %v1317 = vpop.f32.mrb[0].mxu0
      %1318 = vmatprep.mubr.bf16.mxu0 %v776
      %1319 = vmatmul.mubr.bf16.gmra.mrb[0].mxu0 %v775
      %v1320 = vpop.f32.mrb[0].mxu0
      %v1321 = vadd.f32 %v1160, %v1320
      %v1322 = vpop.f32.mrb[0].mxu0
      %v1323 = vpop.f32.mrb[0].mxu0
      %v1324 = vadd.f32 %v1163, %v1323
      %v1325 = vpop.f32.mrb[0].mxu0
      %1326 = vmatprep.mubr.bf16.mxu0 %v780
      %1327 = vmatmul.mubr.bf16.gmra.mrb[0].mxu0 %v779
      %v1328 = vpop.f32.mrb[0].mxu0
      %v1329 = vadd.f32 %v1168, %v1328
      %v1330 = vpop.f32.mrb[0].mxu0
      %v1331 = vpop.f32.mrb[0].mxu0
      %v1332 = vadd.f32 %v1171, %v1331
      %v1333 = vpop.f32.mrb[0].mxu0
      %1334 = vmatprep.mubr.bf16.mxu0 %v784
      %1335 = vmatmul.mubr.bf16.gmra.mrb[0].mxu0 %v783
      %v1336 = vpop.f32.mrb[0].mxu0
      %v1337 = vadd.f32 %v1176, %v1336
      %v1338 = vpop.f32.mrb[0].mxu0
      %v1339 = vpop.f32.mrb[0].mxu0
      %v1340 = vadd.f32 %v1179, %v1339
      %v1341 = vpop.f32.mrb[0].mxu0
      %1342 = vmatprep.mubr.bf16.mxu0 %v788
      %1343 = vmatmul.mubr.bf16.gmra.mrb[0].mxu0 %v787
      %v1344 = vpop.f32.mrb[0].mxu0
      %v1345 = vadd.f32 %v1184, %v1344
      %v1346 = vpop.f32.mrb[0].mxu0
      %v1347 = vpop.f32.mrb[0].mxu0
      %v1348 = vadd.f32 %v1187, %v1347
      %v1349 = vpop.f32.mrb[0].mxu0
      %1350 = vmatprep.mubr.bf16.mxu0 %v792
      %1351 = vmatmul.mubr.bf16.gmra.mrb[0].mxu0 %v791
      %v1352 = vpop.f32.mrb[0].mxu0
      %v1353 = vadd.f32 %v1192, %v1352
      %v1354 = vpop.f32.mrb[0].mxu0
      %v1355 = vpop.f32.mrb[0].mxu0
      %v1356 = vadd.f32 %v1195, %v1355
      %v1357 = vpop.f32.mrb[0].mxu0
      %1358 = vmatprep.mubr.bf16.mxu0 %v796
      %1359 = vmatmul.mubr.bf16.gmra.mrb[0].mxu0 %v795
      %v1360 = vpop.f32.mrb[0].mxu0
      %v1361 = vadd.f32 %v1200, %v1360
      %v1362 = vpop.f32.mrb[0].mxu0
      %v1363 = vpop.f32.mrb[0].mxu0
      %v1364 = vadd.f32 %v1203, %v1363
      %v1365 = vpop.f32.mrb[0].mxu0
      %1366 = vmatprep.mubr.bf16.mxu0 %v800
      %1367 = vmatmul.mubr.bf16.gmra.mrb[0].mxu0 %v799
      %v1368 = vpop.f32.mrb[0].mxu0
      %v1369 = vadd.f32 %v1208, %v1368
      %v1370 = vpop.f32.mrb[0].mxu0
      %v1371 = vpop.f32.mrb[0].mxu0
      %v1372 = vadd.f32 %v1211, %v1371
      %v1373 = vpop.f32.mrb[0].mxu0
      %1374 = vmatprep.mubr.bf16.mxu0 %v804
      %1375 = vmatmul.mubr.bf16.gmra.mrb[0].mxu0 %v803
      %v1376 = vpop.f32.mrb[0].mxu0
      %v1377 = vadd.f32 %v1216, %v1376
      %v1378 = vpop.f32.mrb[0].mxu0
      %v1379 = vpop.f32.mrb[0].mxu0
      %v1380 = vadd.f32 %v1219, %v1379
      %v1381 = vpop.f32.mrb[0].mxu0
      %1382 = vdwg.mxu0
      %v1383 = vadd.f32 %v389, %v1257
      %v1384 = vadd.f32 %v390, %v1260
      %v1385 = vadd.f32 %v391, %v1265
      %v1386 = vadd.f32 %v392, %v1268
      %v1387 = vadd.f32 %v393, %v1273
      %v1388 = vadd.f32 %v394, %v1276
      %v1389 = vadd.f32 %v395, %v1281
      %v1390 = vadd.f32 %v396, %v1284
      %v1391 = vadd.f32 %v397, %v1289
      %v1392 = vadd.f32 %v398, %v1292
      %v1393 = vadd.f32 %v399, %v1297
      %v1394 = vadd.f32 %v400, %v1300
      %v1395 = vadd.f32 %v401, %v1305
      %v1396 = vadd.f32 %v402, %v1308
      %v1397 = vadd.f32 %v403, %v1313
      %v1398 = vadd.f32 %v404, %v1316
      %v1399 = vadd.f32 %v405, %v1321
      %v1400 = vadd.f32 %v406, %v1324
      %v1401 = vadd.f32 %v407, %v1329
      %v1402 = vadd.f32 %v408, %v1332
      %v1403 = vadd.f32 %v409, %v1337
      %v1404 = vadd.f32 %v410, %v1340
      %v1405 = vadd.f32 %v411, %v1345
      %v1406 = vadd.f32 %v412, %v1348
      %v1407 = vadd.f32 %v413, %v1353
      %v1408 = vadd.f32 %v414, %v1356
      %v1409 = vadd.f32 %v415, %v1361
      %v1410 = vadd.f32 %v416, %v1364
      %v1411 = vadd.f32 %v417, %v1369
      %v1412 = vadd.f32 %v418, %v1372
      %v1413 = vadd.f32 %v419, %v1377
      %v1414 = vadd.f32 %v420, %v1380
      %1415 = vst [vmem:[#allocation2] sm:$0xff] %v1383
      %1416 = vst [vmem:[#allocation2 + $0x8] sm:$0xff] %v1384
      %1417 = vst [vmem:[#allocation2 + $0x10] sm:$0xff] %v1385
      %1418 = vst [vmem:[#allocation2 + $0x18] sm:$0xff] %v1386
      %1419 = vst [vmem:[#allocation2 + $0x20] sm:$0xff] %v1387
      %1420 = vst [vmem:[#allocation2 + $0x28] sm:$0xff] %v1388
      %1421 = vst [vmem:[#allocation2 + $0x30] sm:$0xff] %v1389
      %1422 = vst [vmem:[#allocation2 + $0x38] sm:$0xff] %v1390
      %1423 = vst [vmem:[#allocation2 + $0x40] sm:$0xff] %v1391
      %1424 = vst [vmem:[#allocation2 + $0x48] sm:$0xff] %v1392
      %1425 = vst [vmem:[#allocation2 + $0x50] sm:$0xff] %v1393
      %1426 = vst [vmem:[#allocation2 + $0x58] sm:$0xff] %v1394
      %1427 = vst [vmem:[#allocation2 + $0x60] sm:$0xff] %v1395
      %1428 = vst [vmem:[#allocation2 + $0x68] sm:$0xff] %v1396
      %1429 = vst [vmem:[#allocation2 + $0x70] sm:$0xff] %v1397
      %1430 = vst [vmem:[#allocation2 + $0x78] sm:$0xff] %v1398
      %1431 = vst [vmem:[#allocation2 + $0x80] sm:$0xff] %v1399
      %1432 = vst [vmem:[#allocation2 + $0x88] sm:$0xff] %v1400
      %1433 = vst [vmem:[#allocation2 + $0x90] sm:$0xff] %v1401
      %1434 = vst [vmem:[#allocation2 + $0x98] sm:$0xff] %v1402
      %1435 = vst [vmem:[#allocation2 + $0xa0] sm:$0xff] %v1403
      %1436 = vst [vmem:[#allocation2 + $0xa8] sm:$0xff] %v1404
      %1437 = vst [vmem:[#allocation2 + $0xb0] sm:$0xff] %v1405
      %1438 = vst [vmem:[#allocation2 + $0xb8] sm:$0xff] %v1406
      %1439 = vst [vmem:[#allocation2 + $0xc0] sm:$0xff] %v1407
      %1440 = vst [vmem:[#allocation2 + $0xc8] sm:$0xff] %v1408
      %1441 = vst [vmem:[#allocation2 + $0xd0] sm:$0xff] %v1409
      %1442 = vst [vmem:[#allocation2 + $0xd8] sm:$0xff] %v1410
      %1443 = vst [vmem:[#allocation2 + $0xe0] sm:$0xff] %v1411
      %1444 = vst [vmem:[#allocation2 + $0xe8] sm:$0xff] %v1412
      %1445 = vst [vmem:[#allocation2 + $0xf0] sm:$0xff] %v1413
      %1446 = vst [vmem:[#allocation2 + $0xf8] sm:$0xff] %v1414
      // Predicated region
      $region49: #{graphsage_forward.6} parent=43 // pred_check
        %p1447 = pneg %p353
      $region50: #{graphsage_forward.6} parent=43 // pred_check_branch
        %1449 = sbr.rel (%p1447) target = $region52
      $region51: #{graphsage_forward.6} parent=43 // pred_region
        %v1450 = vld [vmem:[#allocation2] sm:$0xff]
        %v1451 = vld [vmem:[#allocation2 + $0x8] sm:$0xff]
        %v1452 = vld [vmem:[#allocation2 + $0x10] sm:$0xff]
        %v1453 = vld [vmem:[#allocation2 + $0x18] sm:$0xff]
        %v1454 = vld [vmem:[#allocation2 + $0x20] sm:$0xff]
        %v1455 = vld [vmem:[#allocation2 + $0x28] sm:$0xff]
        %v1456 = vld [vmem:[#allocation2 + $0x30] sm:$0xff]
        %v1457 = vld [vmem:[#allocation2 + $0x38] sm:$0xff]
        %v1458 = vld [vmem:[#allocation2 + $0x40] sm:$0xff]
        %v1459 = vld [vmem:[#allocation2 + $0x48] sm:$0xff]
        %v1460 = vld [vmem:[#allocation2 + $0x50] sm:$0xff]
        %v1461 = vld [vmem:[#allocation2 + $0x58] sm:$0xff]
        %v1462 = vld [vmem:[#allocation2 + $0x60] sm:$0xff]
        %v1463 = vld [vmem:[#allocation2 + $0x68] sm:$0xff]
        %v1464 = vld [vmem:[#allocation2 + $0x70] sm:$0xff]
        %v1465 = vld [vmem:[#allocation2 + $0x78] sm:$0xff]
        %v1466 = vld [vmem:[#allocation2 + $0x80] sm:$0xff]
        %v1467 = vld [vmem:[#allocation2 + $0x88] sm:$0xff]
        %v1468 = vld [vmem:[#allocation2 + $0x90] sm:$0xff]
        %v1469 = vld [vmem:[#allocation2 + $0x98] sm:$0xff]
        %v1470 = vld [vmem:[#allocation2 + $0xa0] sm:$0xff]
        %v1471 = vld [vmem:[#allocation2 + $0xa8] sm:$0xff]
        %v1472 = vld [vmem:[#allocation2 + $0xb0] sm:$0xff]
        %v1473 = vld [vmem:[#allocation2 + $0xb8] sm:$0xff]
        %v1474 = vld [vmem:[#allocation2 + $0xc0] sm:$0xff]
        %v1475 = vld [vmem:[#allocation2 + $0xc8] sm:$0xff]
        %v1476 = vld [vmem:[#allocation2 + $0xd0] sm:$0xff]
        %v1477 = vld [vmem:[#allocation2 + $0xd8] sm:$0xff]
        %v1478 = vld [vmem:[#allocation2 + $0xe0] sm:$0xff]
        %v1479 = vld [vmem:[#allocation2 + $0xe8] sm:$0xff]
        %v1480 = vld [vmem:[#allocation2 + $0xf0] sm:$0xff]
        %v1481 = vld [vmem:[#allocation2 + $0xf8] sm:$0xff]
        %v1482 = vld [vmem:[%s344] sm:$0xff]
        %v1483 = vld [vmem:[%s344 + $0x8] sm:$0xff]
        %v1484 = vld [vmem:[%s344 + $0x10] sm:$0xff]
        %v1485 = vld [vmem:[%s344 + $0x18] sm:$0xff]
        %v1486 = vld [vmem:[%s344 + $0x20] sm:$0xff]
        %v1487 = vld [vmem:[%s344 + $0x28] sm:$0xff]
        %v1488 = vld [vmem:[%s344 + $0x30] sm:$0xff]
        %v1489 = vld [vmem:[%s344 + $0x38] sm:$0xff]
        %v1490 = vld [vmem:[%s344 + $0x40] sm:$0xff]
        %v1491 = vld [vmem:[%s344 + $0x48] sm:$0xff]
        %v1492 = vld [vmem:[%s344 + $0x50] sm:$0xff]
        %v1493 = vld [vmem:[%s344 + $0x58] sm:$0xff]
        %v1494 = vld [vmem:[%s344 + $0x60] sm:$0xff]
        %v1495 = vld [vmem:[%s344 + $0x68] sm:$0xff]
        %v1496 = vld [vmem:[%s344 + $0x70] sm:$0xff]
        %v1497 = vld [vmem:[%s344 + $0x78] sm:$0xff]
        %v1498 = vld [vmem:[%s344 + $0x80] sm:$0xff]
        %v1499 = vld [vmem:[%s344 + $0x88] sm:$0xff]
        %v1500 = vld [vmem:[%s344 + $0x90] sm:$0xff]
        %v1501 = vld [vmem:[%s344 + $0x98] sm:$0xff]
        %v1502 = vld [vmem:[%s344 + $0xa0] sm:$0xff]
        %v1503 = vld [vmem:[%s344 + $0xa8] sm:$0xff]
        %v1504 = vld [vmem:[%s344 + $0xb0] sm:$0xff]
        %v1505 = vld [vmem:[%s344 + $0xb8] sm:$0xff]
        %v1506 = vld [vmem:[%s344 + $0xc0] sm:$0xff]
        %v1507 = vld [vmem:[%s344 + $0xc8] sm:$0xff]
        %v1508 = vld [vmem:[%s344 + $0xd0] sm:$0xff]
        %v1509 = vld [vmem:[%s344 + $0xd8] sm:$0xff]
        %v1510 = vld [vmem:[%s344 + $0xe0] sm:$0xff]
        %v1511 = vld [vmem:[%s344 + $0xe8] sm:$0xff]
        %v1512 = vld [vmem:[%s344 + $0xf0] sm:$0xff]
        %v1513 = vld [vmem:[%s344 + $0xf8] sm:$0xff]
        %1515 = vset.pattern.permute.xlu0 0
        %1516 = vperm.xlu0 %1515, %v1482
        %v1517 = vpop.permute.xlu0 %1516
        %1520 = vset.pattern.permute.xlu0 0
        %1521 = vperm.xlu0 %1520, %v1483
        %v1522 = vpop.permute.xlu0 %1521
        %1525 = vset.pattern.permute.xlu0 0
        %1526 = vperm.xlu0 %1525, %v1484
        %v1527 = vpop.permute.xlu0 %1526
        %1530 = vset.pattern.permute.xlu0 0
        %1531 = vperm.xlu0 %1530, %v1485
        %v1532 = vpop.permute.xlu0 %1531
        %1535 = vset.pattern.permute.xlu0 0
        %1536 = vperm.xlu0 %1535, %v1486
        %v1537 = vpop.permute.xlu0 %1536
        %1540 = vset.pattern.permute.xlu0 0
        %1541 = vperm.xlu0 %1540, %v1487
        %v1542 = vpop.permute.xlu0 %1541
        %1545 = vset.pattern.permute.xlu0 0
        %1546 = vperm.xlu0 %1545, %v1488
        %v1547 = vpop.permute.xlu0 %1546
        %1550 = vset.pattern.permute.xlu0 0
        %1551 = vperm.xlu0 %1550, %v1489
        %v1552 = vpop.permute.xlu0 %1551
        %1555 = vset.pattern.permute.xlu0 0
        %1556 = vperm.xlu0 %1555, %v1490
        %v1557 = vpop.permute.xlu0 %1556
        %1560 = vset.pattern.permute.xlu0 0
        %1561 = vperm.xlu0 %1560, %v1491
        %v1562 = vpop.permute.xlu0 %1561
        %1565 = vset.pattern.permute.xlu0 0
        %1566 = vperm.xlu0 %1565, %v1492
        %v1567 = vpop.permute.xlu0 %1566
        %1570 = vset.pattern.permute.xlu0 0
        %1571 = vperm.xlu0 %1570, %v1493
        %v1572 = vpop.permute.xlu0 %1571
        %1575 = vset.pattern.permute.xlu0 0
        %1576 = vperm.xlu0 %1575, %v1494
        %v1577 = vpop.permute.xlu0 %1576
        %1580 = vset.pattern.permute.xlu0 0
        %1581 = vperm.xlu0 %1580, %v1495
        %v1582 = vpop.permute.xlu0 %1581
        %1585 = vset.pattern.permute.xlu0 0
        %1586 = vperm.xlu0 %1585, %v1496
        %v1587 = vpop.permute.xlu0 %1586
        %1590 = vset.pattern.permute.xlu0 0
        %1591 = vperm.xlu0 %1590, %v1497
        %v1592 = vpop.permute.xlu0 %1591
        %1595 = vset.pattern.permute.xlu0 0
        %1596 = vperm.xlu0 %1595, %v1498
        %v1597 = vpop.permute.xlu0 %1596
        %1600 = vset.pattern.permute.xlu0 0
        %1601 = vperm.xlu0 %1600, %v1499
        %v1602 = vpop.permute.xlu0 %1601
        %1605 = vset.pattern.permute.xlu0 0
        %1606 = vperm.xlu0 %1605, %v1500
        %v1607 = vpop.permute.xlu0 %1606
        %1610 = vset.pattern.permute.xlu0 0
        %1611 = vperm.xlu0 %1610, %v1501
        %v1612 = vpop.permute.xlu0 %1611
        %1615 = vset.pattern.permute.xlu0 0
        %1616 = vperm.xlu0 %1615, %v1502
        %v1617 = vpop.permute.xlu0 %1616
        %1620 = vset.pattern.permute.xlu0 0
        %1621 = vperm.xlu0 %1620, %v1503
        %v1622 = vpop.permute.xlu0 %1621
        %1625 = vset.pattern.permute.xlu0 0
        %1626 = vperm.xlu0 %1625, %v1504
        %v1627 = vpop.permute.xlu0 %1626
        %1630 = vset.pattern.permute.xlu0 0
        %1631 = vperm.xlu0 %1630, %v1505
        %v1632 = vpop.permute.xlu0 %1631
        %1635 = vset.pattern.permute.xlu0 0
        %1636 = vperm.xlu0 %1635, %v1506
        %v1637 = vpop.permute.xlu0 %1636
        %1640 = vset.pattern.permute.xlu0 0
        %1641 = vperm.xlu0 %1640, %v1507
        %v1642 = vpop.permute.xlu0 %1641
        %1645 = vset.pattern.permute.xlu0 0
        %1646 = vperm.xlu0 %1645, %v1508
        %v1647 = vpop.permute.xlu0 %1646
        %1650 = vset.pattern.permute.xlu0 0
        %1651 = vperm.xlu0 %1650, %v1509
        %v1652 = vpop.permute.xlu0 %1651
        %1655 = vset.pattern.permute.xlu0 0
        %1656 = vperm.xlu0 %1655, %v1510
        %v1657 = vpop.permute.xlu0 %1656
        %1660 = vset.pattern.permute.xlu0 0
        %1661 = vperm.xlu0 %1660, %v1511
        %v1662 = vpop.permute.xlu0 %1661
        %1665 = vset.pattern.permute.xlu0 0
        %1666 = vperm.xlu0 %1665, %v1512
        %v1667 = vpop.permute.xlu0 %1666
        %1670 = vset.pattern.permute.xlu0 0
        %1671 = vperm.xlu0 %1670, %v1513
        %v1672 = vpop.permute.xlu0 %1671
        %v1674 = vmul.f32 %v1450, %v1517
        %v1675 = vmul.f32 %v1451, %v1522
        %v1676 = vmul.f32 %v1452, %v1527
        %v1677 = vmul.f32 %v1453, %v1532
        %v1678 = vmul.f32 %v1454, %v1537
        %v1679 = vmul.f32 %v1455, %v1542
        %v1680 = vmul.f32 %v1456, %v1547
        %v1681 = vmul.f32 %v1457, %v1552
        %v1682 = vmul.f32 %v1458, %v1557
        %v1683 = vmul.f32 %v1459, %v1562
        %v1684 = vmul.f32 %v1460, %v1567
        %v1685 = vmul.f32 %v1461, %v1572
        %v1686 = vmul.f32 %v1462, %v1577
        %v1687 = vmul.f32 %v1463, %v1582
        %v1688 = vmul.f32 %v1464, %v1587
        %v1689 = vmul.f32 %v1465, %v1592
        %v1690 = vmul.f32 %v1466, %v1597
        %v1691 = vmul.f32 %v1467, %v1602
        %v1692 = vmul.f32 %v1468, %v1607
        %v1693 = vmul.f32 %v1469, %v1612
        %v1694 = vmul.f32 %v1470, %v1617
        %v1695 = vmul.f32 %v1471, %v1622
        %v1696 = vmul.f32 %v1472, %v1627
        %v1697 = vmul.f32 %v1473, %v1632
        %v1698 = vmul.f32 %v1474, %v1637
        %v1699 = vmul.f32 %v1475, %v1642
        %v1700 = vmul.f32 %v1476, %v1647
        %v1701 = vmul.f32 %v1477, %v1652
        %v1702 = vmul.f32 %v1478, %v1657
        %v1703 = vmul.f32 %v1479, %v1662
        %v1704 = vmul.f32 %v1480, %v1667
        %v1705 = vmul.f32 %v1481, %v1672
        %v1706 = vpack.c.bf16 %v1675, %v1674
        %v1707 = vpack.c.bf16 %v1677, %v1676
        %v1708 = vpack.c.bf16 %v1679, %v1678
        %v1709 = vpack.c.bf16 %v1681, %v1680
        %v1710 = vpack.c.bf16 %v1683, %v1682
        %v1711 = vpack.c.bf16 %v1685, %v1684
        %v1712 = vpack.c.bf16 %v1687, %v1686
        %v1713 = vpack.c.bf16 %v1689, %v1688
        %v1714 = vpack.c.bf16 %v1691, %v1690
        %v1715 = vpack.c.bf16 %v1693, %v1692
        %v1716 = vpack.c.bf16 %v1695, %v1694
        %v1717 = vpack.c.bf16 %v1697, %v1696
        %v1718 = vpack.c.bf16 %v1699, %v1698
        %v1719 = vpack.c.bf16 %v1701, %v1700
        %v1720 = vpack.c.bf16 %v1703, %v1702
        %v1721 = vpack.c.bf16 %v1705, %v1704
        %v1722 = vld [vmem:[%s338] sm:$0xf]
        %v1723 = vld [vmem:[%s338 + $0x4] sm:$0xf]
        %v1724 = vld [vmem:[%s338 + $0x8] sm:$0xf]
        %v1725 = vld [vmem:[%s338 + $0xc] sm:$0xf]
        %v1726 = vld [vmem:[%s338 + $0x10] sm:$0xf]
        %v1727 = vld [vmem:[%s338 + $0x14] sm:$0xf]
        %v1728 = vld [vmem:[%s338 + $0x18] sm:$0xf]
        %v1729 = vld [vmem:[%s338 + $0x1c] sm:$0xf]
        %v1730 = vld [vmem:[%s338 + $0x20] sm:$0xf]
        %v1731 = vld [vmem:[%s338 + $0x24] sm:$0xf]
        %v1732 = vld [vmem:[%s338 + $0x28] sm:$0xf]
        %v1733 = vld [vmem:[%s338 + $0x2c] sm:$0xf]
        %v1734 = vld [vmem:[%s338 + $0x30] sm:$0xf]
        %v1735 = vld [vmem:[%s338 + $0x34] sm:$0xf]
        %v1736 = vld [vmem:[%s338 + $0x38] sm:$0xf]
        %v1737 = vld [vmem:[%s338 + $0x3c] sm:$0xf]
        %v1738 = vld [vmem:[%s338 + $0x40] sm:$0xf]
        %v1739 = vld [vmem:[%s338 + $0x44] sm:$0xf]
        %v1740 = vld [vmem:[%s338 + $0x48] sm:$0xf]
        %v1741 = vld [vmem:[%s338 + $0x4c] sm:$0xf]
        %v1742 = vld [vmem:[%s338 + $0x50] sm:$0xf]
        %v1743 = vld [vmem:[%s338 + $0x54] sm:$0xf]
        %v1744 = vld [vmem:[%s338 + $0x58] sm:$0xf]
        %v1745 = vld [vmem:[%s338 + $0x5c] sm:$0xf]
        %v1746 = vld [vmem:[%s338 + $0x60] sm:$0xf]
        %v1747 = vld [vmem:[%s338 + $0x64] sm:$0xf]
        %v1748 = vld [vmem:[%s338 + $0x68] sm:$0xf]
        %v1749 = vld [vmem:[%s338 + $0x6c] sm:$0xf]
        %v1750 = vld [vmem:[%s338 + $0x70] sm:$0xf]
        %v1751 = vld [vmem:[%s338 + $0x74] sm:$0xf]
        %v1752 = vld [vmem:[%s338 + $0x78] sm:$0xf]
        %v1753 = vld [vmem:[%s338 + $0x7c] sm:$0xf]
        %v1786 = vunpack.c.l.b16 %v1722
        %v1787 = vunpack.c.l.b16 %v1723
        %v1788 = vunpack.c.l.b16 %v1724
        %v1789 = vunpack.c.l.b16 %v1725
        %v1790 = vunpack.c.l.b16 %v1726
        %v1791 = vunpack.c.l.b16 %v1727
        %v1792 = vunpack.c.l.b16 %v1728
        %v1793 = vunpack.c.l.b16 %v1729
        %v1794 = vunpack.c.l.b16 %v1730
        %v1795 = vunpack.c.l.b16 %v1731
        %v1796 = vunpack.c.l.b16 %v1732
        %v1797 = vunpack.c.l.b16 %v1733
        %v1798 = vunpack.c.l.b16 %v1734
        %v1799 = vunpack.c.l.b16 %v1735
        %v1800 = vunpack.c.l.b16 %v1736
        %v1801 = vunpack.c.l.b16 %v1737
        %v1802 = vunpack.c.l.b16 %v1738
        %v1803 = vunpack.c.l.b16 %v1739
        %v1804 = vunpack.c.l.b16 %v1740
        %v1805 = vunpack.c.l.b16 %v1741
        %v1806 = vunpack.c.l.b16 %v1742
        %v1807 = vunpack.c.l.b16 %v1743
        %v1808 = vunpack.c.l.b16 %v1744
        %v1809 = vunpack.c.l.b16 %v1745
        %v1810 = vunpack.c.l.b16 %v1746
        %v1811 = vunpack.c.l.b16 %v1747
        %v1812 = vunpack.c.l.b16 %v1748
        %v1813 = vunpack.c.l.b16 %v1749
        %v1814 = vunpack.c.l.b16 %v1750
        %v1815 = vunpack.c.l.b16 %v1751
        %v1816 = vunpack.c.l.b16 %v1752
        %v1817 = vunpack.c.l.b16 %v1753
        %v1818 = vpack.c.b16 %v1787, %v1786
        %v1819 = vpack.c.b16 %v1789, %v1788
        %v1820 = vpack.c.b16 %v1791, %v1790
        %v1821 = vpack.c.b16 %v1793, %v1792
        %v1822 = vpack.c.b16 %v1795, %v1794
        %v1823 = vpack.c.b16 %v1797, %v1796
        %v1824 = vpack.c.b16 %v1799, %v1798
        %v1825 = vpack.c.b16 %v1801, %v1800
        %v1826 = vpack.c.b16 %v1803, %v1802
        %v1827 = vpack.c.b16 %v1805, %v1804
        %v1828 = vpack.c.b16 %v1807, %v1806
        %v1829 = vpack.c.b16 %v1809, %v1808
        %v1830 = vpack.c.b16 %v1811, %v1810
        %v1831 = vpack.c.b16 %v1813, %v1812
        %v1832 = vpack.c.b16 %v1815, %v1814
        %v1833 = vpack.c.b16 %v1817, %v1816
        %v1850 = vld [vmem:[%s4] sm:$0xf]
        %v1851 = vld [vmem:[%s4 + $0x4] sm:$0xf]
        %v1852 = vld [vmem:[%s4 + $0x8] sm:$0xf]
        %v1853 = vld [vmem:[%s4 + $0xc] sm:$0xf]
        %v1854 = vld [vmem:[%s4 + $0x10] sm:$0xf]
        %v1855 = vld [vmem:[%s4 + $0x14] sm:$0xf]
        %v1856 = vld [vmem:[%s4 + $0x18] sm:$0xf]
        %v1857 = vld [vmem:[%s4 + $0x1c] sm:$0xf]
        %v1858 = vld [vmem:[%s4 + $0x20] sm:$0xf]
        %v1859 = vld [vmem:[%s4 + $0x24] sm:$0xf]
        %v1860 = vld [vmem:[%s4 + $0x28] sm:$0xf]
        %v1861 = vld [vmem:[%s4 + $0x2c] sm:$0xf]
        %v1862 = vld [vmem:[%s4 + $0x30] sm:$0xf]
        %v1863 = vld [vmem:[%s4 + $0x34] sm:$0xf]
        %v1864 = vld [vmem:[%s4 + $0x38] sm:$0xf]
        %v1865 = vld [vmem:[%s4 + $0x3c] sm:$0xf]
        %v1866 = vld [vmem:[%s4 + $0x40] sm:$0xf]
        %v1867 = vld [vmem:[%s4 + $0x44] sm:$0xf]
        %v1868 = vld [vmem:[%s4 + $0x48] sm:$0xf]
        %v1869 = vld [vmem:[%s4 + $0x4c] sm:$0xf]
        %v1870 = vld [vmem:[%s4 + $0x50] sm:$0xf]
        %v1871 = vld [vmem:[%s4 + $0x54] sm:$0xf]
        %v1872 = vld [vmem:[%s4 + $0x58] sm:$0xf]
        %v1873 = vld [vmem:[%s4 + $0x5c] sm:$0xf]
        %v1874 = vld [vmem:[%s4 + $0x60] sm:$0xf]
        %v1875 = vld [vmem:[%s4 + $0x64] sm:$0xf]
        %v1876 = vld [vmem:[%s4 + $0x68] sm:$0xf]
        %v1877 = vld [vmem:[%s4 + $0x6c] sm:$0xf]
        %v1878 = vld [vmem:[%s4 + $0x70] sm:$0xf]
        %v1879 = vld [vmem:[%s4 + $0x74] sm:$0xf]
        %v1880 = vld [vmem:[%s4 + $0x78] sm:$0xf]
        %v1881 = vld [vmem:[%s4 + $0x7c] sm:$0xf]
        %v1882 = vld [vmem:[%s5] sm:$0x1]
        %v1884 = vlaneseq
        %v1885 = vshrl.u32 %v1884, 7
        %v1886 = vsub.s32 0, %v1885
        %v1887 = vrot.slane %v1882, %v1886
        %v1921 = vunpack.c.l.b16 %v1850
        %v1922 = vunpack.c.l.b16 %v1851
        %v1923 = vunpack.c.l.b16 %v1852
        %v1924 = vunpack.c.l.b16 %v1853
        %v1925 = vunpack.c.l.b16 %v1854
        %v1926 = vunpack.c.l.b16 %v1855
        %v1927 = vunpack.c.l.b16 %v1856
        %v1928 = vunpack.c.l.b16 %v1857
        %v1929 = vunpack.c.l.b16 %v1858
        %v1930 = vunpack.c.l.b16 %v1859
        %v1931 = vunpack.c.l.b16 %v1860
        %v1932 = vunpack.c.l.b16 %v1861
        %v1933 = vunpack.c.l.b16 %v1862
        %v1934 = vunpack.c.l.b16 %v1863
        %v1935 = vunpack.c.l.b16 %v1864
        %v1936 = vunpack.c.l.b16 %v1865
        %v1937 = vunpack.c.l.b16 %v1866
        %v1938 = vunpack.c.l.b16 %v1867
        %v1939 = vunpack.c.l.b16 %v1868
        %v1940 = vunpack.c.l.b16 %v1869
        %v1941 = vunpack.c.l.b16 %v1870
        %v1942 = vunpack.c.l.b16 %v1871
        %v1943 = vunpack.c.l.b16 %v1872
        %v1944 = vunpack.c.l.b16 %v1873
        %v1945 = vunpack.c.l.b16 %v1874
        %v1946 = vunpack.c.l.b16 %v1875
        %v1947 = vunpack.c.l.b16 %v1876
        %v1948 = vunpack.c.l.b16 %v1877
        %v1949 = vunpack.c.l.b16 %v1878
        %v1950 = vunpack.c.l.b16 %v1879
        %v1951 = vunpack.c.l.b16 %v1880
        %v1952 = vunpack.c.l.b16 %v1881
        %v1953 = vpack.c.b16 %v1922, %v1921
        %v1954 = vpack.c.b16 %v1924, %v1923
        %v1955 = vpack.c.b16 %v1926, %v1925
        %v1956 = vpack.c.b16 %v1928, %v1927
        %v1957 = vpack.c.b16 %v1930, %v1929
        %v1958 = vpack.c.b16 %v1932, %v1931
        %v1959 = vpack.c.b16 %v1934, %v1933
        %v1960 = vpack.c.b16 %v1936, %v1935
        %v1961 = vpack.c.b16 %v1938, %v1937
        %v1962 = vpack.c.b16 %v1940, %v1939
        %v1963 = vpack.c.b16 %v1942, %v1941
        %v1964 = vpack.c.b16 %v1944, %v1943
        %v1965 = vpack.c.b16 %v1946, %v1945
        %v1966 = vpack.c.b16 %v1948, %v1947
        %v1967 = vpack.c.b16 %v1950, %v1949
        %v1968 = vpack.c.b16 %v1952, %v1951
        %1985 = vmatprep.subr.bf16.mxu0 0
        %1986 = vmatpush1.bf16.msra.mxu0 %v1953
        %1987 = vmatprep.subr.bf16.mxu0 0
        %1988 = vmatpush1.bf16.msra.mxu0 %v1954
        %1989 = vmatprep.subr.bf16.mxu0 0
        %1990 = vmatpush1.bf16.msra.mxu0 %v1955
        %1991 = vmatprep.subr.bf16.mxu0 0
        %1992 = vmatpush1.bf16.msra.mxu0 %v1956
        %1993 = vmatprep.subr.bf16.mxu0 0
        %1994 = vmatpush1.bf16.msra.mxu0 %v1957
        %1995 = vmatprep.subr.bf16.mxu0 0
        %1996 = vmatpush1.bf16.msra.mxu0 %v1958
        %1997 = vmatprep.subr.bf16.mxu0 0
        %1998 = vmatpush1.bf16.msra.mxu0 %v1959
        %1999 = vmatprep.subr.bf16.mxu0 0
        %2000 = vmatpush1.bf16.msra.mxu0 %v1960
        %2001 = vmatprep.subr.bf16.mxu0 0
        %2002 = vmatpush1.bf16.msra.mxu0 %v1961
        %2003 = vmatprep.subr.bf16.mxu0 0
        %2004 = vmatpush1.bf16.msra.mxu0 %v1962
        %2005 = vmatprep.subr.bf16.mxu0 0
        %2006 = vmatpush1.bf16.msra.mxu0 %v1963
        %2007 = vmatprep.subr.bf16.mxu0 0
        %2008 = vmatpush1.bf16.msra.mxu0 %v1964
        %2009 = vmatprep.subr.bf16.mxu0 0
        %2010 = vmatpush1.bf16.msra.mxu0 %v1965
        %2011 = vmatprep.subr.bf16.mxu0 0
        %2012 = vmatpush1.bf16.msra.mxu0 %v1966
        %2013 = vmatprep.subr.bf16.mxu0 0
        %2014 = vmatpush1.bf16.msra.mxu0 %v1967
        %2015 = vmatprep.subr.bf16.mxu0 0
        %2016 = vmatpush1.bf16.msra.mxu0 %v1968
        %2017 = vmatprep.mubr.bf16.mxu0 %v1818
        %2018 = vmatmul.mubr.bf16.gmra.mrb[0].mxu0 %v1706
        %v2019 = vpop.f32.mrb[0].mxu0
        %v2020 = vadd.f32 %v1887, %v2019
        %v2021 = vpop.f32.mrb[0].mxu0
        %v2022 = vpop.f32.mrb[0].mxu0
        %v2023 = vadd.f32 %v1887, %v2022
        %v2024 = vpop.f32.mrb[0].mxu0
        %2025 = vmatprep.mubr.bf16.mxu0 %v1819
        %2026 = vmatmul.mubr.bf16.gmra.mrb[0].mxu0 %v1707
        %v2027 = vpop.f32.mrb[0].mxu0
        %v2028 = vadd.f32 %v1887, %v2027
        %v2029 = vpop.f32.mrb[0].mxu0
        %v2030 = vpop.f32.mrb[0].mxu0
        %v2031 = vadd.f32 %v1887, %v2030
        %v2032 = vpop.f32.mrb[0].mxu0
        %2033 = vmatprep.mubr.bf16.mxu0 %v1820
        %2034 = vmatmul.mubr.bf16.gmra.mrb[0].mxu0 %v1708
        %v2035 = vpop.f32.mrb[0].mxu0
        %v2036 = vadd.f32 %v1887, %v2035
        %v2037 = vpop.f32.mrb[0].mxu0
        %v2038 = vpop.f32.mrb[0].mxu0
        %v2039 = vadd.f32 %v1887, %v2038
        %v2040 = vpop.f32.mrb[0].mxu0
        %2041 = vmatprep.mubr.bf16.mxu0 %v1821
        %2042 = vmatmul.mubr.bf16.gmra.mrb[0].mxu0 %v1709
        %v2043 = vpop.f32.mrb[0].mxu0
        %v2044 = vadd.f32 %v1887, %v2043
        %v2045 = vpop.f32.mrb[0].mxu0
        %v2046 = vpop.f32.mrb[0].mxu0
        %v2047 = vadd.f32 %v1887, %v2046
        %v2048 = vpop.f32.mrb[0].mxu0
        %2049 = vmatprep.mubr.bf16.mxu0 %v1822
        %2050 = vmatmul.mubr.bf16.gmra.mrb[0].mxu0 %v1710
        %v2051 = vpop.f32.mrb[0].mxu0
        %v2052 = vadd.f32 %v1887, %v2051
        %v2053 = vpop.f32.mrb[0].mxu0
        %v2054 = vpop.f32.mrb[0].mxu0
        %v2055 = vadd.f32 %v1887, %v2054
        %v2056 = vpop.f32.mrb[0].mxu0
        %2057 = vmatprep.mubr.bf16.mxu0 %v1823
        %2058 = vmatmul.mubr.bf16.gmra.mrb[0].mxu0 %v1711
        %v2059 = vpop.f32.mrb[0].mxu0
        %v2060 = vadd.f32 %v1887, %v2059
        %v2061 = vpop.f32.mrb[0].mxu0
        %v2062 = vpop.f32.mrb[0].mxu0
        %v2063 = vadd.f32 %v1887, %v2062
        %v2064 = vpop.f32.mrb[0].mxu0
        %2065 = vmatprep.mubr.bf16.mxu0 %v1824
        %2066 = vmatmul.mubr.bf16.gmra.mrb[0].mxu0 %v1712
        %v2067 = vpop.f32.mrb[0].mxu0
        %v2068 = vadd.f32 %v1887, %v2067
        %v2069 = vpop.f32.mrb[0].mxu0
        %v2070 = vpop.f32.mrb[0].mxu0
        %v2071 = vadd.f32 %v1887, %v2070
        %v2072 = vpop.f32.mrb[0].mxu0
        %2073 = vmatprep.mubr.bf16.mxu0 %v1825
        %2074 = vmatmul.mubr.bf16.gmra.mrb[0].mxu0 %v1713
        %v2075 = vpop.f32.mrb[0].mxu0
        %v2076 = vadd.f32 %v1887, %v2075
        %v2077 = vpop.f32.mrb[0].mxu0
        %v2078 = vpop.f32.mrb[0].mxu0
        %v2079 = vadd.f32 %v1887, %v2078
        %v2080 = vpop.f32.mrb[0].mxu0
        %2081 = vmatprep.mubr.bf16.mxu0 %v1826
        %2082 = vmatmul.mubr.bf16.gmra.mrb[0].mxu0 %v1714
        %v2083 = vpop.f32.mrb[0].mxu0
        %v2084 = vadd.f32 %v1887, %v2083
        %v2085 = vpop.f32.mrb[0].mxu0
        %v2086 = vpop.f32.mrb[0].mxu0
        %v2087 = vadd.f32 %v1887, %v2086
        %v2088 = vpop.f32.mrb[0].mxu0
        %2089 = vmatprep.mubr.bf16.mxu0 %v1827
        %2090 = vmatmul.mubr.bf16.gmra.mrb[0].mxu0 %v1715
        %v2091 = vpop.f32.mrb[0].mxu0
        %v2092 = vadd.f32 %v1887, %v2091
        %v2093 = vpop.f32.mrb[0].mxu0
        %v2094 = vpop.f32.mrb[0].mxu0
        %v2095 = vadd.f32 %v1887, %v2094
        %v2096 = vpop.f32.mrb[0].mxu0
        %2097 = vmatprep.mubr.bf16.mxu0 %v1828
        %2098 = vmatmul.mubr.bf16.gmra.mrb[0].mxu0 %v1716
        %v2099 = vpop.f32.mrb[0].mxu0
        %v2100 = vadd.f32 %v1887, %v2099
        %v2101 = vpop.f32.mrb[0].mxu0
        %v2102 = vpop.f32.mrb[0].mxu0
        %v2103 = vadd.f32 %v1887, %v2102
        %v2104 = vpop.f32.mrb[0].mxu0
        %2105 = vmatprep.mubr.bf16.mxu0 %v1829
        %2106 = vmatmul.mubr.bf16.gmra.mrb[0].mxu0 %v1717
        %v2107 = vpop.f32.mrb[0].mxu0
        %v2108 = vadd.f32 %v1887, %v2107
        %v2109 = vpop.f32.mrb[0].mxu0
        %v2110 = vpop.f32.mrb[0].mxu0
        %v2111 = vadd.f32 %v1887, %v2110
        %v2112 = vpop.f32.mrb[0].mxu0
        %2113 = vmatprep.mubr.bf16.mxu0 %v1830
        %2114 = vmatmul.mubr.bf16.gmra.mrb[0].mxu0 %v1718
        %v2115 = vpop.f32.mrb[0].mxu0
        %v2116 = vadd.f32 %v1887, %v2115
        %v2117 = vpop.f32.mrb[0].mxu0
        %v2118 = vpop.f32.mrb[0].mxu0
        %v2119 = vadd.f32 %v1887, %v2118
        %v2120 = vpop.f32.mrb[0].mxu0
        %2121 = vmatprep.mubr.bf16.mxu0 %v1831
        %2122 = vmatmul.mubr.bf16.gmra.mrb[0].mxu0 %v1719
        %v2123 = vpop.f32.mrb[0].mxu0
        %v2124 = vadd.f32 %v1887, %v2123
        %v2125 = vpop.f32.mrb[0].mxu0
        %v2126 = vpop.f32.mrb[0].mxu0
        %v2127 = vadd.f32 %v1887, %v2126
        %v2128 = vpop.f32.mrb[0].mxu0
        %2129 = vmatprep.mubr.bf16.mxu0 %v1832
        %2130 = vmatmul.mubr.bf16.gmra.mrb[0].mxu0 %v1720
        %v2131 = vpop.f32.mrb[0].mxu0
        %v2132 = vadd.f32 %v1887, %v2131
        %v2133 = vpop.f32.mrb[0].mxu0
        %v2134 = vpop.f32.mrb[0].mxu0
        %v2135 = vadd.f32 %v1887, %v2134
        %v2136 = vpop.f32.mrb[0].mxu0
        %2137 = vmatprep.mubr.bf16.mxu0 %v1833
        %2138 = vmatmul.mubr.bf16.gmra.mrb[0].mxu0 %v1721
        %v2139 = vpop.f32.mrb[0].mxu0
        %v2140 = vadd.f32 %v1887, %v2139
        %v2141 = vpop.f32.mrb[0].mxu0
        %v2142 = vpop.f32.mrb[0].mxu0
        %v2143 = vadd.f32 %v1887, %v2142
        %v2144 = vpop.f32.mrb[0].mxu0
        %2145 = vdwg.mxu0
        %2146 = vst [vmem:[%s350] sm:$0xff] %v2020
        %2147 = vst [vmem:[%s350 + $0x8] sm:$0xff] %v2023
        %2148 = vst [vmem:[%s350 + $0x10] sm:$0xff] %v2028
        %2149 = vst [vmem:[%s350 + $0x18] sm:$0xff] %v2031
        %2150 = vst [vmem:[%s350 + $0x20] sm:$0xff] %v2036
        %2151 = vst [vmem:[%s350 + $0x28] sm:$0xff] %v2039
        %2152 = vst [vmem:[%s350 + $0x30] sm:$0xff] %v2044
        %2153 = vst [vmem:[%s350 + $0x38] sm:$0xff] %v2047
        %2154 = vst [vmem:[%s350 + $0x40] sm:$0xff] %v2052
        %2155 = vst [vmem:[%s350 + $0x48] sm:$0xff] %v2055
        %2156 = vst [vmem:[%s350 + $0x50] sm:$0xff] %v2060
        %2157 = vst [vmem:[%s350 + $0x58] sm:$0xff] %v2063
        %2158 = vst [vmem:[%s350 + $0x60] sm:$0xff] %v2068
        %2159 = vst [vmem:[%s350 + $0x68] sm:$0xff] %v2071
        %2160 = vst [vmem:[%s350 + $0x70] sm:$0xff] %v2076
        %2161 = vst [vmem:[%s350 + $0x78] sm:$0xff] %v2079
        %2162 = vst [vmem:[%s350 + $0x80] sm:$0xff] %v2084
        %2163 = vst [vmem:[%s350 + $0x88] sm:$0xff] %v2087
        %2164 = vst [vmem:[%s350 + $0x90] sm:$0xff] %v2092
        %2165 = vst [vmem:[%s350 + $0x98] sm:$0xff] %v2095
        %2166 = vst [vmem:[%s350 + $0xa0] sm:$0xff] %v2100
        %2167 = vst [vmem:[%s350 + $0xa8] sm:$0xff] %v2103
        %2168 = vst [vmem:[%s350 + $0xb0] sm:$0xff] %v2108
        %2169 = vst [vmem:[%s350 + $0xb8] sm:$0xff] %v2111
        %2170 = vst [vmem:[%s350 + $0xc0] sm:$0xff] %v2116
        %2171 = vst [vmem:[%s350 + $0xc8] sm:$0xff] %v2119
        %2172 = vst [vmem:[%s350 + $0xd0] sm:$0xff] %v2124
        %2173 = vst [vmem:[%s350 + $0xd8] sm:$0xff] %v2127
        %2174 = vst [vmem:[%s350 + $0xe0] sm:$0xff] %v2132
        %2175 = vst [vmem:[%s350 + $0xe8] sm:$0xff] %v2135
        %2176 = vst [vmem:[%s350 + $0xf0] sm:$0xff] %v2140
        %2177 = vst [vmem:[%s350 + $0xf8] sm:$0xff] %v2143
      $region52: #{graphsage_forward.6} parent=43 // pred_fallthru
        _
      %s2178 = smul.u32 32, %s21
      %p2179 = scmp.lt.s32.totalorder %s2178, 95
      %s2180 = scalar_select %p2179, %s2178, 95
      %s2181 = smul.addr %s2180, 8
      %s2182 = scalar_lea.vmem %s6, %s2181
      // Predicated region
      $region53: #{graphsage_forward.6} parent=43 // pred_check
        %p2183 = pneg %p195
      $region54: #{graphsage_forward.6} parent=43 // pred_check_branch
        %2185 = sbr.rel (%p2183) target = $region56
      $region55: #{graphsage_forward.6} parent=43 // pred_region
        %s2186 = smul.u32 32, %s21
      $region56: #{graphsage_forward.6} parent=43 // pred_fallthru
        _
    $region44: #{graphsage_forward.6} parent=5 // pred_fallthru
      _
    %p2187 = scmp.le.s32.totalorder 2, %s12
    // Predicated region
    $region57: #{graphsage_forward.6} parent=5 // pred_check
      %p2188 = pneg %p2187
    $region58: #{graphsage_forward.6} parent=5 // pred_check_branch
      %2190 = sbr.rel (%p2188) target = $region60
    $region59: #{graphsage_forward.6} parent=5 // pred_region
      %s2191 = ssub.s32 %s12, 2
      // Predicated region
      $region61: #{graphsage_forward.6} parent=59 // pred_check
        %p2192 = pneg %p201
      $region62: #{graphsage_forward.6} parent=59 // pred_check_branch
        %2194 = sbr.rel (%p2192) target = $region64
      $region63: #{graphsage_forward.6} parent=59 // pred_region
        %s2195 = smul.u32 32, %s23
        %p2196 = scmp.lt.s32.totalorder %s2195, 95
        %s2197 = scalar_select %p2196, %s2195, 95
        %s2198 = smul.addr %s2197, 8
        %s2199 = scalar_lea.vmem %s6, %s2198
      $region64: #{graphsage_forward.6} parent=59 // pred_fallthru
        _
    $region60: #{graphsage_forward.6} parent=5 // pred_fallthru
      _
  $region6: #{graphsage_forward.6} parent=0 // loop_footer
    %s16 = sadd.s32 1, %s12
  $region7: #{graphsage_forward.6} parent=0 // loop_footer_branch
    %11 = sbr.rel target = $region3
  $region8: #{graphsage_forward.6} parent=0 // loop_exit
    _

</llo_original>
